<compile_context>
chip_gen: v7x
topology: tpu7x:2x2x1
jax: 0.10.0
libtpu: 0.0.40
codegen_flags: <defaults>
</compile_context>

<pallas_src>
import functools
import math

import jax
import jax.numpy as jnp
from jax.experimental import pallas as pl
from jax.experimental.pallas import tpu as pltpu

HALF = jnp.bfloat16


def _vmem_limit_bytes():
  """Generation-aware VMEM limit (~0.5x physical, clamped), safe fallback."""
  default = 48 * 1024 * 1024
  try:
    info = pltpu.get_tpu_info()
    cap = getattr(info, "vmem_capacity_bytes", None)
    if cap:
      return max(32 * 1024 * 1024, min(int(cap) // 2, 96 * 1024 * 1024))
  except Exception:
    pass
  return default


def _pick_tile(dim, pref):
  t = min(pref, dim)
  while dim % t != 0:
    t //= 2
  return t


# ----------------------------------------------------------------------------
# Full-K matmul + bias (+ optional GELU) kernel. Grid = (M/tm, N/tn).
def _mm_bias_kernel(x_ref, w_ref, b_ref, o_ref, *, activation):
  acc = jnp.dot(x_ref[...], w_ref[...], preferred_element_type=jnp.float32)
  acc = acc + b_ref[...].astype(jnp.float32)
  if activation == "gelu":
    # tanh-form GELU: ~6 VALU ops + 1 EUP tanh (separate slot) instead of a
    # ~15-op VALU erf polynomial.
    # TODO(synk): graph uses exact erf-GELU; tanh form matches to ~1e-3, below
    # half-precision resolution of the bf16 output.
    inner = 0.7978845608028654 * (acc + 0.044715 * acc * acc * acc)
    acc = 0.5 * acc * (1.0 + jnp.tanh(inner))
  o_ref[...] = acc.astype(o_ref.dtype)


def matmul_bias(x, w, b, activation=None, tm=1024, tn=512):
  M, K = x.shape
  Kw, N = w.shape
  assert K == Kw
  tm = _pick_tile(M, tm)
  tn = _pick_tile(N, tn)
  kernel = functools.partial(_mm_bias_kernel, activation=activation)
  return pl.pallas_call(
      kernel,
      out_shape=jax.ShapeDtypeStruct((M, N), HALF),
      grid_spec=pltpu.PrefetchScalarGridSpec(
          num_scalar_prefetch=0,
          grid=(M // tm, N // tn),
          in_specs=[
              # x tile invariant across j (inner axis) -> fetched once per i
              pl.BlockSpec((tm, K), lambda i, j: (i, 0)),
              pl.BlockSpec((K, tn), lambda i, j: (0, j)),
              pl.BlockSpec((1, tn), lambda i, j: (0, j)),
          ],
          out_specs=pl.BlockSpec((tm, tn), lambda i, j: (i, j))),
      compiler_params=pltpu.CompilerParams(
          dimension_semantics=("parallel", "parallel"),
          vmem_limit_bytes=_vmem_limit_bytes()),
  )(x, w, b.reshape(1, N))


# ----------------------------------------------------------------------------
# Full-K matmul + bias with fused residual add + LayerNorm epilogue
# (correction=0, eps=1e-5). tn = N (full hidden width) so the LN reduction
# lives inside one tile. Grid = (M/tm,).
def _mm_bias_add_ln_kernel(x_ref, w_ref, b_ref, r_ref, g_ref, be_ref, o_ref,
                           *, eps):
  acc = jnp.dot(x_ref[...], w_ref[...], preferred_element_type=jnp.float32)
  s = acc + b_ref[...].astype(jnp.float32) + r_ref[...].astype(jnp.float32)
  mean = jnp.mean(s, axis=-1, keepdims=True)
  c = s - mean
  var = jnp.mean(c * c, axis=-1, keepdims=True)
  inv = jax.lax.rsqrt(var + eps)
  y = c * inv * g_ref[...].astype(jnp.float32) + be_ref[...].astype(jnp.float32)
  o_ref[...] = y.astype(o_ref.dtype)


def matmul_bias_add_layernorm(x, w, b, residual, gamma, beta, tm=512, eps=1e-5):
  M, K = x.shape
  Kw, N = w.shape
  assert K == Kw and residual.shape == (M, N)
  tm = _pick_tile(M, tm)
  kernel = functools.partial(_mm_bias_add_ln_kernel, eps=eps)
  return pl.pallas_call(
      kernel,
      out_shape=jax.ShapeDtypeStruct((M, N), HALF),
      grid_spec=pltpu.PrefetchScalarGridSpec(
          num_scalar_prefetch=0,
          grid=(M // tm,),
          in_specs=[
              pl.BlockSpec((tm, K), lambda i: (i, 0)),
              pl.BlockSpec((K, N), lambda i: (0, 0)),   # weight stays resident
              pl.BlockSpec((1, N), lambda i: (0, 0)),
              pl.BlockSpec((tm, N), lambda i: (i, 0)),
              pl.BlockSpec((1, N), lambda i: (0, 0)),
              pl.BlockSpec((1, N), lambda i: (0, 0)),
          ],
          out_specs=pl.BlockSpec((tm, N), lambda i: (i, 0))),
      compiler_params=pltpu.CompilerParams(
          dimension_semantics=("parallel",),
          vmem_limit_bytes=_vmem_limit_bytes()),
  )(x, w, b.reshape(1, N), residual, gamma.reshape(1, N), beta.reshape(1, N))


# ----------------------------------------------------------------------------
# Attention: grid = (batch, head-group, query-tile). Each step reads a
# lane-dense (tq, G*dh) / (S, G*dh) slice of the fused qkv tensor for a group
# of G heads (G*dh = 128), does per-head QK^T / sqrt(dh) + mask-bias, fp32
# softmax (normalization folded into the PV output), and writes each head's
# result directly into its lane slice of the (M, D) context layout.
def _attn_kernel(q_ref, k_ref, v_ref, m_ref, o_ref, *, heads, head_dim,
                 inv_scale):
  # additive mask bias, computed once per (batch, head-group, query-tile) step
  bias = (m_ref[0].astype(jnp.float32) - 1.0) * 10000.0          # (1, S)
  qb = q_ref[...]                                                # (tq, G*dh)
  kb = k_ref[...]                                                # (S,  G*dh)
  vb = v_ref[...]                                                # (S,  G*dh)
  for h in range(heads):
    lo, hi = h * head_dim, (h + 1) * head_dim
    qh, kh, vh = qb[:, lo:hi], kb[:, lo:hi], vb[:, lo:hi]
    # trans-B dot (canonical flash-attention pattern): (tq, dh) x (S, dh)^T
    s = jax.lax.dot_general(qh, kh, (((1,), (1,)), ((), ())),
                            preferred_element_type=jnp.float32)  # (tq, S)
    s = s * inv_scale + bias
    mx = jnp.max(s, axis=-1, keepdims=True)
    p = jnp.exp(s - mx)                                          # (tq, S) f32
    denom = jnp.sum(p, axis=-1, keepdims=True)                   # (tq, 1)
    # Fold the softmax normalization into the (tq, dh) output instead of
    # rescaling the (tq, S) probability matrix.
    out_h = jnp.dot(p.astype(vh.dtype), vh,
                    preferred_element_type=jnp.float32)          # (tq, dh)
    out_h = out_h * pl.reciprocal(denom, approx=True)
    o_ref[:, lo:hi] = out_h.astype(o_ref.dtype)


def attention(qkv, mask, batch, seq, n_heads, head_dim, tq=256):
  M, three_d = qkv.shape
  D = three_d // 3
  assert M == batch * seq and D == n_heads * head_dim
  # heads per grid step so that the last block dim is 128 lanes
  G = max(1, min(n_heads, 128 // head_dim))
  while n_heads % G != 0:
    G -= 1
  NG = n_heads // G
  wq = G * head_dim
  tq = _pick_tile(seq, tq)
  n_qt = seq // tq
  inv_scale = 1.0 / math.sqrt(head_dim)
  kernel = functools.partial(_attn_kernel, heads=G, head_dim=head_dim,
                             inv_scale=inv_scale)
  return pl.pallas_call(
      kernel,
      out_shape=jax.ShapeDtypeStruct((M, D), HALF),
      grid_spec=pltpu.PrefetchScalarGridSpec(
          num_scalar_prefetch=0,
          grid=(batch, NG, n_qt),
          in_specs=[
              # q rows for this (batch, query tile); head-group g lanes
              pl.BlockSpec((tq, wq), lambda b, g, qi: (b * n_qt + qi, g)),
              # full-sequence k / v for this batch and head group; index maps
              # don't depend on qi, so they stay VMEM-resident across q tiles
              pl.BlockSpec((seq, wq), lambda b, g, qi: (b, NG + g)),
              pl.BlockSpec((seq, wq), lambda b, g, qi: (b, 2 * NG + g)),
              # padding mask, re-DMA'd only when the batch index changes
              pl.BlockSpec((1, 1, seq), lambda b, g, qi: (b, 0, 0)),
          ],
          out_specs=pl.BlockSpec((tq, wq), lambda b, g, qi: (b * n_qt + qi, g))),
      compiler_params=pltpu.CompilerParams(
          # no cross-step state -> every axis can be sharded across TCs (v7x)
          dimension_semantics=("parallel", "parallel", "parallel"),
          vmem_limit_bytes=_vmem_limit_bytes()),
  )(qkv, qkv, qkv, mask)


# ----------------------------------------------------------------------------
def transformer_block(x, mask, params, n_heads, head_dim):
  B, S, D = x.shape
  M = B * S
  x2 = x.reshape(M, D)

  # fused QKV projection (mm + bias) -> (M, 3D), consumed in-place by attention
  qkv = matmul_bias(x2, params["w_qkv"], params["b_qkv"])
  ctx = attention(qkv, mask, B, S, n_heads, head_dim)              # (M, D)

  # out-proj + bias + residual(x) + LayerNorm1, fused
  ln1 = matmul_bias_add_layernorm(ctx, params["w_o"], params["b_o"],
                                  x2, params["g1"], params["be1"])  # (M, D)

  # FFN: GELU in the ff1 epilogue; ff2 + residual(ln1) + LayerNorm2 fused
  ff1 = matmul_bias(ln1, params["w_ff1"], params["b_ff1"],
                    activation="gelu")                              # (M, FF)
  out = matmul_bias_add_layernorm(ff1, params["w_ff2"], params["b_ff2"],
                                  ln1, params["g2"], params["be2"])  # (M, D)
  return out.reshape(B, S, D)


if __name__ == "__main__":
  # Small shapes consistent with the graph structure (graph uses
  # B=8, S=1024, D=512, H=16, dh=32, FF=2048). dh=32 is preserved so the
  # softmax scale matches the hard-coded 5.656854... = sqrt(32).
  B, S, D, H, FF = 2, 128, 128, 4, 256
  dh = D // H  # 32

  key = jax.random.PRNGKey(0)
  ks = jax.random.split(key, 16)

  def w(k, shape, scale=0.02):
    return (jax.random.normal(k, shape, jnp.float32) * scale).astype(HALF)

  params = {
      "w_qkv": w(ks[0], (D, 3 * D)), "b_qkv": w(ks[1], (3 * D,)),
      "w_o":   w(ks[2], (D, D)),     "b_o":   w(ks[3], (D,)),
      "g1": (1.0 + 0.02 * jax.random.normal(ks[4], (D,))).astype(HALF),
      "be1": w(ks[5], (D,)),
      "w_ff1": w(ks[6], (D, FF)),    "b_ff1": w(ks[7], (FF,)),
      "w_ff2": w(ks[8], (FF, D)),    "b_ff2": w(ks[9], (D,)),
      "g2": (1.0 + 0.02 * jax.random.normal(ks[10], (D,))).astype(HALF),
      "be2": w(ks[11], (D,)),
  }

  x = jax.random.normal(ks[12], (B, S, D), jnp.float32).astype(HALF)
  # padding mask [B, 1, S]: first 3/4 positions valid (1.0), rest masked (0.0)
  valid = (jnp.arange(S) < (3 * S) // 4).astype(HALF)
  mask = jnp.broadcast_to(valid, (B, 1, S)).astype(HALF)

  fwd = jax.jit(functools.partial(transformer_block, n_heads=H, head_dim=dh))
  out = fwd(x, mask, params)
  out = jax.block_until_ready(out)
  assert out.shape == (B, S, D) and out.dtype == HALF
  print("KERNEL_OK")
</pallas_src>

<mosaic_0001>
module attributes {stable_mosaic.version = 11 : i64} {
  func.func @_mm_bias_kernel(%arg0: i32, %arg1: i32, %arg2: memref<256x128xbf16, #tpu.memory_space<vmem>>, %arg3: memref<128x384xbf16, #tpu.memory_space<vmem>>, %arg4: memref<1x384xbf16, #tpu.memory_space<vmem>>, %arg5: memref<256x384xbf16, #tpu.memory_space<vmem>>) attributes {dimension_semantics = [#tpu.dimension_semantics<parallel>, #tpu.dimension_semantics<parallel>], iteration_bounds = array<i64: 1, 1>, scalar_prefetch = 0 : i64, scratch_operands = 0 : i64, tpu.core_type = #tpu.core_type<tc>, window_params = [{transform_indices = @transform_0, window_bounds = array<i64: 256, 128>}, {transform_indices = @transform_1, window_bounds = array<i64: 128, 384>}, {transform_indices = @transform_2, window_bounds = array<i64: 1, 384>}, {transform_indices = @transform_3, window_bounds = array<i64: 256, 384>}]} {
    %c0 = arith.constant 0 : index
    %c0_0 = arith.constant 0 : index
    %0 = vector.load %arg2[%c0, %c0_0] : memref<256x128xbf16, #tpu.memory_space<vmem>>, vector<256x128xbf16>
    %c0_1 = arith.constant 0 : index
    %c0_2 = arith.constant 0 : index
    %1 = vector.load %arg3[%c0_1, %c0_2] : memref<128x384xbf16, #tpu.memory_space<vmem>>, vector<128x384xbf16>
    %cst = arith.constant dense<0.000000e+00> : vector<256x384xf32>
    %2 = tpu.matmul %0, %1, %cst {dimension_numbers = #tpu.dot_dimension_numbers<[1], [0], [0], [1], [0, 0, 1, 1], [], []>} : vector<256x128xbf16>, vector<128x384xbf16>, vector<256x384xf32> -> vector<256x384xf32>
    %c0_3 = arith.constant 0 : index
    %c0_4 = arith.constant 0 : index
    %3 = vector.load %arg4[%c0_3, %c0_4] : memref<1x384xbf16, #tpu.memory_space<vmem>>, vector<1x384xbf16>
    %4 = arith.extf %3 : vector<1x384xbf16> to vector<1x384xf32>
    %5 = vector.broadcast %4 : vector<1x384xf32> to vector<256x384xf32>
    %6 = arith.addf %2, %5 : vector<256x384xf32>
    %7 = arith.truncf %6 : vector<256x384xf32> to vector<256x384xbf16>
    %c0_5 = arith.constant 0 : index
    %c0_6 = arith.constant 0 : index
    %8 = vector.load %arg5[%c0_5, %c0_6] : memref<256x384xbf16, #tpu.memory_space<vmem>>, vector<256x384xbf16>
    tpu.vector_store %arg5[%c0_5, %c0_6], %7 {strides = array<i32>} : memref<256x384xbf16, #tpu.memory_space<vmem>>, vector<256x384xbf16>,
    return
  }
  func.func @transform_0(%arg0: i32, %arg1: i32) -> (i32, i32) {
    %c0_i32 = arith.constant 0 : i32
    %c0_i32_0 = arith.constant 0 : i32
    return %arg0, %c0_i32 : i32, i32
  }
  func.func @transform_1(%arg0: i32, %arg1: i32) -> (i32, i32) {
    %c0_i32 = arith.constant 0 : i32
    %c0_i32_0 = arith.constant 0 : i32
    return %c0_i32, %arg1 : i32, i32
  }
  func.func @transform_2(%arg0: i32, %arg1: i32) -> (i32, i32) {
    %c0_i32 = arith.constant 0 : i32
    %c0_i32_0 = arith.constant 0 : i32
    return %c0_i32, %arg1 : i32, i32
  }
  func.func @transform_3(%arg0: i32, %arg1: i32) -> (i32, i32) {
    %c0_i32 = arith.constant 0 : i32
    return %arg0, %arg1 : i32, i32
  }
}

module attributes {stable_mosaic.version = 11 : i64} {
  func.func @_attn_kernel(%arg0: i32, %arg1: i32, %arg2: i32, %arg3: memref<128x128xbf16, #tpu.memory_space<vmem>>, %arg4: memref<128x128xbf16, #tpu.memory_space<vmem>>, %arg5: memref<128x128xbf16, #tpu.memory_space<vmem>>, %arg6: memref<1x1x128xbf16, #tpu.memory_space<vmem>>, %arg7: memref<128x128xbf16, #tpu.memory_space<vmem>>) attributes {dimension_semantics = [#tpu.dimension_semantics<parallel>, #tpu.dimension_semantics<parallel>, #tpu.dimension_semantics<parallel>], iteration_bounds = array<i64: 2, 1, 1>, scalar_prefetch = 0 : i64, scratch_operands = 0 : i64, tpu.core_type = #tpu.core_type<tc>, window_params = [{transform_indices = @transform_0, window_bounds = array<i64: 128, 128>}, {transform_indices = @transform_1, window_bounds = array<i64: 128, 128>}, {transform_indices = @transform_2, window_bounds = array<i64: 128, 128>}, {transform_indices = @transform_3, window_bounds = array<i64: 1, 1, 128>}, {transform_indices = @transform_4, window_bounds = array<i64: 128, 128>}]} {
    %c0 = arith.constant 0 : index
    %c0_0 = arith.constant 0 : index
    %c0_1 = arith.constant 0 : index
    %0 = vector.load %arg6[%c0, %c0_0, %c0_1] : memref<1x1x128xbf16, #tpu.memory_space<vmem>>, vector<1x1x128xbf16>
    %1 = vector.shape_cast %0 : vector<1x1x128xbf16> to vector<1x128xbf16>
    %2 = arith.extf %1 : vector<1x128xbf16> to vector<1x128xf32>
    %cst = arith.constant 1.000000e+00 : f32
    %3 = vector.broadcast %cst : f32 to vector<1x128xf32>
    %4 = arith.subf %2, %3 : vector<1x128xf32>
    %cst_2 = arith.constant 1.000000e+04 : f32
    %5 = vector.broadcast %cst_2 : f32 to vector<1x128xf32>
    %6 = arith.mulf %4, %5 : vector<1x128xf32>
    %c0_3 = arith.constant 0 : index
    %c0_4 = arith.constant 0 : index
    %7 = vector.load %arg3[%c0_3, %c0_4] : memref<128x128xbf16, #tpu.memory_space<vmem>>, vector<128x128xbf16>
    %c0_5 = arith.constant 0 : index
    %c0_6 = arith.constant 0 : index
    %8 = vector.load %arg4[%c0_5, %c0_6] : memref<128x128xbf16, #tpu.memory_space<vmem>>, vector<128x128xbf16>
    %c0_7 = arith.constant 0 : index
    %c0_8 = arith.constant 0 : index
    %9 = vector.load %arg5[%c0_7, %c0_8] : memref<128x128xbf16, #tpu.memory_space<vmem>>, vector<128x128xbf16>
    %10 = vector.extract_strided_slice %7 {offsets = [0, 0], sizes = [128, 32], strides = [1, 1]} : vector<128x128xbf16> to vector<128x32xbf16>
    %11 = vector.extract_strided_slice %8 {offsets = [0, 0], sizes = [128, 32], strides = [1, 1]} : vector<128x128xbf16> to vector<128x32xbf16>
    %12 = vector.extract_strided_slice %9 {offsets = [0, 0], sizes = [128, 32], strides = [1, 1]} : vector<128x128xbf16> to vector<128x32xbf16>
    %cst_9 = arith.constant dense<0.000000e+00> : vector<128x128xf32>
    %13 = tpu.matmul %10, %11, %cst_9 {dimension_numbers = #tpu.dot_dimension_numbers<[1], [1], [0], [0], [0, 0, 1, 0], [], []>} : vector<128x32xbf16>, vector<128x32xbf16>, vector<128x128xf32> -> vector<128x128xf32>
    %cst_10 = arith.constant 0.176776692 : f32
    %14 = vector.broadcast %cst_10 : f32 to vector<128x128xf32>
    %15 = arith.mulf %13, %14 : vector<128x128xf32>
    %16 = vector.broadcast %6 : vector<1x128xf32> to vector<128x128xf32>
    %17 = arith.addf %15, %16 : vector<128x128xf32>
    %cst_11 = arith.constant dense<0xFF800000> : vector<128xf32>
    %18 = vector.multi_reduction <maximumf>, %17, %cst_11 [1] : vector<128x128xf32> to vector<128xf32>
    %19 = vector.shape_cast %18 : vector<128xf32> to vector<128x1xf32>
    %20 = vector.broadcast %19 : vector<128x1xf32> to vector<128x128xf32>
    %21 = arith.subf %17, %20 : vector<128x128xf32>
    %22 = math.exp %21 : vector<128x128xf32>
    %cst_12 = arith.constant dense<0.000000e+00> : vector<128xf32>
    %23 = vector.multi_reduction <add>, %22, %cst_12 [1] : vector<128x128xf32> to vector<128xf32>
    %24 = vector.shape_cast %23 : vector<128xf32> to vector<128x1xf32>
    %25 = arith.truncf %22 : vector<128x128xf32> to vector<128x128xbf16>
    %cst_13 = arith.constant dense<0.000000e+00> : vector<128x32xf32>
    %26 = tpu.matmul %25, %12, %cst_13 {dimension_numbers = #tpu.dot_dimension_numbers<[1], [0], [0], [1], [0, 0, 1, 1], [], []>} : vector<128x128xbf16>, vector<128x32xbf16>, vector<128x32xf32> -> vector<128x32xf32>
    %27 = tpu.reciprocal %24 {approx = true} : vector<128x1xf32> -> vector<128x1xf32>
    %28 = vector.broadcast %27 : vector<128x1xf32> to vector<128x32xf32>
    %29 = arith.mulf %26, %28 : vector<128x32xf32>
    %30 = arith.truncf %29 : vector<128x32xf32> to vector<128x32xbf16>
    %c0_14 = arith.constant 0 : index
    %c0_15 = arith.constant 0 : index
    %31 = vector.load %arg7[%c0_14, %c0_15] : memref<128x128xbf16, #tpu.memory_space<vmem>>, vector<128x32xbf16>
    tpu.vector_store %arg7[%c0_14, %c0_15], %30 {strides = array<i32>} : memref<128x128xbf16, #tpu.memory_space<vmem>>, vector<128x32xbf16>,
    %32 = vector.extract_strided_slice %7 {offsets = [0, 32], sizes = [128, 32], strides = [1, 1]} : vector<128x128xbf16> to vector<128x32xbf16>
    %33 = vector.extract_strided_slice %8 {offsets = [0, 32], sizes = [128, 32], strides = [1, 1]} : vector<128x128xbf16> to vector<128x32xbf16>
    %34 = vector.extract_strided_slice %9 {offsets = [0, 32], sizes = [128, 32], strides = [1, 1]} : vector<128x128xbf16> to vector<128x32xbf16>
    %cst_16 = arith.constant dense<0.000000e+00> : vector<128x128xf32>
    %35 = tpu.matmul %32, %33, %cst_16 {dimension_numbers = #tpu.dot_dimension_numbers<[1], [1], [0], [0], [0, 0, 1, 0], [], []>} : vector<128x32xbf16>, vector<128x32xbf16>, vector<128x128xf32> -> vector<128x128xf32>
    %cst_17 = arith.constant 0.176776692 : f32
    %36 = vector.broadcast %cst_17 : f32 to vector<128x128xf32>
    %37 = arith.mulf %35, %36 : vector<128x128xf32>
    %38 = vector.broadcast %6 : vector<1x128xf32> to vector<128x128xf32>
    %39 = arith.addf %37, %38 : vector<128x128xf32>
    %cst_18 = arith.constant dense<0xFF800000> : vector<128xf32>
    %40 = vector.multi_reduction <maximumf>, %39, %cst_18 [1] : vector<128x128xf32> to vector<128xf32>
    %41 = vector.shape_cast %40 : vector<128xf32> to vector<128x1xf32>
    %42 = vector.broadcast %41 : vector<128x1xf32> to vector<128x128xf32>
    %43 = arith.subf %39, %42 : vector<128x128xf32>
    %44 = math.exp %43 : vector<128x128xf32>
    %cst_19 = arith.constant dense<0.000000e+00> : vector<128xf32>
    %45 = vector.multi_reduction <add>, %44, %cst_19 [1] : vector<128x128xf32> to vector<128xf32>
    %46 = vector.shape_cast %45 : vector<128xf32> to vector<128x1xf32>
    %47 = arith.truncf %44 : vector<128x128xf32> to vector<128x128xbf16>
    %cst_20 = arith.constant dense<0.000000e+00> : vector<128x32xf32>
    %48 = tpu.matmul %47, %34, %cst_20 {dimension_numbers = #tpu.dot_dimension_numbers<[1], [0], [0], [1], [0, 0, 1, 1], [], []>} : vector<128x128xbf16>, vector<128x32xbf16>, vector<128x32xf32> -> vector<128x32xf32>
    %49 = tpu.reciprocal %46 {approx = true} : vector<128x1xf32> -> vector<128x1xf32>
    %50 = vector.broadcast %49 : vector<128x1xf32> to vector<128x32xf32>
    %51 = arith.mulf %48, %50 : vector<128x32xf32>
    %52 = arith.truncf %51 : vector<128x32xf32> to vector<128x32xbf16>
    %c0_21 = arith.constant 0 : index
    %c32 = arith.constant 32 : index
    %53 = vector.load %arg7[%c0_21, %c32] : memref<128x128xbf16, #tpu.memory_space<vmem>>, vector<128x32xbf16>
    tpu.vector_store %arg7[%c0_21, %c32], %52 {strides = array<i32>} : memref<128x128xbf16, #tpu.memory_space<vmem>>, vector<128x32xbf16>,
    %54 = vector.extract_strided_slice %7 {offsets = [0, 64], sizes = [128, 32], strides = [1, 1]} : vector<128x128xbf16> to vector<128x32xbf16>
    %55 = vector.extract_strided_slice %8 {offsets = [0, 64], sizes = [128, 32], strides = [1, 1]} : vector<128x128xbf16> to vector<128x32xbf16>
    %56 = vector.extract_strided_slice %9 {offsets = [0, 64], sizes = [128, 32], strides = [1, 1]} : vector<128x128xbf16> to vector<128x32xbf16>
    %cst_22 = arith.constant dense<0.000000e+00> : vector<128x128xf32>
    %57 = tpu.matmul %54, %55, %cst_22 {dimension_numbers = #tpu.dot_dimension_numbers<[1], [1], [0], [0], [0, 0, 1, 0], [], []>} : vector<128x32xbf16>, vector<128x32xbf16>, vector<128x128xf32> -> vector<128x128xf32>
    %cst_23 = arith.constant 0.176776692 : f32
    %58 = vector.broadcast %cst_23 : f32 to vector<128x128xf32>
    %59 = arith.mulf %57, %58 : vector<128x128xf32>
    %60 = vector.broadcast %6 : vector<1x128xf32> to vector<128x128xf32>
    %61 = arith.addf %59, %60 : vector<128x128xf32>
    %cst_24 = arith.constant dense<0xFF800000> : vector<128xf32>
    %62 = vector.multi_reduction <maximumf>, %61, %cst_24 [1] : vector<128x128xf32> to vector<128xf32>
    %63 = vector.shape_cast %62 : vector<128xf32> to vector<128x1xf32>
    %64 = vector.broadcast %63 : vector<128x1xf32> to vector<128x128xf32>
    %65 = arith.subf %61, %64 : vector<128x128xf32>
    %66 = math.exp %65 : vector<128x128xf32>
    %cst_25 = arith.constant dense<0.000000e+00> : vector<128xf32>
    %67 = vector.multi_reduction <add>, %66, %cst_25 [1] : vector<128x128xf32> to vector<128xf32>
    %68 = vector.shape_cast %67 : vector<128xf32> to vector<128x1xf32>
    %69 = arith.truncf %66 : vector<128x128xf32> to vector<128x128xbf16>
    %cst_26 = arith.constant dense<0.000000e+00> : vector<128x32xf32>
    %70 = tpu.matmul %69, %56, %cst_26 {dimension_numbers = #tpu.dot_dimension_numbers<[1], [0], [0], [1], [0, 0, 1, 1], [], []>} : vector<128x128xbf16>, vector<128x32xbf16>, vector<128x32xf32> -> vector<128x32xf32>
    %71 = tpu.reciprocal %68 {approx = true} : vector<128x1xf32> -> vector<128x1xf32>
    %72 = vector.broadcast %71 : vector<128x1xf32> to vector<128x32xf32>
    %73 = arith.mulf %70, %72 : vector<128x32xf32>
    %74 = arith.truncf %73 : vector<128x32xf32> to vector<128x32xbf16>
    %c0_27 = arith.constant 0 : index
    %c64 = arith.constant 64 : index
    %75 = vector.load %arg7[%c0_27, %c64] : memref<128x128xbf16, #tpu.memory_space<vmem>>, vector<128x32xbf16>
    tpu.vector_store %arg7[%c0_27, %c64], %74 {strides = array<i32>} : memref<128x128xbf16, #tpu.memory_space<vmem>>, vector<128x32xbf16>,
    %76 = vector.extract_strided_slice %7 {offsets = [0, 96], sizes = [128, 32], strides = [1, 1]} : vector<128x128xbf16> to vector<128x32xbf16>
    %77 = vector.extract_strided_slice %8 {offsets = [0, 96], sizes = [128, 32], strides = [1, 1]} : vector<128x128xbf16> to vector<128x32xbf16>
    %78 = vector.extract_strided_slice %9 {offsets = [0, 96], sizes = [128, 32], strides = [1, 1]} : vector<128x128xbf16> to vector<128x32xbf16>
    %cst_28 = arith.constant dense<0.000000e+00> : vector<128x128xf32>
    %79 = tpu.matmul %76, %77, %cst_28 {dimension_numbers = #tpu.dot_dimension_numbers<[1], [1], [0], [0], [0, 0, 1, 0], [], []>} : vector<128x32xbf16>, vector<128x32xbf16>, vector<128x128xf32> -> vector<128x128xf32>
    %cst_29 = arith.constant 0.176776692 : f32
    %80 = vector.broadcast %cst_29 : f32 to vector<128x128xf32>
    %81 = arith.mulf %79, %80 : vector<128x128xf32>
    %82 = vector.broadcast %6 : vector<1x128xf32> to vector<128x128xf32>
    %83 = arith.addf %81, %82 : vector<128x128xf32>
    %cst_30 = arith.constant dense<0xFF800000> : vector<128xf32>
    %84 = vector.multi_reduction <maximumf>, %83, %cst_30 [1] : vector<128x128xf32> to vector<128xf32>
    %85 = vector.shape_cast %84 : vector<128xf32> to vector<128x1xf32>
    %86 = vector.broadcast %85 : vector<128x1xf32> to vector<128x128xf32>
    %87 = arith.subf %83, %86 : vector<128x128xf32>
    %88 = math.exp %87 : vector<128x128xf32>
    %cst_31 = arith.constant dense<0.000000e+00> : vector<128xf32>
    %89 = vector.multi_reduction <add>, %88, %cst_31 [1] : vector<128x128xf32> to vector<128xf32>
    %90 = vector.shape_cast %89 : vector<128xf32> to vector<128x1xf32>
    %91 = arith.truncf %88 : vector<128x128xf32> to vector<128x128xbf16>
    %cst_32 = arith.constant dense<0.000000e+00> : vector<128x32xf32>
    %92 = tpu.matmul %91, %78, %cst_32 {dimension_numbers = #tpu.dot_dimension_numbers<[1], [0], [0], [1], [0, 0, 1, 1], [], []>} : vector<128x128xbf16>, vector<128x32xbf16>, vector<128x32xf32> -> vector<128x32xf32>
    %93 = tpu.reciprocal %90 {approx = true} : vector<128x1xf32> -> vector<128x1xf32>
    %94 = vector.broadcast %93 : vector<128x1xf32> to vector<128x32xf32>
    %95 = arith.mulf %92, %94 : vector<128x32xf32>
    %96 = arith.truncf %95 : vector<128x32xf32> to vector<128x32xbf16>
    %c0_33 = arith.constant 0 : index
    %c96 = arith.constant 96 : index
    %97 = vector.load %arg7[%c0_33, %c96] : memref<128x128xbf16, #tpu.memory_space<vmem>>, vector<128x32xbf16>
    tpu.vector_store %arg7[%c0_33, %c96], %96 {strides = array<i32>} : memref<128x128xbf16, #tpu.memory_space<vmem>>, vector<128x32xbf16>,
    return
  }
  func.func @transform_0(%arg0: i32, %arg1: i32, %arg2: i32) -> (i32, i32) {
    %c1_i32 = arith.constant 1 : i32
    %0 = arith.muli %arg0, %c1_i32 : i32
    %1 = arith.addi %0, %arg2 : i32
    %c0_i32 = arith.constant 0 : i32
    return %1, %arg1 : i32, i32
  }
  func.func @transform_1(%arg0: i32, %arg1: i32, %arg2: i32) -> (i32, i32) {
    %c1_i32 = arith.constant 1 : i32
    %0 = arith.addi %c1_i32, %arg1 : i32
    %c0_i32 = arith.constant 0 : i32
    return %arg0, %0 : i32, i32
  }
  func.func @transform_2(%arg0: i32, %arg1: i32, %arg2: i32) -> (i32, i32) {
    %c2_i32 = arith.constant 2 : i32
    %0 = arith.addi %c2_i32, %arg1 : i32
    %c0_i32 = arith.constant 0 : i32
    return %arg0, %0 : i32, i32
  }
  func.func @transform_3(%arg0: i32, %arg1: i32, %arg2: i32) -> (i32, i32, i32) {
    %c0_i32 = arith.constant 0 : i32
    %c0_i32_0 = arith.constant 0 : i32
    %c0_i32_1 = arith.constant 0 : i32
    return %arg0, %c0_i32, %c0_i32_0 : i32, i32, i32
  }
  func.func @transform_4(%arg0: i32, %arg1: i32, %arg2: i32) -> (i32, i32) {
    %c1_i32 = arith.constant 1 : i32
    %0 = arith.muli %arg0, %c1_i32 : i32
    %1 = arith.addi %0, %arg2 : i32
    %c0_i32 = arith.constant 0 : i32
    return %1, %arg1 : i32, i32
  }
}

module attributes {stable_mosaic.version = 11 : i64} {
  func.func @_mm_bias_add_ln_kernel(%arg0: i32, %arg1: memref<256x128xbf16, #tpu.memory_space<vmem>>, %arg2: memref<128x128xbf16, #tpu.memory_space<vmem>>, %arg3: memref<1x128xbf16, #tpu.memory_space<vmem>>, %arg4: memref<256x128xbf16, #tpu.memory_space<vmem>>, %arg5: memref<1x128xbf16, #tpu.memory_space<vmem>>, %arg6: memref<1x128xbf16, #tpu.memory_space<vmem>>, %arg7: memref<256x128xbf16, #tpu.memory_space<vmem>>) attributes {dimension_semantics = [#tpu.dimension_semantics<parallel>], iteration_bounds = array<i64: 1>, scalar_prefetch = 0 : i64, scratch_operands = 0 : i64, tpu.core_type = #tpu.core_type<tc>, window_params = [{transform_indices = @transform_0, window_bounds = array<i64: 256, 128>}, {pipeline_mode = #tpu.pipeline_mode<synchronous>, transform_indices = @transform_1, window_bounds = array<i64: 128, 128>}, {pipeline_mode = #tpu.pipeline_mode<synchronous>, transform_indices = @transform_2, window_bounds = array<i64: 1, 128>}, {transform_indices = @transform_3, window_bounds = array<i64: 256, 128>}, {pipeline_mode = #tpu.pipeline_mode<synchronous>, transform_indices = @transform_4, window_bounds = array<i64: 1, 128>}, {pipeline_mode = #tpu.pipeline_mode<synchronous>, transform_indices = @transform_5, window_bounds = array<i64: 1, 128>}, {transform_indices = @transform_6, window_bounds = array<i64: 256, 128>}]} {
    %c0 = arith.constant 0 : index
    %c0_0 = arith.constant 0 : index
    %0 = vector.load %arg1[%c0, %c0_0] : memref<256x128xbf16, #tpu.memory_space<vmem>>, vector<256x128xbf16>
    %c0_1 = arith.constant 0 : index
    %c0_2 = arith.constant 0 : index
    %1 = vector.load %arg2[%c0_1, %c0_2] : memref<128x128xbf16, #tpu.memory_space<vmem>>, vector<128x128xbf16>
    %cst = arith.constant dense<0.000000e+00> : vector<256x128xf32>
    %2 = tpu.matmul %0, %1, %cst {dimension_numbers = #tpu.dot_dimension_numbers<[1], [0], [0], [1], [0, 0, 1, 1], [], []>} : vector<256x128xbf16>, vector<128x128xbf16>, vector<256x128xf32> -> vector<256x128xf32>
    %c0_3 = arith.constant 0 : index
    %c0_4 = arith.constant 0 : index
    %3 = vector.load %arg3[%c0_3, %c0_4] : memref<1x128xbf16, #tpu.memory_space<vmem>>, vector<1x128xbf16>
    %4 = arith.extf %3 : vector<1x128xbf16> to vector<1x128xf32>
    %5 = vector.broadcast %4 : vector<1x128xf32> to vector<256x128xf32>
    %6 = arith.addf %2, %5 : vector<256x128xf32>
    %c0_5 = arith.constant 0 : index
    %c0_6 = arith.constant 0 : index
    %7 = vector.load %arg4[%c0_5, %c0_6] : memref<256x128xbf16, #tpu.memory_space<vmem>>, vector<256x128xbf16>
    %8 = arith.extf %7 : vector<256x128xbf16> to vector<256x128xf32>
    %9 = arith.addf %6, %8 : vector<256x128xf32>
    %cst_7 = arith.constant dense<0.000000e+00> : vector<256xf32>
    %10 = vector.multi_reduction <add>, %9, %cst_7 [1] : vector<256x128xf32> to vector<256xf32>
    %11 = vector.shape_cast %10 : vector<256xf32> to vector<256x1xf32>
    %cst_8 = arith.constant 1.280000e+02 : f32
    %12 = vector.broadcast %cst_8 : f32 to vector<256x1xf32>
    %13 = arith.divf %11, %12 : vector<256x1xf32>
    %14 = vector.broadcast %13 : vector<256x1xf32> to vector<256x128xf32>
    %15 = arith.subf %9, %14 : vector<256x128xf32>
    %16 = arith.mulf %15, %15 : vector<256x128xf32>
    %cst_9 = arith.constant dense<0.000000e+00> : vector<256xf32>
    %17 = vector.multi_reduction <add>, %16, %cst_9 [1] : vector<256x128xf32> to vector<256xf32>
    %18 = vector.shape_cast %17 : vector<256xf32> to vector<256x1xf32>
    %cst_10 = arith.constant 1.280000e+02 : f32
    %19 = vector.broadcast %cst_10 : f32 to vector<256x1xf32>
    %20 = arith.divf %18, %19 : vector<256x1xf32>
    %cst_11 = arith.constant 9.99999974E-6 : f32
    %21 = vector.broadcast %cst_11 : f32 to vector<256x1xf32>
    %22 = arith.addf %20, %21 : vector<256x1xf32>
    %23 = math.rsqrt %22 : vector<256x1xf32>
    %24 = vector.broadcast %23 : vector<256x1xf32> to vector<256x128xf32>
    %25 = arith.mulf %15, %24 : vector<256x128xf32>
    %c0_12 = arith.constant 0 : index
    %c0_13 = arith.constant 0 : index
    %26 = vector.load %arg5[%c0_12, %c0_13] : memref<1x128xbf16, #tpu.memory_space<vmem>>, vector<1x128xbf16>
    %27 = arith.extf %26 : vector<1x128xbf16> to vector<1x128xf32>
    %28 = vector.broadcast %27 : vector<1x128xf32> to vector<256x128xf32>
    %29 = arith.mulf %25, %28 : vector<256x128xf32>
    %c0_14 = arith.constant 0 : index
    %c0_15 = arith.constant 0 : index
    %30 = vector.load %arg6[%c0_14, %c0_15] : memref<1x128xbf16, #tpu.memory_space<vmem>>, vector<1x128xbf16>
    %31 = arith.extf %30 : vector<1x128xbf16> to vector<1x128xf32>
    %32 = vector.broadcast %31 : vector<1x128xf32> to vector<256x128xf32>
    %33 = arith.addf %29, %32 : vector<256x128xf32>
    %34 = arith.truncf %33 : vector<256x128xf32> to vector<256x128xbf16>
    %c0_16 = arith.constant 0 : index
    %c0_17 = arith.constant 0 : index
    %35 = vector.load %arg7[%c0_16, %c0_17] : memref<256x128xbf16, #tpu.memory_space<vmem>>, vector<256x128xbf16>
    tpu.vector_store %arg7[%c0_16, %c0_17], %34 {strides = array<i32>} : memref<256x128xbf16, #tpu.memory_space<vmem>>, vector<256x128xbf16>,
    return
  }
  func.func @transform_0(%arg0: i32) -> (i32, i32) {
    %c0_i32 = arith.constant 0 : i32
    %c0_i32_0 = arith.constant 0 : i32
    return %arg0, %c0_i32 : i32, i32
  }
  func.func @transform_1(%arg0: i32) -> (i32, i32) {
    %c0_i32 = arith.constant 0 : i32
    %c0_i32_0 = arith.constant 0 : i32
    %c0_i32_1 = arith.constant 0 : i32
    return %c0_i32, %c0_i32_0 : i32, i32
  }
  func.func @transform_2(%arg0: i32) -> (i32, i32) {
    %c0_i32 = arith.constant 0 : i32
    %c0_i32_0 = arith.constant 0 : i32
    %c0_i32_1 = arith.constant 0 : i32
    return %c0_i32, %c0_i32_0 : i32, i32
  }
  func.func @transform_3(%arg0: i32) -> (i32, i32) {
    %c0_i32 = arith.constant 0 : i32
    %c0_i32_0 = arith.constant 0 : i32
    return %arg0, %c0_i32 : i32, i32
  }
  func.func @transform_4(%arg0: i32) -> (i32, i32) {
    %c0_i32 = arith.constant 0 : i32
    %c0_i32_0 = arith.constant 0 : i32
    %c0_i32_1 = arith.constant 0 : i32
    return %c0_i32, %c0_i32_0 : i32, i32
  }
  func.func @transform_5(%arg0: i32) -> (i32, i32) {
    %c0_i32 = arith.constant 0 : i32
    %c0_i32_0 = arith.constant 0 : i32
    %c0_i32_1 = arith.constant 0 : i32
    return %c0_i32, %c0_i32_0 : i32, i32
  }
  func.func @transform_6(%arg0: i32) -> (i32, i32) {
    %c0_i32 = arith.constant 0 : i32
    %c0_i32_0 = arith.constant 0 : i32
    return %arg0, %c0_i32 : i32, i32
  }
}

module attributes {stable_mosaic.version = 11 : i64} {
  func.func @_mm_bias_kernel(%arg0: i32, %arg1: i32, %arg2: memref<256x128xbf16, #tpu.memory_space<vmem>>, %arg3: memref<128x256xbf16, #tpu.memory_space<vmem>>, %arg4: memref<1x256xbf16, #tpu.memory_space<vmem>>, %arg5: memref<256x256xbf16, #tpu.memory_space<vmem>>) attributes {dimension_semantics = [#tpu.dimension_semantics<parallel>, #tpu.dimension_semantics<parallel>], iteration_bounds = array<i64: 1, 1>, scalar_prefetch = 0 : i64, scratch_operands = 0 : i64, tpu.core_type = #tpu.core_type<tc>, window_params = [{transform_indices = @transform_0, window_bounds = array<i64: 256, 128>}, {transform_indices = @transform_1, window_bounds = array<i64: 128, 256>}, {transform_indices = @transform_2, window_bounds = array<i64: 1, 256>}, {transform_indices = @transform_3, window_bounds = array<i64: 256, 256>}]} {
    %c0 = arith.constant 0 : index
    %c0_0 = arith.constant 0 : index
    %0 = vector.load %arg2[%c0, %c0_0] : memref<256x128xbf16, #tpu.memory_space<vmem>>, vector<256x128xbf16>
    %c0_1 = arith.constant 0 : index
    %c0_2 = arith.constant 0 : index
    %1 = vector.load %arg3[%c0_1, %c0_2] : memref<128x256xbf16, #tpu.memory_space<vmem>>, vector<128x256xbf16>
    %cst = arith.constant dense<0.000000e+00> : vector<256x256xf32>
    %2 = tpu.matmul %0, %1, %cst {dimension_numbers = #tpu.dot_dimension_numbers<[1], [0], [0], [1], [0, 0, 1, 1], [], []>} : vector<256x128xbf16>, vector<128x256xbf16>, vector<256x256xf32> -> vector<256x256xf32>
    %c0_3 = arith.constant 0 : index
    %c0_4 = arith.constant 0 : index
    %3 = vector.load %arg4[%c0_3, %c0_4] : memref<1x256xbf16, #tpu.memory_space<vmem>>, vector<1x256xbf16>
    %4 = arith.extf %3 : vector<1x256xbf16> to vector<1x256xf32>
    %5 = vector.broadcast %4 : vector<1x256xf32> to vector<256x256xf32>
    %6 = arith.addf %2, %5 : vector<256x256xf32>
    %cst_5 = arith.constant 4.471500e-02 : f32
    %7 = vector.broadcast %cst_5 : f32 to vector<256x256xf32>
    %8 = arith.mulf %7, %6 : vector<256x256xf32>
    %9 = arith.mulf %8, %6 : vector<256x256xf32>
    %10 = arith.mulf %9, %6 : vector<256x256xf32>
    %11 = arith.addf %6, %10 : vector<256x256xf32>
    %cst_6 = arith.constant 0.797884583 : f32
    %12 = vector.broadcast %cst_6 : f32 to vector<256x256xf32>
    %13 = arith.mulf %12, %11 : vector<256x256xf32>
    %cst_7 = arith.constant 5.000000e-01 : f32
    %14 = vector.broadcast %cst_7 : f32 to vector<256x256xf32>
    %15 = arith.mulf %14, %6 : vector<256x256xf32>
    %16 = math.tanh %13 : vector<256x256xf32>
    %cst_8 = arith.constant 1.000000e+00 : f32
    %17 = vector.broadcast %cst_8 : f32 to vector<256x256xf32>
    %18 = arith.addf %17, %16 : vector<256x256xf32>
    %19 = arith.mulf %15, %18 : vector<256x256xf32>
    %20 = arith.truncf %19 : vector<256x256xf32> to vector<256x256xbf16>
    %c0_9 = arith.constant 0 : index
    %c0_10 = arith.constant 0 : index
    %21 = vector.load %arg5[%c0_9, %c0_10] : memref<256x256xbf16, #tpu.memory_space<vmem>>, vector<256x256xbf16>
    tpu.vector_store %arg5[%c0_9, %c0_10], %20 {strides = array<i32>} : memref<256x256xbf16, #tpu.memory_space<vmem>>, vector<256x256xbf16>,
    return
  }
  func.func @transform_0(%arg0: i32, %arg1: i32) -> (i32, i32) {
    %c0_i32 = arith.constant 0 : i32
    %c0_i32_0 = arith.constant 0 : i32
    return %arg0, %c0_i32 : i32, i32
  }
  func.func @transform_1(%arg0: i32, %arg1: i32) -> (i32, i32) {
    %c0_i32 = arith.constant 0 : i32
    %c0_i32_0 = arith.constant 0 : i32
    return %c0_i32, %arg1 : i32, i32
  }
  func.func @transform_2(%arg0: i32, %arg1: i32) -> (i32, i32) {
    %c0_i32 = arith.constant 0 : i32
    %c0_i32_0 = arith.constant 0 : i32
    return %c0_i32, %arg1 : i32, i32
  }
  func.func @transform_3(%arg0: i32, %arg1: i32) -> (i32, i32) {
    %c0_i32 = arith.constant 0 : i32
    return %arg0, %arg1 : i32, i32
  }
}

module attributes {stable_mosaic.version = 11 : i64} {
  func.func @_mm_bias_add_ln_kernel(%arg0: i32, %arg1: memref<256x256xbf16, #tpu.memory_space<vmem>>, %arg2: memref<256x128xbf16, #tpu.memory_space<vmem>>, %arg3: memref<1x128xbf16, #tpu.memory_space<vmem>>, %arg4: memref<256x128xbf16, #tpu.memory_space<vmem>>, %arg5: memref<1x128xbf16, #tpu.memory_space<vmem>>, %arg6: memref<1x128xbf16, #tpu.memory_space<vmem>>, %arg7: memref<256x128xbf16, #tpu.memory_space<vmem>>) attributes {dimension_semantics = [#tpu.dimension_semantics<parallel>], iteration_bounds = array<i64: 1>, scalar_prefetch = 0 : i64, scratch_operands = 0 : i64, tpu.core_type = #tpu.core_type<tc>, window_params = [{transform_indices = @transform_0, window_bounds = array<i64: 256, 256>}, {pipeline_mode = #tpu.pipeline_mode<synchronous>, transform_indices = @transform_1, window_bounds = array<i64: 256, 128>}, {pipeline_mode = #tpu.pipeline_mode<synchronous>, transform_indices = @transform_2, window_bounds = array<i64: 1, 128>}, {transform_indices = @transform_3, window_bounds = array<i64: 256, 128>}, {pipeline_mode = #tpu.pipeline_mode<synchronous>, transform_indices = @transform_4, window_bounds = array<i64: 1, 128>}, {pipeline_mode = #tpu.pipeline_mode<synchronous>, transform_indices = @transform_5, window_bounds = array<i64: 1, 128>}, {transform_indices = @transform_6, window_bounds = array<i64: 256, 128>}]} {
    %c0 = arith.constant 0 : index
    %c0_0 = arith.constant 0 : index
    %0 = vector.load %arg1[%c0, %c0_0] : memref<256x256xbf16, #tpu.memory_space<vmem>>, vector<256x256xbf16>
    %c0_1 = arith.constant 0 : index
    %c0_2 = arith.constant 0 : index
    %1 = vector.load %arg2[%c0_1, %c0_2] : memref<256x128xbf16, #tpu.memory_space<vmem>>, vector<256x128xbf16>
    %cst = arith.constant dense<0.000000e+00> : vector<256x128xf32>
    %2 = tpu.matmul %0, %1, %cst {dimension_numbers = #tpu.dot_dimension_numbers<[1], [0], [0], [1], [0, 0, 1, 1], [], []>} : vector<256x256xbf16>, vector<256x128xbf16>, vector<256x128xf32> -> vector<256x128xf32>
    %c0_3 = arith.constant 0 : index
    %c0_4 = arith.constant 0 : index
    %3 = vector.load %arg3[%c0_3, %c0_4] : memref<1x128xbf16, #tpu.memory_space<vmem>>, vector<1x128xbf16>
    %4 = arith.extf %3 : vector<1x128xbf16> to vector<1x128xf32>
    %5 = vector.broadcast %4 : vector<1x128xf32> to vector<256x128xf32>
    %6 = arith.addf %2, %5 : vector<256x128xf32>
    %c0_5 = arith.constant 0 : index
    %c0_6 = arith.constant 0 : index
    %7 = vector.load %arg4[%c0_5, %c0_6] : memref<256x128xbf16, #tpu.memory_space<vmem>>, vector<256x128xbf16>
    %8 = arith.extf %7 : vector<256x128xbf16> to vector<256x128xf32>
    %9 = arith.addf %6, %8 : vector<256x128xf32>
    %cst_7 = arith.constant dense<0.000000e+00> : vector<256xf32>
    %10 = vector.multi_reduction <add>, %9, %cst_7 [1] : vector<256x128xf32> to vector<256xf32>
    %11 = vector.shape_cast %10 : vector<256xf32> to vector<256x1xf32>
    %cst_8 = arith.constant 1.280000e+02 : f32
    %12 = vector.broadcast %cst_8 : f32 to vector<256x1xf32>
    %13 = arith.divf %11, %12 : vector<256x1xf32>
    %14 = vector.broadcast %13 : vector<256x1xf32> to vector<256x128xf32>
    %15 = arith.subf %9, %14 : vector<256x128xf32>
    %16 = arith.mulf %15, %15 : vector<256x128xf32>
    %cst_9 = arith.constant dense<0.000000e+00> : vector<256xf32>
    %17 = vector.multi_reduction <add>, %16, %cst_9 [1] : vector<256x128xf32> to vector<256xf32>
    %18 = vector.shape_cast %17 : vector<256xf32> to vector<256x1xf32>
    %cst_10 = arith.constant 1.280000e+02 : f32
    %19 = vector.broadcast %cst_10 : f32 to vector<256x1xf32>
    %20 = arith.divf %18, %19 : vector<256x1xf32>
    %cst_11 = arith.constant 9.99999974E-6 : f32
    %21 = vector.broadcast %cst_11 : f32 to vector<256x1xf32>
    %22 = arith.addf %20, %21 : vector<256x1xf32>
    %23 = math.rsqrt %22 : vector<256x1xf32>
    %24 = vector.broadcast %23 : vector<256x1xf32> to vector<256x128xf32>
    %25 = arith.mulf %15, %24 : vector<256x128xf32>
    %c0_12 = arith.constant 0 : index
    %c0_13 = arith.constant 0 : index
    %26 = vector.load %arg5[%c0_12, %c0_13] : memref<1x128xbf16, #tpu.memory_space<vmem>>, vector<1x128xbf16>
    %27 = arith.extf %26 : vector<1x128xbf16> to vector<1x128xf32>
    %28 = vector.broadcast %27 : vector<1x128xf32> to vector<256x128xf32>
    %29 = arith.mulf %25, %28 : vector<256x128xf32>
    %c0_14 = arith.constant 0 : index
    %c0_15 = arith.constant 0 : index
    %30 = vector.load %arg6[%c0_14, %c0_15] : memref<1x128xbf16, #tpu.memory_space<vmem>>, vector<1x128xbf16>
    %31 = arith.extf %30 : vector<1x128xbf16> to vector<1x128xf32>
    %32 = vector.broadcast %31 : vector<1x128xf32> to vector<256x128xf32>
    %33 = arith.addf %29, %32 : vector<256x128xf32>
    %34 = arith.truncf %33 : vector<256x128xf32> to vector<256x128xbf16>
    %c0_16 = arith.constant 0 : index
    %c0_17 = arith.constant 0 : index
    %35 = vector.load %arg7[%c0_16, %c0_17] : memref<256x128xbf16, #tpu.memory_space<vmem>>, vector<256x128xbf16>
    tpu.vector_store %arg7[%c0_16, %c0_17], %34 {strides = array<i32>} : memref<256x128xbf16, #tpu.memory_space<vmem>>, vector<256x128xbf16>,
    return
  }
  func.func @transform_0(%arg0: i32) -> (i32, i32) {
    %c0_i32 = arith.constant 0 : i32
    %c0_i32_0 = arith.constant 0 : i32
    return %arg0, %c0_i32 : i32, i32
  }
  func.func @transform_1(%arg0: i32) -> (i32, i32) {
    %c0_i32 = arith.constant 0 : i32
    %c0_i32_0 = arith.constant 0 : i32
    %c0_i32_1 = arith.constant 0 : i32
    return %c0_i32, %c0_i32_0 : i32, i32
  }
  func.func @transform_2(%arg0: i32) -> (i32, i32) {
    %c0_i32 = arith.constant 0 : i32
    %c0_i32_0 = arith.constant 0 : i32
    %c0_i32_1 = arith.constant 0 : i32
    return %c0_i32, %c0_i32_0 : i32, i32
  }
  func.func @transform_3(%arg0: i32) -> (i32, i32) {
    %c0_i32 = arith.constant 0 : i32
    %c0_i32_0 = arith.constant 0 : i32
    return %arg0, %c0_i32 : i32, i32
  }
  func.func @transform_4(%arg0: i32) -> (i32, i32) {
    %c0_i32 = arith.constant 0 : i32
    %c0_i32_0 = arith.constant 0 : i32
    %c0_i32_1 = arith.constant 0 : i32
    return %c0_i32, %c0_i32_0 : i32, i32
  }
  func.func @transform_5(%arg0: i32) -> (i32, i32) {
    %c0_i32 = arith.constant 0 : i32
    %c0_i32_0 = arith.constant 0 : i32
    %c0_i32_1 = arith.constant 0 : i32
    return %c0_i32, %c0_i32_0 : i32, i32
  }
  func.func @transform_6(%arg0: i32) -> (i32, i32) {
    %c0_i32 = arith.constant 0 : i32
    %c0_i32_0 = arith.constant 0 : i32
    return %arg0, %c0_i32 : i32, i32
  }
}

</mosaic_0001>

<llo_original>
// kernel: transformer_block.5
$region0: #{transformer_block.5}
  #allocation0 [shape = 'u32[]', space=smem, size = 0x4, offset = 0x4, fixed_abs, tag = 'smem constant byte address 0x4 - core index']
  #allocation1 [shape = 'u32[144,128]{1,0:T(1,128)}', space=vmem, size = 0x12000, scoped, tag = 'internal scratch']
  %s0 = inlined_call_operand.hbm [shape: bf16[256,128], index: 0, kind: input, shape index: {}]
  %s1 = inlined_call_operand.hbm [shape: bf16[128,384], index: 1, kind: input, shape index: {}]
  %s2 = inlined_call_operand.vmem [shape: bf16[1,384], index: 2, kind: input, shape index: {}]
  %s3 = inlined_call_operand.vmem [shape: bf16[256,384], index: 3, kind: output, shape index: {}]
  %s4 = sld [smem:[#allocation0]]
  $region30: #{transformer_block.5} parent=0
    _
  %s6 = ssub.s32 1, %s4
  %s7 = scalar_select 0, %s6, %s4
  $region1: #{transformer_block.5} parent=0
    #allocation2 [shape = 'u8[65536]{0}', space=vmem, size = 0x10000, scoped, tag = 'input window, operand 0, single buffered']
    #allocation3 [shape = 's32[1]{0}', space=sflag, size = 0x4, scoped, tag = 'scoped memory for transformer_block.5']
    #allocation4 [shape = 'u8[98304]{0}', space=vmem, size = 0x18000, scoped, tag = 'input window, operand 1, single buffered']
    #allocation5 [shape = 's32[1]{0}', space=sflag, size = 0x4, scoped, tag = 'scoped memory for transformer_block.5']
    %8 = vsyncpa [#allocation3], 0
    %9 = vsyncpa [#allocation5], 0
    // Predicated region
    $region2: #{transformer_block.5} parent=1 // pred_check
      _
    $region3: #{transformer_block.5} parent=1 // pred_check_branch
      %11 = sbr.rel (0) target = $region5
    $region4: #{transformer_block.5} parent=1 // pred_region
      %s13 = ssub.s32 2048, 2048
      %14 = vsyncadd [#allocation3], %s13
      %s15 = sshll.u32 [#allocation2], 4
      %s16 = int_to_ptr.vmem [resolvable:$true] %s15
      %21 = dma.hbm_to_vmem [thread:$0]  %s0, 2048, %s16, [#allocation3], 64, 64, 4
    $region5: #{transformer_block.5} parent=1 // pred_fallthru
      _
    // Predicated region
    $region6: #{transformer_block.5} parent=1 // pred_check
      _
    $region7: #{transformer_block.5} parent=1 // pred_check_branch
      %23 = sbr.rel (0) target = $region9
    $region8: #{transformer_block.5} parent=1 // pred_region
      %s25 = ssub.s32 3072, 3072
      %26 = vsyncadd [#allocation5], %s25
      %s27 = sshll.u32 [#allocation4], 4
      %s28 = int_to_ptr.vmem [resolvable:$true] %s27
      %33 = dma.hbm_to_vmem [thread:$0]  %s1, 3072, %s28, [#allocation5], 192, 192, 12
    $region9: #{transformer_block.5} parent=1 // pred_fallthru
      _
    // Predicated region
    $region10: #{transformer_block.5} parent=1 // pred_check
      _
    $region11: #{transformer_block.5} parent=1 // pred_check_branch
      %35 = sbr.rel (0) target = $region13
    $region12: #{transformer_block.5} parent=1 // pred_region
      _
    $region13: #{transformer_block.5} parent=1 // pred_fallthru
      _
    // Predicated region
    $region14: #{transformer_block.5} parent=1 // pred_check
      _
    $region15: #{transformer_block.5} parent=1 // pred_check_branch
      %37 = sbr.rel (0) target = $region17
    $region16: #{transformer_block.5} parent=1 // pred_region
      %38 = dma.done [#allocation3], 2048
    $region17: #{transformer_block.5} parent=1 // pred_fallthru
      _
    // Predicated region
    $region18: #{transformer_block.5} parent=1 // pred_check
      _
    $region19: #{transformer_block.5} parent=1 // pred_check_branch
      %40 = sbr.rel (0) target = $region21
    $region20: #{transformer_block.5} parent=1 // pred_region
      %41 = dma.done [#allocation5], 3072
    $region21: #{transformer_block.5} parent=1 // pred_fallthru
      _
    %v43 = vld [vmem:[#allocation2] sm:$0xf]
    %v44 = vld [vmem:[#allocation2 + $0x4] sm:$0xf]
    %v45 = vld [vmem:[#allocation2 + $0x8] sm:$0xf]
    %v46 = vld [vmem:[#allocation2 + $0xc] sm:$0xf]
    %v47 = vld [vmem:[#allocation2 + $0x10] sm:$0xf]
    %v48 = vld [vmem:[#allocation2 + $0x14] sm:$0xf]
    %v49 = vld [vmem:[#allocation2 + $0x18] sm:$0xf]
    %v50 = vld [vmem:[#allocation2 + $0x1c] sm:$0xf]
    %v51 = vld [vmem:[#allocation2 + $0x20] sm:$0xf]
    %v52 = vld [vmem:[#allocation2 + $0x24] sm:$0xf]
    %v53 = vld [vmem:[#allocation2 + $0x28] sm:$0xf]
    %v54 = vld [vmem:[#allocation2 + $0x2c] sm:$0xf]
    %v55 = vld [vmem:[#allocation2 + $0x30] sm:$0xf]
    %v56 = vld [vmem:[#allocation2 + $0x34] sm:$0xf]
    %v57 = vld [vmem:[#allocation2 + $0x38] sm:$0xf]
    %v58 = vld [vmem:[#allocation2 + $0x3c] sm:$0xf]
    %v59 = vld [vmem:[#allocation2 + $0x40] sm:$0xf]
    %v60 = vld [vmem:[#allocation2 + $0x44] sm:$0xf]
    %v61 = vld [vmem:[#allocation2 + $0x48] sm:$0xf]
    %v62 = vld [vmem:[#allocation2 + $0x4c] sm:$0xf]
    %v63 = vld [vmem:[#allocation2 + $0x50] sm:$0xf]
    %v64 = vld [vmem:[#allocation2 + $0x54] sm:$0xf]
    %v65 = vld [vmem:[#allocation2 + $0x58] sm:$0xf]
    %v66 = vld [vmem:[#allocation2 + $0x5c] sm:$0xf]
    %v67 = vld [vmem:[#allocation2 + $0x60] sm:$0xf]
    %v68 = vld [vmem:[#allocation2 + $0x64] sm:$0xf]
    %v69 = vld [vmem:[#allocation2 + $0x68] sm:$0xf]
    %v70 = vld [vmem:[#allocation2 + $0x6c] sm:$0xf]
    %v71 = vld [vmem:[#allocation2 + $0x70] sm:$0xf]
    %v72 = vld [vmem:[#allocation2 + $0x74] sm:$0xf]
    %v73 = vld [vmem:[#allocation2 + $0x78] sm:$0xf]
    %v74 = vld [vmem:[#allocation2 + $0x7c] sm:$0xf]
    %v75 = vld [vmem:[#allocation4] sm:$0xff]
    %v76 = vld [vmem:[#allocation4 + $0x8] sm:$0xf]
    %v77 = vld [vmem:[#allocation4 + $0xc] sm:$0xff]
    %v78 = vld [vmem:[#allocation4 + $0x14] sm:$0xf]
    %v79 = vld [vmem:[#allocation4 + $0x18] sm:$0xff]
    %v80 = vld [vmem:[#allocation4 + $0x20] sm:$0xf]
    %v81 = vld [vmem:[#allocation4 + $0x24] sm:$0xff]
    %v82 = vld [vmem:[#allocation4 + $0x2c] sm:$0xf]
    %v83 = vld [vmem:[#allocation4 + $0x30] sm:$0xff]
    %v84 = vld [vmem:[#allocation4 + $0x38] sm:$0xf]
    %v85 = vld [vmem:[#allocation4 + $0x3c] sm:$0xff]
    %v86 = vld [vmem:[#allocation4 + $0x44] sm:$0xf]
    %v87 = vld [vmem:[#allocation4 + $0x48] sm:$0xff]
    %v88 = vld [vmem:[#allocation4 + $0x50] sm:$0xf]
    %v89 = vld [vmem:[#allocation4 + $0x54] sm:$0xff]
    %v90 = vld [vmem:[#allocation4 + $0x5c] sm:$0xf]
    %v91 = vld [vmem:[#allocation4 + $0x60] sm:$0xff]
    %v92 = vld [vmem:[#allocation4 + $0x68] sm:$0xf]
    %v93 = vld [vmem:[#allocation4 + $0x6c] sm:$0xff]
    %v94 = vld [vmem:[#allocation4 + $0x74] sm:$0xf]
    %v95 = vld [vmem:[#allocation4 + $0x78] sm:$0xff]
    %v96 = vld [vmem:[#allocation4 + $0x80] sm:$0xf]
    %v97 = vld [vmem:[#allocation4 + $0x84] sm:$0xff]
    %v98 = vld [vmem:[#allocation4 + $0x8c] sm:$0xf]
    %v99 = vld [vmem:[#allocation4 + $0x90] sm:$0xff]
    %v100 = vld [vmem:[#allocation4 + $0x98] sm:$0xf]
    %v101 = vld [vmem:[#allocation4 + $0x9c] sm:$0xff]
    %v102 = vld [vmem:[#allocation4 + $0xa4] sm:$0xf]
    %v103 = vld [vmem:[#allocation4 + $0xa8] sm:$0xff]
    %v104 = vld [vmem:[#allocation4 + $0xb0] sm:$0xf]
    %v105 = vld [vmem:[#allocation4 + $0xb4] sm:$0xff]
    %v106 = vld [vmem:[#allocation4 + $0xbc] sm:$0xf]
    %v107 = vld [vmem:[%s2] sm:$0x7]
    %v108 = vunpack.c.l.bf16 %v107
    %v110 = vlaneseq
    %v111 = vshrl.u32 %v110, 7
    %v112 = vsub.s32 0, %v111
    %v113 = vrot.slane %v108, %v112
    %v114 = vlaneseq
    %v115 = vshrl.u32 %v114, 7
    %v116 = vsub.s32 2, %v115
    %v117 = vrot.slane %v108, %v116
    %v118 = vlaneseq
    %v119 = vshrl.u32 %v118, 7
    %v120 = vsub.s32 4, %v119
    %v121 = vrot.slane %v108, %v120
    %v125 = vlaneseq
    %v126 = vshrl.u32 %v125, 7
    %v127 = vsub.s32 0, %v126
    %v128 = vrot.slane %v113, %v127
    %v129 = vlaneseq
    %v130 = vshrl.u32 %v129, 7
    %v131 = vsub.s32 0, %v130
    %v132 = vrot.slane %v117, %v131
    %v133 = vlaneseq
    %v134 = vshrl.u32 %v133, 7
    %v135 = vsub.s32 0, %v134
    %v136 = vrot.slane %v121, %v135
    %v169 = vunpack.c.l.b16 %v43
    %v170 = vunpack.c.l.b16 %v44
    %v171 = vunpack.c.l.b16 %v45
    %v172 = vunpack.c.l.b16 %v46
    %v173 = vunpack.c.l.b16 %v47
    %v174 = vunpack.c.l.b16 %v48
    %v175 = vunpack.c.l.b16 %v49
    %v176 = vunpack.c.l.b16 %v50
    %v177 = vunpack.c.l.b16 %v51
    %v178 = vunpack.c.l.b16 %v52
    %v179 = vunpack.c.l.b16 %v53
    %v180 = vunpack.c.l.b16 %v54
    %v181 = vunpack.c.l.b16 %v55
    %v182 = vunpack.c.l.b16 %v56
    %v183 = vunpack.c.l.b16 %v57
    %v184 = vunpack.c.l.b16 %v58
    %v185 = vunpack.c.l.b16 %v59
    %v186 = vunpack.c.l.b16 %v60
    %v187 = vunpack.c.l.b16 %v61
    %v188 = vunpack.c.l.b16 %v62
    %v189 = vunpack.c.l.b16 %v63
    %v190 = vunpack.c.l.b16 %v64
    %v191 = vunpack.c.l.b16 %v65
    %v192 = vunpack.c.l.b16 %v66
    %v193 = vunpack.c.l.b16 %v67
    %v194 = vunpack.c.l.b16 %v68
    %v195 = vunpack.c.l.b16 %v69
    %v196 = vunpack.c.l.b16 %v70
    %v197 = vunpack.c.l.b16 %v71
    %v198 = vunpack.c.l.b16 %v72
    %v199 = vunpack.c.l.b16 %v73
    %v200 = vunpack.c.l.b16 %v74
    %v201 = vpack.c.b16 %v170, %v169
    %v202 = vpack.c.b16 %v172, %v171
    %v203 = vpack.c.b16 %v174, %v173
    %v204 = vpack.c.b16 %v176, %v175
    %v205 = vpack.c.b16 %v178, %v177
    %v206 = vpack.c.b16 %v180, %v179
    %v207 = vpack.c.b16 %v182, %v181
    %v208 = vpack.c.b16 %v184, %v183
    %v209 = vpack.c.b16 %v186, %v185
    %v210 = vpack.c.b16 %v188, %v187
    %v211 = vpack.c.b16 %v190, %v189
    %v212 = vpack.c.b16 %v192, %v191
    %v213 = vpack.c.b16 %v194, %v193
    %v214 = vpack.c.b16 %v196, %v195
    %v215 = vpack.c.b16 %v198, %v197
    %v216 = vpack.c.b16 %v200, %v199
    %v265 = vunpack.c.l.b16 %v75
    %v266 = vunpack.c.h.b16 %v75
    %v267 = vunpack.c.l.b16 %v76
    %v268 = vunpack.c.l.b16 %v77
    %v269 = vunpack.c.h.b16 %v77
    %v270 = vunpack.c.l.b16 %v78
    %v271 = vunpack.c.l.b16 %v79
    %v272 = vunpack.c.h.b16 %v79
    %v273 = vunpack.c.l.b16 %v80
    %v274 = vunpack.c.l.b16 %v81
    %v275 = vunpack.c.h.b16 %v81
    %v276 = vunpack.c.l.b16 %v82
    %v277 = vunpack.c.l.b16 %v83
    %v278 = vunpack.c.h.b16 %v83
    %v279 = vunpack.c.l.b16 %v84
    %v280 = vunpack.c.l.b16 %v85
    %v281 = vunpack.c.h.b16 %v85
    %v282 = vunpack.c.l.b16 %v86
    %v283 = vunpack.c.l.b16 %v87
    %v284 = vunpack.c.h.b16 %v87
    %v285 = vunpack.c.l.b16 %v88
    %v286 = vunpack.c.l.b16 %v89
    %v287 = vunpack.c.h.b16 %v89
    %v288 = vunpack.c.l.b16 %v90
    %v289 = vunpack.c.l.b16 %v91
    %v290 = vunpack.c.h.b16 %v91
    %v291 = vunpack.c.l.b16 %v92
    %v292 = vunpack.c.l.b16 %v93
    %v293 = vunpack.c.h.b16 %v93
    %v294 = vunpack.c.l.b16 %v94
    %v295 = vunpack.c.l.b16 %v95
    %v296 = vunpack.c.h.b16 %v95
    %v297 = vunpack.c.l.b16 %v96
    %v298 = vunpack.c.l.b16 %v97
    %v299 = vunpack.c.h.b16 %v97
    %v300 = vunpack.c.l.b16 %v98
    %v301 = vunpack.c.l.b16 %v99
    %v302 = vunpack.c.h.b16 %v99
    %v303 = vunpack.c.l.b16 %v100
    %v304 = vunpack.c.l.b16 %v101
    %v305 = vunpack.c.h.b16 %v101
    %v306 = vunpack.c.l.b16 %v102
    %v307 = vunpack.c.l.b16 %v103
    %v308 = vunpack.c.h.b16 %v103
    %v309 = vunpack.c.l.b16 %v104
    %v310 = vunpack.c.l.b16 %v105
    %v311 = vunpack.c.h.b16 %v105
    %v312 = vunpack.c.l.b16 %v106
    %v313 = vpack.c.b16 %v268, %v265
    %v314 = vpack.c.b16 %v269, %v266
    %v315 = vpack.c.b16 %v270, %v267
    %v316 = vpack.c.b16 %v274, %v271
    %v317 = vpack.c.b16 %v275, %v272
    %v318 = vpack.c.b16 %v276, %v273
    %v319 = vpack.c.b16 %v280, %v277
    %v320 = vpack.c.b16 %v281, %v278
    %v321 = vpack.c.b16 %v282, %v279
    %v322 = vpack.c.b16 %v286, %v283
    %v323 = vpack.c.b16 %v287, %v284
    %v324 = vpack.c.b16 %v288, %v285
    %v325 = vpack.c.b16 %v292, %v289
    %v326 = vpack.c.b16 %v293, %v290
    %v327 = vpack.c.b16 %v294, %v291
    %v328 = vpack.c.b16 %v298, %v295
    %v329 = vpack.c.b16 %v299, %v296
    %v330 = vpack.c.b16 %v300, %v297
    %v331 = vpack.c.b16 %v304, %v301
    %v332 = vpack.c.b16 %v305, %v302
    %v333 = vpack.c.b16 %v306, %v303
    %v334 = vpack.c.b16 %v310, %v307
    %v335 = vpack.c.b16 %v311, %v308
    %v336 = vpack.c.b16 %v312, %v309
    %361 = vmatprep.subr.bf16.mxu0 %v314
    %362 = vmatpush1.bf16.msra.mxu0 %v313
    %363 = vmatprep.subr.bf16.mxu0 %v317
    %364 = vmatpush1.bf16.msra.mxu0 %v316
    %365 = vmatprep.subr.bf16.mxu0 %v320
    %366 = vmatpush1.bf16.msra.mxu0 %v319
    %367 = vmatprep.subr.bf16.mxu0 %v323
    %368 = vmatpush1.bf16.msra.mxu0 %v322
    %369 = vmatprep.subr.bf16.mxu0 %v326
    %370 = vmatpush1.bf16.msra.mxu0 %v325
    %371 = vmatprep.subr.bf16.mxu0 %v329
    %372 = vmatpush1.bf16.msra.mxu0 %v328
    %373 = vmatprep.subr.bf16.mxu0 %v332
    %374 = vmatpush1.bf16.msra.mxu0 %v331
    %375 = vmatprep.subr.bf16.mxu0 %v335
    %376 = vmatpush1.bf16.msra.mxu0 %v334
    %377 = vmatprep.subr.bf16.mxu0 0
    %378 = vmatpush1.bf16.msra.mxu0 0
    %379 = vmatprep.subr.bf16.mxu0 0
    %380 = vmatpush1.bf16.msra.mxu0 0
    %381 = vmatprep.subr.bf16.mxu0 0
    %382 = vmatpush1.bf16.msra.mxu0 0
    %383 = vmatprep.subr.bf16.mxu0 0
    %384 = vmatpush1.bf16.msra.mxu0 0
    %385 = vmatprep.subr.bf16.mxu0 0
    %386 = vmatpush1.bf16.msra.mxu0 0
    %387 = vmatprep.subr.bf16.mxu0 0
    %388 = vmatpush1.bf16.msra.mxu0 0
    %389 = vmatprep.subr.bf16.mxu0 0
    %390 = vmatpush1.bf16.msra.mxu0 0
    %391 = vmatprep.subr.bf16.mxu0 0
    %392 = vmatpush1.bf16.msra.mxu0 0
    %393 = vmatprep.mubr.bf16.mxu0 0
    %394 = vmatmul.mubr.bf16.gmra.mrb[0].mxu0 %v201
    %v395 = vpop.f32.mrb[0].mxu0
    %v396 = vadd.f32 %v128, %v395
    %v397 = vpop.f32.mrb[0].mxu0
    %v398 = vadd.f32 %v132, %v397
    %v399 = vpop.f32.mrb[0].mxu0
    %v400 = vadd.f32 %v128, %v399
    %v401 = vpop.f32.mrb[0].mxu0
    %v402 = vadd.f32 %v132, %v401
    %403 = vmatprep.mubr.bf16.mxu0 0
    %404 = vmatmul.mubr.bf16.gmra.mrb[0].mxu0 %v202
    %v405 = vpop.f32.mrb[0].mxu0
    %v406 = vadd.f32 %v128, %v405
    %v407 = vpop.f32.mrb[0].mxu0
    %v408 = vadd.f32 %v132, %v407
    %v409 = vpop.f32.mrb[0].mxu0
    %v410 = vadd.f32 %v128, %v409
    %v411 = vpop.f32.mrb[0].mxu0
    %v412 = vadd.f32 %v132, %v411
    %413 = vmatprep.mubr.bf16.mxu0 0
    %414 = vmatmul.mubr.bf16.gmra.mrb[0].mxu0 %v203
    %v415 = vpop.f32.mrb[0].mxu0
    %v416 = vadd.f32 %v128, %v415
    %v417 = vpop.f32.mrb[0].mxu0
    %v418 = vadd.f32 %v132, %v417
    %v419 = vpop.f32.mrb[0].mxu0
    %v420 = vadd.f32 %v128, %v419
    %v421 = vpop.f32.mrb[0].mxu0
    %v422 = vadd.f32 %v132, %v421
    %423 = vmatprep.mubr.bf16.mxu0 0
    %424 = vmatmul.mubr.bf16.gmra.mrb[0].mxu0 %v204
    %v425 = vpop.f32.mrb[0].mxu0
    %v426 = vadd.f32 %v128, %v425
    %v427 = vpop.f32.mrb[0].mxu0
    %v428 = vadd.f32 %v132, %v427
    %v429 = vpop.f32.mrb[0].mxu0
    %v430 = vadd.f32 %v128, %v429
    %v431 = vpop.f32.mrb[0].mxu0
    %v432 = vadd.f32 %v132, %v431
    %433 = vmatprep.mubr.bf16.mxu0 0
    %434 = vmatmul.mubr.bf16.gmra.mrb[0].mxu0 %v205
    %v435 = vpop.f32.mrb[0].mxu0
    %v436 = vadd.f32 %v128, %v435
    %v437 = vpop.f32.mrb[0].mxu0
    %v438 = vadd.f32 %v132, %v437
    %v439 = vpop.f32.mrb[0].mxu0
    %v440 = vadd.f32 %v128, %v439
    %v441 = vpop.f32.mrb[0].mxu0
    %v442 = vadd.f32 %v132, %v441
    %443 = vmatprep.mubr.bf16.mxu0 0
    %444 = vmatmul.mubr.bf16.gmra.mrb[0].mxu0 %v206
    %v445 = vpop.f32.mrb[0].mxu0
    %v446 = vadd.f32 %v128, %v445
    %v447 = vpop.f32.mrb[0].mxu0
    %v448 = vadd.f32 %v132, %v447
    %v449 = vpop.f32.mrb[0].mxu0
    %v450 = vadd.f32 %v128, %v449
    %v451 = vpop.f32.mrb[0].mxu0
    %v452 = vadd.f32 %v132, %v451
    %453 = vmatprep.mubr.bf16.mxu0 0
    %454 = vmatmul.mubr.bf16.gmra.mrb[0].mxu0 %v207
    %v455 = vpop.f32.mrb[0].mxu0
    %v456 = vadd.f32 %v128, %v455
    %v457 = vpop.f32.mrb[0].mxu0
    %v458 = vadd.f32 %v132, %v457
    %v459 = vpop.f32.mrb[0].mxu0
    %v460 = vadd.f32 %v128, %v459
    %v461 = vpop.f32.mrb[0].mxu0
    %v462 = vadd.f32 %v132, %v461
    %463 = vmatprep.mubr.bf16.mxu0 0
    %464 = vmatmul.mubr.bf16.gmra.mrb[0].mxu0 %v208
    %v465 = vpop.f32.mrb[0].mxu0
    %v466 = vadd.f32 %v128, %v465
    %v467 = vpop.f32.mrb[0].mxu0
    %v468 = vadd.f32 %v132, %v467
    %v469 = vpop.f32.mrb[0].mxu0
    %v470 = vadd.f32 %v128, %v469
    %v471 = vpop.f32.mrb[0].mxu0
    %v472 = vadd.f32 %v132, %v471
    %473 = vmatprep.mubr.bf16.mxu0 0
    %474 = vmatmul.mubr.bf16.gmra.mrb[0].mxu0 %v209
    %v475 = vpop.f32.mrb[0].mxu0
    %v476 = vadd.f32 %v128, %v475
    %v477 = vpop.f32.mrb[0].mxu0
    %v478 = vadd.f32 %v132, %v477
    %v479 = vpop.f32.mrb[0].mxu0
    %v480 = vadd.f32 %v128, %v479
    %v481 = vpop.f32.mrb[0].mxu0
    %v482 = vadd.f32 %v132, %v481
    %483 = vmatprep.mubr.bf16.mxu0 0
    %484 = vmatmul.mubr.bf16.gmra.mrb[0].mxu0 %v210
    %v485 = vpop.f32.mrb[0].mxu0
    %v486 = vadd.f32 %v128, %v485
    %v487 = vpop.f32.mrb[0].mxu0
    %v488 = vadd.f32 %v132, %v487
    %v489 = vpop.f32.mrb[0].mxu0
    %v490 = vadd.f32 %v128, %v489
    %v491 = vpop.f32.mrb[0].mxu0
    %v492 = vadd.f32 %v132, %v491
    %493 = vmatprep.mubr.bf16.mxu0 0
    %494 = vmatmul.mubr.bf16.gmra.mrb[0].mxu0 %v211
    %v495 = vpop.f32.mrb[0].mxu0
    %v496 = vadd.f32 %v128, %v495
    %v497 = vpop.f32.mrb[0].mxu0
    %v498 = vadd.f32 %v132, %v497
    %v499 = vpop.f32.mrb[0].mxu0
    %v500 = vadd.f32 %v128, %v499
    %v501 = vpop.f32.mrb[0].mxu0
    %v502 = vadd.f32 %v132, %v501
    %503 = vmatprep.mubr.bf16.mxu0 0
    %504 = vmatmul.mubr.bf16.gmra.mrb[0].mxu0 %v212
    %v505 = vpop.f32.mrb[0].mxu0
    %v506 = vadd.f32 %v128, %v505
    %v507 = vpop.f32.mrb[0].mxu0
    %v508 = vadd.f32 %v132, %v507
    %v509 = vpop.f32.mrb[0].mxu0
    %v510 = vadd.f32 %v128, %v509
    %v511 = vpop.f32.mrb[0].mxu0
    %v512 = vadd.f32 %v132, %v511
    %513 = vmatprep.mubr.bf16.mxu0 0
    %514 = vmatmul.mubr.bf16.gmra.mrb[0].mxu0 %v213
    %v515 = vpop.f32.mrb[0].mxu0
    %v516 = vadd.f32 %v128, %v515
    %v517 = vpop.f32.mrb[0].mxu0
    %v518 = vadd.f32 %v132, %v517
    %v519 = vpop.f32.mrb[0].mxu0
    %v520 = vadd.f32 %v128, %v519
    %v521 = vpop.f32.mrb[0].mxu0
    %v522 = vadd.f32 %v132, %v521
    %523 = vmatprep.mubr.bf16.mxu0 0
    %524 = vmatmul.mubr.bf16.gmra.mrb[0].mxu0 %v214
    %v525 = vpop.f32.mrb[0].mxu0
    %v526 = vadd.f32 %v128, %v525
    %v527 = vpop.f32.mrb[0].mxu0
    %v528 = vadd.f32 %v132, %v527
    %v529 = vpop.f32.mrb[0].mxu0
    %v530 = vadd.f32 %v128, %v529
    %v531 = vpop.f32.mrb[0].mxu0
    %v532 = vadd.f32 %v132, %v531
    %533 = vmatprep.mubr.bf16.mxu0 0
    %534 = vmatmul.mubr.bf16.gmra.mrb[0].mxu0 %v215
    %v535 = vpop.f32.mrb[0].mxu0
    %v536 = vadd.f32 %v128, %v535
    %v537 = vpop.f32.mrb[0].mxu0
    %v538 = vadd.f32 %v132, %v537
    %v539 = vpop.f32.mrb[0].mxu0
    %v540 = vadd.f32 %v128, %v539
    %v541 = vpop.f32.mrb[0].mxu0
    %v542 = vadd.f32 %v132, %v541
    %543 = vmatprep.mubr.bf16.mxu0 0
    %544 = vmatmul.mubr.bf16.gmra.mrb[0].mxu0 %v216
    %v545 = vpop.f32.mrb[0].mxu0
    %v546 = vadd.f32 %v128, %v545
    %v547 = vpop.f32.mrb[0].mxu0
    %v548 = vadd.f32 %v132, %v547
    %v549 = vpop.f32.mrb[0].mxu0
    %v550 = vadd.f32 %v128, %v549
    %v551 = vpop.f32.mrb[0].mxu0
    %v552 = vadd.f32 %v132, %v551
    %553 = vdwg.mxu0
    %554 = vmatprep.subr.bf16.mxu0 0
    %555 = vmatpush1.bf16.msra.mxu0 %v315
    %556 = vmatprep.subr.bf16.mxu0 0
    %557 = vmatpush1.bf16.msra.mxu0 %v318
    %558 = vmatprep.subr.bf16.mxu0 0
    %559 = vmatpush1.bf16.msra.mxu0 %v321
    %560 = vmatprep.subr.bf16.mxu0 0
    %561 = vmatpush1.bf16.msra.mxu0 %v324
    %562 = vmatprep.subr.bf16.mxu0 0
    %563 = vmatpush1.bf16.msra.mxu0 %v327
    %564 = vmatprep.subr.bf16.mxu0 0
    %565 = vmatpush1.bf16.msra.mxu0 %v330
    %566 = vmatprep.subr.bf16.mxu0 0
    %567 = vmatpush1.bf16.msra.mxu0 %v333
    %568 = vmatprep.subr.bf16.mxu0 0
    %569 = vmatpush1.bf16.msra.mxu0 %v336
    %570 = vmatprep.subr.bf16.mxu0 0
    %571 = vmatpush1.bf16.msra.mxu0 0
    %572 = vmatprep.subr.bf16.mxu0 0
    %573 = vmatpush1.bf16.msra.mxu0 0
    %574 = vmatprep.subr.bf16.mxu0 0
    %575 = vmatpush1.bf16.msra.mxu0 0
    %576 = vmatprep.subr.bf16.mxu0 0
    %577 = vmatpush1.bf16.msra.mxu0 0
    %578 = vmatprep.subr.bf16.mxu0 0
    %579 = vmatpush1.bf16.msra.mxu0 0
    %580 = vmatprep.subr.bf16.mxu0 0
    %581 = vmatpush1.bf16.msra.mxu0 0
    %582 = vmatprep.subr.bf16.mxu0 0
    %583 = vmatpush1.bf16.msra.mxu0 0
    %584 = vmatprep.subr.bf16.mxu0 0
    %585 = vmatpush1.bf16.msra.mxu0 0
    %586 = vmatprep.mubr.bf16.mxu0 0
    %587 = vmatmul.mubr.bf16.gmra.mrb[0].mxu0 %v201
    %v588 = vpop.f32.mrb[0].mxu0
    %v589 = vadd.f32 %v136, %v588
    %v590 = vpop.f32.mrb[0].mxu0
    %v591 = vpop.f32.mrb[0].mxu0
    %v592 = vadd.f32 %v136, %v591
    %v593 = vpop.f32.mrb[0].mxu0
    %594 = vmatprep.mubr.bf16.mxu0 0
    %595 = vmatmul.mubr.bf16.gmra.mrb[0].mxu0 %v202
    %v596 = vpop.f32.mrb[0].mxu0
    %v597 = vadd.f32 %v136, %v596
    %v598 = vpop.f32.mrb[0].mxu0
    %v599 = vpop.f32.mrb[0].mxu0
    %v600 = vadd.f32 %v136, %v599
    %v601 = vpop.f32.mrb[0].mxu0
    %602 = vmatprep.mubr.bf16.mxu0 0
    %603 = vmatmul.mubr.bf16.gmra.mrb[0].mxu0 %v203
    %v604 = vpop.f32.mrb[0].mxu0
    %v605 = vadd.f32 %v136, %v604
    %v606 = vpop.f32.mrb[0].mxu0
    %v607 = vpop.f32.mrb[0].mxu0
    %v608 = vadd.f32 %v136, %v607
    %v609 = vpop.f32.mrb[0].mxu0
    %610 = vmatprep.mubr.bf16.mxu0 0
    %611 = vmatmul.mubr.bf16.gmra.mrb[0].mxu0 %v204
    %v612 = vpop.f32.mrb[0].mxu0
    %v613 = vadd.f32 %v136, %v612
    %v614 = vpop.f32.mrb[0].mxu0
    %v615 = vpop.f32.mrb[0].mxu0
    %v616 = vadd.f32 %v136, %v615
    %v617 = vpop.f32.mrb[0].mxu0
    %618 = vmatprep.mubr.bf16.mxu0 0
    %619 = vmatmul.mubr.bf16.gmra.mrb[0].mxu0 %v205
    %v620 = vpop.f32.mrb[0].mxu0
    %v621 = vadd.f32 %v136, %v620
    %v622 = vpop.f32.mrb[0].mxu0
    %v623 = vpop.f32.mrb[0].mxu0
    %v624 = vadd.f32 %v136, %v623
    %v625 = vpop.f32.mrb[0].mxu0
    %626 = vmatprep.mubr.bf16.mxu0 0
    %627 = vmatmul.mubr.bf16.gmra.mrb[0].mxu0 %v206
    %v628 = vpop.f32.mrb[0].mxu0
    %v629 = vadd.f32 %v136, %v628
    %v630 = vpop.f32.mrb[0].mxu0
    %v631 = vpop.f32.mrb[0].mxu0
    %v632 = vadd.f32 %v136, %v631
    %v633 = vpop.f32.mrb[0].mxu0
    %634 = vmatprep.mubr.bf16.mxu0 0
    %635 = vmatmul.mubr.bf16.gmra.mrb[0].mxu0 %v207
    %v636 = vpop.f32.mrb[0].mxu0
    %v637 = vadd.f32 %v136, %v636
    %v638 = vpop.f32.mrb[0].mxu0
    %v639 = vpop.f32.mrb[0].mxu0
    %v640 = vadd.f32 %v136, %v639
    %v641 = vpop.f32.mrb[0].mxu0
    %642 = vmatprep.mubr.bf16.mxu0 0
    %643 = vmatmul.mubr.bf16.gmra.mrb[0].mxu0 %v208
    %v644 = vpop.f32.mrb[0].mxu0
    %v645 = vadd.f32 %v136, %v644
    %v646 = vpop.f32.mrb[0].mxu0
    %v647 = vpop.f32.mrb[0].mxu0
    %v648 = vadd.f32 %v136, %v647
    %v649 = vpop.f32.mrb[0].mxu0
    %650 = vmatprep.mubr.bf16.mxu0 0
    %651 = vmatmul.mubr.bf16.gmra.mrb[0].mxu0 %v209
    %v652 = vpop.f32.mrb[0].mxu0
    %v653 = vadd.f32 %v136, %v652
    %v654 = vpop.f32.mrb[0].mxu0
    %v655 = vpop.f32.mrb[0].mxu0
    %v656 = vadd.f32 %v136, %v655
    %v657 = vpop.f32.mrb[0].mxu0
    %658 = vmatprep.mubr.bf16.mxu0 0
    %659 = vmatmul.mubr.bf16.gmra.mrb[0].mxu0 %v210
    %v660 = vpop.f32.mrb[0].mxu0
    %v661 = vadd.f32 %v136, %v660
    %v662 = vpop.f32.mrb[0].mxu0
    %v663 = vpop.f32.mrb[0].mxu0
    %v664 = vadd.f32 %v136, %v663
    %v665 = vpop.f32.mrb[0].mxu0
    %666 = vmatprep.mubr.bf16.mxu0 0
    %667 = vmatmul.mubr.bf16.gmra.mrb[0].mxu0 %v211
    %v668 = vpop.f32.mrb[0].mxu0
    %v669 = vadd.f32 %v136, %v668
    %v670 = vpop.f32.mrb[0].mxu0
    %v671 = vpop.f32.mrb[0].mxu0
    %v672 = vadd.f32 %v136, %v671
    %v673 = vpop.f32.mrb[0].mxu0
    %674 = vmatprep.mubr.bf16.mxu0 0
    %675 = vmatmul.mubr.bf16.gmra.mrb[0].mxu0 %v212
    %v676 = vpop.f32.mrb[0].mxu0
    %v677 = vadd.f32 %v136, %v676
    %v678 = vpop.f32.mrb[0].mxu0
    %v679 = vpop.f32.mrb[0].mxu0
    %v680 = vadd.f32 %v136, %v679
    %v681 = vpop.f32.mrb[0].mxu0
    %682 = vmatprep.mubr.bf16.mxu0 0
    %683 = vmatmul.mubr.bf16.gmra.mrb[0].mxu0 %v213
    %v684 = vpop.f32.mrb[0].mxu0
    %v685 = vadd.f32 %v136, %v684
    %v686 = vpop.f32.mrb[0].mxu0
    %v687 = vpop.f32.mrb[0].mxu0
    %v688 = vadd.f32 %v136, %v687
    %v689 = vpop.f32.mrb[0].mxu0
    %690 = vmatprep.mubr.bf16.mxu0 0
    %691 = vmatmul.mubr.bf16.gmra.mrb[0].mxu0 %v214
    %v692 = vpop.f32.mrb[0].mxu0
    %v693 = vadd.f32 %v136, %v692
    %v694 = vpop.f32.mrb[0].mxu0
    %v695 = vpop.f32.mrb[0].mxu0
    %v696 = vadd.f32 %v136, %v695
    %v697 = vpop.f32.mrb[0].mxu0
    %698 = vmatprep.mubr.bf16.mxu0 0
    %699 = vmatmul.mubr.bf16.gmra.mrb[0].mxu0 %v215
    %v700 = vpop.f32.mrb[0].mxu0
    %v701 = vadd.f32 %v136, %v700
    %v702 = vpop.f32.mrb[0].mxu0
    %v703 = vpop.f32.mrb[0].mxu0
    %v704 = vadd.f32 %v136, %v703
    %v705 = vpop.f32.mrb[0].mxu0
    %706 = vmatprep.mubr.bf16.mxu0 0
    %707 = vmatmul.mubr.bf16.gmra.mrb[0].mxu0 %v216
    %v708 = vpop.f32.mrb[0].mxu0
    %v709 = vadd.f32 %v136, %v708
    %v710 = vpop.f32.mrb[0].mxu0
    %v711 = vpop.f32.mrb[0].mxu0
    %v712 = vadd.f32 %v136, %v711
    %v713 = vpop.f32.mrb[0].mxu0
    %714 = vdwg.mxu0
    %v715 = vpack.c.bf16 %v400, %v396
    %v716 = vpack.c.bf16 %v402, %v398
    %v717 = vpack.c.bf16 %v592, %v589
    %v718 = vpack.c.bf16 %v410, %v406
    %v719 = vpack.c.bf16 %v412, %v408
    %v720 = vpack.c.bf16 %v600, %v597
    %v721 = vpack.c.bf16 %v420, %v416
    %v722 = vpack.c.bf16 %v422, %v418
    %v723 = vpack.c.bf16 %v608, %v605
    %v724 = vpack.c.bf16 %v430, %v426
    %v725 = vpack.c.bf16 %v432, %v428
    %v726 = vpack.c.bf16 %v616, %v613
    %v727 = vpack.c.bf16 %v440, %v436
    %v728 = vpack.c.bf16 %v442, %v438
    %v729 = vpack.c.bf16 %v624, %v621
    %v730 = vpack.c.bf16 %v450, %v446
    %v731 = vpack.c.bf16 %v452, %v448
    %v732 = vpack.c.bf16 %v632, %v629
    %v733 = vpack.c.bf16 %v460, %v456
    %v734 = vpack.c.bf16 %v462, %v458
    %v735 = vpack.c.bf16 %v640, %v637
    %v736 = vpack.c.bf16 %v470, %v466
    %v737 = vpack.c.bf16 %v472, %v468
    %v738 = vpack.c.bf16 %v648, %v645
    %v739 = vpack.c.bf16 %v480, %v476
    %v740 = vpack.c.bf16 %v482, %v478
    %v741 = vpack.c.bf16 %v656, %v653
    %v742 = vpack.c.bf16 %v490, %v486
    %v743 = vpack.c.bf16 %v492, %v488
    %v744 = vpack.c.bf16 %v664, %v661
    %v745 = vpack.c.bf16 %v500, %v496
    %v746 = vpack.c.bf16 %v502, %v498
    %v747 = vpack.c.bf16 %v672, %v669
    %v748 = vpack.c.bf16 %v510, %v506
    %v749 = vpack.c.bf16 %v512, %v508
    %v750 = vpack.c.bf16 %v680, %v677
    %v751 = vpack.c.bf16 %v520, %v516
    %v752 = vpack.c.bf16 %v522, %v518
    %v753 = vpack.c.bf16 %v688, %v685
    %v754 = vpack.c.bf16 %v530, %v526
    %v755 = vpack.c.bf16 %v532, %v528
    %v756 = vpack.c.bf16 %v696, %v693
    %v757 = vpack.c.bf16 %v540, %v536
    %v758 = vpack.c.bf16 %v542, %v538
    %v759 = vpack.c.bf16 %v704, %v701
    %v760 = vpack.c.bf16 %v550, %v546
    %v761 = vpack.c.bf16 %v552, %v548
    %v762 = vpack.c.bf16 %v712, %v709
    %v811 = vunpack.c.l.b16 %v715
    %v812 = vunpack.c.l.b16 %v716
    %v813 = vunpack.c.l.b16 %v717
    %v814 = vunpack.c.h.b16 %v715
    %v815 = vunpack.c.h.b16 %v716
    %v816 = vunpack.c.h.b16 %v717
    %v817 = vunpack.c.l.b16 %v718
    %v818 = vunpack.c.l.b16 %v719
    %v819 = vunpack.c.l.b16 %v720
    %v820 = vunpack.c.h.b16 %v718
    %v821 = vunpack.c.h.b16 %v719
    %v822 = vunpack.c.h.b16 %v720
    %v823 = vunpack.c.l.b16 %v721
    %v824 = vunpack.c.l.b16 %v722
    %v825 = vunpack.c.l.b16 %v723
    %v826 = vunpack.c.h.b16 %v721
    %v827 = vunpack.c.h.b16 %v722
    %v828 = vunpack.c.h.b16 %v723
    %v829 = vunpack.c.l.b16 %v724
    %v830 = vunpack.c.l.b16 %v725
    %v831 = vunpack.c.l.b16 %v726
    %v832 = vunpack.c.h.b16 %v724
    %v833 = vunpack.c.h.b16 %v725
    %v834 = vunpack.c.h.b16 %v726
    %v835 = vunpack.c.l.b16 %v727
    %v836 = vunpack.c.l.b16 %v728
    %v837 = vunpack.c.l.b16 %v729
    %v838 = vunpack.c.h.b16 %v727
    %v839 = vunpack.c.h.b16 %v728
    %v840 = vunpack.c.h.b16 %v729
    %v841 = vunpack.c.l.b16 %v730
    %v842 = vunpack.c.l.b16 %v731
    %v843 = vunpack.c.l.b16 %v732
    %v844 = vunpack.c.h.b16 %v730
    %v845 = vunpack.c.h.b16 %v731
    %v846 = vunpack.c.h.b16 %v732
    %v847 = vunpack.c.l.b16 %v733
    %v848 = vunpack.c.l.b16 %v734
    %v849 = vunpack.c.l.b16 %v735
    %v850 = vunpack.c.h.b16 %v733
    %v851 = vunpack.c.h.b16 %v734
    %v852 = vunpack.c.h.b16 %v735
    %v853 = vunpack.c.l.b16 %v736
    %v854 = vunpack.c.l.b16 %v737
    %v855 = vunpack.c.l.b16 %v738
    %v856 = vunpack.c.h.b16 %v736
    %v857 = vunpack.c.h.b16 %v737
    %v858 = vunpack.c.h.b16 %v738
    %v859 = vunpack.c.l.b16 %v739
    %v860 = vunpack.c.l.b16 %v740
    %v861 = vunpack.c.l.b16 %v741
    %v862 = vunpack.c.h.b16 %v739
    %v863 = vunpack.c.h.b16 %v740
    %v864 = vunpack.c.h.b16 %v741
    %v865 = vunpack.c.l.b16 %v742
    %v866 = vunpack.c.l.b16 %v743
    %v867 = vunpack.c.l.b16 %v744
    %v868 = vunpack.c.h.b16 %v742
    %v869 = vunpack.c.h.b16 %v743
    %v870 = vunpack.c.h.b16 %v744
    %v871 = vunpack.c.l.b16 %v745
    %v872 = vunpack.c.l.b16 %v746
    %v873 = vunpack.c.l.b16 %v747
    %v874 = vunpack.c.h.b16 %v745
    %v875 = vunpack.c.h.b16 %v746
    %v876 = vunpack.c.h.b16 %v747
    %v877 = vunpack.c.l.b16 %v748
    %v878 = vunpack.c.l.b16 %v749
    %v879 = vunpack.c.l.b16 %v750
    %v880 = vunpack.c.h.b16 %v748
    %v881 = vunpack.c.h.b16 %v749
    %v882 = vunpack.c.h.b16 %v750
    %v883 = vunpack.c.l.b16 %v751
    %v884 = vunpack.c.l.b16 %v752
    %v885 = vunpack.c.l.b16 %v753
    %v886 = vunpack.c.h.b16 %v751
    %v887 = vunpack.c.h.b16 %v752
    %v888 = vunpack.c.h.b16 %v753
    %v889 = vunpack.c.l.b16 %v754
    %v890 = vunpack.c.l.b16 %v755
    %v891 = vunpack.c.l.b16 %v756
    %v892 = vunpack.c.h.b16 %v754
    %v893 = vunpack.c.h.b16 %v755
    %v894 = vunpack.c.h.b16 %v756
    %v895 = vunpack.c.l.b16 %v757
    %v896 = vunpack.c.l.b16 %v758
    %v897 = vunpack.c.l.b16 %v759
    %v898 = vunpack.c.h.b16 %v757
    %v899 = vunpack.c.h.b16 %v758
    %v900 = vunpack.c.h.b16 %v759
    %v901 = vunpack.c.l.b16 %v760
    %v902 = vunpack.c.l.b16 %v761
    %v903 = vunpack.c.l.b16 %v762
    %v904 = vunpack.c.h.b16 %v760
    %v905 = vunpack.c.h.b16 %v761
    %v906 = vunpack.c.h.b16 %v762
    %v907 = vpack.c.b16 %v812, %v811
    %v908 = vpack.c.b16 %v813, %v813
    %v909 = vpack.c.b16 %v815, %v814
    %v910 = vpack.c.b16 %v816, %v816
    %v911 = vpack.c.b16 %v818, %v817
    %v912 = vpack.c.b16 %v819, %v819
    %v913 = vpack.c.b16 %v821, %v820
    %v914 = vpack.c.b16 %v822, %v822
    %v915 = vpack.c.b16 %v824, %v823
    %v916 = vpack.c.b16 %v825, %v825
    %v917 = vpack.c.b16 %v827, %v826
    %v918 = vpack.c.b16 %v828, %v828
    %v919 = vpack.c.b16 %v830, %v829
    %v920 = vpack.c.b16 %v831, %v831
    %v921 = vpack.c.b16 %v833, %v832
    %v922 = vpack.c.b16 %v834, %v834
    %v923 = vpack.c.b16 %v836, %v835
    %v924 = vpack.c.b16 %v837, %v837
    %v925 = vpack.c.b16 %v839, %v838
    %v926 = vpack.c.b16 %v840, %v840
    %v927 = vpack.c.b16 %v842, %v841
    %v928 = vpack.c.b16 %v843, %v843
    %v929 = vpack.c.b16 %v845, %v844
    %v930 = vpack.c.b16 %v846, %v846
    %v931 = vpack.c.b16 %v848, %v847
    %v932 = vpack.c.b16 %v849, %v849
    %v933 = vpack.c.b16 %v851, %v850
    %v934 = vpack.c.b16 %v852, %v852
    %v935 = vpack.c.b16 %v854, %v853
    %v936 = vpack.c.b16 %v855, %v855
    %v937 = vpack.c.b16 %v857, %v856
    %v938 = vpack.c.b16 %v858, %v858
    %v939 = vpack.c.b16 %v860, %v859
    %v940 = vpack.c.b16 %v861, %v861
    %v941 = vpack.c.b16 %v863, %v862
    %v942 = vpack.c.b16 %v864, %v864
    %v943 = vpack.c.b16 %v866, %v865
    %v944 = vpack.c.b16 %v867, %v867
    %v945 = vpack.c.b16 %v869, %v868
    %v946 = vpack.c.b16 %v870, %v870
    %v947 = vpack.c.b16 %v872, %v871
    %v948 = vpack.c.b16 %v873, %v873
    %v949 = vpack.c.b16 %v875, %v874
    %v950 = vpack.c.b16 %v876, %v876
    %v951 = vpack.c.b16 %v878, %v877
    %v952 = vpack.c.b16 %v879, %v879
    %v953 = vpack.c.b16 %v881, %v880
    %v954 = vpack.c.b16 %v882, %v882
    %v955 = vpack.c.b16 %v884, %v883
    %v956 = vpack.c.b16 %v885, %v885
    %v957 = vpack.c.b16 %v887, %v886
    %v958 = vpack.c.b16 %v888, %v888
    %v959 = vpack.c.b16 %v890, %v889
    %v960 = vpack.c.b16 %v891, %v891
    %v961 = vpack.c.b16 %v893, %v892
    %v962 = vpack.c.b16 %v894, %v894
    %v963 = vpack.c.b16 %v896, %v895
    %v964 = vpack.c.b16 %v897, %v897
    %v965 = vpack.c.b16 %v899, %v898
    %v966 = vpack.c.b16 %v900, %v900
    %v967 = vpack.c.b16 %v902, %v901
    %v968 = vpack.c.b16 %v903, %v903
    %v969 = vpack.c.b16 %v905, %v904
    %v970 = vpack.c.b16 %v906, %v906
    %1035 = vst [vmem:[%s3] sm:$0xff] %v907
    %1036 = vst [vmem:[%s3 + $0x8] sm:$0xf] %v908
    %1037 = vst [vmem:[%s3 + $0xc] sm:$0xff] %v909
    %1038 = vst [vmem:[%s3 + $0x14] sm:$0xf] %v910
    %1039 = vst [vmem:[%s3 + $0x18] sm:$0xff] %v911
    %1040 = vst [vmem:[%s3 + $0x20] sm:$0xf] %v912
    %1041 = vst [vmem:[%s3 + $0x24] sm:$0xff] %v913
    %1042 = vst [vmem:[%s3 + $0x2c] sm:$0xf] %v914
    %1043 = vst [vmem:[%s3 + $0x30] sm:$0xff] %v915
    %1044 = vst [vmem:[%s3 + $0x38] sm:$0xf] %v916
    %1045 = vst [vmem:[%s3 + $0x3c] sm:$0xff] %v917
    %1046 = vst [vmem:[%s3 + $0x44] sm:$0xf] %v918
    %1047 = vst [vmem:[%s3 + $0x48] sm:$0xff] %v919
    %1048 = vst [vmem:[%s3 + $0x50] sm:$0xf] %v920
    %1049 = vst [vmem:[%s3 + $0x54] sm:$0xff] %v921
    %1050 = vst [vmem:[%s3 + $0x5c] sm:$0xf] %v922
    %1051 = vst [vmem:[%s3 + $0x60] sm:$0xff] %v923
    %1052 = vst [vmem:[%s3 + $0x68] sm:$0xf] %v924
    %1053 = vst [vmem:[%s3 + $0x6c] sm:$0xff] %v925
    %1054 = vst [vmem:[%s3 + $0x74] sm:$0xf] %v926
    %1055 = vst [vmem:[%s3 + $0x78] sm:$0xff] %v927
    %1056 = vst [vmem:[%s3 + $0x80] sm:$0xf] %v928
    %1057 = vst [vmem:[%s3 + $0x84] sm:$0xff] %v929
    %1058 = vst [vmem:[%s3 + $0x8c] sm:$0xf] %v930
    %1059 = vst [vmem:[%s3 + $0x90] sm:$0xff] %v931
    %1060 = vst [vmem:[%s3 + $0x98] sm:$0xf] %v932
    %1061 = vst [vmem:[%s3 + $0x9c] sm:$0xff] %v933
    %1062 = vst [vmem:[%s3 + $0xa4] sm:$0xf] %v934
    %1063 = vst [vmem:[%s3 + $0xa8] sm:$0xff] %v935
    %1064 = vst [vmem:[%s3 + $0xb0] sm:$0xf] %v936
    %1065 = vst [vmem:[%s3 + $0xb4] sm:$0xff] %v937
    %1066 = vst [vmem:[%s3 + $0xbc] sm:$0xf] %v938
    %1067 = vst [vmem:[%s3 + $0xc0] sm:$0xff] %v939
    %1068 = vst [vmem:[%s3 + $0xc8] sm:$0xf] %v940
    %1069 = vst [vmem:[%s3 + $0xcc] sm:$0xff] %v941
    %1070 = vst [vmem:[%s3 + $0xd4] sm:$0xf] %v942
    %1071 = vst [vmem:[%s3 + $0xd8] sm:$0xff] %v943
    %1072 = vst [vmem:[%s3 + $0xe0] sm:$0xf] %v944
    %1073 = vst [vmem:[%s3 + $0xe4] sm:$0xff] %v945
    %1074 = vst [vmem:[%s3 + $0xec] sm:$0xf] %v946
    %1075 = vst [vmem:[%s3 + $0xf0] sm:$0xff] %v947
    %1076 = vst [vmem:[%s3 + $0xf8] sm:$0xf] %v948
    %1077 = vst [vmem:[%s3 + $0xfc] sm:$0xff] %v949
    %1078 = vst [vmem:[%s3 + $0x104] sm:$0xf] %v950
    %1079 = vst [vmem:[%s3 + $0x108] sm:$0xff] %v951
    %1080 = vst [vmem:[%s3 + $0x110] sm:$0xf] %v952
    %1081 = vst [vmem:[%s3 + $0x114] sm:$0xff] %v953
    %1082 = vst [vmem:[%s3 + $0x11c] sm:$0xf] %v954
    %1083 = vst [vmem:[%s3 + $0x120] sm:$0xff] %v955
    %1084 = vst [vmem:[%s3 + $0x128] sm:$0xf] %v956
    %1085 = vst [vmem:[%s3 + $0x12c] sm:$0xff] %v957
    %1086 = vst [vmem:[%s3 + $0x134] sm:$0xf] %v958
    %1087 = vst [vmem:[%s3 + $0x138] sm:$0xff] %v959
    %1088 = vst [vmem:[%s3 + $0x140] sm:$0xf] %v960
    %1089 = vst [vmem:[%s3 + $0x144] sm:$0xff] %v961
    %1090 = vst [vmem:[%s3 + $0x14c] sm:$0xf] %v962
    %1091 = vst [vmem:[%s3 + $0x150] sm:$0xff] %v963
    %1092 = vst [vmem:[%s3 + $0x158] sm:$0xf] %v964
    %1093 = vst [vmem:[%s3 + $0x15c] sm:$0xff] %v965
    %1094 = vst [vmem:[%s3 + $0x164] sm:$0xf] %v966
    %1095 = vst [vmem:[%s3 + $0x168] sm:$0xff] %v967
    %1096 = vst [vmem:[%s3 + $0x170] sm:$0xf] %v968
    %1097 = vst [vmem:[%s3 + $0x174] sm:$0xff] %v969
    %1098 = vst [vmem:[%s3 + $0x17c] sm:$0xf] %v970
    // Predicated region
    $region22: #{transformer_block.5} parent=1 // pred_check
      _
    $region23: #{transformer_block.5} parent=1 // pred_check_branch
      %1100 = sbr.rel (0) target = $region25
    $region24: #{transformer_block.5} parent=1 // pred_region
      _
    $region25: #{transformer_block.5} parent=1 // pred_fallthru
      _
    // Predicated region
    $region26: #{transformer_block.5} parent=1 // pred_check
      _
    $region27: #{transformer_block.5} parent=1 // pred_check_branch
      %1102 = sbr.rel (0) target = $region29
    $region28: #{transformer_block.5} parent=1 // pred_region
      _
    $region29: #{transformer_block.5} parent=1 // pred_fallthru
      _
    %1103 = vsyncpa [#allocation3], 1
    %1104 = vsyncpa [#allocation5], 1

// kernel: transformer_block.7
$region0: #{transformer_block.7}
  #allocation0 [shape = 'u32[]', space=smem, size = 0x4, offset = 0x4, fixed_abs, tag = 'smem constant byte address 0x4 - core index']
  #allocation1 [shape = 'u32[144,128]{1,0:T(1,128)}', space=vmem, size = 0x12000, scoped, tag = 'internal scratch']
  %s0 = inlined_call_operand.vmem [shape: bf16[256,128], index: 0, kind: input, shape index: {}]
  %s1 = inlined_call_operand.vmem [shape: bf16[128,128], index: 1, kind: input, shape index: {}]
  %s2 = inlined_call_operand.vmem [shape: bf16[1,128], index: 2, kind: input, shape index: {}]
  %s3 = inlined_call_operand.vmem [shape: bf16[256,128], index: 3, kind: input, shape index: {}]
  %s4 = inlined_call_operand.vmem [shape: bf16[1,128], index: 4, kind: input, shape index: {}]
  %s5 = inlined_call_operand.vmem [shape: bf16[1,128], index: 5, kind: input, shape index: {}]
  %s6 = inlined_call_operand.vmem [shape: bf16[256,128], index: 6, kind: output, shape index: {}]
  %s7 = sld [smem:[#allocation0]]
  $region34: #{transformer_block.7} parent=0
    _
  %s9 = ssub.s32 1, %s7
  %s10 = scalar_select 0, %s9, %s7
  // Predicated region
  $region2: #{transformer_block.7} parent=0 // pred_check
    _
  $region3: #{transformer_block.7} parent=0 // pred_check_branch
    %12 = sbr.rel (0) target = $region5
  $region4: #{transformer_block.7} parent=0 // pred_region
    _
  $region5: #{transformer_block.7} parent=0 // pred_fallthru
    _
  // Predicated region
  $region6: #{transformer_block.7} parent=0 // pred_check
    _
  $region7: #{transformer_block.7} parent=0 // pred_check_branch
    %14 = sbr.rel (0) target = $region9
  $region8: #{transformer_block.7} parent=0 // pred_region
    _
  $region9: #{transformer_block.7} parent=0 // pred_fallthru
    _
  // Predicated region
  $region10: #{transformer_block.7} parent=0 // pred_check
    _
  $region11: #{transformer_block.7} parent=0 // pred_check_branch
    %16 = sbr.rel (0) target = $region13
  $region12: #{transformer_block.7} parent=0 // pred_region
    _
  $region13: #{transformer_block.7} parent=0 // pred_fallthru
    _
  // Predicated region
  $region14: #{transformer_block.7} parent=0 // pred_check
    _
  $region15: #{transformer_block.7} parent=0 // pred_check_branch
    %18 = sbr.rel (0) target = $region17
  $region16: #{transformer_block.7} parent=0 // pred_region
    _
  $region17: #{transformer_block.7} parent=0 // pred_fallthru
    _
  // Predicated region
  $region18: #{transformer_block.7} parent=0 // pred_check
    _
  $region19: #{transformer_block.7} parent=0 // pred_check_branch
    %20 = sbr.rel (0) target = $region21
  $region20: #{transformer_block.7} parent=0 // pred_region
    _
  $region21: #{transformer_block.7} parent=0 // pred_fallthru
    _
  // Predicated region
  $region22: #{transformer_block.7} parent=0 // pred_check
    _
  $region23: #{transformer_block.7} parent=0 // pred_check_branch
    %22 = sbr.rel (0) target = $region25
  $region24: #{transformer_block.7} parent=0 // pred_region
    _
  $region25: #{transformer_block.7} parent=0 // pred_fallthru
    _
  %v24 = vld [vmem:[%s0] sm:$0xf]
  %v25 = vld [vmem:[%s0 + $0x4] sm:$0xf]
  %v26 = vld [vmem:[%s0 + $0x8] sm:$0xf]
  %v27 = vld [vmem:[%s0 + $0xc] sm:$0xf]
  %v28 = vld [vmem:[%s0 + $0x10] sm:$0xf]
  %v29 = vld [vmem:[%s0 + $0x14] sm:$0xf]
  %v30 = vld [vmem:[%s0 + $0x18] sm:$0xf]
  %v31 = vld [vmem:[%s0 + $0x1c] sm:$0xf]
  %v32 = vld [vmem:[%s0 + $0x20] sm:$0xf]
  %v33 = vld [vmem:[%s0 + $0x24] sm:$0xf]
  %v34 = vld [vmem:[%s0 + $0x28] sm:$0xf]
  %v35 = vld [vmem:[%s0 + $0x2c] sm:$0xf]
  %v36 = vld [vmem:[%s0 + $0x30] sm:$0xf]
  %v37 = vld [vmem:[%s0 + $0x34] sm:$0xf]
  %v38 = vld [vmem:[%s0 + $0x38] sm:$0xf]
  %v39 = vld [vmem:[%s0 + $0x3c] sm:$0xf]
  %v40 = vld [vmem:[%s0 + $0x40] sm:$0xf]
  %v41 = vld [vmem:[%s0 + $0x44] sm:$0xf]
  %v42 = vld [vmem:[%s0 + $0x48] sm:$0xf]
  %v43 = vld [vmem:[%s0 + $0x4c] sm:$0xf]
  %v44 = vld [vmem:[%s0 + $0x50] sm:$0xf]
  %v45 = vld [vmem:[%s0 + $0x54] sm:$0xf]
  %v46 = vld [vmem:[%s0 + $0x58] sm:$0xf]
  %v47 = vld [vmem:[%s0 + $0x5c] sm:$0xf]
  %v48 = vld [vmem:[%s0 + $0x60] sm:$0xf]
  %v49 = vld [vmem:[%s0 + $0x64] sm:$0xf]
  %v50 = vld [vmem:[%s0 + $0x68] sm:$0xf]
  %v51 = vld [vmem:[%s0 + $0x6c] sm:$0xf]
  %v52 = vld [vmem:[%s0 + $0x70] sm:$0xf]
  %v53 = vld [vmem:[%s0 + $0x74] sm:$0xf]
  %v54 = vld [vmem:[%s0 + $0x78] sm:$0xf]
  %v55 = vld [vmem:[%s0 + $0x7c] sm:$0xf]
  %v56 = vld [vmem:[%s1] sm:$0xf]
  %v57 = vld [vmem:[%s1 + $0x4] sm:$0xf]
  %v58 = vld [vmem:[%s1 + $0x8] sm:$0xf]
  %v59 = vld [vmem:[%s1 + $0xc] sm:$0xf]
  %v60 = vld [vmem:[%s1 + $0x10] sm:$0xf]
  %v61 = vld [vmem:[%s1 + $0x14] sm:$0xf]
  %v62 = vld [vmem:[%s1 + $0x18] sm:$0xf]
  %v63 = vld [vmem:[%s1 + $0x1c] sm:$0xf]
  %v64 = vld [vmem:[%s1 + $0x20] sm:$0xf]
  %v65 = vld [vmem:[%s1 + $0x24] sm:$0xf]
  %v66 = vld [vmem:[%s1 + $0x28] sm:$0xf]
  %v67 = vld [vmem:[%s1 + $0x2c] sm:$0xf]
  %v68 = vld [vmem:[%s1 + $0x30] sm:$0xf]
  %v69 = vld [vmem:[%s1 + $0x34] sm:$0xf]
  %v70 = vld [vmem:[%s1 + $0x38] sm:$0xf]
  %v71 = vld [vmem:[%s1 + $0x3c] sm:$0xf]
  %v72 = vld [vmem:[%s2] sm:$0x1]
  %v73 = vunpack.c.l.bf16 %v72
  %v74 = vlaneseq
  %v75 = vshrl.u32 %v74, 7
  %v76 = vsub.s32 0, %v75
  %v77 = vrot.slane %v73, %v76
  %v110 = vunpack.c.l.b16 %v24
  %v111 = vunpack.c.l.b16 %v25
  %v112 = vunpack.c.l.b16 %v26
  %v113 = vunpack.c.l.b16 %v27
  %v114 = vunpack.c.l.b16 %v28
  %v115 = vunpack.c.l.b16 %v29
  %v116 = vunpack.c.l.b16 %v30
  %v117 = vunpack.c.l.b16 %v31
  %v118 = vunpack.c.l.b16 %v32
  %v119 = vunpack.c.l.b16 %v33
  %v120 = vunpack.c.l.b16 %v34
  %v121 = vunpack.c.l.b16 %v35
  %v122 = vunpack.c.l.b16 %v36
  %v123 = vunpack.c.l.b16 %v37
  %v124 = vunpack.c.l.b16 %v38
  %v125 = vunpack.c.l.b16 %v39
  %v126 = vunpack.c.l.b16 %v40
  %v127 = vunpack.c.l.b16 %v41
  %v128 = vunpack.c.l.b16 %v42
  %v129 = vunpack.c.l.b16 %v43
  %v130 = vunpack.c.l.b16 %v44
  %v131 = vunpack.c.l.b16 %v45
  %v132 = vunpack.c.l.b16 %v46
  %v133 = vunpack.c.l.b16 %v47
  %v134 = vunpack.c.l.b16 %v48
  %v135 = vunpack.c.l.b16 %v49
  %v136 = vunpack.c.l.b16 %v50
  %v137 = vunpack.c.l.b16 %v51
  %v138 = vunpack.c.l.b16 %v52
  %v139 = vunpack.c.l.b16 %v53
  %v140 = vunpack.c.l.b16 %v54
  %v141 = vunpack.c.l.b16 %v55
  %v142 = vpack.c.b16 %v111, %v110
  %v143 = vpack.c.b16 %v113, %v112
  %v144 = vpack.c.b16 %v115, %v114
  %v145 = vpack.c.b16 %v117, %v116
  %v146 = vpack.c.b16 %v119, %v118
  %v147 = vpack.c.b16 %v121, %v120
  %v148 = vpack.c.b16 %v123, %v122
  %v149 = vpack.c.b16 %v125, %v124
  %v150 = vpack.c.b16 %v127, %v126
  %v151 = vpack.c.b16 %v129, %v128
  %v152 = vpack.c.b16 %v131, %v130
  %v153 = vpack.c.b16 %v133, %v132
  %v154 = vpack.c.b16 %v135, %v134
  %v155 = vpack.c.b16 %v137, %v136
  %v156 = vpack.c.b16 %v139, %v138
  %v157 = vpack.c.b16 %v141, %v140
  %v190 = vunpack.c.l.b16 %v56
  %v191 = vunpack.c.l.b16 %v57
  %v192 = vunpack.c.l.b16 %v58
  %v193 = vunpack.c.l.b16 %v59
  %v194 = vunpack.c.l.b16 %v60
  %v195 = vunpack.c.l.b16 %v61
  %v196 = vunpack.c.l.b16 %v62
  %v197 = vunpack.c.l.b16 %v63
  %v198 = vunpack.c.l.b16 %v64
  %v199 = vunpack.c.l.b16 %v65
  %v200 = vunpack.c.l.b16 %v66
  %v201 = vunpack.c.l.b16 %v67
  %v202 = vunpack.c.l.b16 %v68
  %v203 = vunpack.c.l.b16 %v69
  %v204 = vunpack.c.l.b16 %v70
  %v205 = vunpack.c.l.b16 %v71
  %v206 = vpack.c.b16 %v191, %v190
  %v207 = vpack.c.b16 %v193, %v192
  %v208 = vpack.c.b16 %v195, %v194
  %v209 = vpack.c.b16 %v197, %v196
  %v210 = vpack.c.b16 %v199, %v198
  %v211 = vpack.c.b16 %v201, %v200
  %v212 = vpack.c.b16 %v203, %v202
  %v213 = vpack.c.b16 %v205, %v204
  %222 = vmatprep.subr.bf16.mxu0 0
  %223 = vmatpush1.bf16.msra.mxu0 %v206
  %224 = vmatprep.subr.bf16.mxu0 0
  %225 = vmatpush1.bf16.msra.mxu0 %v207
  %226 = vmatprep.subr.bf16.mxu0 0
  %227 = vmatpush1.bf16.msra.mxu0 %v208
  %228 = vmatprep.subr.bf16.mxu0 0
  %229 = vmatpush1.bf16.msra.mxu0 %v209
  %230 = vmatprep.subr.bf16.mxu0 0
  %231 = vmatpush1.bf16.msra.mxu0 %v210
  %232 = vmatprep.subr.bf16.mxu0 0
  %233 = vmatpush1.bf16.msra.mxu0 %v211
  %234 = vmatprep.subr.bf16.mxu0 0
  %235 = vmatpush1.bf16.msra.mxu0 %v212
  %236 = vmatprep.subr.bf16.mxu0 0
  %237 = vmatpush1.bf16.msra.mxu0 %v213
  %238 = vmatprep.subr.bf16.mxu0 0
  %239 = vmatpush1.bf16.msra.mxu0 0
  %240 = vmatprep.subr.bf16.mxu0 0
  %241 = vmatpush1.bf16.msra.mxu0 0
  %242 = vmatprep.subr.bf16.mxu0 0
  %243 = vmatpush1.bf16.msra.mxu0 0
  %244 = vmatprep.subr.bf16.mxu0 0
  %245 = vmatpush1.bf16.msra.mxu0 0
  %246 = vmatprep.subr.bf16.mxu0 0
  %247 = vmatpush1.bf16.msra.mxu0 0
  %248 = vmatprep.subr.bf16.mxu0 0
  %249 = vmatpush1.bf16.msra.mxu0 0
  %250 = vmatprep.subr.bf16.mxu0 0
  %251 = vmatpush1.bf16.msra.mxu0 0
  %252 = vmatprep.subr.bf16.mxu0 0
  %253 = vmatpush1.bf16.msra.mxu0 0
  %254 = vmatprep.mubr.bf16.mxu0 0
  %255 = vmatmul.mubr.bf16.gmra.mrb[0].mxu0 %v142
  %v256 = vpop.f32.mrb[0].mxu0
  %v257 = vadd.f32 %v77, %v256
  %v258 = vpop.f32.mrb[0].mxu0
  %v259 = vpop.f32.mrb[0].mxu0
  %v260 = vadd.f32 %v77, %v259
  %v261 = vpop.f32.mrb[0].mxu0
  %262 = vmatprep.mubr.bf16.mxu0 0
  %263 = vmatmul.mubr.bf16.gmra.mrb[0].mxu0 %v143
  %v264 = vpop.f32.mrb[0].mxu0
  %v265 = vadd.f32 %v77, %v264
  %v266 = vpop.f32.mrb[0].mxu0
  %v267 = vpop.f32.mrb[0].mxu0
  %v268 = vadd.f32 %v77, %v267
  %v269 = vpop.f32.mrb[0].mxu0
  %270 = vmatprep.mubr.bf16.mxu0 0
  %271 = vmatmul.mubr.bf16.gmra.mrb[0].mxu0 %v144
  %v272 = vpop.f32.mrb[0].mxu0
  %v273 = vadd.f32 %v77, %v272
  %v274 = vpop.f32.mrb[0].mxu0
  %v275 = vpop.f32.mrb[0].mxu0
  %v276 = vadd.f32 %v77, %v275
  %v277 = vpop.f32.mrb[0].mxu0
  %278 = vmatprep.mubr.bf16.mxu0 0
  %279 = vmatmul.mubr.bf16.gmra.mrb[0].mxu0 %v145
  %v280 = vpop.f32.mrb[0].mxu0
  %v281 = vadd.f32 %v77, %v280
  %v282 = vpop.f32.mrb[0].mxu0
  %v283 = vpop.f32.mrb[0].mxu0
  %v284 = vadd.f32 %v77, %v283
  %v285 = vpop.f32.mrb[0].mxu0
  %286 = vmatprep.mubr.bf16.mxu0 0
  %287 = vmatmul.mubr.bf16.gmra.mrb[0].mxu0 %v146
  %v288 = vpop.f32.mrb[0].mxu0
  %v289 = vadd.f32 %v77, %v288
  %v290 = vpop.f32.mrb[0].mxu0
  %v291 = vpop.f32.mrb[0].mxu0
  %v292 = vadd.f32 %v77, %v291
  %v293 = vpop.f32.mrb[0].mxu0
  %294 = vmatprep.mubr.bf16.mxu0 0
  %295 = vmatmul.mubr.bf16.gmra.mrb[0].mxu0 %v147
  %v296 = vpop.f32.mrb[0].mxu0
  %v297 = vadd.f32 %v77, %v296
  %v298 = vpop.f32.mrb[0].mxu0
  %v299 = vpop.f32.mrb[0].mxu0
  %v300 = vadd.f32 %v77, %v299
  %v301 = vpop.f32.mrb[0].mxu0
  %302 = vmatprep.mubr.bf16.mxu0 0
  %303 = vmatmul.mubr.bf16.gmra.mrb[0].mxu0 %v148
  %v304 = vpop.f32.mrb[0].mxu0
  %v305 = vadd.f32 %v77, %v304
  %v306 = vpop.f32.mrb[0].mxu0
  %v307 = vpop.f32.mrb[0].mxu0
  %v308 = vadd.f32 %v77, %v307
  %v309 = vpop.f32.mrb[0].mxu0
  %310 = vmatprep.mubr.bf16.mxu0 0
  %311 = vmatmul.mubr.bf16.gmra.mrb[0].mxu0 %v149
  %v312 = vpop.f32.mrb[0].mxu0
  %v313 = vadd.f32 %v77, %v312
  %v314 = vpop.f32.mrb[0].mxu0
  %v315 = vpop.f32.mrb[0].mxu0
  %v316 = vadd.f32 %v77, %v315
  %v317 = vpop.f32.mrb[0].mxu0
  %318 = vmatprep.mubr.bf16.mxu0 0
  %319 = vmatmul.mubr.bf16.gmra.mrb[0].mxu0 %v150
  %v320 = vpop.f32.mrb[0].mxu0
  %v321 = vadd.f32 %v77, %v320
  %v322 = vpop.f32.mrb[0].mxu0
  %v323 = vpop.f32.mrb[0].mxu0
  %v324 = vadd.f32 %v77, %v323
  %v325 = vpop.f32.mrb[0].mxu0
  %326 = vmatprep.mubr.bf16.mxu0 0
  %327 = vmatmul.mubr.bf16.gmra.mrb[0].mxu0 %v151
  %v328 = vpop.f32.mrb[0].mxu0
  %v329 = vadd.f32 %v77, %v328
  %v330 = vpop.f32.mrb[0].mxu0
  %v331 = vpop.f32.mrb[0].mxu0
  %v332 = vadd.f32 %v77, %v331
  %v333 = vpop.f32.mrb[0].mxu0
  %334 = vmatprep.mubr.bf16.mxu0 0
  %335 = vmatmul.mubr.bf16.gmra.mrb[0].mxu0 %v152
  %v336 = vpop.f32.mrb[0].mxu0
  %v337 = vadd.f32 %v77, %v336
  %v338 = vpop.f32.mrb[0].mxu0
  %v339 = vpop.f32.mrb[0].mxu0
  %v340 = vadd.f32 %v77, %v339
  %v341 = vpop.f32.mrb[0].mxu0
  %342 = vmatprep.mubr.bf16.mxu0 0
  %343 = vmatmul.mubr.bf16.gmra.mrb[0].mxu0 %v153
  %v344 = vpop.f32.mrb[0].mxu0
  %v345 = vadd.f32 %v77, %v344
  %v346 = vpop.f32.mrb[0].mxu0
  %v347 = vpop.f32.mrb[0].mxu0
  %v348 = vadd.f32 %v77, %v347
  %v349 = vpop.f32.mrb[0].mxu0
  %350 = vmatprep.mubr.bf16.mxu0 0
  %351 = vmatmul.mubr.bf16.gmra.mrb[0].mxu0 %v154
  %v352 = vpop.f32.mrb[0].mxu0
  %v353 = vadd.f32 %v77, %v352
  %v354 = vpop.f32.mrb[0].mxu0
  %v355 = vpop.f32.mrb[0].mxu0
  %v356 = vadd.f32 %v77, %v355
  %v357 = vpop.f32.mrb[0].mxu0
  %358 = vmatprep.mubr.bf16.mxu0 0
  %359 = vmatmul.mubr.bf16.gmra.mrb[0].mxu0 %v155
  %v360 = vpop.f32.mrb[0].mxu0
  %v361 = vadd.f32 %v77, %v360
  %v362 = vpop.f32.mrb[0].mxu0
  %v363 = vpop.f32.mrb[0].mxu0
  %v364 = vadd.f32 %v77, %v363
  %v365 = vpop.f32.mrb[0].mxu0
  %366 = vmatprep.mubr.bf16.mxu0 0
  %367 = vmatmul.mubr.bf16.gmra.mrb[0].mxu0 %v156
  %v368 = vpop.f32.mrb[0].mxu0
  %v369 = vadd.f32 %v77, %v368
  %v370 = vpop.f32.mrb[0].mxu0
  %v371 = vpop.f32.mrb[0].mxu0
  %v372 = vadd.f32 %v77, %v371
  %v373 = vpop.f32.mrb[0].mxu0
  %374 = vmatprep.mubr.bf16.mxu0 0
  %375 = vmatmul.mubr.bf16.gmra.mrb[0].mxu0 %v157
  %v376 = vpop.f32.mrb[0].mxu0
  %v377 = vadd.f32 %v77, %v376
  %v378 = vpop.f32.mrb[0].mxu0
  %v379 = vpop.f32.mrb[0].mxu0
  %v380 = vadd.f32 %v77, %v379
  %v381 = vpop.f32.mrb[0].mxu0
  %382 = vdwg.mxu0
  %v383 = vld [vmem:[%s3] sm:$0xf]
  %v384 = vld [vmem:[%s3 + $0x4] sm:$0xf]
  %v385 = vld [vmem:[%s3 + $0x8] sm:$0xf]
  %v386 = vld [vmem:[%s3 + $0xc] sm:$0xf]
  %v387 = vld [vmem:[%s3 + $0x10] sm:$0xf]
  %v388 = vld [vmem:[%s3 + $0x14] sm:$0xf]
  %v389 = vld [vmem:[%s3 + $0x18] sm:$0xf]
  %v390 = vld [vmem:[%s3 + $0x1c] sm:$0xf]
  %v391 = vld [vmem:[%s3 + $0x20] sm:$0xf]
  %v392 = vld [vmem:[%s3 + $0x24] sm:$0xf]
  %v393 = vld [vmem:[%s3 + $0x28] sm:$0xf]
  %v394 = vld [vmem:[%s3 + $0x2c] sm:$0xf]
  %v395 = vld [vmem:[%s3 + $0x30] sm:$0xf]
  %v396 = vld [vmem:[%s3 + $0x34] sm:$0xf]
  %v397 = vld [vmem:[%s3 + $0x38] sm:$0xf]
  %v398 = vld [vmem:[%s3 + $0x3c] sm:$0xf]
  %v399 = vld [vmem:[%s3 + $0x40] sm:$0xf]
  %v400 = vld [vmem:[%s3 + $0x44] sm:$0xf]
  %v401 = vld [vmem:[%s3 + $0x48] sm:$0xf]
  %v402 = vld [vmem:[%s3 + $0x4c] sm:$0xf]
  %v403 = vld [vmem:[%s3 + $0x50] sm:$0xf]
  %v404 = vld [vmem:[%s3 + $0x54] sm:$0xf]
  %v405 = vld [vmem:[%s3 + $0x58] sm:$0xf]
  %v406 = vld [vmem:[%s3 + $0x5c] sm:$0xf]
  %v407 = vld [vmem:[%s3 + $0x60] sm:$0xf]
  %v408 = vld [vmem:[%s3 + $0x64] sm:$0xf]
  %v409 = vld [vmem:[%s3 + $0x68] sm:$0xf]
  %v410 = vld [vmem:[%s3 + $0x6c] sm:$0xf]
  %v411 = vld [vmem:[%s3 + $0x70] sm:$0xf]
  %v412 = vld [vmem:[%s3 + $0x74] sm:$0xf]
  %v413 = vld [vmem:[%s3 + $0x78] sm:$0xf]
  %v414 = vld [vmem:[%s3 + $0x7c] sm:$0xf]
  %v415 = vunpack.c.l.bf16 %v383
  %v416 = vunpack.c.l.bf16 %v384
  %v417 = vunpack.c.l.bf16 %v385
  %v418 = vunpack.c.l.bf16 %v386
  %v419 = vunpack.c.l.bf16 %v387
  %v420 = vunpack.c.l.bf16 %v388
  %v421 = vunpack.c.l.bf16 %v389
  %v422 = vunpack.c.l.bf16 %v390
  %v423 = vunpack.c.l.bf16 %v391
  %v424 = vunpack.c.l.bf16 %v392
  %v425 = vunpack.c.l.bf16 %v393
  %v426 = vunpack.c.l.bf16 %v394
  %v427 = vunpack.c.l.bf16 %v395
  %v428 = vunpack.c.l.bf16 %v396
  %v429 = vunpack.c.l.bf16 %v397
  %v430 = vunpack.c.l.bf16 %v398
  %v431 = vunpack.c.l.bf16 %v399
  %v432 = vunpack.c.l.bf16 %v400
  %v433 = vunpack.c.l.bf16 %v401
  %v434 = vunpack.c.l.bf16 %v402
  %v435 = vunpack.c.l.bf16 %v403
  %v436 = vunpack.c.l.bf16 %v404
  %v437 = vunpack.c.l.bf16 %v405
  %v438 = vunpack.c.l.bf16 %v406
  %v439 = vunpack.c.l.bf16 %v407
  %v440 = vunpack.c.l.bf16 %v408
  %v441 = vunpack.c.l.bf16 %v409
  %v442 = vunpack.c.l.bf16 %v410
  %v443 = vunpack.c.l.bf16 %v411
  %v444 = vunpack.c.l.bf16 %v412
  %v445 = vunpack.c.l.bf16 %v413
  %v446 = vunpack.c.l.bf16 %v414
  %v447 = vadd.f32 %v257, %v415
  %v448 = vadd.f32 %v260, %v416
  %v449 = vadd.f32 %v265, %v417
  %v450 = vadd.f32 %v268, %v418
  %v451 = vadd.f32 %v273, %v419
  %v452 = vadd.f32 %v276, %v420
  %v453 = vadd.f32 %v281, %v421
  %v454 = vadd.f32 %v284, %v422
  %v455 = vadd.f32 %v289, %v423
  %v456 = vadd.f32 %v292, %v424
  %v457 = vadd.f32 %v297, %v425
  %v458 = vadd.f32 %v300, %v426
  %v459 = vadd.f32 %v305, %v427
  %v460 = vadd.f32 %v308, %v428
  %v461 = vadd.f32 %v313, %v429
  %v462 = vadd.f32 %v316, %v430
  %v463 = vadd.f32 %v321, %v431
  %v464 = vadd.f32 %v324, %v432
  %v465 = vadd.f32 %v329, %v433
  %v466 = vadd.f32 %v332, %v434
  %v467 = vadd.f32 %v337, %v435
  %v468 = vadd.f32 %v340, %v436
  %v469 = vadd.f32 %v345, %v437
  %v470 = vadd.f32 %v348, %v438
  %v471 = vadd.f32 %v353, %v439
  %v472 = vadd.f32 %v356, %v440
  %v473 = vadd.f32 %v361, %v441
  %v474 = vadd.f32 %v364, %v442
  %v475 = vadd.f32 %v369, %v443
  %v476 = vadd.f32 %v372, %v444
  %v477 = vadd.f32 %v377, %v445
  %v478 = vadd.f32 %v380, %v446
  %479 = vadd.xlane.f32.xlu0 %v447
  %v480 = vpop.xlane.xlu0 %479
  %481 = vadd.xlane.f32.xlu0 %v448
  %v482 = vpop.xlane.xlu0 %481
  %483 = vadd.xlane.f32.xlu0 %v449
  %v484 = vpop.xlane.xlu0 %483
  %485 = vadd.xlane.f32.xlu0 %v450
  %v486 = vpop.xlane.xlu0 %485
  %487 = vadd.xlane.f32.xlu0 %v451
  %v488 = vpop.xlane.xlu0 %487
  %489 = vadd.xlane.f32.xlu0 %v452
  %v490 = vpop.xlane.xlu0 %489
  %491 = vadd.xlane.f32.xlu0 %v453
  %v492 = vpop.xlane.xlu0 %491
  %493 = vadd.xlane.f32.xlu0 %v454
  %v494 = vpop.xlane.xlu0 %493
  %495 = vadd.xlane.f32.xlu0 %v455
  %v496 = vpop.xlane.xlu0 %495
  %497 = vadd.xlane.f32.xlu0 %v456
  %v498 = vpop.xlane.xlu0 %497
  %499 = vadd.xlane.f32.xlu0 %v457
  %v500 = vpop.xlane.xlu0 %499
  %501 = vadd.xlane.f32.xlu0 %v458
  %v502 = vpop.xlane.xlu0 %501
  %503 = vadd.xlane.f32.xlu0 %v459
  %v504 = vpop.xlane.xlu0 %503
  %505 = vadd.xlane.f32.xlu0 %v460
  %v506 = vpop.xlane.xlu0 %505
  %507 = vadd.xlane.f32.xlu0 %v461
  %v508 = vpop.xlane.xlu0 %507
  %509 = vadd.xlane.f32.xlu0 %v462
  %v510 = vpop.xlane.xlu0 %509
  %511 = vadd.xlane.f32.xlu0 %v463
  %v512 = vpop.xlane.xlu0 %511
  %513 = vadd.xlane.f32.xlu0 %v464
  %v514 = vpop.xlane.xlu0 %513
  %515 = vadd.xlane.f32.xlu0 %v465
  %v516 = vpop.xlane.xlu0 %515
  %517 = vadd.xlane.f32.xlu0 %v466
  %v518 = vpop.xlane.xlu0 %517
  %519 = vadd.xlane.f32.xlu0 %v467
  %v520 = vpop.xlane.xlu0 %519
  %521 = vadd.xlane.f32.xlu0 %v468
  %v522 = vpop.xlane.xlu0 %521
  %523 = vadd.xlane.f32.xlu0 %v469
  %v524 = vpop.xlane.xlu0 %523
  %525 = vadd.xlane.f32.xlu0 %v470
  %v526 = vpop.xlane.xlu0 %525
  %527 = vadd.xlane.f32.xlu0 %v471
  %v528 = vpop.xlane.xlu0 %527
  %529 = vadd.xlane.f32.xlu0 %v472
  %v530 = vpop.xlane.xlu0 %529
  %531 = vadd.xlane.f32.xlu0 %v473
  %v532 = vpop.xlane.xlu0 %531
  %533 = vadd.xlane.f32.xlu0 %v474
  %v534 = vpop.xlane.xlu0 %533
  %535 = vadd.xlane.f32.xlu0 %v475
  %v536 = vpop.xlane.xlu0 %535
  %537 = vadd.xlane.f32.xlu0 %v476
  %v538 = vpop.xlane.xlu0 %537
  %539 = vadd.xlane.f32.xlu0 %v477
  %v540 = vpop.xlane.xlu0 %539
  %541 = vadd.xlane.f32.xlu0 %v478
  %v542 = vpop.xlane.xlu0 %541
  %v543 = vrcp.pop 128.0
  %v544 = vmul.f32 %v480, %v543
  %v545 = vmul.f32 %v482, %v543
  %v546 = vmul.f32 %v484, %v543
  %v547 = vmul.f32 %v486, %v543
  %v548 = vmul.f32 %v488, %v543
  %v549 = vmul.f32 %v490, %v543
  %v550 = vmul.f32 %v492, %v543
  %v551 = vmul.f32 %v494, %v543
  %v552 = vmul.f32 %v496, %v543
  %v553 = vmul.f32 %v498, %v543
  %v554 = vmul.f32 %v500, %v543
  %v555 = vmul.f32 %v502, %v543
  %v556 = vmul.f32 %v504, %v543
  %v557 = vmul.f32 %v506, %v543
  %v558 = vmul.f32 %v508, %v543
  %v559 = vmul.f32 %v510, %v543
  %v560 = vmul.f32 %v512, %v543
  %v561 = vmul.f32 %v514, %v543
  %v562 = vmul.f32 %v516, %v543
  %v563 = vmul.f32 %v518, %v543
  %v564 = vmul.f32 %v520, %v543
  %v565 = vmul.f32 %v522, %v543
  %v566 = vmul.f32 %v524, %v543
  %v567 = vmul.f32 %v526, %v543
  %v568 = vmul.f32 %v528, %v543
  %v569 = vmul.f32 %v530, %v543
  %v570 = vmul.f32 %v532, %v543
  %v571 = vmul.f32 %v534, %v543
  %v572 = vmul.f32 %v536, %v543
  %v573 = vmul.f32 %v538, %v543
  %v574 = vmul.f32 %v540, %v543
  %v575 = vmul.f32 %v542, %v543
  %v576 = vsub.f32 %v447, %v544
  %v577 = vsub.f32 %v448, %v545
  %v578 = vsub.f32 %v449, %v546
  %v579 = vsub.f32 %v450, %v547
  %v580 = vsub.f32 %v451, %v548
  %v581 = vsub.f32 %v452, %v549
  %v582 = vsub.f32 %v453, %v550
  %v583 = vsub.f32 %v454, %v551
  %v584 = vsub.f32 %v455, %v552
  %v585 = vsub.f32 %v456, %v553
  %v586 = vsub.f32 %v457, %v554
  %v587 = vsub.f32 %v458, %v555
  %v588 = vsub.f32 %v459, %v556
  %v589 = vsub.f32 %v460, %v557
  %v590 = vsub.f32 %v461, %v558
  %v591 = vsub.f32 %v462, %v559
  %v592 = vsub.f32 %v463, %v560
  %v593 = vsub.f32 %v464, %v561
  %v594 = vsub.f32 %v465, %v562
  %v595 = vsub.f32 %v466, %v563
  %v596 = vsub.f32 %v467, %v564
  %v597 = vsub.f32 %v468, %v565
  %v598 = vsub.f32 %v469, %v566
  %v599 = vsub.f32 %v470, %v567
  %v600 = vsub.f32 %v471, %v568
  %v601 = vsub.f32 %v472, %v569
  %v602 = vsub.f32 %v473, %v570
  %v603 = vsub.f32 %v474, %v571
  %v604 = vsub.f32 %v475, %v572
  %v605 = vsub.f32 %v476, %v573
  %v606 = vsub.f32 %v477, %v574
  %v607 = vsub.f32 %v478, %v575
  %v608 = vmul.f32 %v576, %v576
  %v609 = vmul.f32 %v577, %v577
  %v610 = vmul.f32 %v578, %v578
  %v611 = vmul.f32 %v579, %v579
  %v612 = vmul.f32 %v580, %v580
  %v613 = vmul.f32 %v581, %v581
  %v614 = vmul.f32 %v582, %v582
  %v615 = vmul.f32 %v583, %v583
  %v616 = vmul.f32 %v584, %v584
  %v617 = vmul.f32 %v585, %v585
  %v618 = vmul.f32 %v586, %v586
  %v619 = vmul.f32 %v587, %v587
  %v620 = vmul.f32 %v588, %v588
  %v621 = vmul.f32 %v589, %v589
  %v622 = vmul.f32 %v590, %v590
  %v623 = vmul.f32 %v591, %v591
  %v624 = vmul.f32 %v592, %v592
  %v625 = vmul.f32 %v593, %v593
  %v626 = vmul.f32 %v594, %v594
  %v627 = vmul.f32 %v595, %v595
  %v628 = vmul.f32 %v596, %v596
  %v629 = vmul.f32 %v597, %v597
  %v630 = vmul.f32 %v598, %v598
  %v631 = vmul.f32 %v599, %v599
  %v632 = vmul.f32 %v600, %v600
  %v633 = vmul.f32 %v601, %v601
  %v634 = vmul.f32 %v602, %v602
  %v635 = vmul.f32 %v603, %v603
  %v636 = vmul.f32 %v604, %v604
  %v637 = vmul.f32 %v605, %v605
  %v638 = vmul.f32 %v606, %v606
  %v639 = vmul.f32 %v607, %v607
  %640 = vadd.xlane.f32.xlu0 %v608
  %v641 = vpop.xlane.xlu0 %640
  %642 = vadd.xlane.f32.xlu0 %v609
  %v643 = vpop.xlane.xlu0 %642
  %644 = vadd.xlane.f32.xlu0 %v610
  %v645 = vpop.xlane.xlu0 %644
  %646 = vadd.xlane.f32.xlu0 %v611
  %v647 = vpop.xlane.xlu0 %646
  %648 = vadd.xlane.f32.xlu0 %v612
  %v649 = vpop.xlane.xlu0 %648
  %650 = vadd.xlane.f32.xlu0 %v613
  %v651 = vpop.xlane.xlu0 %650
  %652 = vadd.xlane.f32.xlu0 %v614
  %v653 = vpop.xlane.xlu0 %652
  %654 = vadd.xlane.f32.xlu0 %v615
  %v655 = vpop.xlane.xlu0 %654
  %656 = vadd.xlane.f32.xlu0 %v616
  %v657 = vpop.xlane.xlu0 %656
  %658 = vadd.xlane.f32.xlu0 %v617
  %v659 = vpop.xlane.xlu0 %658
  %660 = vadd.xlane.f32.xlu0 %v618
  %v661 = vpop.xlane.xlu0 %660
  %662 = vadd.xlane.f32.xlu0 %v619
  %v663 = vpop.xlane.xlu0 %662
  %664 = vadd.xlane.f32.xlu0 %v620
  %v665 = vpop.xlane.xlu0 %664
  %666 = vadd.xlane.f32.xlu0 %v621
  %v667 = vpop.xlane.xlu0 %666
  %668 = vadd.xlane.f32.xlu0 %v622
  %v669 = vpop.xlane.xlu0 %668
  %670 = vadd.xlane.f32.xlu0 %v623
  %v671 = vpop.xlane.xlu0 %670
  %672 = vadd.xlane.f32.xlu0 %v624
  %v673 = vpop.xlane.xlu0 %672
  %674 = vadd.xlane.f32.xlu0 %v625
  %v675 = vpop.xlane.xlu0 %674
  %676 = vadd.xlane.f32.xlu0 %v626
  %v677 = vpop.xlane.xlu0 %676
  %678 = vadd.xlane.f32.xlu0 %v627
  %v679 = vpop.xlane.xlu0 %678
  %680 = vadd.xlane.f32.xlu0 %v628
  %v681 = vpop.xlane.xlu0 %680
  %682 = vadd.xlane.f32.xlu0 %v629
  %v683 = vpop.xlane.xlu0 %682
  %684 = vadd.xlane.f32.xlu0 %v630
  %v685 = vpop.xlane.xlu0 %684
  %686 = vadd.xlane.f32.xlu0 %v631
  %v687 = vpop.xlane.xlu0 %686
  %688 = vadd.xlane.f32.xlu0 %v632
  %v689 = vpop.xlane.xlu0 %688
  %690 = vadd.xlane.f32.xlu0 %v633
  %v691 = vpop.xlane.xlu0 %690
  %692 = vadd.xlane.f32.xlu0 %v634
  %v693 = vpop.xlane.xlu0 %692
  %694 = vadd.xlane.f32.xlu0 %v635
  %v695 = vpop.xlane.xlu0 %694
  %696 = vadd.xlane.f32.xlu0 %v636
  %v697 = vpop.xlane.xlu0 %696
  %698 = vadd.xlane.f32.xlu0 %v637
  %v699 = vpop.xlane.xlu0 %698
  %700 = vadd.xlane.f32.xlu0 %v638
  %v701 = vpop.xlane.xlu0 %700
  %702 = vadd.xlane.f32.xlu0 %v639
  %v703 = vpop.xlane.xlu0 %702
  %v704 = vmul.f32 %v641, %v543
  %v705 = vmul.f32 %v643, %v543
  %v706 = vmul.f32 %v645, %v543
  %v707 = vmul.f32 %v647, %v543
  %v708 = vmul.f32 %v649, %v543
  %v709 = vmul.f32 %v651, %v543
  %v710 = vmul.f32 %v653, %v543
  %v711 = vmul.f32 %v655, %v543
  %v712 = vmul.f32 %v657, %v543
  %v713 = vmul.f32 %v659, %v543
  %v714 = vmul.f32 %v661, %v543
  %v715 = vmul.f32 %v663, %v543
  %v716 = vmul.f32 %v665, %v543
  %v717 = vmul.f32 %v667, %v543
  %v718 = vmul.f32 %v669, %v543
  %v719 = vmul.f32 %v671, %v543
  %v720 = vmul.f32 %v673, %v543
  %v721 = vmul.f32 %v675, %v543
  %v722 = vmul.f32 %v677, %v543
  %v723 = vmul.f32 %v679, %v543
  %v724 = vmul.f32 %v681, %v543
  %v725 = vmul.f32 %v683, %v543
  %v726 = vmul.f32 %v685, %v543
  %v727 = vmul.f32 %v687, %v543
  %v728 = vmul.f32 %v689, %v543
  %v729 = vmul.f32 %v691, %v543
  %v730 = vmul.f32 %v693, %v543
  %v731 = vmul.f32 %v695, %v543
  %v732 = vmul.f32 %v697, %v543
  %v733 = vmul.f32 %v699, %v543
  %v734 = vmul.f32 %v701, %v543
  %v735 = vmul.f32 %v703, %v543
  %v736 = vadd.f32 %v704, 1e-05
  %v737 = vadd.f32 %v705, 1e-05
  %v738 = vadd.f32 %v706, 1e-05
  %v739 = vadd.f32 %v707, 1e-05
  %v740 = vadd.f32 %v708, 1e-05
  %v741 = vadd.f32 %v709, 1e-05
  %v742 = vadd.f32 %v710, 1e-05
  %v743 = vadd.f32 %v711, 1e-05
  %v744 = vadd.f32 %v712, 1e-05
  %v745 = vadd.f32 %v713, 1e-05
  %v746 = vadd.f32 %v714, 1e-05
  %v747 = vadd.f32 %v715, 1e-05
  %v748 = vadd.f32 %v716, 1e-05
  %v749 = vadd.f32 %v717, 1e-05
  %v750 = vadd.f32 %v718, 1e-05
  %v751 = vadd.f32 %v719, 1e-05
  %v752 = vadd.f32 %v720, 1e-05
  %v753 = vadd.f32 %v721, 1e-05
  %v754 = vadd.f32 %v722, 1e-05
  %v755 = vadd.f32 %v723, 1e-05
  %v756 = vadd.f32 %v724, 1e-05
  %v757 = vadd.f32 %v725, 1e-05
  %v758 = vadd.f32 %v726, 1e-05
  %v759 = vadd.f32 %v727, 1e-05
  %v760 = vadd.f32 %v728, 1e-05
  %v761 = vadd.f32 %v729, 1e-05
  %v762 = vadd.f32 %v730, 1e-05
  %v763 = vadd.f32 %v731, 1e-05
  %v764 = vadd.f32 %v732, 1e-05
  %v765 = vadd.f32 %v733, 1e-05
  %v766 = vadd.f32 %v734, 1e-05
  %v767 = vadd.f32 %v735, 1e-05
  %v768 = vrsqrt.pop %v736
  %v769 = vrsqrt.pop %v737
  %v770 = vrsqrt.pop %v738
  %v771 = vrsqrt.pop %v739
  %v772 = vrsqrt.pop %v740
  %v773 = vrsqrt.pop %v741
  %v774 = vrsqrt.pop %v742
  %v775 = vrsqrt.pop %v743
  %v776 = vrsqrt.pop %v744
  %v777 = vrsqrt.pop %v745
  %v778 = vrsqrt.pop %v746
  %v779 = vrsqrt.pop %v747
  %v780 = vrsqrt.pop %v748
  %v781 = vrsqrt.pop %v749
  %v782 = vrsqrt.pop %v750
  %v783 = vrsqrt.pop %v751
  %v784 = vrsqrt.pop %v752
  %v785 = vrsqrt.pop %v753
  %v786 = vrsqrt.pop %v754
  %v787 = vrsqrt.pop %v755
  %v788 = vrsqrt.pop %v756
  %v789 = vrsqrt.pop %v757
  %v790 = vrsqrt.pop %v758
  %v791 = vrsqrt.pop %v759
  %v792 = vrsqrt.pop %v760
  %v793 = vrsqrt.pop %v761
  %v794 = vrsqrt.pop %v762
  %v795 = vrsqrt.pop %v763
  %v796 = vrsqrt.pop %v764
  %v797 = vrsqrt.pop %v765
  %v798 = vrsqrt.pop %v766
  %v799 = vrsqrt.pop %v767
  %v800 = vmul.f32 %v576, %v768
  %v801 = vmul.f32 %v577, %v769
  %v802 = vmul.f32 %v578, %v770
  %v803 = vmul.f32 %v579, %v771
  %v804 = vmul.f32 %v580, %v772
  %v805 = vmul.f32 %v581, %v773
  %v806 = vmul.f32 %v582, %v774
  %v807 = vmul.f32 %v583, %v775
  %v808 = vmul.f32 %v584, %v776
  %v809 = vmul.f32 %v585, %v777
  %v810 = vmul.f32 %v586, %v778
  %v811 = vmul.f32 %v587, %v779
  %v812 = vmul.f32 %v588, %v780
  %v813 = vmul.f32 %v589, %v781
  %v814 = vmul.f32 %v590, %v782
  %v815 = vmul.f32 %v591, %v783
  %v816 = vmul.f32 %v592, %v784
  %v817 = vmul.f32 %v593, %v785
  %v818 = vmul.f32 %v594, %v786
  %v819 = vmul.f32 %v595, %v787
  %v820 = vmul.f32 %v596, %v788
  %v821 = vmul.f32 %v597, %v789
  %v822 = vmul.f32 %v598, %v790
  %v823 = vmul.f32 %v599, %v791
  %v824 = vmul.f32 %v600, %v792
  %v825 = vmul.f32 %v601, %v793
  %v826 = vmul.f32 %v602, %v794
  %v827 = vmul.f32 %v603, %v795
  %v828 = vmul.f32 %v604, %v796
  %v829 = vmul.f32 %v605, %v797
  %v830 = vmul.f32 %v606, %v798
  %v831 = vmul.f32 %v607, %v799
  %v832 = vld [vmem:[%s4] sm:$0x1]
  %v833 = vunpack.c.l.bf16 %v832
  %v834 = vlaneseq
  %v835 = vshrl.u32 %v834, 7
  %v836 = vsub.s32 0, %v835
  %v837 = vrot.slane %v833, %v836
  %v838 = vmul.f32 %v800, %v837
  %v839 = vmul.f32 %v801, %v837
  %v840 = vmul.f32 %v802, %v837
  %v841 = vmul.f32 %v803, %v837
  %v842 = vmul.f32 %v804, %v837
  %v843 = vmul.f32 %v805, %v837
  %v844 = vmul.f32 %v806, %v837
  %v845 = vmul.f32 %v807, %v837
  %v846 = vmul.f32 %v808, %v837
  %v847 = vmul.f32 %v809, %v837
  %v848 = vmul.f32 %v810, %v837
  %v849 = vmul.f32 %v811, %v837
  %v850 = vmul.f32 %v812, %v837
  %v851 = vmul.f32 %v813, %v837
  %v852 = vmul.f32 %v814, %v837
  %v853 = vmul.f32 %v815, %v837
  %v854 = vmul.f32 %v816, %v837
  %v855 = vmul.f32 %v817, %v837
  %v856 = vmul.f32 %v818, %v837
  %v857 = vmul.f32 %v819, %v837
  %v858 = vmul.f32 %v820, %v837
  %v859 = vmul.f32 %v821, %v837
  %v860 = vmul.f32 %v822, %v837
  %v861 = vmul.f32 %v823, %v837
  %v862 = vmul.f32 %v824, %v837
  %v863 = vmul.f32 %v825, %v837
  %v864 = vmul.f32 %v826, %v837
  %v865 = vmul.f32 %v827, %v837
  %v866 = vmul.f32 %v828, %v837
  %v867 = vmul.f32 %v829, %v837
  %v868 = vmul.f32 %v830, %v837
  %v869 = vmul.f32 %v831, %v837
  %v870 = vld [vmem:[%s5] sm:$0x1]
  %v871 = vunpack.c.l.bf16 %v870
  %v872 = vlaneseq
  %v873 = vshrl.u32 %v872, 7
  %v874 = vsub.s32 0, %v873
  %v875 = vrot.slane %v871, %v874
  %v876 = vadd.f32 %v838, %v875
  %v877 = vadd.f32 %v839, %v875
  %v878 = vadd.f32 %v840, %v875
  %v879 = vadd.f32 %v841, %v875
  %v880 = vadd.f32 %v842, %v875
  %v881 = vadd.f32 %v843, %v875
  %v882 = vadd.f32 %v844, %v875
  %v883 = vadd.f32 %v845, %v875
  %v884 = vadd.f32 %v846, %v875
  %v885 = vadd.f32 %v847, %v875
  %v886 = vadd.f32 %v848, %v875
  %v887 = vadd.f32 %v849, %v875
  %v888 = vadd.f32 %v850, %v875
  %v889 = vadd.f32 %v851, %v875
  %v890 = vadd.f32 %v852, %v875
  %v891 = vadd.f32 %v853, %v875
  %v892 = vadd.f32 %v854, %v875
  %v893 = vadd.f32 %v855, %v875
  %v894 = vadd.f32 %v856, %v875
  %v895 = vadd.f32 %v857, %v875
  %v896 = vadd.f32 %v858, %v875
  %v897 = vadd.f32 %v859, %v875
  %v898 = vadd.f32 %v860, %v875
  %v899 = vadd.f32 %v861, %v875
  %v900 = vadd.f32 %v862, %v875
  %v901 = vadd.f32 %v863, %v875
  %v902 = vadd.f32 %v864, %v875
  %v903 = vadd.f32 %v865, %v875
  %v904 = vadd.f32 %v866, %v875
  %v905 = vadd.f32 %v867, %v875
  %v906 = vadd.f32 %v868, %v875
  %v907 = vadd.f32 %v869, %v875
  %v908 = vpack.c.bf16 %v877, %v876
  %v909 = vpack.c.bf16 %v879, %v878
  %v910 = vpack.c.bf16 %v881, %v880
  %v911 = vpack.c.bf16 %v883, %v882
  %v912 = vpack.c.bf16 %v885, %v884
  %v913 = vpack.c.bf16 %v887, %v886
  %v914 = vpack.c.bf16 %v889, %v888
  %v915 = vpack.c.bf16 %v891, %v890
  %v916 = vpack.c.bf16 %v893, %v892
  %v917 = vpack.c.bf16 %v895, %v894
  %v918 = vpack.c.bf16 %v897, %v896
  %v919 = vpack.c.bf16 %v899, %v898
  %v920 = vpack.c.bf16 %v901, %v900
  %v921 = vpack.c.bf16 %v903, %v902
  %v922 = vpack.c.bf16 %v905, %v904
  %v923 = vpack.c.bf16 %v907, %v906
  %v940 = vunpack.c.l.b16 %v908
  %v941 = vunpack.c.h.b16 %v908
  %v942 = vunpack.c.l.b16 %v909
  %v943 = vunpack.c.h.b16 %v909
  %v944 = vunpack.c.l.b16 %v910
  %v945 = vunpack.c.h.b16 %v910
  %v946 = vunpack.c.l.b16 %v911
  %v947 = vunpack.c.h.b16 %v911
  %v948 = vunpack.c.l.b16 %v912
  %v949 = vunpack.c.h.b16 %v912
  %v950 = vunpack.c.l.b16 %v913
  %v951 = vunpack.c.h.b16 %v913
  %v952 = vunpack.c.l.b16 %v914
  %v953 = vunpack.c.h.b16 %v914
  %v954 = vunpack.c.l.b16 %v915
  %v955 = vunpack.c.h.b16 %v915
  %v956 = vunpack.c.l.b16 %v916
  %v957 = vunpack.c.h.b16 %v916
  %v958 = vunpack.c.l.b16 %v917
  %v959 = vunpack.c.h.b16 %v917
  %v960 = vunpack.c.l.b16 %v918
  %v961 = vunpack.c.h.b16 %v918
  %v962 = vunpack.c.l.b16 %v919
  %v963 = vunpack.c.h.b16 %v919
  %v964 = vunpack.c.l.b16 %v920
  %v965 = vunpack.c.h.b16 %v920
  %v966 = vunpack.c.l.b16 %v921
  %v967 = vunpack.c.h.b16 %v921
  %v968 = vunpack.c.l.b16 %v922
  %v969 = vunpack.c.h.b16 %v922
  %v970 = vunpack.c.l.b16 %v923
  %v971 = vunpack.c.h.b16 %v923
  %v972 = vpack.c.b16 %v940, %v940
  %v973 = vpack.c.b16 %v941, %v941
  %v974 = vpack.c.b16 %v942, %v942
  %v975 = vpack.c.b16 %v943, %v943
  %v976 = vpack.c.b16 %v944, %v944
  %v977 = vpack.c.b16 %v945, %v945
  %v978 = vpack.c.b16 %v946, %v946
  %v979 = vpack.c.b16 %v947, %v947
  %v980 = vpack.c.b16 %v948, %v948
  %v981 = vpack.c.b16 %v949, %v949
  %v982 = vpack.c.b16 %v950, %v950
  %v983 = vpack.c.b16 %v951, %v951
  %v984 = vpack.c.b16 %v952, %v952
  %v985 = vpack.c.b16 %v953, %v953
  %v986 = vpack.c.b16 %v954, %v954
  %v987 = vpack.c.b16 %v955, %v955
  %v988 = vpack.c.b16 %v956, %v956
  %v989 = vpack.c.b16 %v957, %v957
  %v990 = vpack.c.b16 %v958, %v958
  %v991 = vpack.c.b16 %v959, %v959
  %v992 = vpack.c.b16 %v960, %v960
  %v993 = vpack.c.b16 %v961, %v961
  %v994 = vpack.c.b16 %v962, %v962
  %v995 = vpack.c.b16 %v963, %v963
  %v996 = vpack.c.b16 %v964, %v964
  %v997 = vpack.c.b16 %v965, %v965
  %v998 = vpack.c.b16 %v966, %v966
  %v999 = vpack.c.b16 %v967, %v967
  %v1000 = vpack.c.b16 %v968, %v968
  %v1001 = vpack.c.b16 %v969, %v969
  %v1002 = vpack.c.b16 %v970, %v970
  %v1003 = vpack.c.b16 %v971, %v971
  %1036 = vst [vmem:[%s6] sm:$0xf] %v972
  %1037 = vst [vmem:[%s6 + $0x4] sm:$0xf] %v973
  %1038 = vst [vmem:[%s6 + $0x8] sm:$0xf] %v974
  %1039 = vst [vmem:[%s6 + $0xc] sm:$0xf] %v975
  %1040 = vst [vmem:[%s6 + $0x10] sm:$0xf] %v976
  %1041 = vst [vmem:[%s6 + $0x14] sm:$0xf] %v977
  %1042 = vst [vmem:[%s6 + $0x18] sm:$0xf] %v978
  %1043 = vst [vmem:[%s6 + $0x1c] sm:$0xf] %v979
  %1044 = vst [vmem:[%s6 + $0x20] sm:$0xf] %v980
  %1045 = vst [vmem:[%s6 + $0x24] sm:$0xf] %v981
  %1046 = vst [vmem:[%s6 + $0x28] sm:$0xf] %v982
  %1047 = vst [vmem:[%s6 + $0x2c] sm:$0xf] %v983
  %1048 = vst [vmem:[%s6 + $0x30] sm:$0xf] %v984
  %1049 = vst [vmem:[%s6 + $0x34] sm:$0xf] %v985
  %1050 = vst [vmem:[%s6 + $0x38] sm:$0xf] %v986
  %1051 = vst [vmem:[%s6 + $0x3c] sm:$0xf] %v987
  %1052 = vst [vmem:[%s6 + $0x40] sm:$0xf] %v988
  %1053 = vst [vmem:[%s6 + $0x44] sm:$0xf] %v989
  %1054 = vst [vmem:[%s6 + $0x48] sm:$0xf] %v990
  %1055 = vst [vmem:[%s6 + $0x4c] sm:$0xf] %v991
  %1056 = vst [vmem:[%s6 + $0x50] sm:$0xf] %v992
  %1057 = vst [vmem:[%s6 + $0x54] sm:$0xf] %v993
  %1058 = vst [vmem:[%s6 + $0x58] sm:$0xf] %v994
  %1059 = vst [vmem:[%s6 + $0x5c] sm:$0xf] %v995
  %1060 = vst [vmem:[%s6 + $0x60] sm:$0xf] %v996
  %1061 = vst [vmem:[%s6 + $0x64] sm:$0xf] %v997
  %1062 = vst [vmem:[%s6 + $0x68] sm:$0xf] %v998
  %1063 = vst [vmem:[%s6 + $0x6c] sm:$0xf] %v999
  %1064 = vst [vmem:[%s6 + $0x70] sm:$0xf] %v1000
  %1065 = vst [vmem:[%s6 + $0x74] sm:$0xf] %v1001
  %1066 = vst [vmem:[%s6 + $0x78] sm:$0xf] %v1002
  %1067 = vst [vmem:[%s6 + $0x7c] sm:$0xf] %v1003
  // Predicated region
  $region26: #{transformer_block.7} parent=0 // pred_check
    _
  $region27: #{transformer_block.7} parent=0 // pred_check_branch
    %1069 = sbr.rel (0) target = $region29
  $region28: #{transformer_block.7} parent=0 // pred_region
    _
  $region29: #{transformer_block.7} parent=0 // pred_fallthru
    _
  // Predicated region
  $region30: #{transformer_block.7} parent=0 // pred_check
    _
  $region31: #{transformer_block.7} parent=0 // pred_check_branch
    %1071 = sbr.rel (0) target = $region33
  $region32: #{transformer_block.7} parent=0 // pred_region
    _
  $region33: #{transformer_block.7} parent=0 // pred_fallthru
    _

// kernel: transformer_block.8
$region0: #{transformer_block.8}
  #allocation0 [shape = 'u32[]', space=smem, size = 0x4, offset = 0x4, fixed_abs, tag = 'smem constant byte address 0x4 - core index']
  #allocation1 [shape = 'u32[144,128]{1,0:T(1,128)}', space=vmem, size = 0x12000, scoped, tag = 'internal scratch']
  %s0 = inlined_call_operand.vmem [shape: bf16[256,128], index: 0, kind: input, shape index: {}]
  %s1 = inlined_call_operand.vmem [shape: bf16[128,256], index: 1, kind: input, shape index: {}]
  %s2 = inlined_call_operand.vmem [shape: bf16[1,256], index: 2, kind: input, shape index: {}]
  %s3 = inlined_call_operand.vmem [shape: bf16[256,256], index: 3, kind: output, shape index: {}]
  %s4 = sld [smem:[#allocation0]]
  $region22: #{transformer_block.8} parent=0
    _
  %s6 = ssub.s32 1, %s4
  %s7 = scalar_select 0, %s6, %s4
  // Predicated region
  $region2: #{transformer_block.8} parent=0 // pred_check
    _
  $region3: #{transformer_block.8} parent=0 // pred_check_branch
    %9 = sbr.rel (0) target = $region5
  $region4: #{transformer_block.8} parent=0 // pred_region
    _
  $region5: #{transformer_block.8} parent=0 // pred_fallthru
    _
  // Predicated region
  $region6: #{transformer_block.8} parent=0 // pred_check
    _
  $region7: #{transformer_block.8} parent=0 // pred_check_branch
    %11 = sbr.rel (0) target = $region9
  $region8: #{transformer_block.8} parent=0 // pred_region
    _
  $region9: #{transformer_block.8} parent=0 // pred_fallthru
    _
  // Predicated region
  $region10: #{transformer_block.8} parent=0 // pred_check
    _
  $region11: #{transformer_block.8} parent=0 // pred_check_branch
    %13 = sbr.rel (0) target = $region13
  $region12: #{transformer_block.8} parent=0 // pred_region
    _
  $region13: #{transformer_block.8} parent=0 // pred_fallthru
    _
  %v15 = vld [vmem:[%s0] sm:$0xf]
  %v16 = vld [vmem:[%s0 + $0x4] sm:$0xf]
  %v17 = vld [vmem:[%s0 + $0x8] sm:$0xf]
  %v18 = vld [vmem:[%s0 + $0xc] sm:$0xf]
  %v19 = vld [vmem:[%s0 + $0x10] sm:$0xf]
  %v20 = vld [vmem:[%s0 + $0x14] sm:$0xf]
  %v21 = vld [vmem:[%s0 + $0x18] sm:$0xf]
  %v22 = vld [vmem:[%s0 + $0x1c] sm:$0xf]
  %v23 = vld [vmem:[%s0 + $0x20] sm:$0xf]
  %v24 = vld [vmem:[%s0 + $0x24] sm:$0xf]
  %v25 = vld [vmem:[%s0 + $0x28] sm:$0xf]
  %v26 = vld [vmem:[%s0 + $0x2c] sm:$0xf]
  %v27 = vld [vmem:[%s0 + $0x30] sm:$0xf]
  %v28 = vld [vmem:[%s0 + $0x34] sm:$0xf]
  %v29 = vld [vmem:[%s0 + $0x38] sm:$0xf]
  %v30 = vld [vmem:[%s0 + $0x3c] sm:$0xf]
  %v31 = vld [vmem:[%s0 + $0x40] sm:$0xf]
  %v32 = vld [vmem:[%s0 + $0x44] sm:$0xf]
  %v33 = vld [vmem:[%s0 + $0x48] sm:$0xf]
  %v34 = vld [vmem:[%s0 + $0x4c] sm:$0xf]
  %v35 = vld [vmem:[%s0 + $0x50] sm:$0xf]
  %v36 = vld [vmem:[%s0 + $0x54] sm:$0xf]
  %v37 = vld [vmem:[%s0 + $0x58] sm:$0xf]
  %v38 = vld [vmem:[%s0 + $0x5c] sm:$0xf]
  %v39 = vld [vmem:[%s0 + $0x60] sm:$0xf]
  %v40 = vld [vmem:[%s0 + $0x64] sm:$0xf]
  %v41 = vld [vmem:[%s0 + $0x68] sm:$0xf]
  %v42 = vld [vmem:[%s0 + $0x6c] sm:$0xf]
  %v43 = vld [vmem:[%s0 + $0x70] sm:$0xf]
  %v44 = vld [vmem:[%s0 + $0x74] sm:$0xf]
  %v45 = vld [vmem:[%s0 + $0x78] sm:$0xf]
  %v46 = vld [vmem:[%s0 + $0x7c] sm:$0xf]
  %v47 = vld [vmem:[%s1] sm:$0xff]
  %v48 = vld [vmem:[%s1 + $0x8] sm:$0xff]
  %v49 = vld [vmem:[%s1 + $0x10] sm:$0xff]
  %v50 = vld [vmem:[%s1 + $0x18] sm:$0xff]
  %v51 = vld [vmem:[%s1 + $0x20] sm:$0xff]
  %v52 = vld [vmem:[%s1 + $0x28] sm:$0xff]
  %v53 = vld [vmem:[%s1 + $0x30] sm:$0xff]
  %v54 = vld [vmem:[%s1 + $0x38] sm:$0xff]
  %v55 = vld [vmem:[%s1 + $0x40] sm:$0xff]
  %v56 = vld [vmem:[%s1 + $0x48] sm:$0xff]
  %v57 = vld [vmem:[%s1 + $0x50] sm:$0xff]
  %v58 = vld [vmem:[%s1 + $0x58] sm:$0xff]
  %v59 = vld [vmem:[%s1 + $0x60] sm:$0xff]
  %v60 = vld [vmem:[%s1 + $0x68] sm:$0xff]
  %v61 = vld [vmem:[%s1 + $0x70] sm:$0xff]
  %v62 = vld [vmem:[%s1 + $0x78] sm:$0xff]
  %v63 = vld [vmem:[%s2] sm:$0x3]
  %v64 = vunpack.c.l.bf16 %v63
  %v66 = vlaneseq
  %v67 = vshrl.u32 %v66, 7
  %v68 = vsub.s32 0, %v67
  %v69 = vrot.slane %v64, %v68
  %v70 = vlaneseq
  %v71 = vshrl.u32 %v70, 7
  %v72 = vsub.s32 2, %v71
  %v73 = vrot.slane %v64, %v72
  %v76 = vlaneseq
  %v77 = vshrl.u32 %v76, 7
  %v78 = vsub.s32 0, %v77
  %v79 = vrot.slane %v69, %v78
  %v80 = vlaneseq
  %v81 = vshrl.u32 %v80, 7
  %v82 = vsub.s32 0, %v81
  %v83 = vrot.slane %v73, %v82
  %v116 = vunpack.c.l.b16 %v15
  %v117 = vunpack.c.l.b16 %v16
  %v118 = vunpack.c.l.b16 %v17
  %v119 = vunpack.c.l.b16 %v18
  %v120 = vunpack.c.l.b16 %v19
  %v121 = vunpack.c.l.b16 %v20
  %v122 = vunpack.c.l.b16 %v21
  %v123 = vunpack.c.l.b16 %v22
  %v124 = vunpack.c.l.b16 %v23
  %v125 = vunpack.c.l.b16 %v24
  %v126 = vunpack.c.l.b16 %v25
  %v127 = vunpack.c.l.b16 %v26
  %v128 = vunpack.c.l.b16 %v27
  %v129 = vunpack.c.l.b16 %v28
  %v130 = vunpack.c.l.b16 %v29
  %v131 = vunpack.c.l.b16 %v30
  %v132 = vunpack.c.l.b16 %v31
  %v133 = vunpack.c.l.b16 %v32
  %v134 = vunpack.c.l.b16 %v33
  %v135 = vunpack.c.l.b16 %v34
  %v136 = vunpack.c.l.b16 %v35
  %v137 = vunpack.c.l.b16 %v36
  %v138 = vunpack.c.l.b16 %v37
  %v139 = vunpack.c.l.b16 %v38
  %v140 = vunpack.c.l.b16 %v39
  %v141 = vunpack.c.l.b16 %v40
  %v142 = vunpack.c.l.b16 %v41
  %v143 = vunpack.c.l.b16 %v42
  %v144 = vunpack.c.l.b16 %v43
  %v145 = vunpack.c.l.b16 %v44
  %v146 = vunpack.c.l.b16 %v45
  %v147 = vunpack.c.l.b16 %v46
  %v148 = vpack.c.b16 %v117, %v116
  %v149 = vpack.c.b16 %v119, %v118
  %v150 = vpack.c.b16 %v121, %v120
  %v151 = vpack.c.b16 %v123, %v122
  %v152 = vpack.c.b16 %v125, %v124
  %v153 = vpack.c.b16 %v127, %v126
  %v154 = vpack.c.b16 %v129, %v128
  %v155 = vpack.c.b16 %v131, %v130
  %v156 = vpack.c.b16 %v133, %v132
  %v157 = vpack.c.b16 %v135, %v134
  %v158 = vpack.c.b16 %v137, %v136
  %v159 = vpack.c.b16 %v139, %v138
  %v160 = vpack.c.b16 %v141, %v140
  %v161 = vpack.c.b16 %v143, %v142
  %v162 = vpack.c.b16 %v145, %v144
  %v163 = vpack.c.b16 %v147, %v146
  %v196 = vunpack.c.l.b16 %v47
  %v197 = vunpack.c.h.b16 %v47
  %v198 = vunpack.c.l.b16 %v48
  %v199 = vunpack.c.h.b16 %v48
  %v200 = vunpack.c.l.b16 %v49
  %v201 = vunpack.c.h.b16 %v49
  %v202 = vunpack.c.l.b16 %v50
  %v203 = vunpack.c.h.b16 %v50
  %v204 = vunpack.c.l.b16 %v51
  %v205 = vunpack.c.h.b16 %v51
  %v206 = vunpack.c.l.b16 %v52
  %v207 = vunpack.c.h.b16 %v52
  %v208 = vunpack.c.l.b16 %v53
  %v209 = vunpack.c.h.b16 %v53
  %v210 = vunpack.c.l.b16 %v54
  %v211 = vunpack.c.h.b16 %v54
  %v212 = vunpack.c.l.b16 %v55
  %v213 = vunpack.c.h.b16 %v55
  %v214 = vunpack.c.l.b16 %v56
  %v215 = vunpack.c.h.b16 %v56
  %v216 = vunpack.c.l.b16 %v57
  %v217 = vunpack.c.h.b16 %v57
  %v218 = vunpack.c.l.b16 %v58
  %v219 = vunpack.c.h.b16 %v58
  %v220 = vunpack.c.l.b16 %v59
  %v221 = vunpack.c.h.b16 %v59
  %v222 = vunpack.c.l.b16 %v60
  %v223 = vunpack.c.h.b16 %v60
  %v224 = vunpack.c.l.b16 %v61
  %v225 = vunpack.c.h.b16 %v61
  %v226 = vunpack.c.l.b16 %v62
  %v227 = vunpack.c.h.b16 %v62
  %v228 = vpack.c.b16 %v198, %v196
  %v229 = vpack.c.b16 %v199, %v197
  %v230 = vpack.c.b16 %v202, %v200
  %v231 = vpack.c.b16 %v203, %v201
  %v232 = vpack.c.b16 %v206, %v204
  %v233 = vpack.c.b16 %v207, %v205
  %v234 = vpack.c.b16 %v210, %v208
  %v235 = vpack.c.b16 %v211, %v209
  %v236 = vpack.c.b16 %v214, %v212
  %v237 = vpack.c.b16 %v215, %v213
  %v238 = vpack.c.b16 %v218, %v216
  %v239 = vpack.c.b16 %v219, %v217
  %v240 = vpack.c.b16 %v222, %v220
  %v241 = vpack.c.b16 %v223, %v221
  %v242 = vpack.c.b16 %v226, %v224
  %v243 = vpack.c.b16 %v227, %v225
  %260 = vmatprep.subr.bf16.mxu0 %v229
  %261 = vmatpush1.bf16.msra.mxu0 %v228
  %262 = vmatprep.subr.bf16.mxu0 %v231
  %263 = vmatpush1.bf16.msra.mxu0 %v230
  %264 = vmatprep.subr.bf16.mxu0 %v233
  %265 = vmatpush1.bf16.msra.mxu0 %v232
  %266 = vmatprep.subr.bf16.mxu0 %v235
  %267 = vmatpush1.bf16.msra.mxu0 %v234
  %268 = vmatprep.subr.bf16.mxu0 %v237
  %269 = vmatpush1.bf16.msra.mxu0 %v236
  %270 = vmatprep.subr.bf16.mxu0 %v239
  %271 = vmatpush1.bf16.msra.mxu0 %v238
  %272 = vmatprep.subr.bf16.mxu0 %v241
  %273 = vmatpush1.bf16.msra.mxu0 %v240
  %274 = vmatprep.subr.bf16.mxu0 %v243
  %275 = vmatpush1.bf16.msra.mxu0 %v242
  %276 = vmatprep.subr.bf16.mxu0 0
  %277 = vmatpush1.bf16.msra.mxu0 0
  %278 = vmatprep.subr.bf16.mxu0 0
  %279 = vmatpush1.bf16.msra.mxu0 0
  %280 = vmatprep.subr.bf16.mxu0 0
  %281 = vmatpush1.bf16.msra.mxu0 0
  %282 = vmatprep.subr.bf16.mxu0 0
  %283 = vmatpush1.bf16.msra.mxu0 0
  %284 = vmatprep.subr.bf16.mxu0 0
  %285 = vmatpush1.bf16.msra.mxu0 0
  %286 = vmatprep.subr.bf16.mxu0 0
  %287 = vmatpush1.bf16.msra.mxu0 0
  %288 = vmatprep.subr.bf16.mxu0 0
  %289 = vmatpush1.bf16.msra.mxu0 0
  %290 = vmatprep.subr.bf16.mxu0 0
  %291 = vmatpush1.bf16.msra.mxu0 0
  %292 = vmatprep.mubr.bf16.mxu0 0
  %293 = vmatmul.mubr.bf16.gmra.mrb[0].mxu0 %v148
  %v294 = vpop.f32.mrb[0].mxu0
  %v295 = vadd.f32 %v79, %v294
  %v296 = vpop.f32.mrb[0].mxu0
  %v297 = vadd.f32 %v83, %v296
  %v298 = vpop.f32.mrb[0].mxu0
  %v299 = vadd.f32 %v79, %v298
  %v300 = vpop.f32.mrb[0].mxu0
  %v301 = vadd.f32 %v83, %v300
  %302 = vmatprep.mubr.bf16.mxu0 0
  %303 = vmatmul.mubr.bf16.gmra.mrb[0].mxu0 %v149
  %v304 = vpop.f32.mrb[0].mxu0
  %v305 = vadd.f32 %v79, %v304
  %v306 = vpop.f32.mrb[0].mxu0
  %v307 = vadd.f32 %v83, %v306
  %v308 = vpop.f32.mrb[0].mxu0
  %v309 = vadd.f32 %v79, %v308
  %v310 = vpop.f32.mrb[0].mxu0
  %v311 = vadd.f32 %v83, %v310
  %312 = vmatprep.mubr.bf16.mxu0 0
  %313 = vmatmul.mubr.bf16.gmra.mrb[0].mxu0 %v150
  %v314 = vpop.f32.mrb[0].mxu0
  %v315 = vadd.f32 %v79, %v314
  %v316 = vpop.f32.mrb[0].mxu0
  %v317 = vadd.f32 %v83, %v316
  %v318 = vpop.f32.mrb[0].mxu0
  %v319 = vadd.f32 %v79, %v318
  %v320 = vpop.f32.mrb[0].mxu0
  %v321 = vadd.f32 %v83, %v320
  %322 = vmatprep.mubr.bf16.mxu0 0
  %323 = vmatmul.mubr.bf16.gmra.mrb[0].mxu0 %v151
  %v324 = vpop.f32.mrb[0].mxu0
  %v325 = vadd.f32 %v79, %v324
  %v326 = vpop.f32.mrb[0].mxu0
  %v327 = vadd.f32 %v83, %v326
  %v328 = vpop.f32.mrb[0].mxu0
  %v329 = vadd.f32 %v79, %v328
  %v330 = vpop.f32.mrb[0].mxu0
  %v331 = vadd.f32 %v83, %v330
  %332 = vmatprep.mubr.bf16.mxu0 0
  %333 = vmatmul.mubr.bf16.gmra.mrb[0].mxu0 %v152
  %v334 = vpop.f32.mrb[0].mxu0
  %v335 = vadd.f32 %v79, %v334
  %v336 = vpop.f32.mrb[0].mxu0
  %v337 = vadd.f32 %v83, %v336
  %v338 = vpop.f32.mrb[0].mxu0
  %v339 = vadd.f32 %v79, %v338
  %v340 = vpop.f32.mrb[0].mxu0
  %v341 = vadd.f32 %v83, %v340
  %342 = vmatprep.mubr.bf16.mxu0 0
  %343 = vmatmul.mubr.bf16.gmra.mrb[0].mxu0 %v153
  %v344 = vpop.f32.mrb[0].mxu0
  %v345 = vadd.f32 %v79, %v344
  %v346 = vpop.f32.mrb[0].mxu0
  %v347 = vadd.f32 %v83, %v346
  %v348 = vpop.f32.mrb[0].mxu0
  %v349 = vadd.f32 %v79, %v348
  %v350 = vpop.f32.mrb[0].mxu0
  %v351 = vadd.f32 %v83, %v350
  %352 = vmatprep.mubr.bf16.mxu0 0
  %353 = vmatmul.mubr.bf16.gmra.mrb[0].mxu0 %v154
  %v354 = vpop.f32.mrb[0].mxu0
  %v355 = vadd.f32 %v79, %v354
  %v356 = vpop.f32.mrb[0].mxu0
  %v357 = vadd.f32 %v83, %v356
  %v358 = vpop.f32.mrb[0].mxu0
  %v359 = vadd.f32 %v79, %v358
  %v360 = vpop.f32.mrb[0].mxu0
  %v361 = vadd.f32 %v83, %v360
  %362 = vmatprep.mubr.bf16.mxu0 0
  %363 = vmatmul.mubr.bf16.gmra.mrb[0].mxu0 %v155
  %v364 = vpop.f32.mrb[0].mxu0
  %v365 = vadd.f32 %v79, %v364
  %v366 = vpop.f32.mrb[0].mxu0
  %v367 = vadd.f32 %v83, %v366
  %v368 = vpop.f32.mrb[0].mxu0
  %v369 = vadd.f32 %v79, %v368
  %v370 = vpop.f32.mrb[0].mxu0
  %v371 = vadd.f32 %v83, %v370
  %372 = vmatprep.mubr.bf16.mxu0 0
  %373 = vmatmul.mubr.bf16.gmra.mrb[0].mxu0 %v156
  %v374 = vpop.f32.mrb[0].mxu0
  %v375 = vadd.f32 %v79, %v374
  %v376 = vpop.f32.mrb[0].mxu0
  %v377 = vadd.f32 %v83, %v376
  %v378 = vpop.f32.mrb[0].mxu0
  %v379 = vadd.f32 %v79, %v378
  %v380 = vpop.f32.mrb[0].mxu0
  %v381 = vadd.f32 %v83, %v380
  %382 = vmatprep.mubr.bf16.mxu0 0
  %383 = vmatmul.mubr.bf16.gmra.mrb[0].mxu0 %v157
  %v384 = vpop.f32.mrb[0].mxu0
  %v385 = vadd.f32 %v79, %v384
  %v386 = vpop.f32.mrb[0].mxu0
  %v387 = vadd.f32 %v83, %v386
  %v388 = vpop.f32.mrb[0].mxu0
  %v389 = vadd.f32 %v79, %v388
  %v390 = vpop.f32.mrb[0].mxu0
  %v391 = vadd.f32 %v83, %v390
  %392 = vmatprep.mubr.bf16.mxu0 0
  %393 = vmatmul.mubr.bf16.gmra.mrb[0].mxu0 %v158
  %v394 = vpop.f32.mrb[0].mxu0
  %v395 = vadd.f32 %v79, %v394
  %v396 = vpop.f32.mrb[0].mxu0
  %v397 = vadd.f32 %v83, %v396
  %v398 = vpop.f32.mrb[0].mxu0
  %v399 = vadd.f32 %v79, %v398
  %v400 = vpop.f32.mrb[0].mxu0
  %v401 = vadd.f32 %v83, %v400
  %402 = vmatprep.mubr.bf16.mxu0 0
  %403 = vmatmul.mubr.bf16.gmra.mrb[0].mxu0 %v159
  %v404 = vpop.f32.mrb[0].mxu0
  %v405 = vadd.f32 %v79, %v404
  %v406 = vpop.f32.mrb[0].mxu0
  %v407 = vadd.f32 %v83, %v406
  %v408 = vpop.f32.mrb[0].mxu0
  %v409 = vadd.f32 %v79, %v408
  %v410 = vpop.f32.mrb[0].mxu0
  %v411 = vadd.f32 %v83, %v410
  %412 = vmatprep.mubr.bf16.mxu0 0
  %413 = vmatmul.mubr.bf16.gmra.mrb[0].mxu0 %v160
  %v414 = vpop.f32.mrb[0].mxu0
  %v415 = vadd.f32 %v79, %v414
  %v416 = vpop.f32.mrb[0].mxu0
  %v417 = vadd.f32 %v83, %v416
  %v418 = vpop.f32.mrb[0].mxu0
  %v419 = vadd.f32 %v79, %v418
  %v420 = vpop.f32.mrb[0].mxu0
  %v421 = vadd.f32 %v83, %v420
  %422 = vmatprep.mubr.bf16.mxu0 0
  %423 = vmatmul.mubr.bf16.gmra.mrb[0].mxu0 %v161
  %v424 = vpop.f32.mrb[0].mxu0
  %v425 = vadd.f32 %v79, %v424
  %v426 = vpop.f32.mrb[0].mxu0
  %v427 = vadd.f32 %v83, %v426
  %v428 = vpop.f32.mrb[0].mxu0
  %v429 = vadd.f32 %v79, %v428
  %v430 = vpop.f32.mrb[0].mxu0
  %v431 = vadd.f32 %v83, %v430
  %432 = vmatprep.mubr.bf16.mxu0 0
  %433 = vmatmul.mubr.bf16.gmra.mrb[0].mxu0 %v162
  %v434 = vpop.f32.mrb[0].mxu0
  %v435 = vadd.f32 %v79, %v434
  %v436 = vpop.f32.mrb[0].mxu0
  %v437 = vadd.f32 %v83, %v436
  %v438 = vpop.f32.mrb[0].mxu0
  %v439 = vadd.f32 %v79, %v438
  %v440 = vpop.f32.mrb[0].mxu0
  %v441 = vadd.f32 %v83, %v440
  %442 = vmatprep.mubr.bf16.mxu0 0
  %443 = vmatmul.mubr.bf16.gmra.mrb[0].mxu0 %v163
  %v444 = vpop.f32.mrb[0].mxu0
  %v445 = vadd.f32 %v79, %v444
  %v446 = vpop.f32.mrb[0].mxu0
  %v447 = vadd.f32 %v83, %v446
  %v448 = vpop.f32.mrb[0].mxu0
  %v449 = vadd.f32 %v79, %v448
  %v450 = vpop.f32.mrb[0].mxu0
  %v451 = vadd.f32 %v83, %v450
  %452 = vdwg.mxu0
  %v453 = vmul.f32 %v295, 0.044715
  %v454 = vmul.f32 %v297, 0.044715
  %v455 = vmul.f32 %v299, 0.044715
  %v456 = vmul.f32 %v301, 0.044715
  %v457 = vmul.f32 %v305, 0.044715
  %v458 = vmul.f32 %v307, 0.044715
  %v459 = vmul.f32 %v309, 0.044715
  %v460 = vmul.f32 %v311, 0.044715
  %v461 = vmul.f32 %v315, 0.044715
  %v462 = vmul.f32 %v317, 0.044715
  %v463 = vmul.f32 %v319, 0.044715
  %v464 = vmul.f32 %v321, 0.044715
  %v465 = vmul.f32 %v325, 0.044715
  %v466 = vmul.f32 %v327, 0.044715
  %v467 = vmul.f32 %v329, 0.044715
  %v468 = vmul.f32 %v331, 0.044715
  %v469 = vmul.f32 %v335, 0.044715
  %v470 = vmul.f32 %v337, 0.044715
  %v471 = vmul.f32 %v339, 0.044715
  %v472 = vmul.f32 %v341, 0.044715
  %v473 = vmul.f32 %v345, 0.044715
  %v474 = vmul.f32 %v347, 0.044715
  %v475 = vmul.f32 %v349, 0.044715
  %v476 = vmul.f32 %v351, 0.044715
  %v477 = vmul.f32 %v355, 0.044715
  %v478 = vmul.f32 %v357, 0.044715
  %v479 = vmul.f32 %v359, 0.044715
  %v480 = vmul.f32 %v361, 0.044715
  %v481 = vmul.f32 %v365, 0.044715
  %v482 = vmul.f32 %v367, 0.044715
  %v483 = vmul.f32 %v369, 0.044715
  %v484 = vmul.f32 %v371, 0.044715
  %v485 = vmul.f32 %v375, 0.044715
  %v486 = vmul.f32 %v377, 0.044715
  %v487 = vmul.f32 %v379, 0.044715
  %v488 = vmul.f32 %v381, 0.044715
  %v489 = vmul.f32 %v385, 0.044715
  %v490 = vmul.f32 %v387, 0.044715
  %v491 = vmul.f32 %v389, 0.044715
  %v492 = vmul.f32 %v391, 0.044715
  %v493 = vmul.f32 %v395, 0.044715
  %v494 = vmul.f32 %v397, 0.044715
  %v495 = vmul.f32 %v399, 0.044715
  %v496 = vmul.f32 %v401, 0.044715
  %v497 = vmul.f32 %v405, 0.044715
  %v498 = vmul.f32 %v407, 0.044715
  %v499 = vmul.f32 %v409, 0.044715
  %v500 = vmul.f32 %v411, 0.044715
  %v501 = vmul.f32 %v415, 0.044715
  %v502 = vmul.f32 %v417, 0.044715
  %v503 = vmul.f32 %v419, 0.044715
  %v504 = vmul.f32 %v421, 0.044715
  %v505 = vmul.f32 %v425, 0.044715
  %v506 = vmul.f32 %v427, 0.044715
  %v507 = vmul.f32 %v429, 0.044715
  %v508 = vmul.f32 %v431, 0.044715
  %v509 = vmul.f32 %v435, 0.044715
  %v510 = vmul.f32 %v437, 0.044715
  %v511 = vmul.f32 %v439, 0.044715
  %v512 = vmul.f32 %v441, 0.044715
  %v513 = vmul.f32 %v445, 0.044715
  %v514 = vmul.f32 %v447, 0.044715
  %v515 = vmul.f32 %v449, 0.044715
  %v516 = vmul.f32 %v451, 0.044715
  %v517 = vmul.f32 %v453, %v295
  %v518 = vmul.f32 %v454, %v297
  %v519 = vmul.f32 %v455, %v299
  %v520 = vmul.f32 %v456, %v301
  %v521 = vmul.f32 %v457, %v305
  %v522 = vmul.f32 %v458, %v307
  %v523 = vmul.f32 %v459, %v309
  %v524 = vmul.f32 %v460, %v311
  %v525 = vmul.f32 %v461, %v315
  %v526 = vmul.f32 %v462, %v317
  %v527 = vmul.f32 %v463, %v319
  %v528 = vmul.f32 %v464, %v321
  %v529 = vmul.f32 %v465, %v325
  %v530 = vmul.f32 %v466, %v327
  %v531 = vmul.f32 %v467, %v329
  %v532 = vmul.f32 %v468, %v331
  %v533 = vmul.f32 %v469, %v335
  %v534 = vmul.f32 %v470, %v337
  %v535 = vmul.f32 %v471, %v339
  %v536 = vmul.f32 %v472, %v341
  %v537 = vmul.f32 %v473, %v345
  %v538 = vmul.f32 %v474, %v347
  %v539 = vmul.f32 %v475, %v349
  %v540 = vmul.f32 %v476, %v351
  %v541 = vmul.f32 %v477, %v355
  %v542 = vmul.f32 %v478, %v357
  %v543 = vmul.f32 %v479, %v359
  %v544 = vmul.f32 %v480, %v361
  %v545 = vmul.f32 %v481, %v365
  %v546 = vmul.f32 %v482, %v367
  %v547 = vmul.f32 %v483, %v369
  %v548 = vmul.f32 %v484, %v371
  %v549 = vmul.f32 %v485, %v375
  %v550 = vmul.f32 %v486, %v377
  %v551 = vmul.f32 %v487, %v379
  %v552 = vmul.f32 %v488, %v381
  %v553 = vmul.f32 %v489, %v385
  %v554 = vmul.f32 %v490, %v387
  %v555 = vmul.f32 %v491, %v389
  %v556 = vmul.f32 %v492, %v391
  %v557 = vmul.f32 %v493, %v395
  %v558 = vmul.f32 %v494, %v397
  %v559 = vmul.f32 %v495, %v399
  %v560 = vmul.f32 %v496, %v401
  %v561 = vmul.f32 %v497, %v405
  %v562 = vmul.f32 %v498, %v407
  %v563 = vmul.f32 %v499, %v409
  %v564 = vmul.f32 %v500, %v411
  %v565 = vmul.f32 %v501, %v415
  %v566 = vmul.f32 %v502, %v417
  %v567 = vmul.f32 %v503, %v419
  %v568 = vmul.f32 %v504, %v421
  %v569 = vmul.f32 %v505, %v425
  %v570 = vmul.f32 %v506, %v427
  %v571 = vmul.f32 %v507, %v429
  %v572 = vmul.f32 %v508, %v431
  %v573 = vmul.f32 %v509, %v435
  %v574 = vmul.f32 %v510, %v437
  %v575 = vmul.f32 %v511, %v439
  %v576 = vmul.f32 %v512, %v441
  %v577 = vmul.f32 %v513, %v445
  %v578 = vmul.f32 %v514, %v447
  %v579 = vmul.f32 %v515, %v449
  %v580 = vmul.f32 %v516, %v451
  %v581 = vmul.f32 %v517, %v295
  %v582 = vmul.f32 %v518, %v297
  %v583 = vmul.f32 %v519, %v299
  %v584 = vmul.f32 %v520, %v301
  %v585 = vmul.f32 %v521, %v305
  %v586 = vmul.f32 %v522, %v307
  %v587 = vmul.f32 %v523, %v309
  %v588 = vmul.f32 %v524, %v311
  %v589 = vmul.f32 %v525, %v315
  %v590 = vmul.f32 %v526, %v317
  %v591 = vmul.f32 %v527, %v319
  %v592 = vmul.f32 %v528, %v321
  %v593 = vmul.f32 %v529, %v325
  %v594 = vmul.f32 %v530, %v327
  %v595 = vmul.f32 %v531, %v329
  %v596 = vmul.f32 %v532, %v331
  %v597 = vmul.f32 %v533, %v335
  %v598 = vmul.f32 %v534, %v337
  %v599 = vmul.f32 %v535, %v339
  %v600 = vmul.f32 %v536, %v341
  %v601 = vmul.f32 %v537, %v345
  %v602 = vmul.f32 %v538, %v347
  %v603 = vmul.f32 %v539, %v349
  %v604 = vmul.f32 %v540, %v351
  %v605 = vmul.f32 %v541, %v355
  %v606 = vmul.f32 %v542, %v357
  %v607 = vmul.f32 %v543, %v359
  %v608 = vmul.f32 %v544, %v361
  %v609 = vmul.f32 %v545, %v365
  %v610 = vmul.f32 %v546, %v367
  %v611 = vmul.f32 %v547, %v369
  %v612 = vmul.f32 %v548, %v371
  %v613 = vmul.f32 %v549, %v375
  %v614 = vmul.f32 %v550, %v377
  %v615 = vmul.f32 %v551, %v379
  %v616 = vmul.f32 %v552, %v381
  %v617 = vmul.f32 %v553, %v385
  %v618 = vmul.f32 %v554, %v387
  %v619 = vmul.f32 %v555, %v389
  %v620 = vmul.f32 %v556, %v391
  %v621 = vmul.f32 %v557, %v395
  %v622 = vmul.f32 %v558, %v397
  %v623 = vmul.f32 %v559, %v399
  %v624 = vmul.f32 %v560, %v401
  %v625 = vmul.f32 %v561, %v405
  %v626 = vmul.f32 %v562, %v407
  %v627 = vmul.f32 %v563, %v409
  %v628 = vmul.f32 %v564, %v411
  %v629 = vmul.f32 %v565, %v415
  %v630 = vmul.f32 %v566, %v417
  %v631 = vmul.f32 %v567, %v419
  %v632 = vmul.f32 %v568, %v421
  %v633 = vmul.f32 %v569, %v425
  %v634 = vmul.f32 %v570, %v427
  %v635 = vmul.f32 %v571, %v429
  %v636 = vmul.f32 %v572, %v431
  %v637 = vmul.f32 %v573, %v435
  %v638 = vmul.f32 %v574, %v437
  %v639 = vmul.f32 %v575, %v439
  %v640 = vmul.f32 %v576, %v441
  %v641 = vmul.f32 %v577, %v445
  %v642 = vmul.f32 %v578, %v447
  %v643 = vmul.f32 %v579, %v449
  %v644 = vmul.f32 %v580, %v451
  %v645 = vadd.f32 %v295, %v581
  %v646 = vadd.f32 %v297, %v582
  %v647 = vadd.f32 %v299, %v583
  %v648 = vadd.f32 %v301, %v584
  %v649 = vadd.f32 %v305, %v585
  %v650 = vadd.f32 %v307, %v586
  %v651 = vadd.f32 %v309, %v587
  %v652 = vadd.f32 %v311, %v588
  %v653 = vadd.f32 %v315, %v589
  %v654 = vadd.f32 %v317, %v590
  %v655 = vadd.f32 %v319, %v591
  %v656 = vadd.f32 %v321, %v592
  %v657 = vadd.f32 %v325, %v593
  %v658 = vadd.f32 %v327, %v594
  %v659 = vadd.f32 %v329, %v595
  %v660 = vadd.f32 %v331, %v596
  %v661 = vadd.f32 %v335, %v597
  %v662 = vadd.f32 %v337, %v598
  %v663 = vadd.f32 %v339, %v599
  %v664 = vadd.f32 %v341, %v600
  %v665 = vadd.f32 %v345, %v601
  %v666 = vadd.f32 %v347, %v602
  %v667 = vadd.f32 %v349, %v603
  %v668 = vadd.f32 %v351, %v604
  %v669 = vadd.f32 %v355, %v605
  %v670 = vadd.f32 %v357, %v606
  %v671 = vadd.f32 %v359, %v607
  %v672 = vadd.f32 %v361, %v608
  %v673 = vadd.f32 %v365, %v609
  %v674 = vadd.f32 %v367, %v610
  %v675 = vadd.f32 %v369, %v611
  %v676 = vadd.f32 %v371, %v612
  %v677 = vadd.f32 %v375, %v613
  %v678 = vadd.f32 %v377, %v614
  %v679 = vadd.f32 %v379, %v615
  %v680 = vadd.f32 %v381, %v616
  %v681 = vadd.f32 %v385, %v617
  %v682 = vadd.f32 %v387, %v618
  %v683 = vadd.f32 %v389, %v619
  %v684 = vadd.f32 %v391, %v620
  %v685 = vadd.f32 %v395, %v621
  %v686 = vadd.f32 %v397, %v622
  %v687 = vadd.f32 %v399, %v623
  %v688 = vadd.f32 %v401, %v624
  %v689 = vadd.f32 %v405, %v625
  %v690 = vadd.f32 %v407, %v626
  %v691 = vadd.f32 %v409, %v627
  %v692 = vadd.f32 %v411, %v628
  %v693 = vadd.f32 %v415, %v629
  %v694 = vadd.f32 %v417, %v630
  %v695 = vadd.f32 %v419, %v631
  %v696 = vadd.f32 %v421, %v632
  %v697 = vadd.f32 %v425, %v633
  %v698 = vadd.f32 %v427, %v634
  %v699 = vadd.f32 %v429, %v635
  %v700 = vadd.f32 %v431, %v636
  %v701 = vadd.f32 %v435, %v637
  %v702 = vadd.f32 %v437, %v638
  %v703 = vadd.f32 %v439, %v639
  %v704 = vadd.f32 %v441, %v640
  %v705 = vadd.f32 %v445, %v641
  %v706 = vadd.f32 %v447, %v642
  %v707 = vadd.f32 %v449, %v643
  %v708 = vadd.f32 %v451, %v644
  %v709 = vmul.f32 %v645, 0.7978846
  %v710 = vmul.f32 %v646, 0.7978846
  %v711 = vmul.f32 %v647, 0.7978846
  %v712 = vmul.f32 %v648, 0.7978846
  %v713 = vmul.f32 %v649, 0.7978846
  %v714 = vmul.f32 %v650, 0.7978846
  %v715 = vmul.f32 %v651, 0.7978846
  %v716 = vmul.f32 %v652, 0.7978846
  %v717 = vmul.f32 %v653, 0.7978846
  %v718 = vmul.f32 %v654, 0.7978846
  %v719 = vmul.f32 %v655, 0.7978846
  %v720 = vmul.f32 %v656, 0.7978846
  %v721 = vmul.f32 %v657, 0.7978846
  %v722 = vmul.f32 %v658, 0.7978846
  %v723 = vmul.f32 %v659, 0.7978846
  %v724 = vmul.f32 %v660, 0.7978846
  %v725 = vmul.f32 %v661, 0.7978846
  %v726 = vmul.f32 %v662, 0.7978846
  %v727 = vmul.f32 %v663, 0.7978846
  %v728 = vmul.f32 %v664, 0.7978846
  %v729 = vmul.f32 %v665, 0.7978846
  %v730 = vmul.f32 %v666, 0.7978846
  %v731 = vmul.f32 %v667, 0.7978846
  %v732 = vmul.f32 %v668, 0.7978846
  %v733 = vmul.f32 %v669, 0.7978846
  %v734 = vmul.f32 %v670, 0.7978846
  %v735 = vmul.f32 %v671, 0.7978846
  %v736 = vmul.f32 %v672, 0.7978846
  %v737 = vmul.f32 %v673, 0.7978846
  %v738 = vmul.f32 %v674, 0.7978846
  %v739 = vmul.f32 %v675, 0.7978846
  %v740 = vmul.f32 %v676, 0.7978846
  %v741 = vmul.f32 %v677, 0.7978846
  %v742 = vmul.f32 %v678, 0.7978846
  %v743 = vmul.f32 %v679, 0.7978846
  %v744 = vmul.f32 %v680, 0.7978846
  %v745 = vmul.f32 %v681, 0.7978846
  %v746 = vmul.f32 %v682, 0.7978846
  %v747 = vmul.f32 %v683, 0.7978846
  %v748 = vmul.f32 %v684, 0.7978846
  %v749 = vmul.f32 %v685, 0.7978846
  %v750 = vmul.f32 %v686, 0.7978846
  %v751 = vmul.f32 %v687, 0.7978846
  %v752 = vmul.f32 %v688, 0.7978846
  %v753 = vmul.f32 %v689, 0.7978846
  %v754 = vmul.f32 %v690, 0.7978846
  %v755 = vmul.f32 %v691, 0.7978846
  %v756 = vmul.f32 %v692, 0.7978846
  %v757 = vmul.f32 %v693, 0.7978846
  %v758 = vmul.f32 %v694, 0.7978846
  %v759 = vmul.f32 %v695, 0.7978846
  %v760 = vmul.f32 %v696, 0.7978846
  %v761 = vmul.f32 %v697, 0.7978846
  %v762 = vmul.f32 %v698, 0.7978846
  %v763 = vmul.f32 %v699, 0.7978846
  %v764 = vmul.f32 %v700, 0.7978846
  %v765 = vmul.f32 %v701, 0.7978846
  %v766 = vmul.f32 %v702, 0.7978846
  %v767 = vmul.f32 %v703, 0.7978846
  %v768 = vmul.f32 %v704, 0.7978846
  %v769 = vmul.f32 %v705, 0.7978846
  %v770 = vmul.f32 %v706, 0.7978846
  %v771 = vmul.f32 %v707, 0.7978846
  %v772 = vmul.f32 %v708, 0.7978846
  %v773 = vmul.f32 %v295, 0.5
  %v774 = vmul.f32 %v297, 0.5
  %v775 = vmul.f32 %v299, 0.5
  %v776 = vmul.f32 %v301, 0.5
  %v777 = vmul.f32 %v305, 0.5
  %v778 = vmul.f32 %v307, 0.5
  %v779 = vmul.f32 %v309, 0.5
  %v780 = vmul.f32 %v311, 0.5
  %v781 = vmul.f32 %v315, 0.5
  %v782 = vmul.f32 %v317, 0.5
  %v783 = vmul.f32 %v319, 0.5
  %v784 = vmul.f32 %v321, 0.5
  %v785 = vmul.f32 %v325, 0.5
  %v786 = vmul.f32 %v327, 0.5
  %v787 = vmul.f32 %v329, 0.5
  %v788 = vmul.f32 %v331, 0.5
  %v789 = vmul.f32 %v335, 0.5
  %v790 = vmul.f32 %v337, 0.5
  %v791 = vmul.f32 %v339, 0.5
  %v792 = vmul.f32 %v341, 0.5
  %v793 = vmul.f32 %v345, 0.5
  %v794 = vmul.f32 %v347, 0.5
  %v795 = vmul.f32 %v349, 0.5
  %v796 = vmul.f32 %v351, 0.5
  %v797 = vmul.f32 %v355, 0.5
  %v798 = vmul.f32 %v357, 0.5
  %v799 = vmul.f32 %v359, 0.5
  %v800 = vmul.f32 %v361, 0.5
  %v801 = vmul.f32 %v365, 0.5
  %v802 = vmul.f32 %v367, 0.5
  %v803 = vmul.f32 %v369, 0.5
  %v804 = vmul.f32 %v371, 0.5
  %v805 = vmul.f32 %v375, 0.5
  %v806 = vmul.f32 %v377, 0.5
  %v807 = vmul.f32 %v379, 0.5
  %v808 = vmul.f32 %v381, 0.5
  %v809 = vmul.f32 %v385, 0.5
  %v810 = vmul.f32 %v387, 0.5
  %v811 = vmul.f32 %v389, 0.5
  %v812 = vmul.f32 %v391, 0.5
  %v813 = vmul.f32 %v395, 0.5
  %v814 = vmul.f32 %v397, 0.5
  %v815 = vmul.f32 %v399, 0.5
  %v816 = vmul.f32 %v401, 0.5
  %v817 = vmul.f32 %v405, 0.5
  %v818 = vmul.f32 %v407, 0.5
  %v819 = vmul.f32 %v409, 0.5
  %v820 = vmul.f32 %v411, 0.5
  %v821 = vmul.f32 %v415, 0.5
  %v822 = vmul.f32 %v417, 0.5
  %v823 = vmul.f32 %v419, 0.5
  %v824 = vmul.f32 %v421, 0.5
  %v825 = vmul.f32 %v425, 0.5
  %v826 = vmul.f32 %v427, 0.5
  %v827 = vmul.f32 %v429, 0.5
  %v828 = vmul.f32 %v431, 0.5
  %v829 = vmul.f32 %v435, 0.5
  %v830 = vmul.f32 %v437, 0.5
  %v831 = vmul.f32 %v439, 0.5
  %v832 = vmul.f32 %v441, 0.5
  %v833 = vmul.f32 %v445, 0.5
  %v834 = vmul.f32 %v447, 0.5
  %v835 = vmul.f32 %v449, 0.5
  %v836 = vmul.f32 %v451, 0.5
  %v837 = vtanh.pop %v709
  %v838 = vtanh.pop %v710
  %v839 = vtanh.pop %v711
  %v840 = vtanh.pop %v712
  %v841 = vtanh.pop %v713
  %v842 = vtanh.pop %v714
  %v843 = vtanh.pop %v715
  %v844 = vtanh.pop %v716
  %v845 = vtanh.pop %v717
  %v846 = vtanh.pop %v718
  %v847 = vtanh.pop %v719
  %v848 = vtanh.pop %v720
  %v849 = vtanh.pop %v721
  %v850 = vtanh.pop %v722
  %v851 = vtanh.pop %v723
  %v852 = vtanh.pop %v724
  %v853 = vtanh.pop %v725
  %v854 = vtanh.pop %v726
  %v855 = vtanh.pop %v727
  %v856 = vtanh.pop %v728
  %v857 = vtanh.pop %v729
  %v858 = vtanh.pop %v730
  %v859 = vtanh.pop %v731
  %v860 = vtanh.pop %v732
  %v861 = vtanh.pop %v733
  %v862 = vtanh.pop %v734
  %v863 = vtanh.pop %v735
  %v864 = vtanh.pop %v736
  %v865 = vtanh.pop %v737
  %v866 = vtanh.pop %v738
  %v867 = vtanh.pop %v739
  %v868 = vtanh.pop %v740
  %v869 = vtanh.pop %v741
  %v870 = vtanh.pop %v742
  %v871 = vtanh.pop %v743
  %v872 = vtanh.pop %v744
  %v873 = vtanh.pop %v745
  %v874 = vtanh.pop %v746
  %v875 = vtanh.pop %v747
  %v876 = vtanh.pop %v748
  %v877 = vtanh.pop %v749
  %v878 = vtanh.pop %v750
  %v879 = vtanh.pop %v751
  %v880 = vtanh.pop %v752
  %v881 = vtanh.pop %v753
  %v882 = vtanh.pop %v754
  %v883 = vtanh.pop %v755
  %v884 = vtanh.pop %v756
  %v885 = vtanh.pop %v757
  %v886 = vtanh.pop %v758
  %v887 = vtanh.pop %v759
  %v888 = vtanh.pop %v760
  %v889 = vtanh.pop %v761
  %v890 = vtanh.pop %v762
  %v891 = vtanh.pop %v763
  %v892 = vtanh.pop %v764
  %v893 = vtanh.pop %v765
  %v894 = vtanh.pop %v766
  %v895 = vtanh.pop %v767
  %v896 = vtanh.pop %v768
  %v897 = vtanh.pop %v769
  %v898 = vtanh.pop %v770
  %v899 = vtanh.pop %v771
  %v900 = vtanh.pop %v772
  %v901 = vadd.f32 %v837, 1.0
  %v902 = vadd.f32 %v838, 1.0
  %v903 = vadd.f32 %v839, 1.0
  %v904 = vadd.f32 %v840, 1.0
  %v905 = vadd.f32 %v841, 1.0
  %v906 = vadd.f32 %v842, 1.0
  %v907 = vadd.f32 %v843, 1.0
  %v908 = vadd.f32 %v844, 1.0
  %v909 = vadd.f32 %v845, 1.0
  %v910 = vadd.f32 %v846, 1.0
  %v911 = vadd.f32 %v847, 1.0
  %v912 = vadd.f32 %v848, 1.0
  %v913 = vadd.f32 %v849, 1.0
  %v914 = vadd.f32 %v850, 1.0
  %v915 = vadd.f32 %v851, 1.0
  %v916 = vadd.f32 %v852, 1.0
  %v917 = vadd.f32 %v853, 1.0
  %v918 = vadd.f32 %v854, 1.0
  %v919 = vadd.f32 %v855, 1.0
  %v920 = vadd.f32 %v856, 1.0
  %v921 = vadd.f32 %v857, 1.0
  %v922 = vadd.f32 %v858, 1.0
  %v923 = vadd.f32 %v859, 1.0
  %v924 = vadd.f32 %v860, 1.0
  %v925 = vadd.f32 %v861, 1.0
  %v926 = vadd.f32 %v862, 1.0
  %v927 = vadd.f32 %v863, 1.0
  %v928 = vadd.f32 %v864, 1.0
  %v929 = vadd.f32 %v865, 1.0
  %v930 = vadd.f32 %v866, 1.0
  %v931 = vadd.f32 %v867, 1.0
  %v932 = vadd.f32 %v868, 1.0
  %v933 = vadd.f32 %v869, 1.0
  %v934 = vadd.f32 %v870, 1.0
  %v935 = vadd.f32 %v871, 1.0
  %v936 = vadd.f32 %v872, 1.0
  %v937 = vadd.f32 %v873, 1.0
  %v938 = vadd.f32 %v874, 1.0
  %v939 = vadd.f32 %v875, 1.0
  %v940 = vadd.f32 %v876, 1.0
  %v941 = vadd.f32 %v877, 1.0
  %v942 = vadd.f32 %v878, 1.0
  %v943 = vadd.f32 %v879, 1.0
  %v944 = vadd.f32 %v880, 1.0
  %v945 = vadd.f32 %v881, 1.0
  %v946 = vadd.f32 %v882, 1.0
  %v947 = vadd.f32 %v883, 1.0
  %v948 = vadd.f32 %v884, 1.0
  %v949 = vadd.f32 %v885, 1.0
  %v950 = vadd.f32 %v886, 1.0
  %v951 = vadd.f32 %v887, 1.0
  %v952 = vadd.f32 %v888, 1.0
  %v953 = vadd.f32 %v889, 1.0
  %v954 = vadd.f32 %v890, 1.0
  %v955 = vadd.f32 %v891, 1.0
  %v956 = vadd.f32 %v892, 1.0
  %v957 = vadd.f32 %v893, 1.0
  %v958 = vadd.f32 %v894, 1.0
  %v959 = vadd.f32 %v895, 1.0
  %v960 = vadd.f32 %v896, 1.0
  %v961 = vadd.f32 %v897, 1.0
  %v962 = vadd.f32 %v898, 1.0
  %v963 = vadd.f32 %v899, 1.0
  %v964 = vadd.f32 %v900, 1.0
  %v965 = vmul.f32 %v773, %v901
  %v966 = vmul.f32 %v774, %v902
  %v967 = vmul.f32 %v775, %v903
  %v968 = vmul.f32 %v776, %v904
  %v969 = vmul.f32 %v777, %v905
  %v970 = vmul.f32 %v778, %v906
  %v971 = vmul.f32 %v779, %v907
  %v972 = vmul.f32 %v780, %v908
  %v973 = vmul.f32 %v781, %v909
  %v974 = vmul.f32 %v782, %v910
  %v975 = vmul.f32 %v783, %v911
  %v976 = vmul.f32 %v784, %v912
  %v977 = vmul.f32 %v785, %v913
  %v978 = vmul.f32 %v786, %v914
  %v979 = vmul.f32 %v787, %v915
  %v980 = vmul.f32 %v788, %v916
  %v981 = vmul.f32 %v789, %v917
  %v982 = vmul.f32 %v790, %v918
  %v983 = vmul.f32 %v791, %v919
  %v984 = vmul.f32 %v792, %v920
  %v985 = vmul.f32 %v793, %v921
  %v986 = vmul.f32 %v794, %v922
  %v987 = vmul.f32 %v795, %v923
  %v988 = vmul.f32 %v796, %v924
  %v989 = vmul.f32 %v797, %v925
  %v990 = vmul.f32 %v798, %v926
  %v991 = vmul.f32 %v799, %v927
  %v992 = vmul.f32 %v800, %v928
  %v993 = vmul.f32 %v801, %v929
  %v994 = vmul.f32 %v802, %v930
  %v995 = vmul.f32 %v803, %v931
  %v996 = vmul.f32 %v804, %v932
  %v997 = vmul.f32 %v805, %v933
  %v998 = vmul.f32 %v806, %v934
  %v999 = vmul.f32 %v807, %v935
  %v1000 = vmul.f32 %v808, %v936
  %v1001 = vmul.f32 %v809, %v937
  %v1002 = vmul.f32 %v810, %v938
  %v1003 = vmul.f32 %v811, %v939
  %v1004 = vmul.f32 %v812, %v940
  %v1005 = vmul.f32 %v813, %v941
  %v1006 = vmul.f32 %v814, %v942
  %v1007 = vmul.f32 %v815, %v943
  %v1008 = vmul.f32 %v816, %v944
  %v1009 = vmul.f32 %v817, %v945
  %v1010 = vmul.f32 %v818, %v946
  %v1011 = vmul.f32 %v819, %v947
  %v1012 = vmul.f32 %v820, %v948
  %v1013 = vmul.f32 %v821, %v949
  %v1014 = vmul.f32 %v822, %v950
  %v1015 = vmul.f32 %v823, %v951
  %v1016 = vmul.f32 %v824, %v952
  %v1017 = vmul.f32 %v825, %v953
  %v1018 = vmul.f32 %v826, %v954
  %v1019 = vmul.f32 %v827, %v955
  %v1020 = vmul.f32 %v828, %v956
  %v1021 = vmul.f32 %v829, %v957
  %v1022 = vmul.f32 %v830, %v958
  %v1023 = vmul.f32 %v831, %v959
  %v1024 = vmul.f32 %v832, %v960
  %v1025 = vmul.f32 %v833, %v961
  %v1026 = vmul.f32 %v834, %v962
  %v1027 = vmul.f32 %v835, %v963
  %v1028 = vmul.f32 %v836, %v964
  %v1029 = vpack.c.bf16 %v967, %v965
  %v1030 = vpack.c.bf16 %v968, %v966
  %v1031 = vpack.c.bf16 %v971, %v969
  %v1032 = vpack.c.bf16 %v972, %v970
  %v1033 = vpack.c.bf16 %v975, %v973
  %v1034 = vpack.c.bf16 %v976, %v974
  %v1035 = vpack.c.bf16 %v979, %v977
  %v1036 = vpack.c.bf16 %v980, %v978
  %v1037 = vpack.c.bf16 %v983, %v981
  %v1038 = vpack.c.bf16 %v984, %v982
  %v1039 = vpack.c.bf16 %v987, %v985
  %v1040 = vpack.c.bf16 %v988, %v986
  %v1041 = vpack.c.bf16 %v991, %v989
  %v1042 = vpack.c.bf16 %v992, %v990
  %v1043 = vpack.c.bf16 %v995, %v993
  %v1044 = vpack.c.bf16 %v996, %v994
  %v1045 = vpack.c.bf16 %v999, %v997
  %v1046 = vpack.c.bf16 %v1000, %v998
  %v1047 = vpack.c.bf16 %v1003, %v1001
  %v1048 = vpack.c.bf16 %v1004, %v1002
  %v1049 = vpack.c.bf16 %v1007, %v1005
  %v1050 = vpack.c.bf16 %v1008, %v1006
  %v1051 = vpack.c.bf16 %v1011, %v1009
  %v1052 = vpack.c.bf16 %v1012, %v1010
  %v1053 = vpack.c.bf16 %v1015, %v1013
  %v1054 = vpack.c.bf16 %v1016, %v1014
  %v1055 = vpack.c.bf16 %v1019, %v1017
  %v1056 = vpack.c.bf16 %v1020, %v1018
  %v1057 = vpack.c.bf16 %v1023, %v1021
  %v1058 = vpack.c.bf16 %v1024, %v1022
  %v1059 = vpack.c.bf16 %v1027, %v1025
  %v1060 = vpack.c.bf16 %v1028, %v1026
  %v1093 = vunpack.c.l.b16 %v1029
  %v1094 = vunpack.c.l.b16 %v1030
  %v1095 = vunpack.c.h.b16 %v1029
  %v1096 = vunpack.c.h.b16 %v1030
  %v1097 = vunpack.c.l.b16 %v1031
  %v1098 = vunpack.c.l.b16 %v1032
  %v1099 = vunpack.c.h.b16 %v1031
  %v1100 = vunpack.c.h.b16 %v1032
  %v1101 = vunpack.c.l.b16 %v1033
  %v1102 = vunpack.c.l.b16 %v1034
  %v1103 = vunpack.c.h.b16 %v1033
  %v1104 = vunpack.c.h.b16 %v1034
  %v1105 = vunpack.c.l.b16 %v1035
  %v1106 = vunpack.c.l.b16 %v1036
  %v1107 = vunpack.c.h.b16 %v1035
  %v1108 = vunpack.c.h.b16 %v1036
  %v1109 = vunpack.c.l.b16 %v1037
  %v1110 = vunpack.c.l.b16 %v1038
  %v1111 = vunpack.c.h.b16 %v1037
  %v1112 = vunpack.c.h.b16 %v1038
  %v1113 = vunpack.c.l.b16 %v1039
  %v1114 = vunpack.c.l.b16 %v1040
  %v1115 = vunpack.c.h.b16 %v1039
  %v1116 = vunpack.c.h.b16 %v1040
  %v1117 = vunpack.c.l.b16 %v1041
  %v1118 = vunpack.c.l.b16 %v1042
  %v1119 = vunpack.c.h.b16 %v1041
  %v1120 = vunpack.c.h.b16 %v1042
  %v1121 = vunpack.c.l.b16 %v1043
  %v1122 = vunpack.c.l.b16 %v1044
  %v1123 = vunpack.c.h.b16 %v1043
  %v1124 = vunpack.c.h.b16 %v1044
  %v1125 = vunpack.c.l.b16 %v1045
  %v1126 = vunpack.c.l.b16 %v1046
  %v1127 = vunpack.c.h.b16 %v1045
  %v1128 = vunpack.c.h.b16 %v1046
  %v1129 = vunpack.c.l.b16 %v1047
  %v1130 = vunpack.c.l.b16 %v1048
  %v1131 = vunpack.c.h.b16 %v1047
  %v1132 = vunpack.c.h.b16 %v1048
  %v1133 = vunpack.c.l.b16 %v1049
  %v1134 = vunpack.c.l.b16 %v1050
  %v1135 = vunpack.c.h.b16 %v1049
  %v1136 = vunpack.c.h.b16 %v1050
  %v1137 = vunpack.c.l.b16 %v1051
  %v1138 = vunpack.c.l.b16 %v1052
  %v1139 = vunpack.c.h.b16 %v1051
  %v1140 = vunpack.c.h.b16 %v1052
  %v1141 = vunpack.c.l.b16 %v1053
  %v1142 = vunpack.c.l.b16 %v1054
  %v1143 = vunpack.c.h.b16 %v1053
  %v1144 = vunpack.c.h.b16 %v1054
  %v1145 = vunpack.c.l.b16 %v1055
  %v1146 = vunpack.c.l.b16 %v1056
  %v1147 = vunpack.c.h.b16 %v1055
  %v1148 = vunpack.c.h.b16 %v1056
  %v1149 = vunpack.c.l.b16 %v1057
  %v1150 = vunpack.c.l.b16 %v1058
  %v1151 = vunpack.c.h.b16 %v1057
  %v1152 = vunpack.c.h.b16 %v1058
  %v1153 = vunpack.c.l.b16 %v1059
  %v1154 = vunpack.c.l.b16 %v1060
  %v1155 = vunpack.c.h.b16 %v1059
  %v1156 = vunpack.c.h.b16 %v1060
  %v1157 = vpack.c.b16 %v1094, %v1093
  %v1158 = vpack.c.b16 %v1096, %v1095
  %v1159 = vpack.c.b16 %v1098, %v1097
  %v1160 = vpack.c.b16 %v1100, %v1099
  %v1161 = vpack.c.b16 %v1102, %v1101
  %v1162 = vpack.c.b16 %v1104, %v1103
  %v1163 = vpack.c.b16 %v1106, %v1105
  %v1164 = vpack.c.b16 %v1108, %v1107
  %v1165 = vpack.c.b16 %v1110, %v1109
  %v1166 = vpack.c.b16 %v1112, %v1111
  %v1167 = vpack.c.b16 %v1114, %v1113
  %v1168 = vpack.c.b16 %v1116, %v1115
  %v1169 = vpack.c.b16 %v1118, %v1117
  %v1170 = vpack.c.b16 %v1120, %v1119
  %v1171 = vpack.c.b16 %v1122, %v1121
  %v1172 = vpack.c.b16 %v1124, %v1123
  %v1173 = vpack.c.b16 %v1126, %v1125
  %v1174 = vpack.c.b16 %v1128, %v1127
  %v1175 = vpack.c.b16 %v1130, %v1129
  %v1176 = vpack.c.b16 %v1132, %v1131
  %v1177 = vpack.c.b16 %v1134, %v1133
  %v1178 = vpack.c.b16 %v1136, %v1135
  %v1179 = vpack.c.b16 %v1138, %v1137
  %v1180 = vpack.c.b16 %v1140, %v1139
  %v1181 = vpack.c.b16 %v1142, %v1141
  %v1182 = vpack.c.b16 %v1144, %v1143
  %v1183 = vpack.c.b16 %v1146, %v1145
  %v1184 = vpack.c.b16 %v1148, %v1147
  %v1185 = vpack.c.b16 %v1150, %v1149
  %v1186 = vpack.c.b16 %v1152, %v1151
  %v1187 = vpack.c.b16 %v1154, %v1153
  %v1188 = vpack.c.b16 %v1156, %v1155
  %1221 = vst [vmem:[%s3] sm:$0xff] %v1157
  %1222 = vst [vmem:[%s3 + $0x8] sm:$0xff] %v1158
  %1223 = vst [vmem:[%s3 + $0x10] sm:$0xff] %v1159
  %1224 = vst [vmem:[%s3 + $0x18] sm:$0xff] %v1160
  %1225 = vst [vmem:[%s3 + $0x20] sm:$0xff] %v1161
  %1226 = vst [vmem:[%s3 + $0x28] sm:$0xff] %v1162
  %1227 = vst [vmem:[%s3 + $0x30] sm:$0xff] %v1163
  %1228 = vst [vmem:[%s3 + $0x38] sm:$0xff] %v1164
  %1229 = vst [vmem:[%s3 + $0x40] sm:$0xff] %v1165
  %1230 = vst [vmem:[%s3 + $0x48] sm:$0xff] %v1166
  %1231 = vst [vmem:[%s3 + $0x50] sm:$0xff] %v1167
  %1232 = vst [vmem:[%s3 + $0x58] sm:$0xff] %v1168
  %1233 = vst [vmem:[%s3 + $0x60] sm:$0xff] %v1169
  %1234 = vst [vmem:[%s3 + $0x68] sm:$0xff] %v1170
  %1235 = vst [vmem:[%s3 + $0x70] sm:$0xff] %v1171
  %1236 = vst [vmem:[%s3 + $0x78] sm:$0xff] %v1172
  %1237 = vst [vmem:[%s3 + $0x80] sm:$0xff] %v1173
  %1238 = vst [vmem:[%s3 + $0x88] sm:$0xff] %v1174
  %1239 = vst [vmem:[%s3 + $0x90] sm:$0xff] %v1175
  %1240 = vst [vmem:[%s3 + $0x98] sm:$0xff] %v1176
  %1241 = vst [vmem:[%s3 + $0xa0] sm:$0xff] %v1177
  %1242 = vst [vmem:[%s3 + $0xa8] sm:$0xff] %v1178
  %1243 = vst [vmem:[%s3 + $0xb0] sm:$0xff] %v1179
  %1244 = vst [vmem:[%s3 + $0xb8] sm:$0xff] %v1180
  %1245 = vst [vmem:[%s3 + $0xc0] sm:$0xff] %v1181
  %1246 = vst [vmem:[%s3 + $0xc8] sm:$0xff] %v1182
  %1247 = vst [vmem:[%s3 + $0xd0] sm:$0xff] %v1183
  %1248 = vst [vmem:[%s3 + $0xd8] sm:$0xff] %v1184
  %1249 = vst [vmem:[%s3 + $0xe0] sm:$0xff] %v1185
  %1250 = vst [vmem:[%s3 + $0xe8] sm:$0xff] %v1186
  %1251 = vst [vmem:[%s3 + $0xf0] sm:$0xff] %v1187
  %1252 = vst [vmem:[%s3 + $0xf8] sm:$0xff] %v1188
  // Predicated region
  $region14: #{transformer_block.8} parent=0 // pred_check
    _
  $region15: #{transformer_block.8} parent=0 // pred_check_branch
    %1254 = sbr.rel (0) target = $region17
  $region16: #{transformer_block.8} parent=0 // pred_region
    _
  $region17: #{transformer_block.8} parent=0 // pred_fallthru
    _
  // Predicated region
  $region18: #{transformer_block.8} parent=0 // pred_check
    _
  $region19: #{transformer_block.8} parent=0 // pred_check_branch
    %1256 = sbr.rel (0) target = $region21
  $region20: #{transformer_block.8} parent=0 // pred_region
    _
  $region21: #{transformer_block.8} parent=0 // pred_fallthru
    _

// kernel: transformer_block.6
$region0: #{transformer_block.6}
  #allocation0 [shape = 'u32[]', space=smem, size = 0x4, offset = 0x4, fixed_abs, tag = 'smem constant byte address 0x4 - core index']
  #allocation1 [shape = 'u32[144,128]{1,0:T(1,128)}', space=vmem, size = 0x12000, scoped, tag = 'internal scratch']
  %s0 = inlined_call_operand.vmem [shape: bf16[256,384], index: 0, kind: input, shape index: {}, may-alias: {0,1,2}]
  %s1 = inlined_call_operand.vmem [shape: bf16[256,384], index: 1, kind: input, shape index: {}, may-alias: {0,1,2}]
  %s2 = inlined_call_operand.vmem [shape: bf16[256,384], index: 2, kind: input, shape index: {}, may-alias: {0,1,2}]
  %s3 = inlined_call_operand.vmem [shape: bf16[2,1,128], index: 3, kind: input, shape index: {}]
  %s4 = inlined_call_operand.vmem [shape: bf16[256,128], index: 4, kind: output, shape index: {}]
  %s5 = sld [smem:[#allocation0]]
  $region172: #{transformer_block.6} parent=0
    _
  %s7 = ssub.s32 1, %s5
  %s8 = scalar_select 0, %s7, %s5
  $region1: #{transformer_block.6} parent=0
    #allocation2 [shape = 'u8[65536]{0}', space=vmem, size = 0x10000, scoped, tag = 'input window, operand 0']
    #allocation3 [shape = 'u8[65536]{0}', space=vmem, size = 0x10000, scoped, tag = 'input window, operand 1']
    #allocation4 [shape = 'u8[65536]{0}', space=vmem, size = 0x10000, scoped, tag = 'input window, operand 2']
    loop: start=0, step=1, limit=4
    $region2: #{transformer_block.6} parent=1 // loop_pre_header
      _
    $region3: #{transformer_block.6} parent=1 // loop_header
      %s10 = sphi 0, %s14
      %p11 = scmp.ge.s32.totalorder %s10, 4
      %s17 = sphi 0, %s36
      %s18 = sphi 0, %s32
      %s19 = sphi 0, %s28
      %s20 = sphi 0, %s17
      %s21 = sphi 0, %s18
      %s22 = sphi 0, %s19
      %s23 = sphi 0, %s20
      %s24 = sphi 0, %s21
      %s25 = sphi 0, %s22
      %s43 = sphi 0, %s45
      %s46 = sphi 0, %s43
      %s47 = sphi 0, %s46
      %s63 = sphi 0, %s47
      %s73 = sphi 0, %s75
      %s76 = sphi 0, %s73
      %s77 = sphi 0, %s76
      %s93 = sphi 0, %s77
      %s103 = sphi 0, %s105
      %s106 = sphi 0, %s103
      %s107 = sphi 0, %s106
      %s123 = sphi 0, %s107
      %s129 = sphi 0, %s131
      %s132 = sphi 0, %s129
      %s133 = sphi 0, %s132
      %s149 = sphi 0, %s133
      %s159 = sphi 0, %s161
      %s162 = sphi 0, %s159
      %s163 = sphi 0, %s162
      %s179 = sphi 0, %s163
    $region4: #{transformer_block.6} parent=1 // loop_header_branch
      %13 = sbr.rel (%p11) target = $region8
    $region5: #{transformer_block.6} parent=1 // loop_body
      %s15 = ssub.s32 %s10, 1
      %s16 = ssub.s32 %s10, 2
      %s26 = sadd.s32 1, %s19
      %p27 = scmp.ge.s32.totalorder %s26, 1
      %s28 = scalar_select %p27, 0, %s26
      %s29 = sadd.s32 1, %s18
      %s30 = scalar_select %p27, %s29, %s18
      %p31 = scmp.ge.s32.totalorder %s30, 1
      %s32 = scalar_select %p31, 0, %s30
      %s33 = sadd.s32 1, %s17
      %s34 = scalar_select %p31, %s33, %s17
      %p35 = scmp.ge.s32.totalorder %s34, 2
      %s36 = scalar_select %p35, 0, %s34
      %s37 = sadd.s32 %s17, %s19
      %s38 = sadd.s32 %s36, %s28
      %s39 = ssub.s32 %s37, %s38
      %s40 = ssub.s32 %s18, %s32
      %s41 = sor.u32 %s39, %s40
      %p42 = scmp.eq.s32.totalorder %s41, 0
      %s44 = sadd.s32 %s43, 1
      %s45 = scalar_select %p42, %s43, %s44
      %p48 = pneg %p42
      %p49 = scmp.eq.s32.totalorder %s10, 1
      %p50 = por %p48, %p49
      %p51 = scmp.ne.s32.totalorder %s43, %s46
      %p52 = scmp.eq.s32.totalorder %s10, 0
      %p53 = por %p51, %p52
      %p54 = scmp.ne.s32.totalorder %s43, %s46
      %p55 = scmp.eq.s32.totalorder %s15, 1
      %p56 = por %p54, %p55
      %p57 = scmp.ne.s32.totalorder %s46, %s47
      %p58 = scmp.eq.s32.totalorder %s15, 0
      %p59 = por %p57, %p58
      %p60 = scmp.ne.s32.totalorder %s46, %s47
      %p61 = scmp.eq.s32.totalorder %s16, 1
      %p62 = por %p60, %p61
      %p64 = scmp.ne.s32.totalorder %s47, %s63
      %p65 = scmp.eq.s32.totalorder %s16, 0
      %p66 = por %p64, %p65
      %s67 = sadd.s32 %s18, 1
      %s68 = sadd.s32 %s32, 1
      %s69 = ssub.s32 %s17, %s36
      %s70 = ssub.s32 %s67, %s68
      %s71 = sor.u32 %s69, %s70
      %p72 = scmp.eq.s32.totalorder %s71, 0
      %s74 = sadd.s32 %s73, 1
      %s75 = scalar_select %p72, %s73, %s74
      %p78 = pneg %p72
      %p79 = scmp.eq.s32.totalorder %s10, 1
      %p80 = por %p78, %p79
      %p81 = scmp.ne.s32.totalorder %s73, %s76
      %p82 = scmp.eq.s32.totalorder %s10, 0
      %p83 = por %p81, %p82
      %p84 = scmp.ne.s32.totalorder %s73, %s76
      %p85 = scmp.eq.s32.totalorder %s15, 1
      %p86 = por %p84, %p85
      %p87 = scmp.ne.s32.totalorder %s76, %s77
      %p88 = scmp.eq.s32.totalorder %s15, 0
      %p89 = por %p87, %p88
      %p90 = scmp.ne.s32.totalorder %s76, %s77
      %p91 = scmp.eq.s32.totalorder %s16, 1
      %p92 = por %p90, %p91
      %p94 = scmp.ne.s32.totalorder %s77, %s93
      %p95 = scmp.eq.s32.totalorder %s16, 0
      %p96 = por %p94, %p95
      %s97 = sadd.s32 %s18, 2
      %s98 = sadd.s32 %s32, 2
      %s99 = ssub.s32 %s17, %s36
      %s100 = ssub.s32 %s97, %s98
      %s101 = sor.u32 %s99, %s100
      %p102 = scmp.eq.s32.totalorder %s101, 0
      %s104 = sadd.s32 %s103, 1
      %s105 = scalar_select %p102, %s103, %s104
      %p108 = pneg %p102
      %p109 = scmp.eq.s32.totalorder %s10, 1
      %p110 = por %p108, %p109
      %p111 = scmp.ne.s32.totalorder %s103, %s106
      %p112 = scmp.eq.s32.totalorder %s10, 0
      %p113 = por %p111, %p112
      %p114 = scmp.ne.s32.totalorder %s103, %s106
      %p115 = scmp.eq.s32.totalorder %s15, 1
      %p116 = por %p114, %p115
      %p117 = scmp.ne.s32.totalorder %s106, %s107
      %p118 = scmp.eq.s32.totalorder %s15, 0
      %p119 = por %p117, %p118
      %p120 = scmp.ne.s32.totalorder %s106, %s107
      %p121 = scmp.eq.s32.totalorder %s16, 1
      %p122 = por %p120, %p121
      %p124 = scmp.ne.s32.totalorder %s107, %s123
      %p125 = scmp.eq.s32.totalorder %s16, 0
      %p126 = por %p124, %p125
      %s127 = ssub.s32 %s17, %s36
      %p128 = scmp.eq.s32.totalorder %s127, 0
      %s130 = sadd.s32 %s129, 1
      %s131 = scalar_select %p128, %s129, %s130
      %p134 = pneg %p128
      %p135 = scmp.eq.s32.totalorder %s10, 1
      %p136 = por %p134, %p135
      %p137 = scmp.ne.s32.totalorder %s129, %s132
      %p138 = scmp.eq.s32.totalorder %s10, 0
      %p139 = por %p137, %p138
      %p140 = scmp.ne.s32.totalorder %s129, %s132
      %p141 = scmp.eq.s32.totalorder %s15, 1
      %p142 = por %p140, %p141
      %p143 = scmp.ne.s32.totalorder %s132, %s133
      %p144 = scmp.eq.s32.totalorder %s15, 0
      %p145 = por %p143, %p144
      %p146 = scmp.ne.s32.totalorder %s132, %s133
      %p147 = scmp.eq.s32.totalorder %s16, 1
      %p148 = por %p146, %p147
      %p150 = scmp.ne.s32.totalorder %s133, %s149
      %p151 = scmp.eq.s32.totalorder %s16, 0
      %p152 = por %p150, %p151
      %s153 = sadd.s32 %s17, %s19
      %s154 = sadd.s32 %s36, %s28
      %s155 = ssub.s32 %s153, %s154
      %s156 = ssub.s32 %s18, %s32
      %s157 = sor.u32 %s155, %s156
      %p158 = scmp.eq.s32.totalorder %s157, 0
      %s160 = sadd.s32 %s159, 1
      %s161 = scalar_select %p158, %s159, %s160
      %p164 = pneg %p158
      %p165 = scmp.eq.s32.totalorder %s10, 1
      %p166 = por %p164, %p165
      %p167 = scmp.ne.s32.totalorder %s159, %s162
      %p168 = scmp.eq.s32.totalorder %s10, 0
      %p169 = por %p167, %p168
      %p170 = scmp.ne.s32.totalorder %s159, %s162
      %p171 = scmp.eq.s32.totalorder %s15, 1
      %p172 = por %p170, %p171
      %p173 = scmp.ne.s32.totalorder %s162, %s163
      %p174 = scmp.eq.s32.totalorder %s15, 0
      %p175 = por %p173, %p174
      %p176 = scmp.ne.s32.totalorder %s162, %s163
      %p177 = scmp.eq.s32.totalorder %s16, 1
      %p178 = por %p176, %p177
      %p180 = scmp.ne.s32.totalorder %s163, %s179
      %p181 = scmp.eq.s32.totalorder %s16, 0
      %p182 = por %p180, %p181
      %p183 = scmp.le.s32.totalorder 1, %s10
      %p184 = scmp.lt.s32.totalorder %s10, 3
      %p185 = pnand %p183, %p184
      %p186 = pneg %p185
      // Predicated region
      $region9: #{transformer_block.6} parent=5 // pred_check
        _
      $region10: #{transformer_block.6} parent=5 // pred_check_branch
        %188 = sbr.rel (%p185) target = $region12
      $region11: #{transformer_block.6} parent=5 // pred_region
        %s189 = ssub.s32 %s10, 1
      $region12: #{transformer_block.6} parent=5 // pred_fallthru
        _
      %p190 = scmp.lt.s32.totalorder %s10, 2
      // Predicated region
      $region13: #{transformer_block.6} parent=5 // pred_check
        %p191 = pneg %p190
      $region14: #{transformer_block.6} parent=5 // pred_check_branch
        %193 = sbr.rel (%p191) target = $region16
      $region15: #{transformer_block.6} parent=5 // pred_region
        // Predicated region
        $region17: #{transformer_block.6} parent=15 // pred_check
          %p194 = pneg %p53
        $region18: #{transformer_block.6} parent=15 // pred_check_branch
          %196 = sbr.rel (%p194) target = $region20
        $region19: #{transformer_block.6} parent=15 // pred_region
          %s197 = sand.u32 %s43, 1
          %s198 = sand.u32 %s43, 1
          %s199 = smul.addr %s198, 64
          %s200 = scalar_lea.vmem [#allocation2], %s199
          %s201 = sadd.s32 %s17, %s19
          %s202 = smul.u32 16, %s201
          %s203 = smul.addr %s202, 3
          %s204 = sadd.s32 %s18, %s203
          %s205 = smul.addr %s204, 4
          %s206 = scalar_lea.vmem %s0, %s205
          // Predicated region
          $region21: #{transformer_block.6} parent=19 // pred_check
            _
          $region22: #{transformer_block.6} parent=19 // pred_check_branch
            %208 = sbr.rel (0) target = $region24
          $region23: #{transformer_block.6} parent=19 // pred_region
            // Predicated region
            $region25: #{transformer_block.6} parent=23 // pred_check
              _
            $region26: #{transformer_block.6} parent=23 // pred_check_branch
              %210 = sbr.rel target = $region28
            $region27: #{transformer_block.6} parent=23 // pred_region
              // Predicated region
              $region40: #{transformer_block.6} parent=27 // pred_check
                _
              $region41: #{transformer_block.6} parent=27 // pred_check_branch
                %255 = sbr.rel (0) target = $region43
              $region42: #{transformer_block.6} parent=27 // pred_region
                loop: start=0, step=1, limit=1
                $region44: #{transformer_block.6} parent=42 // loop_pre_header
                  _
                $region45: #{transformer_block.6} parent=42 // loop_header
                  %s257 = sphi 0, %s261
                  %p258 = scmp.ge.s32.totalorder %s257, 1
                  %s262 = sphi %s206, %s206
                  %s263 = sphi %s200, %s200
                $region46: #{transformer_block.6} parent=42 // loop_header_branch
                  %260 = sbr.rel (%p258) target = $region50
                $region47: #{transformer_block.6} parent=42 // loop_body
                  _
                $region48: #{transformer_block.6} parent=42 // loop_footer
                  %s261 = sadd.s32 1, %s257
                $region49: #{transformer_block.6} parent=42 // loop_footer_branch
                  %256 = sbr.rel target = $region45
                $region50: #{transformer_block.6} parent=42 // loop_exit
                  _
                loop: start=0, step=1, limit=1
                $region51: #{transformer_block.6} parent=42 // loop_pre_header
                  _
                $region52: #{transformer_block.6} parent=42 // loop_header
                  %s266 = sphi 0, %s270
                  %p267 = scmp.ge.s32.totalorder %s266, 1
                  %s271 = sphi %s206, %s206
                  %s272 = sphi %s200, %s200
                $region53: #{transformer_block.6} parent=42 // loop_header_branch
                  %269 = sbr.rel (%p267) target = $region57
                $region54: #{transformer_block.6} parent=42 // loop_body
                  %v273 = vld [vmem:[%s271] sm:$0xf]
                  %274 = vst [vmem:[%s272] sm:$0xf] %v273
                  %v275 = vld [vmem:[%s271 + $0xc] sm:$0xf]
                  %276 = vst [vmem:[%s272 + $0x4] sm:$0xf] %v275
                  %v277 = vld [vmem:[%s271 + $0x18] sm:$0xf]
                  %278 = vst [vmem:[%s272 + $0x8] sm:$0xf] %v277
                  %v279 = vld [vmem:[%s271 + $0x24] sm:$0xf]
                  %280 = vst [vmem:[%s272 + $0xc] sm:$0xf] %v279
                  %v281 = vld [vmem:[%s271 + $0x30] sm:$0xf]
                  %282 = vst [vmem:[%s272 + $0x10] sm:$0xf] %v281
                  %v283 = vld [vmem:[%s271 + $0x3c] sm:$0xf]
                  %284 = vst [vmem:[%s272 + $0x14] sm:$0xf] %v283
                  %v285 = vld [vmem:[%s271 + $0x48] sm:$0xf]
                  %286 = vst [vmem:[%s272 + $0x18] sm:$0xf] %v285
                  %v287 = vld [vmem:[%s271 + $0x54] sm:$0xf]
                  %288 = vst [vmem:[%s272 + $0x1c] sm:$0xf] %v287
                  %v289 = vld [vmem:[%s271 + $0x60] sm:$0xf]
                  %290 = vst [vmem:[%s272 + $0x20] sm:$0xf] %v289
                  %v291 = vld [vmem:[%s271 + $0x6c] sm:$0xf]
                  %292 = vst [vmem:[%s272 + $0x24] sm:$0xf] %v291
                  %v293 = vld [vmem:[%s271 + $0x78] sm:$0xf]
                  %294 = vst [vmem:[%s272 + $0x28] sm:$0xf] %v293
                  %v295 = vld [vmem:[%s271 + $0x84] sm:$0xf]
                  %296 = vst [vmem:[%s272 + $0x2c] sm:$0xf] %v295
                  %v297 = vld [vmem:[%s271 + $0x90] sm:$0xf]
                  %298 = vst [vmem:[%s272 + $0x30] sm:$0xf] %v297
                  %v299 = vld [vmem:[%s271 + $0x9c] sm:$0xf]
                  %300 = vst [vmem:[%s272 + $0x34] sm:$0xf] %v299
                  %v301 = vld [vmem:[%s271 + $0xa8] sm:$0xf]
                  %302 = vst [vmem:[%s272 + $0x38] sm:$0xf] %v301
                  %v303 = vld [vmem:[%s271 + $0xb4] sm:$0xf]
                  %304 = vst [vmem:[%s272 + $0x3c] sm:$0xf] %v303
                $region55: #{transformer_block.6} parent=42 // loop_footer
                  %s270 = sadd.s32 1, %s266
                $region56: #{transformer_block.6} parent=42 // loop_footer_branch
                  %265 = sbr.rel target = $region52
                $region57: #{transformer_block.6} parent=42 // loop_exit
                  _
              $region43: #{transformer_block.6} parent=27 // pred_fallthru
                _
            $region28: #{transformer_block.6} parent=23 // pred_fallthru
              _
            // Predicated region
            $region29: #{transformer_block.6} parent=23 // pred_check
              _
            $region30: #{transformer_block.6} parent=23 // pred_check_branch
              %212 = sbr.rel (0) target = $region32
            $region31: #{transformer_block.6} parent=23 // pred_region
              loop: start=0, step=1, limit=1
              $region33: #{transformer_block.6} parent=31 // loop_pre_header
                _
              $region34: #{transformer_block.6} parent=31 // loop_header
                %s215 = sphi 0, %s219
                %p216 = scmp.ge.s32.totalorder %s215, 1
                %s220 = sphi %s206, %s206
                %s221 = sphi %s200, %s200
              $region35: #{transformer_block.6} parent=31 // loop_header_branch
                %218 = sbr.rel (%p216) target = $region39
              $region36: #{transformer_block.6} parent=31 // loop_body
                %v222 = vld [vmem:[%s220] sm:$0xf]
                %223 = vst [vmem:[%s221] sm:$0xf] %v222
                %v224 = vld [vmem:[%s220 + $0xc] sm:$0xf]
                %225 = vst [vmem:[%s221 + $0x4] sm:$0xf] %v224
                %v226 = vld [vmem:[%s220 + $0x18] sm:$0xf]
                %227 = vst [vmem:[%s221 + $0x8] sm:$0xf] %v226
                %v228 = vld [vmem:[%s220 + $0x24] sm:$0xf]
                %229 = vst [vmem:[%s221 + $0xc] sm:$0xf] %v228
                %v230 = vld [vmem:[%s220 + $0x30] sm:$0xf]
                %231 = vst [vmem:[%s221 + $0x10] sm:$0xf] %v230
                %v232 = vld [vmem:[%s220 + $0x3c] sm:$0xf]
                %233 = vst [vmem:[%s221 + $0x14] sm:$0xf] %v232
                %v234 = vld [vmem:[%s220 + $0x48] sm:$0xf]
                %235 = vst [vmem:[%s221 + $0x18] sm:$0xf] %v234
                %v236 = vld [vmem:[%s220 + $0x54] sm:$0xf]
                %237 = vst [vmem:[%s221 + $0x1c] sm:$0xf] %v236
                %v238 = vld [vmem:[%s220 + $0x60] sm:$0xf]
                %239 = vst [vmem:[%s221 + $0x20] sm:$0xf] %v238
                %v240 = vld [vmem:[%s220 + $0x6c] sm:$0xf]
                %241 = vst [vmem:[%s221 + $0x24] sm:$0xf] %v240
                %v242 = vld [vmem:[%s220 + $0x78] sm:$0xf]
                %243 = vst [vmem:[%s221 + $0x28] sm:$0xf] %v242
                %v244 = vld [vmem:[%s220 + $0x84] sm:$0xf]
                %245 = vst [vmem:[%s221 + $0x2c] sm:$0xf] %v244
                %v246 = vld [vmem:[%s220 + $0x90] sm:$0xf]
                %247 = vst [vmem:[%s221 + $0x30] sm:$0xf] %v246
                %v248 = vld [vmem:[%s220 + $0x9c] sm:$0xf]
                %249 = vst [vmem:[%s221 + $0x34] sm:$0xf] %v248
                %v250 = vld [vmem:[%s220 + $0xa8] sm:$0xf]
                %251 = vst [vmem:[%s221 + $0x38] sm:$0xf] %v250
                %v252 = vld [vmem:[%s220 + $0xb4] sm:$0xf]
                %253 = vst [vmem:[%s221 + $0x3c] sm:$0xf] %v252
              $region37: #{transformer_block.6} parent=31 // loop_footer
                %s219 = sadd.s32 1, %s215
              $region38: #{transformer_block.6} parent=31 // loop_footer_branch
                %214 = sbr.rel target = $region34
              $region39: #{transformer_block.6} parent=31 // loop_exit
                _
            $region32: #{transformer_block.6} parent=23 // pred_fallthru
              _
          $region24: #{transformer_block.6} parent=19 // pred_fallthru
            _
          %305 = vnop
        $region20: #{transformer_block.6} parent=15 // pred_fallthru
          _
        // Predicated region
        $region58: #{transformer_block.6} parent=15 // pred_check
          %p306 = pneg %p83
        $region59: #{transformer_block.6} parent=15 // pred_check_branch
          %308 = sbr.rel (%p306) target = $region61
        $region60: #{transformer_block.6} parent=15 // pred_region
          %s309 = sand.u32 %s73, 1
          %s310 = sand.u32 %s73, 1
          %s311 = smul.addr %s310, 64
          %s312 = scalar_lea.vmem [#allocation3], %s311
          %s313 = sadd.s32 %s18, 1
          %s314 = smul.u32 16, %s17
          %s315 = smul.addr %s314, 3
          %s316 = sadd.s32 %s313, %s315
          %s317 = smul.addr %s316, 4
          %s318 = scalar_lea.vmem %s1, %s317
          // Predicated region
          $region62: #{transformer_block.6} parent=60 // pred_check
            _
          $region63: #{transformer_block.6} parent=60 // pred_check_branch
            %320 = sbr.rel (0) target = $region65
          $region64: #{transformer_block.6} parent=60 // pred_region
            // Predicated region
            $region66: #{transformer_block.6} parent=64 // pred_check
              _
            $region67: #{transformer_block.6} parent=64 // pred_check_branch
              %322 = sbr.rel target = $region69
            $region68: #{transformer_block.6} parent=64 // pred_region
              // Predicated region
              $region81: #{transformer_block.6} parent=68 // pred_check
                _
              $region82: #{transformer_block.6} parent=68 // pred_check_branch
                %367 = sbr.rel (0) target = $region84
              $region83: #{transformer_block.6} parent=68 // pred_region
                loop: start=0, step=1, limit=1
                $region85: #{transformer_block.6} parent=83 // loop_pre_header
                  _
                $region86: #{transformer_block.6} parent=83 // loop_header
                  %s369 = sphi 0, %s373
                  %p370 = scmp.ge.s32.totalorder %s369, 1
                  %s374 = sphi %s318, %s318
                  %s375 = sphi %s312, %s312
                $region87: #{transformer_block.6} parent=83 // loop_header_branch
                  %372 = sbr.rel (%p370) target = $region91
                $region88: #{transformer_block.6} parent=83 // loop_body
                  _
                $region89: #{transformer_block.6} parent=83 // loop_footer
                  %s373 = sadd.s32 1, %s369
                $region90: #{transformer_block.6} parent=83 // loop_footer_branch
                  %368 = sbr.rel target = $region86
                $region91: #{transformer_block.6} parent=83 // loop_exit
                  _
                loop: start=0, step=1, limit=1
                $region92: #{transformer_block.6} parent=83 // loop_pre_header
                  _
                $region93: #{transformer_block.6} parent=83 // loop_header
                  %s378 = sphi 0, %s382
                  %p379 = scmp.ge.s32.totalorder %s378, 1
                  %s383 = sphi %s318, %s318
                  %s384 = sphi %s312, %s312
                $region94: #{transformer_block.6} parent=83 // loop_header_branch
                  %381 = sbr.rel (%p379) target = $region98
                $region95: #{transformer_block.6} parent=83 // loop_body
                  %v385 = vld [vmem:[%s383] sm:$0xf]
                  %386 = vst [vmem:[%s384] sm:$0xf] %v385
                  %v387 = vld [vmem:[%s383 + $0xc] sm:$0xf]
                  %388 = vst [vmem:[%s384 + $0x4] sm:$0xf] %v387
                  %v389 = vld [vmem:[%s383 + $0x18] sm:$0xf]
                  %390 = vst [vmem:[%s384 + $0x8] sm:$0xf] %v389
                  %v391 = vld [vmem:[%s383 + $0x24] sm:$0xf]
                  %392 = vst [vmem:[%s384 + $0xc] sm:$0xf] %v391
                  %v393 = vld [vmem:[%s383 + $0x30] sm:$0xf]
                  %394 = vst [vmem:[%s384 + $0x10] sm:$0xf] %v393
                  %v395 = vld [vmem:[%s383 + $0x3c] sm:$0xf]
                  %396 = vst [vmem:[%s384 + $0x14] sm:$0xf] %v395
                  %v397 = vld [vmem:[%s383 + $0x48] sm:$0xf]
                  %398 = vst [vmem:[%s384 + $0x18] sm:$0xf] %v397
                  %v399 = vld [vmem:[%s383 + $0x54] sm:$0xf]
                  %400 = vst [vmem:[%s384 + $0x1c] sm:$0xf] %v399
                  %v401 = vld [vmem:[%s383 + $0x60] sm:$0xf]
                  %402 = vst [vmem:[%s384 + $0x20] sm:$0xf] %v401
                  %v403 = vld [vmem:[%s383 + $0x6c] sm:$0xf]
                  %404 = vst [vmem:[%s384 + $0x24] sm:$0xf] %v403
                  %v405 = vld [vmem:[%s383 + $0x78] sm:$0xf]
                  %406 = vst [vmem:[%s384 + $0x28] sm:$0xf] %v405
                  %v407 = vld [vmem:[%s383 + $0x84] sm:$0xf]
                  %408 = vst [vmem:[%s384 + $0x2c] sm:$0xf] %v407
                  %v409 = vld [vmem:[%s383 + $0x90] sm:$0xf]
                  %410 = vst [vmem:[%s384 + $0x30] sm:$0xf] %v409
                  %v411 = vld [vmem:[%s383 + $0x9c] sm:$0xf]
                  %412 = vst [vmem:[%s384 + $0x34] sm:$0xf] %v411
                  %v413 = vld [vmem:[%s383 + $0xa8] sm:$0xf]
                  %414 = vst [vmem:[%s384 + $0x38] sm:$0xf] %v413
                  %v415 = vld [vmem:[%s383 + $0xb4] sm:$0xf]
                  %416 = vst [vmem:[%s384 + $0x3c] sm:$0xf] %v415
                $region96: #{transformer_block.6} parent=83 // loop_footer
                  %s382 = sadd.s32 1, %s378
                $region97: #{transformer_block.6} parent=83 // loop_footer_branch
                  %377 = sbr.rel target = $region93
                $region98: #{transformer_block.6} parent=83 // loop_exit
                  _
              $region84: #{transformer_block.6} parent=68 // pred_fallthru
                _
            $region69: #{transformer_block.6} parent=64 // pred_fallthru
              _
            // Predicated region
            $region70: #{transformer_block.6} parent=64 // pred_check
              _
            $region71: #{transformer_block.6} parent=64 // pred_check_branch
              %324 = sbr.rel (0) target = $region73
            $region72: #{transformer_block.6} parent=64 // pred_region
              loop: start=0, step=1, limit=1
              $region74: #{transformer_block.6} parent=72 // loop_pre_header
                _
              $region75: #{transformer_block.6} parent=72 // loop_header
                %s327 = sphi 0, %s331
                %p328 = scmp.ge.s32.totalorder %s327, 1
                %s332 = sphi %s318, %s318
                %s333 = sphi %s312, %s312
              $region76: #{transformer_block.6} parent=72 // loop_header_branch
                %330 = sbr.rel (%p328) target = $region80
              $region77: #{transformer_block.6} parent=72 // loop_body
                %v334 = vld [vmem:[%s332] sm:$0xf]
                %335 = vst [vmem:[%s333] sm:$0xf] %v334
                %v336 = vld [vmem:[%s332 + $0xc] sm:$0xf]
                %337 = vst [vmem:[%s333 + $0x4] sm:$0xf] %v336
                %v338 = vld [vmem:[%s332 + $0x18] sm:$0xf]
                %339 = vst [vmem:[%s333 + $0x8] sm:$0xf] %v338
                %v340 = vld [vmem:[%s332 + $0x24] sm:$0xf]
                %341 = vst [vmem:[%s333 + $0xc] sm:$0xf] %v340
                %v342 = vld [vmem:[%s332 + $0x30] sm:$0xf]
                %343 = vst [vmem:[%s333 + $0x10] sm:$0xf] %v342
                %v344 = vld [vmem:[%s332 + $0x3c] sm:$0xf]
                %345 = vst [vmem:[%s333 + $0x14] sm:$0xf] %v344
                %v346 = vld [vmem:[%s332 + $0x48] sm:$0xf]
                %347 = vst [vmem:[%s333 + $0x18] sm:$0xf] %v346
                %v348 = vld [vmem:[%s332 + $0x54] sm:$0xf]
                %349 = vst [vmem:[%s333 + $0x1c] sm:$0xf] %v348
                %v350 = vld [vmem:[%s332 + $0x60] sm:$0xf]
                %351 = vst [vmem:[%s333 + $0x20] sm:$0xf] %v350
                %v352 = vld [vmem:[%s332 + $0x6c] sm:$0xf]
                %353 = vst [vmem:[%s333 + $0x24] sm:$0xf] %v352
                %v354 = vld [vmem:[%s332 + $0x78] sm:$0xf]
                %355 = vst [vmem:[%s333 + $0x28] sm:$0xf] %v354
                %v356 = vld [vmem:[%s332 + $0x84] sm:$0xf]
                %357 = vst [vmem:[%s333 + $0x2c] sm:$0xf] %v356
                %v358 = vld [vmem:[%s332 + $0x90] sm:$0xf]
                %359 = vst [vmem:[%s333 + $0x30] sm:$0xf] %v358
                %v360 = vld [vmem:[%s332 + $0x9c] sm:$0xf]
                %361 = vst [vmem:[%s333 + $0x34] sm:$0xf] %v360
                %v362 = vld [vmem:[%s332 + $0xa8] sm:$0xf]
                %363 = vst [vmem:[%s333 + $0x38] sm:$0xf] %v362
                %v364 = vld [vmem:[%s332 + $0xb4] sm:$0xf]
                %365 = vst [vmem:[%s333 + $0x3c] sm:$0xf] %v364
              $region78: #{transformer_block.6} parent=72 // loop_footer
                %s331 = sadd.s32 1, %s327
              $region79: #{transformer_block.6} parent=72 // loop_footer_branch
                %326 = sbr.rel target = $region75
              $region80: #{transformer_block.6} parent=72 // loop_exit
                _
            $region73: #{transformer_block.6} parent=64 // pred_fallthru
              _
          $region65: #{transformer_block.6} parent=60 // pred_fallthru
            _
          %417 = vnop
        $region61: #{transformer_block.6} parent=15 // pred_fallthru
          _
        // Predicated region
        $region99: #{transformer_block.6} parent=15 // pred_check
          %p418 = pneg %p113
        $region100: #{transformer_block.6} parent=15 // pred_check_branch
          %420 = sbr.rel (%p418) target = $region102
        $region101: #{transformer_block.6} parent=15 // pred_region
          %s421 = sand.u32 %s103, 1
          %s422 = sand.u32 %s103, 1
          %s423 = smul.addr %s422, 64
          %s424 = scalar_lea.vmem [#allocation4], %s423
          %s425 = sadd.s32 %s18, 2
          %s426 = smul.u32 16, %s17
          %s427 = smul.addr %s426, 3
          %s428 = sadd.s32 %s425, %s427
          %s429 = smul.addr %s428, 4
          %s430 = scalar_lea.vmem %s2, %s429
          // Predicated region
          $region103: #{transformer_block.6} parent=101 // pred_check
            _
          $region104: #{transformer_block.6} parent=101 // pred_check_branch
            %432 = sbr.rel (0) target = $region106
          $region105: #{transformer_block.6} parent=101 // pred_region
            // Predicated region
            $region107: #{transformer_block.6} parent=105 // pred_check
              _
            $region108: #{transformer_block.6} parent=105 // pred_check_branch
              %434 = sbr.rel target = $region110
            $region109: #{transformer_block.6} parent=105 // pred_region
              // Predicated region
              $region122: #{transformer_block.6} parent=109 // pred_check
                _
              $region123: #{transformer_block.6} parent=109 // pred_check_branch
                %479 = sbr.rel (0) target = $region125
              $region124: #{transformer_block.6} parent=109 // pred_region
                loop: start=0, step=1, limit=1
                $region126: #{transformer_block.6} parent=124 // loop_pre_header
                  _
                $region127: #{transformer_block.6} parent=124 // loop_header
                  %s481 = sphi 0, %s485
                  %p482 = scmp.ge.s32.totalorder %s481, 1
                  %s486 = sphi %s430, %s430
                  %s487 = sphi %s424, %s424
                $region128: #{transformer_block.6} parent=124 // loop_header_branch
                  %484 = sbr.rel (%p482) target = $region132
                $region129: #{transformer_block.6} parent=124 // loop_body
                  _
                $region130: #{transformer_block.6} parent=124 // loop_footer
                  %s485 = sadd.s32 1, %s481
                $region131: #{transformer_block.6} parent=124 // loop_footer_branch
                  %480 = sbr.rel target = $region127
                $region132: #{transformer_block.6} parent=124 // loop_exit
                  _
                loop: start=0, step=1, limit=1
                $region133: #{transformer_block.6} parent=124 // loop_pre_header
                  _
                $region134: #{transformer_block.6} parent=124 // loop_header
                  %s490 = sphi 0, %s494
                  %p491 = scmp.ge.s32.totalorder %s490, 1
                  %s495 = sphi %s430, %s430
                  %s496 = sphi %s424, %s424
                $region135: #{transformer_block.6} parent=124 // loop_header_branch
                  %493 = sbr.rel (%p491) target = $region139
                $region136: #{transformer_block.6} parent=124 // loop_body
                  %v497 = vld [vmem:[%s495] sm:$0xf]
                  %498 = vst [vmem:[%s496] sm:$0xf] %v497
                  %v499 = vld [vmem:[%s495 + $0xc] sm:$0xf]
                  %500 = vst [vmem:[%s496 + $0x4] sm:$0xf] %v499
                  %v501 = vld [vmem:[%s495 + $0x18] sm:$0xf]
                  %502 = vst [vmem:[%s496 + $0x8] sm:$0xf] %v501
                  %v503 = vld [vmem:[%s495 + $0x24] sm:$0xf]
                  %504 = vst [vmem:[%s496 + $0xc] sm:$0xf] %v503
                  %v505 = vld [vmem:[%s495 + $0x30] sm:$0xf]
                  %506 = vst [vmem:[%s496 + $0x10] sm:$0xf] %v505
                  %v507 = vld [vmem:[%s495 + $0x3c] sm:$0xf]
                  %508 = vst [vmem:[%s496 + $0x14] sm:$0xf] %v507
                  %v509 = vld [vmem:[%s495 + $0x48] sm:$0xf]
                  %510 = vst [vmem:[%s496 + $0x18] sm:$0xf] %v509
                  %v511 = vld [vmem:[%s495 + $0x54] sm:$0xf]
                  %512 = vst [vmem:[%s496 + $0x1c] sm:$0xf] %v511
                  %v513 = vld [vmem:[%s495 + $0x60] sm:$0xf]
                  %514 = vst [vmem:[%s496 + $0x20] sm:$0xf] %v513
                  %v515 = vld [vmem:[%s495 + $0x6c] sm:$0xf]
                  %516 = vst [vmem:[%s496 + $0x24] sm:$0xf] %v515
                  %v517 = vld [vmem:[%s495 + $0x78] sm:$0xf]
                  %518 = vst [vmem:[%s496 + $0x28] sm:$0xf] %v517
                  %v519 = vld [vmem:[%s495 + $0x84] sm:$0xf]
                  %520 = vst [vmem:[%s496 + $0x2c] sm:$0xf] %v519
                  %v521 = vld [vmem:[%s495 + $0x90] sm:$0xf]
                  %522 = vst [vmem:[%s496 + $0x30] sm:$0xf] %v521
                  %v523 = vld [vmem:[%s495 + $0x9c] sm:$0xf]
                  %524 = vst [vmem:[%s496 + $0x34] sm:$0xf] %v523
                  %v525 = vld [vmem:[%s495 + $0xa8] sm:$0xf]
                  %526 = vst [vmem:[%s496 + $0x38] sm:$0xf] %v525
                  %v527 = vld [vmem:[%s495 + $0xb4] sm:$0xf]
                  %528 = vst [vmem:[%s496 + $0x3c] sm:$0xf] %v527
                $region137: #{transformer_block.6} parent=124 // loop_footer
                  %s494 = sadd.s32 1, %s490
                $region138: #{transformer_block.6} parent=124 // loop_footer_branch
                  %489 = sbr.rel target = $region134
                $region139: #{transformer_block.6} parent=124 // loop_exit
                  _
              $region125: #{transformer_block.6} parent=109 // pred_fallthru
                _
            $region110: #{transformer_block.6} parent=105 // pred_fallthru
              _
            // Predicated region
            $region111: #{transformer_block.6} parent=105 // pred_check
              _
            $region112: #{transformer_block.6} parent=105 // pred_check_branch
              %436 = sbr.rel (0) target = $region114
            $region113: #{transformer_block.6} parent=105 // pred_region
              loop: start=0, step=1, limit=1
              $region115: #{transformer_block.6} parent=113 // loop_pre_header
                _
              $region116: #{transformer_block.6} parent=113 // loop_header
                %s439 = sphi 0, %s443
                %p440 = scmp.ge.s32.totalorder %s439, 1
                %s444 = sphi %s430, %s430
                %s445 = sphi %s424, %s424
              $region117: #{transformer_block.6} parent=113 // loop_header_branch
                %442 = sbr.rel (%p440) target = $region121
              $region118: #{transformer_block.6} parent=113 // loop_body
                %v446 = vld [vmem:[%s444] sm:$0xf]
                %447 = vst [vmem:[%s445] sm:$0xf] %v446
                %v448 = vld [vmem:[%s444 + $0xc] sm:$0xf]
                %449 = vst [vmem:[%s445 + $0x4] sm:$0xf] %v448
                %v450 = vld [vmem:[%s444 + $0x18] sm:$0xf]
                %451 = vst [vmem:[%s445 + $0x8] sm:$0xf] %v450
                %v452 = vld [vmem:[%s444 + $0x24] sm:$0xf]
                %453 = vst [vmem:[%s445 + $0xc] sm:$0xf] %v452
                %v454 = vld [vmem:[%s444 + $0x30] sm:$0xf]
                %455 = vst [vmem:[%s445 + $0x10] sm:$0xf] %v454
                %v456 = vld [vmem:[%s444 + $0x3c] sm:$0xf]
                %457 = vst [vmem:[%s445 + $0x14] sm:$0xf] %v456
                %v458 = vld [vmem:[%s444 + $0x48] sm:$0xf]
                %459 = vst [vmem:[%s445 + $0x18] sm:$0xf] %v458
                %v460 = vld [vmem:[%s444 + $0x54] sm:$0xf]
                %461 = vst [vmem:[%s445 + $0x1c] sm:$0xf] %v460
                %v462 = vld [vmem:[%s444 + $0x60] sm:$0xf]
                %463 = vst [vmem:[%s445 + $0x20] sm:$0xf] %v462
                %v464 = vld [vmem:[%s444 + $0x6c] sm:$0xf]
                %465 = vst [vmem:[%s445 + $0x24] sm:$0xf] %v464
                %v466 = vld [vmem:[%s444 + $0x78] sm:$0xf]
                %467 = vst [vmem:[%s445 + $0x28] sm:$0xf] %v466
                %v468 = vld [vmem:[%s444 + $0x84] sm:$0xf]
                %469 = vst [vmem:[%s445 + $0x2c] sm:$0xf] %v468
                %v470 = vld [vmem:[%s444 + $0x90] sm:$0xf]
                %471 = vst [vmem:[%s445 + $0x30] sm:$0xf] %v470
                %v472 = vld [vmem:[%s444 + $0x9c] sm:$0xf]
                %473 = vst [vmem:[%s445 + $0x34] sm:$0xf] %v472
                %v474 = vld [vmem:[%s444 + $0xa8] sm:$0xf]
                %475 = vst [vmem:[%s445 + $0x38] sm:$0xf] %v474
                %v476 = vld [vmem:[%s444 + $0xb4] sm:$0xf]
                %477 = vst [vmem:[%s445 + $0x3c] sm:$0xf] %v476
              $region119: #{transformer_block.6} parent=113 // loop_footer
                %s443 = sadd.s32 1, %s439
              $region120: #{transformer_block.6} parent=113 // loop_footer_branch
                %438 = sbr.rel target = $region116
              $region121: #{transformer_block.6} parent=113 // loop_exit
                _
            $region114: #{transformer_block.6} parent=105 // pred_fallthru
              _
          $region106: #{transformer_block.6} parent=101 // pred_fallthru
            _
          %529 = vnop
        $region102: #{transformer_block.6} parent=15 // pred_fallthru
          _
        // Predicated region
        $region140: #{transformer_block.6} parent=15 // pred_check
          %p530 = pneg %p139
        $region141: #{transformer_block.6} parent=15 // pred_check_branch
          %532 = sbr.rel (%p530) target = $region143
        $region142: #{transformer_block.6} parent=15 // pred_region
          %p533 = scmp.lt.s32.totalorder %s17, 1
          %s534 = scalar_select %p533, %s17, 1
          %s535 = scalar_lea.vmem %s3, %s534
        $region143: #{transformer_block.6} parent=15 // pred_fallthru
          _
      $region16: #{transformer_block.6} parent=5 // pred_fallthru
        _
      %p536 = scmp.le.s32.totalorder 1, %s10
      %p537 = scmp.lt.s32.totalorder %s10, 3
      %p538 = pnand %p536, %p537
      %p539 = pneg %p538
      // Predicated region
      $region144: #{transformer_block.6} parent=5 // pred_check
        _
      $region145: #{transformer_block.6} parent=5 // pred_check_branch
        %541 = sbr.rel (%p538) target = $region147
      $region146: #{transformer_block.6} parent=5 // pred_region
        %s542 = ssub.s32 %s10, 1
        %s543 = sand.u32 %s46, 1
        %s544 = sand.u32 %s46, 1
        %s545 = smul.addr %s544, 64
        %s546 = scalar_lea.vmem [#allocation2], %s545
        // Predicated region
        $region148: #{transformer_block.6} parent=146 // pred_check
          %p547 = pneg %p59
        $region149: #{transformer_block.6} parent=146 // pred_check_branch
          %549 = sbr.rel (%p547) target = $region151
        $region150: #{transformer_block.6} parent=146 // pred_region
          _
        $region151: #{transformer_block.6} parent=146 // pred_fallthru
          _
        %s550 = sand.u32 %s76, 1
        %s551 = sand.u32 %s76, 1
        %s552 = smul.addr %s551, 64
        %s553 = scalar_lea.vmem [#allocation3], %s552
        // Predicated region
        $region152: #{transformer_block.6} parent=146 // pred_check
          %p554 = pneg %p89
        $region153: #{transformer_block.6} parent=146 // pred_check_branch
          %556 = sbr.rel (%p554) target = $region155
        $region154: #{transformer_block.6} parent=146 // pred_region
          _
        $region155: #{transformer_block.6} parent=146 // pred_fallthru
          _
        %s557 = sand.u32 %s106, 1
        %s558 = sand.u32 %s106, 1
        %s559 = smul.addr %s558, 64
        %s560 = scalar_lea.vmem [#allocation4], %s559
        // Predicated region
        $region156: #{transformer_block.6} parent=146 // pred_check
          %p561 = pneg %p119
        $region157: #{transformer_block.6} parent=146 // pred_check_branch
          %563 = sbr.rel (%p561) target = $region159
        $region158: #{transformer_block.6} parent=146 // pred_region
          _
        $region159: #{transformer_block.6} parent=146 // pred_fallthru
          _
        %s564 = sand.u32 %s46, 1
        %s565 = sand.u32 %s46, 1
        %s566 = smul.addr %s565, 64
        %s567 = scalar_lea.vmem [#allocation2], %s566
        %p568 = pneg %p59
        %p569 = pneg %p56
        %s570 = sand.u32 %s76, 1
        %s571 = sand.u32 %s76, 1
        %s572 = smul.addr %s571, 64
        %s573 = scalar_lea.vmem [#allocation3], %s572
        %p574 = pneg %p89
        %p575 = pneg %p86
        %s576 = sand.u32 %s106, 1
        %s577 = sand.u32 %s106, 1
        %s578 = smul.addr %s577, 64
        %s579 = scalar_lea.vmem [#allocation4], %s578
        %p580 = pneg %p119
        %p581 = pneg %p116
        %p582 = scmp.lt.s32.totalorder %s20, 1
        %s583 = scalar_select %p582, %s20, 1
        %s584 = scalar_lea.vmem %s3, %s583
        %p585 = pneg %p145
        %p586 = pneg %p142
        %p587 = pneg %p175
        %p588 = pneg %p172
        %s589 = sadd.s32 %s20, %s22
        %s590 = smul.u32 16, %s589
        %p591 = scmp.lt.s32.totalorder %s590, 31
        %s592 = scalar_select %p591, %s590, 31
        %p593 = scmp.lt.s32.totalorder %s21, 0
        %s594 = scalar_select %p593, %s21, 0
        %s595 = sadd.s32 %s594, %s592
        %s596 = smul.addr %s595, 4
        %s597 = scalar_lea.vmem %s4, %s596
        %s598 = sadd.s32 %s20, %s22
        %s599 = smul.u32 16, %s598
        %s600 = sadd.s32 %s21, 1
        %s601 = smul.u32 16, %s20
        %s602 = sadd.s32 %s21, 2
        %s603 = smul.u32 16, %s20
        %p604 = scmp.lt.s32.totalorder %s20, 1
        %s605 = scalar_select %p604, %s20, 1
        %s606 = scalar_lea.vmem %s3, %s605
        %s607 = sadd.s32 %s20, %s22
        %s608 = smul.u32 16, %s607
        %p609 = scmp.lt.s32.totalorder %s608, 31
        %s610 = scalar_select %p609, %s608, 31
        %p611 = scmp.lt.s32.totalorder %s21, 0
        %s612 = scalar_select %p611, %s21, 0
        %s613 = sadd.s32 %s612, %s610
        %s614 = smul.addr %s613, 4
        %s615 = scalar_lea.vmem %s4, %s614
        %s616 = sadd.s32 %s20, %s22
        %s617 = smul.u32 16, %s616
        %v619 = vld [vmem:[%s606] sm:$0x1]
        %v620 = vunpack.c.l.bf16 %v619
        %v621 = vsub.f32 %v620, 1.0
        %v622 = vmul.f32 %v621, 10000.0
        %v623 = vld [vmem:[%s546] sm:$0xf]
        %v624 = vld [vmem:[%s546 + $0x4] sm:$0xf]
        %v625 = vld [vmem:[%s546 + $0x8] sm:$0xf]
        %v626 = vld [vmem:[%s546 + $0xc] sm:$0xf]
        %v627 = vld [vmem:[%s546 + $0x10] sm:$0xf]
        %v628 = vld [vmem:[%s546 + $0x14] sm:$0xf]
        %v629 = vld [vmem:[%s546 + $0x18] sm:$0xf]
        %v630 = vld [vmem:[%s546 + $0x1c] sm:$0xf]
        %v631 = vld [vmem:[%s546 + $0x20] sm:$0xf]
        %v632 = vld [vmem:[%s546 + $0x24] sm:$0xf]
        %v633 = vld [vmem:[%s546 + $0x28] sm:$0xf]
        %v634 = vld [vmem:[%s546 + $0x2c] sm:$0xf]
        %v635 = vld [vmem:[%s546 + $0x30] sm:$0xf]
        %v636 = vld [vmem:[%s546 + $0x34] sm:$0xf]
        %v637 = vld [vmem:[%s546 + $0x38] sm:$0xf]
        %v638 = vld [vmem:[%s546 + $0x3c] sm:$0xf]
        %v639 = vld [vmem:[%s553] sm:$0xf]
        %v640 = vld [vmem:[%s553 + $0x4] sm:$0xf]
        %v641 = vld [vmem:[%s553 + $0x8] sm:$0xf]
        %v642 = vld [vmem:[%s553 + $0xc] sm:$0xf]
        %v643 = vld [vmem:[%s553 + $0x10] sm:$0xf]
        %v644 = vld [vmem:[%s553 + $0x14] sm:$0xf]
        %v645 = vld [vmem:[%s553 + $0x18] sm:$0xf]
        %v646 = vld [vmem:[%s553 + $0x1c] sm:$0xf]
        %v647 = vld [vmem:[%s553 + $0x20] sm:$0xf]
        %v648 = vld [vmem:[%s553 + $0x24] sm:$0xf]
        %v649 = vld [vmem:[%s553 + $0x28] sm:$0xf]
        %v650 = vld [vmem:[%s553 + $0x2c] sm:$0xf]
        %v651 = vld [vmem:[%s553 + $0x30] sm:$0xf]
        %v652 = vld [vmem:[%s553 + $0x34] sm:$0xf]
        %v653 = vld [vmem:[%s553 + $0x38] sm:$0xf]
        %v654 = vld [vmem:[%s553 + $0x3c] sm:$0xf]
        %v655 = vld [vmem:[%s560] sm:$0xf]
        %v656 = vld [vmem:[%s560 + $0x4] sm:$0xf]
        %v657 = vld [vmem:[%s560 + $0x8] sm:$0xf]
        %v658 = vld [vmem:[%s560 + $0xc] sm:$0xf]
        %v659 = vld [vmem:[%s560 + $0x10] sm:$0xf]
        %v660 = vld [vmem:[%s560 + $0x14] sm:$0xf]
        %v661 = vld [vmem:[%s560 + $0x18] sm:$0xf]
        %v662 = vld [vmem:[%s560 + $0x1c] sm:$0xf]
        %v663 = vld [vmem:[%s560 + $0x20] sm:$0xf]
        %v664 = vld [vmem:[%s560 + $0x24] sm:$0xf]
        %v665 = vld [vmem:[%s560 + $0x28] sm:$0xf]
        %v666 = vld [vmem:[%s560 + $0x2c] sm:$0xf]
        %v667 = vld [vmem:[%s560 + $0x30] sm:$0xf]
        %v668 = vld [vmem:[%s560 + $0x34] sm:$0xf]
        %v669 = vld [vmem:[%s560 + $0x38] sm:$0xf]
        %v670 = vld [vmem:[%s560 + $0x3c] sm:$0xf]
        %v687 = vunpack.c.l.b16 %v623
        %v688 = vunpack.c.l.b16 %v624
        %v689 = vunpack.c.l.b16 %v625
        %v690 = vunpack.c.l.b16 %v626
        %v691 = vunpack.c.l.b16 %v627
        %v692 = vunpack.c.l.b16 %v628
        %v693 = vunpack.c.l.b16 %v629
        %v694 = vunpack.c.l.b16 %v630
        %v695 = vunpack.c.l.b16 %v631
        %v696 = vunpack.c.l.b16 %v632
        %v697 = vunpack.c.l.b16 %v633
        %v698 = vunpack.c.l.b16 %v634
        %v699 = vunpack.c.l.b16 %v635
        %v700 = vunpack.c.l.b16 %v636
        %v701 = vunpack.c.l.b16 %v637
        %v702 = vunpack.c.l.b16 %v638
        %v703 = vpack.c.b16 %v688, %v687
        %v704 = vpack.c.b16 %v690, %v689
        %v705 = vpack.c.b16 %v692, %v691
        %v706 = vpack.c.b16 %v694, %v693
        %v707 = vpack.c.b16 %v696, %v695
        %v708 = vpack.c.b16 %v698, %v697
        %v709 = vpack.c.b16 %v700, %v699
        %v710 = vpack.c.b16 %v702, %v701
        %v727 = vunpack.c.l.b16 %v639
        %v728 = vunpack.c.l.b16 %v640
        %v729 = vunpack.c.l.b16 %v641
        %v730 = vunpack.c.l.b16 %v642
        %v731 = vunpack.c.l.b16 %v643
        %v732 = vunpack.c.l.b16 %v644
        %v733 = vunpack.c.l.b16 %v645
        %v734 = vunpack.c.l.b16 %v646
        %v735 = vunpack.c.l.b16 %v647
        %v736 = vunpack.c.l.b16 %v648
        %v737 = vunpack.c.l.b16 %v649
        %v738 = vunpack.c.l.b16 %v650
        %v739 = vunpack.c.l.b16 %v651
        %v740 = vunpack.c.l.b16 %v652
        %v741 = vunpack.c.l.b16 %v653
        %v742 = vunpack.c.l.b16 %v654
        %v743 = vpack.c.b16 %v728, %v727
        %v744 = vpack.c.b16 %v730, %v729
        %v745 = vpack.c.b16 %v732, %v731
        %v746 = vpack.c.b16 %v734, %v733
        %v747 = vpack.c.b16 %v736, %v735
        %v748 = vpack.c.b16 %v738, %v737
        %v749 = vpack.c.b16 %v740, %v739
        %v750 = vpack.c.b16 %v742, %v741
        %vm751 = vcmask 261120
        %v753 = vsel %vm751, %v703, 0
        %v756 = vsel %vm751, %v704, 0
        %v759 = vsel %vm751, %v705, 0
        %v762 = vsel %vm751, %v706, 0
        %v765 = vsel %vm751, %v707, 0
        %v768 = vsel %vm751, %v708, 0
        %v771 = vsel %vm751, %v709, 0
        %v774 = vsel %vm751, %v710, 0
        %v777 = vsel %vm751, %v743, 0
        %v780 = vsel %vm751, %v744, 0
        %v783 = vsel %vm751, %v745, 0
        %v786 = vsel %vm751, %v746, 0
        %v789 = vsel %vm751, %v747, 0
        %v792 = vsel %vm751, %v748, 0
        %v795 = vsel %vm751, %v749, 0
        %v798 = vsel %vm751, %v750, 0
        %800 = vmatprep.subr.bf16.mxu0 0
        %801 = vmatpush1.bf16.xpose.msra.mxu0 %v777
        %802 = vmatprep.subr.bf16.mxu0 0
        %803 = vmatpush1.bf16.xpose.msra.mxu0 %v780
        %804 = vmatprep.subr.bf16.mxu0 0
        %805 = vmatpush1.bf16.xpose.msra.mxu0 %v783
        %806 = vmatprep.subr.bf16.mxu0 0
        %807 = vmatpush1.bf16.xpose.msra.mxu0 %v786
        %808 = vmatprep.subr.bf16.mxu0 0
        %809 = vmatpush1.bf16.xpose.msra.mxu0 %v789
        %810 = vmatprep.subr.bf16.mxu0 0
        %811 = vmatpush1.bf16.xpose.msra.mxu0 %v792
        %812 = vmatprep.subr.bf16.mxu0 0
        %813 = vmatpush1.bf16.xpose.msra.mxu0 %v795
        %814 = vmatprep.subr.bf16.mxu0 0
        %815 = vmatpush1.bf16.xpose.msra.mxu0 %v798
        %816 = vmatprep.subr.bf16.mxu0 0
        %817 = vmatpush1.bf16.xpose.msra.mxu0 0
        %818 = vmatprep.subr.bf16.mxu0 0
        %819 = vmatpush1.bf16.xpose.msra.mxu0 0
        %820 = vmatprep.subr.bf16.mxu0 0
        %821 = vmatpush1.bf16.xpose.msra.mxu0 0
        %822 = vmatprep.subr.bf16.mxu0 0
        %823 = vmatpush1.bf16.xpose.msra.mxu0 0
        %824 = vmatprep.subr.bf16.mxu0 0
        %825 = vmatpush1.bf16.xpose.msra.mxu0 0
        %826 = vmatprep.subr.bf16.mxu0 0
        %827 = vmatpush1.bf16.xpose.msra.mxu0 0
        %828 = vmatprep.subr.bf16.mxu0 0
        %829 = vmatpush1.bf16.xpose.msra.mxu0 0
        %830 = vmatprep.subr.bf16.mxu0 0
        %831 = vmatpush1.bf16.xpose.msra.mxu0 0
        %832 = vmatprep.mubr.bf16.mxu0 0
        %833 = vmatmul.mubr.bf16.gmra.mrb[0].mxu0 %v753
        %v834 = vpop.f32.mrb[0].mxu0
        %v835 = vadd.f32 0.0, %v834
        %v836 = vpop.f32.mrb[0].mxu0
        %v837 = vpop.f32.mrb[0].mxu0
        %v838 = vadd.f32 0.0, %v837
        %v839 = vpop.f32.mrb[0].mxu0
        %840 = vmatprep.mubr.bf16.mxu0 0
        %841 = vmatmul.mubr.bf16.gmra.mrb[0].mxu0 %v756
        %v842 = vpop.f32.mrb[0].mxu0
        %v843 = vadd.f32 0.0, %v842
        %v844 = vpop.f32.mrb[0].mxu0
        %v845 = vpop.f32.mrb[0].mxu0
        %v846 = vadd.f32 0.0, %v845
        %v847 = vpop.f32.mrb[0].mxu0
        %848 = vmatprep.mubr.bf16.mxu0 0
        %849 = vmatmul.mubr.bf16.gmra.mrb[0].mxu0 %v759
        %v850 = vpop.f32.mrb[0].mxu0
        %v851 = vadd.f32 0.0, %v850
        %v852 = vpop.f32.mrb[0].mxu0
        %v853 = vpop.f32.mrb[0].mxu0
        %v854 = vadd.f32 0.0, %v853
        %v855 = vpop.f32.mrb[0].mxu0
        %856 = vmatprep.mubr.bf16.mxu0 0
        %857 = vmatmul.mubr.bf16.gmra.mrb[0].mxu0 %v762
        %v858 = vpop.f32.mrb[0].mxu0
        %v859 = vadd.f32 0.0, %v858
        %v860 = vpop.f32.mrb[0].mxu0
        %v861 = vpop.f32.mrb[0].mxu0
        %v862 = vadd.f32 0.0, %v861
        %v863 = vpop.f32.mrb[0].mxu0
        %864 = vmatprep.mubr.bf16.mxu0 0
        %865 = vmatmul.mubr.bf16.gmra.mrb[0].mxu0 %v765
        %v866 = vpop.f32.mrb[0].mxu0
        %v867 = vadd.f32 0.0, %v866
        %v868 = vpop.f32.mrb[0].mxu0
        %v869 = vpop.f32.mrb[0].mxu0
        %v870 = vadd.f32 0.0, %v869
        %v871 = vpop.f32.mrb[0].mxu0
        %872 = vmatprep.mubr.bf16.mxu0 0
        %873 = vmatmul.mubr.bf16.gmra.mrb[0].mxu0 %v768
        %v874 = vpop.f32.mrb[0].mxu0
        %v875 = vadd.f32 0.0, %v874
        %v876 = vpop.f32.mrb[0].mxu0
        %v877 = vpop.f32.mrb[0].mxu0
        %v878 = vadd.f32 0.0, %v877
        %v879 = vpop.f32.mrb[0].mxu0
        %880 = vmatprep.mubr.bf16.mxu0 0
        %881 = vmatmul.mubr.bf16.gmra.mrb[0].mxu0 %v771
        %v882 = vpop.f32.mrb[0].mxu0
        %v883 = vadd.f32 0.0, %v882
        %v884 = vpop.f32.mrb[0].mxu0
        %v885 = vpop.f32.mrb[0].mxu0
        %v886 = vadd.f32 0.0, %v885
        %v887 = vpop.f32.mrb[0].mxu0
        %888 = vmatprep.mubr.bf16.mxu0 0
        %889 = vmatmul.mubr.bf16.gmra.mrb[0].mxu0 %v774
        %v890 = vpop.f32.mrb[0].mxu0
        %v891 = vadd.f32 0.0, %v890
        %v892 = vpop.f32.mrb[0].mxu0
        %v893 = vpop.f32.mrb[0].mxu0
        %v894 = vadd.f32 0.0, %v893
        %v895 = vpop.f32.mrb[0].mxu0
        %896 = vdwg.mxu0
        %v897 = vmul.f32 %v835, 0.17677669
        %v898 = vmul.f32 %v838, 0.17677669
        %v899 = vmul.f32 %v843, 0.17677669
        %v900 = vmul.f32 %v846, 0.17677669
        %v901 = vmul.f32 %v851, 0.17677669
        %v902 = vmul.f32 %v854, 0.17677669
        %v903 = vmul.f32 %v859, 0.17677669
        %v904 = vmul.f32 %v862, 0.17677669
        %v905 = vmul.f32 %v867, 0.17677669
        %v906 = vmul.f32 %v870, 0.17677669
        %v907 = vmul.f32 %v875, 0.17677669
        %v908 = vmul.f32 %v878, 0.17677669
        %v909 = vmul.f32 %v883, 0.17677669
        %v910 = vmul.f32 %v886, 0.17677669
        %v911 = vmul.f32 %v891, 0.17677669
        %v912 = vmul.f32 %v894, 0.17677669
        %v913 = vlaneseq
        %v914 = vshrl.u32 %v913, 7
        %v915 = vsub.s32 0, %v914
        %v916 = vrot.slane %v622, %v915
        %v917 = vadd.f32 %v897, %v916
        %v918 = vadd.f32 %v898, %v916
        %v919 = vadd.f32 %v899, %v916
        %v920 = vadd.f32 %v900, %v916
        %v921 = vadd.f32 %v901, %v916
        %v922 = vadd.f32 %v902, %v916
        %v923 = vadd.f32 %v903, %v916
        %v924 = vadd.f32 %v904, %v916
        %v925 = vadd.f32 %v905, %v916
        %v926 = vadd.f32 %v906, %v916
        %v927 = vadd.f32 %v907, %v916
        %v928 = vadd.f32 %v908, %v916
        %v929 = vadd.f32 %v909, %v916
        %v930 = vadd.f32 %v910, %v916
        %v931 = vadd.f32 %v911, %v916
        %v932 = vadd.f32 %v912, %v916
        %933 = vmax.xlane.f32.xlu0 %v917
        %v934 = vpop.xlane.xlu0 %933
        %935 = vmax.xlane.f32.xlu0 %v918
        %v936 = vpop.xlane.xlu0 %935
        %937 = vmax.xlane.f32.xlu0 %v919
        %v938 = vpop.xlane.xlu0 %937
        %939 = vmax.xlane.f32.xlu0 %v920
        %v940 = vpop.xlane.xlu0 %939
        %941 = vmax.xlane.f32.xlu0 %v921
        %v942 = vpop.xlane.xlu0 %941
        %943 = vmax.xlane.f32.xlu0 %v922
        %v944 = vpop.xlane.xlu0 %943
        %945 = vmax.xlane.f32.xlu0 %v923
        %v946 = vpop.xlane.xlu0 %945
        %947 = vmax.xlane.f32.xlu0 %v924
        %v948 = vpop.xlane.xlu0 %947
        %949 = vmax.xlane.f32.xlu0 %v925
        %v950 = vpop.xlane.xlu0 %949
        %951 = vmax.xlane.f32.xlu0 %v926
        %v952 = vpop.xlane.xlu0 %951
        %953 = vmax.xlane.f32.xlu0 %v927
        %v954 = vpop.xlane.xlu0 %953
        %955 = vmax.xlane.f32.xlu0 %v928
        %v956 = vpop.xlane.xlu0 %955
        %957 = vmax.xlane.f32.xlu0 %v929
        %v958 = vpop.xlane.xlu0 %957
        %959 = vmax.xlane.f32.xlu0 %v930
        %v960 = vpop.xlane.xlu0 %959
        %961 = vmax.xlane.f32.xlu0 %v931
        %v962 = vpop.xlane.xlu0 %961
        %963 = vmax.xlane.f32.xlu0 %v932
        %v964 = vpop.xlane.xlu0 %963
        %v965 = vsub.f32 %v917, %v934
        %v966 = vsub.f32 %v918, %v936
        %v967 = vsub.f32 %v919, %v938
        %v968 = vsub.f32 %v920, %v940
        %v969 = vsub.f32 %v921, %v942
        %v970 = vsub.f32 %v922, %v944
        %v971 = vsub.f32 %v923, %v946
        %v972 = vsub.f32 %v924, %v948
        %v973 = vsub.f32 %v925, %v950
        %v974 = vsub.f32 %v926, %v952
        %v975 = vsub.f32 %v927, %v954
        %v976 = vsub.f32 %v928, %v956
        %v977 = vsub.f32 %v929, %v958
        %v978 = vsub.f32 %v930, %v960
        %v979 = vsub.f32 %v931, %v962
        %v980 = vsub.f32 %v932, %v964
        %v981 = vmul.f32 %v965, 1.442695
        %v982 = vpow.pop %v981
        %v983 = vmul.f32 %v966, 1.442695
        %v984 = vpow.pop %v983
        %v985 = vmul.f32 %v967, 1.442695
        %v986 = vpow.pop %v985
        %v987 = vmul.f32 %v968, 1.442695
        %v988 = vpow.pop %v987
        %v989 = vmul.f32 %v969, 1.442695
        %v990 = vpow.pop %v989
        %v991 = vmul.f32 %v970, 1.442695
        %v992 = vpow.pop %v991
        %v993 = vmul.f32 %v971, 1.442695
        %v994 = vpow.pop %v993
        %v995 = vmul.f32 %v972, 1.442695
        %v996 = vpow.pop %v995
        %v997 = vmul.f32 %v973, 1.442695
        %v998 = vpow.pop %v997
        %v999 = vmul.f32 %v974, 1.442695
        %v1000 = vpow.pop %v999
        %v1001 = vmul.f32 %v975, 1.442695
        %v1002 = vpow.pop %v1001
        %v1003 = vmul.f32 %v976, 1.442695
        %v1004 = vpow.pop %v1003
        %v1005 = vmul.f32 %v977, 1.442695
        %v1006 = vpow.pop %v1005
        %v1007 = vmul.f32 %v978, 1.442695
        %v1008 = vpow.pop %v1007
        %v1009 = vmul.f32 %v979, 1.442695
        %v1010 = vpow.pop %v1009
        %v1011 = vmul.f32 %v980, 1.442695
        %v1012 = vpow.pop %v1011
        %1013 = vadd.xlane.f32.xlu0 %v982
        %v1014 = vpop.xlane.xlu0 %1013
        %1015 = vadd.xlane.f32.xlu0 %v984
        %v1016 = vpop.xlane.xlu0 %1015
        %1017 = vadd.xlane.f32.xlu0 %v986
        %v1018 = vpop.xlane.xlu0 %1017
        %1019 = vadd.xlane.f32.xlu0 %v988
        %v1020 = vpop.xlane.xlu0 %1019
        %1021 = vadd.xlane.f32.xlu0 %v990
        %v1022 = vpop.xlane.xlu0 %1021
        %1023 = vadd.xlane.f32.xlu0 %v992
        %v1024 = vpop.xlane.xlu0 %1023
        %1025 = vadd.xlane.f32.xlu0 %v994
        %v1026 = vpop.xlane.xlu0 %1025
        %1027 = vadd.xlane.f32.xlu0 %v996
        %v1028 = vpop.xlane.xlu0 %1027
        %1029 = vadd.xlane.f32.xlu0 %v998
        %v1030 = vpop.xlane.xlu0 %1029
        %1031 = vadd.xlane.f32.xlu0 %v1000
        %v1032 = vpop.xlane.xlu0 %1031
        %1033 = vadd.xlane.f32.xlu0 %v1002
        %v1034 = vpop.xlane.xlu0 %1033
        %1035 = vadd.xlane.f32.xlu0 %v1004
        %v1036 = vpop.xlane.xlu0 %1035
        %1037 = vadd.xlane.f32.xlu0 %v1006
        %v1038 = vpop.xlane.xlu0 %1037
        %1039 = vadd.xlane.f32.xlu0 %v1008
        %v1040 = vpop.xlane.xlu0 %1039
        %1041 = vadd.xlane.f32.xlu0 %v1010
        %v1042 = vpop.xlane.xlu0 %1041
        %1043 = vadd.xlane.f32.xlu0 %v1012
        %v1044 = vpop.xlane.xlu0 %1043
        %v1045 = vpack.c.bf16 %v984, %v982
        %v1046 = vpack.c.bf16 %v988, %v986
        %v1047 = vpack.c.bf16 %v992, %v990
        %v1048 = vpack.c.bf16 %v996, %v994
        %v1049 = vpack.c.bf16 %v1000, %v998
        %v1050 = vpack.c.bf16 %v1004, %v1002
        %v1051 = vpack.c.bf16 %v1008, %v1006
        %v1052 = vpack.c.bf16 %v1012, %v1010
        %v1069 = vunpack.c.l.b16 %v655
        %v1070 = vunpack.c.l.b16 %v656
        %v1071 = vunpack.c.l.b16 %v657
        %v1072 = vunpack.c.l.b16 %v658
        %v1073 = vunpack.c.l.b16 %v659
        %v1074 = vunpack.c.l.b16 %v660
        %v1075 = vunpack.c.l.b16 %v661
        %v1076 = vunpack.c.l.b16 %v662
        %v1077 = vunpack.c.l.b16 %v663
        %v1078 = vunpack.c.l.b16 %v664
        %v1079 = vunpack.c.l.b16 %v665
        %v1080 = vunpack.c.l.b16 %v666
        %v1081 = vunpack.c.l.b16 %v667
        %v1082 = vunpack.c.l.b16 %v668
        %v1083 = vunpack.c.l.b16 %v669
        %v1084 = vunpack.c.l.b16 %v670
        %v1085 = vpack.c.b16 %v1070, %v1069
        %v1086 = vpack.c.b16 %v1072, %v1071
        %v1087 = vpack.c.b16 %v1074, %v1073
        %v1088 = vpack.c.b16 %v1076, %v1075
        %v1089 = vpack.c.b16 %v1078, %v1077
        %v1090 = vpack.c.b16 %v1080, %v1079
        %v1091 = vpack.c.b16 %v1082, %v1081
        %v1092 = vpack.c.b16 %v1084, %v1083
        %1101 = vmatprep.subr.bf16.mxu0 0
        %1102 = vmatpush1.bf16.msra.mxu0 %v1085
        %1103 = vmatprep.subr.bf16.mxu0 0
        %1104 = vmatpush1.bf16.msra.mxu0 %v1086
        %1105 = vmatprep.subr.bf16.mxu0 0
        %1106 = vmatpush1.bf16.msra.mxu0 %v1087
        %1107 = vmatprep.subr.bf16.mxu0 0
        %1108 = vmatpush1.bf16.msra.mxu0 %v1088
        %1109 = vmatprep.subr.bf16.mxu0 0
        %1110 = vmatpush1.bf16.msra.mxu0 %v1089
        %1111 = vmatprep.subr.bf16.mxu0 0
        %1112 = vmatpush1.bf16.msra.mxu0 %v1090
        %1113 = vmatprep.subr.bf16.mxu0 0
        %1114 = vmatpush1.bf16.msra.mxu0 %v1091
        %1115 = vmatprep.subr.bf16.mxu0 0
        %1116 = vmatpush1.bf16.msra.mxu0 %v1092
        %1117 = vmatprep.subr.bf16.mxu0 0
        %1118 = vmatpush1.bf16.msra.mxu0 0
        %1119 = vmatprep.subr.bf16.mxu0 0
        %1120 = vmatpush1.bf16.msra.mxu0 0
        %1121 = vmatprep.subr.bf16.mxu0 0
        %1122 = vmatpush1.bf16.msra.mxu0 0
        %1123 = vmatprep.subr.bf16.mxu0 0
        %1124 = vmatpush1.bf16.msra.mxu0 0
        %1125 = vmatprep.subr.bf16.mxu0 0
        %1126 = vmatpush1.bf16.msra.mxu0 0
        %1127 = vmatprep.subr.bf16.mxu0 0
        %1128 = vmatpush1.bf16.msra.mxu0 0
        %1129 = vmatprep.subr.bf16.mxu0 0
        %1130 = vmatpush1.bf16.msra.mxu0 0
        %1131 = vmatprep.subr.bf16.mxu0 0
        %1132 = vmatpush1.bf16.msra.mxu0 0
        %1133 = vmatprep.mubr.bf16.mxu0 0
        %1134 = vmatmul.mubr.bf16.gmra.mrb[0].mxu0 %v1045
        %v1135 = vpop.f32.mrb[0].mxu0
        %v1136 = vadd.f32 0.0, %v1135
        %v1137 = vpop.f32.mrb[0].mxu0
        %v1138 = vpop.f32.mrb[0].mxu0
        %v1139 = vadd.f32 0.0, %v1138
        %v1140 = vpop.f32.mrb[0].mxu0
        %1141 = vmatprep.mubr.bf16.mxu0 0
        %1142 = vmatmul.mubr.bf16.gmra.mrb[0].mxu0 %v1046
        %v1143 = vpop.f32.mrb[0].mxu0
        %v1144 = vadd.f32 0.0, %v1143
        %v1145 = vpop.f32.mrb[0].mxu0
        %v1146 = vpop.f32.mrb[0].mxu0
        %v1147 = vadd.f32 0.0, %v1146
        %v1148 = vpop.f32.mrb[0].mxu0
        %1149 = vmatprep.mubr.bf16.mxu0 0
        %1150 = vmatmul.mubr.bf16.gmra.mrb[0].mxu0 %v1047
        %v1151 = vpop.f32.mrb[0].mxu0
        %v1152 = vadd.f32 0.0, %v1151
        %v1153 = vpop.f32.mrb[0].mxu0
        %v1154 = vpop.f32.mrb[0].mxu0
        %v1155 = vadd.f32 0.0, %v1154
        %v1156 = vpop.f32.mrb[0].mxu0
        %1157 = vmatprep.mubr.bf16.mxu0 0
        %1158 = vmatmul.mubr.bf16.gmra.mrb[0].mxu0 %v1048
        %v1159 = vpop.f32.mrb[0].mxu0
        %v1160 = vadd.f32 0.0, %v1159
        %v1161 = vpop.f32.mrb[0].mxu0
        %v1162 = vpop.f32.mrb[0].mxu0
        %v1163 = vadd.f32 0.0, %v1162
        %v1164 = vpop.f32.mrb[0].mxu0
        %1165 = vmatprep.mubr.bf16.mxu0 0
        %1166 = vmatmul.mubr.bf16.gmra.mrb[0].mxu0 %v1049
        %v1167 = vpop.f32.mrb[0].mxu0
        %v1168 = vadd.f32 0.0, %v1167
        %v1169 = vpop.f32.mrb[0].mxu0
        %v1170 = vpop.f32.mrb[0].mxu0
        %v1171 = vadd.f32 0.0, %v1170
        %v1172 = vpop.f32.mrb[0].mxu0
        %1173 = vmatprep.mubr.bf16.mxu0 0
        %1174 = vmatmul.mubr.bf16.gmra.mrb[0].mxu0 %v1050
        %v1175 = vpop.f32.mrb[0].mxu0
        %v1176 = vadd.f32 0.0, %v1175
        %v1177 = vpop.f32.mrb[0].mxu0
        %v1178 = vpop.f32.mrb[0].mxu0
        %v1179 = vadd.f32 0.0, %v1178
        %v1180 = vpop.f32.mrb[0].mxu0
        %1181 = vmatprep.mubr.bf16.mxu0 0
        %1182 = vmatmul.mubr.bf16.gmra.mrb[0].mxu0 %v1051
        %v1183 = vpop.f32.mrb[0].mxu0
        %v1184 = vadd.f32 0.0, %v1183
        %v1185 = vpop.f32.mrb[0].mxu0
        %v1186 = vpop.f32.mrb[0].mxu0
        %v1187 = vadd.f32 0.0, %v1186
        %v1188 = vpop.f32.mrb[0].mxu0
        %1189 = vmatprep.mubr.bf16.mxu0 0
        %1190 = vmatmul.mubr.bf16.gmra.mrb[0].mxu0 %v1052
        %v1191 = vpop.f32.mrb[0].mxu0
        %v1192 = vadd.f32 0.0, %v1191
        %v1193 = vpop.f32.mrb[0].mxu0
        %v1194 = vpop.f32.mrb[0].mxu0
        %v1195 = vadd.f32 0.0, %v1194
        %v1196 = vpop.f32.mrb[0].mxu0
        %1197 = vdwg.mxu0
        %v1198 = vrcp.pop %v1014
        %v1199 = vrcp.pop %v1016
        %v1200 = vrcp.pop %v1018
        %v1201 = vrcp.pop %v1020
        %v1202 = vrcp.pop %v1022
        %v1203 = vrcp.pop %v1024
        %v1204 = vrcp.pop %v1026
        %v1205 = vrcp.pop %v1028
        %v1206 = vrcp.pop %v1030
        %v1207 = vrcp.pop %v1032
        %v1208 = vrcp.pop %v1034
        %v1209 = vrcp.pop %v1036
        %v1210 = vrcp.pop %v1038
        %v1211 = vrcp.pop %v1040
        %v1212 = vrcp.pop %v1042
        %v1213 = vrcp.pop %v1044
        %v1214 = vmul.f32 %v1136, %v1198
        %v1215 = vmul.f32 %v1139, %v1199
        %v1216 = vmul.f32 %v1144, %v1200
        %v1217 = vmul.f32 %v1147, %v1201
        %v1218 = vmul.f32 %v1152, %v1202
        %v1219 = vmul.f32 %v1155, %v1203
        %v1220 = vmul.f32 %v1160, %v1204
        %v1221 = vmul.f32 %v1163, %v1205
        %v1222 = vmul.f32 %v1168, %v1206
        %v1223 = vmul.f32 %v1171, %v1207
        %v1224 = vmul.f32 %v1176, %v1208
        %v1225 = vmul.f32 %v1179, %v1209
        %v1226 = vmul.f32 %v1184, %v1210
        %v1227 = vmul.f32 %v1187, %v1211
        %v1228 = vmul.f32 %v1192, %v1212
        %v1229 = vmul.f32 %v1195, %v1213
        %v1230 = vpack.c.bf16 %v1215, %v1214
        %v1231 = vpack.c.bf16 %v1217, %v1216
        %v1232 = vpack.c.bf16 %v1219, %v1218
        %v1233 = vpack.c.bf16 %v1221, %v1220
        %v1234 = vpack.c.bf16 %v1223, %v1222
        %v1235 = vpack.c.bf16 %v1225, %v1224
        %v1236 = vpack.c.bf16 %v1227, %v1226
        %v1237 = vpack.c.bf16 %v1229, %v1228
        %v1246 = vunpack.c.l.b16 %v1230
        %v1247 = vunpack.c.h.b16 %v1230
        %v1248 = vunpack.c.l.b16 %v1231
        %v1249 = vunpack.c.h.b16 %v1231
        %v1250 = vunpack.c.l.b16 %v1232
        %v1251 = vunpack.c.h.b16 %v1232
        %v1252 = vunpack.c.l.b16 %v1233
        %v1253 = vunpack.c.h.b16 %v1233
        %v1254 = vunpack.c.l.b16 %v1234
        %v1255 = vunpack.c.h.b16 %v1234
        %v1256 = vunpack.c.l.b16 %v1235
        %v1257 = vunpack.c.h.b16 %v1235
        %v1258 = vunpack.c.l.b16 %v1236
        %v1259 = vunpack.c.h.b16 %v1236
        %v1260 = vunpack.c.l.b16 %v1237
        %v1261 = vunpack.c.h.b16 %v1237
        %v1262 = vpack.c.b16 %v1246, %v1246
        %v1263 = vpack.c.b16 %v1247, %v1247
        %v1264 = vpack.c.b16 %v1248, %v1248
        %v1265 = vpack.c.b16 %v1249, %v1249
        %v1266 = vpack.c.b16 %v1250, %v1250
        %v1267 = vpack.c.b16 %v1251, %v1251
        %v1268 = vpack.c.b16 %v1252, %v1252
        %v1269 = vpack.c.b16 %v1253, %v1253
        %v1270 = vpack.c.b16 %v1254, %v1254
        %v1271 = vpack.c.b16 %v1255, %v1255
        %v1272 = vpack.c.b16 %v1256, %v1256
        %v1273 = vpack.c.b16 %v1257, %v1257
        %v1274 = vpack.c.b16 %v1258, %v1258
        %v1275 = vpack.c.b16 %v1259, %v1259
        %v1276 = vpack.c.b16 %v1260, %v1260
        %v1277 = vpack.c.b16 %v1261, %v1261
        %vm1294 = vcmask 257024
        %1295 = vst.msk [vmem:[%s615] sm:$0xf] %vm1294, %v1262
        %1296 = vst.msk [vmem:[%s615 + $0x4] sm:$0xf] %vm1294, %v1263
        %1297 = vst.msk [vmem:[%s615 + $0x8] sm:$0xf] %vm1294, %v1264
        %1298 = vst.msk [vmem:[%s615 + $0xc] sm:$0xf] %vm1294, %v1265
        %1299 = vst.msk [vmem:[%s615 + $0x10] sm:$0xf] %vm1294, %v1266
        %1300 = vst.msk [vmem:[%s615 + $0x14] sm:$0xf] %vm1294, %v1267
        %1301 = vst.msk [vmem:[%s615 + $0x18] sm:$0xf] %vm1294, %v1268
        %1302 = vst.msk [vmem:[%s615 + $0x1c] sm:$0xf] %vm1294, %v1269
        %1303 = vst.msk [vmem:[%s615 + $0x20] sm:$0xf] %vm1294, %v1270
        %1304 = vst.msk [vmem:[%s615 + $0x24] sm:$0xf] %vm1294, %v1271
        %1305 = vst.msk [vmem:[%s615 + $0x28] sm:$0xf] %vm1294, %v1272
        %1306 = vst.msk [vmem:[%s615 + $0x2c] sm:$0xf] %vm1294, %v1273
        %1307 = vst.msk [vmem:[%s615 + $0x30] sm:$0xf] %vm1294, %v1274
        %1308 = vst.msk [vmem:[%s615 + $0x34] sm:$0xf] %vm1294, %v1275
        %1309 = vst.msk [vmem:[%s615 + $0x38] sm:$0xf] %vm1294, %v1276
        %1310 = vst.msk [vmem:[%s615 + $0x3c] sm:$0xf] %vm1294, %v1277
        %1311 = vrot.lane.b32.xlu0 %v703, 96
        %v1312 = vpop.permute.xlu0 %1311
        %1313 = vrot.lane.b32.xlu0 %v704, 96
        %v1314 = vpop.permute.xlu0 %1313
        %1315 = vrot.lane.b32.xlu0 %v705, 96
        %v1316 = vpop.permute.xlu0 %1315
        %1317 = vrot.lane.b32.xlu0 %v706, 96
        %v1318 = vpop.permute.xlu0 %1317
        %1319 = vrot.lane.b32.xlu0 %v707, 96
        %v1320 = vpop.permute.xlu0 %1319
        %1321 = vrot.lane.b32.xlu0 %v708, 96
        %v1322 = vpop.permute.xlu0 %1321
        %1323 = vrot.lane.b32.xlu0 %v709, 96
        %v1324 = vpop.permute.xlu0 %1323
        %1325 = vrot.lane.b32.xlu0 %v710, 96
        %v1326 = vpop.permute.xlu0 %1325
        %1327 = vrot.lane.b32.xlu0 %v743, 96
        %v1328 = vpop.permute.xlu0 %1327
        %1329 = vrot.lane.b32.xlu0 %v744, 96
        %v1330 = vpop.permute.xlu0 %1329
        %1331 = vrot.lane.b32.xlu0 %v745, 96
        %v1332 = vpop.permute.xlu0 %1331
        %1333 = vrot.lane.b32.xlu0 %v746, 96
        %v1334 = vpop.permute.xlu0 %1333
        %1335 = vrot.lane.b32.xlu0 %v747, 96
        %v1336 = vpop.permute.xlu0 %1335
        %1337 = vrot.lane.b32.xlu0 %v748, 96
        %v1338 = vpop.permute.xlu0 %1337
        %1339 = vrot.lane.b32.xlu0 %v749, 96
        %v1340 = vpop.permute.xlu0 %1339
        %1341 = vrot.lane.b32.xlu0 %v750, 96
        %v1342 = vpop.permute.xlu0 %1341
        %v1344 = vsel %vm751, %v1312, 0
        %v1347 = vsel %vm751, %v1314, 0
        %v1350 = vsel %vm751, %v1316, 0
        %v1353 = vsel %vm751, %v1318, 0
        %v1356 = vsel %vm751, %v1320, 0
        %v1359 = vsel %vm751, %v1322, 0
        %v1362 = vsel %vm751, %v1324, 0
        %v1365 = vsel %vm751, %v1326, 0
        %v1368 = vsel %vm751, %v1328, 0
        %v1371 = vsel %vm751, %v1330, 0
        %v1374 = vsel %vm751, %v1332, 0
        %v1377 = vsel %vm751, %v1334, 0
        %v1380 = vsel %vm751, %v1336, 0
        %v1383 = vsel %vm751, %v1338, 0
        %v1386 = vsel %vm751, %v1340, 0
        %v1389 = vsel %vm751, %v1342, 0
        %1391 = vmatprep.subr.bf16.mxu0 0
        %1392 = vmatpush1.bf16.xpose.msra.mxu0 %v1368
        %1393 = vmatprep.subr.bf16.mxu0 0
        %1394 = vmatpush1.bf16.xpose.msra.mxu0 %v1371
        %1395 = vmatprep.subr.bf16.mxu0 0
        %1396 = vmatpush1.bf16.xpose.msra.mxu0 %v1374
        %1397 = vmatprep.subr.bf16.mxu0 0
        %1398 = vmatpush1.bf16.xpose.msra.mxu0 %v1377
        %1399 = vmatprep.subr.bf16.mxu0 0
        %1400 = vmatpush1.bf16.xpose.msra.mxu0 %v1380
        %1401 = vmatprep.subr.bf16.mxu0 0
        %1402 = vmatpush1.bf16.xpose.msra.mxu0 %v1383
        %1403 = vmatprep.subr.bf16.mxu0 0
        %1404 = vmatpush1.bf16.xpose.msra.mxu0 %v1386
        %1405 = vmatprep.subr.bf16.mxu0 0
        %1406 = vmatpush1.bf16.xpose.msra.mxu0 %v1389
        %1407 = vmatprep.subr.bf16.mxu0 0
        %1408 = vmatpush1.bf16.xpose.msra.mxu0 0
        %1409 = vmatprep.subr.bf16.mxu0 0
        %1410 = vmatpush1.bf16.xpose.msra.mxu0 0
        %1411 = vmatprep.subr.bf16.mxu0 0
        %1412 = vmatpush1.bf16.xpose.msra.mxu0 0
        %1413 = vmatprep.subr.bf16.mxu0 0
        %1414 = vmatpush1.bf16.xpose.msra.mxu0 0
        %1415 = vmatprep.subr.bf16.mxu0 0
        %1416 = vmatpush1.bf16.xpose.msra.mxu0 0
        %1417 = vmatprep.subr.bf16.mxu0 0
        %1418 = vmatpush1.bf16.xpose.msra.mxu0 0
        %1419 = vmatprep.subr.bf16.mxu0 0
        %1420 = vmatpush1.bf16.xpose.msra.mxu0 0
        %1421 = vmatprep.subr.bf16.mxu0 0
        %1422 = vmatpush1.bf16.xpose.msra.mxu0 0
        %1423 = vmatprep.mubr.bf16.mxu0 0
        %1424 = vmatmul.mubr.bf16.gmra.mrb[0].mxu0 %v1344
        %v1425 = vpop.f32.mrb[0].mxu0
        %v1426 = vadd.f32 0.0, %v1425
        %v1427 = vpop.f32.mrb[0].mxu0
        %v1428 = vpop.f32.mrb[0].mxu0
        %v1429 = vadd.f32 0.0, %v1428
        %v1430 = vpop.f32.mrb[0].mxu0
        %1431 = vmatprep.mubr.bf16.mxu0 0
        %1432 = vmatmul.mubr.bf16.gmra.mrb[0].mxu0 %v1347
        %v1433 = vpop.f32.mrb[0].mxu0
        %v1434 = vadd.f32 0.0, %v1433
        %v1435 = vpop.f32.mrb[0].mxu0
        %v1436 = vpop.f32.mrb[0].mxu0
        %v1437 = vadd.f32 0.0, %v1436
        %v1438 = vpop.f32.mrb[0].mxu0
        %1439 = vmatprep.mubr.bf16.mxu0 0
        %1440 = vmatmul.mubr.bf16.gmra.mrb[0].mxu0 %v1350
        %v1441 = vpop.f32.mrb[0].mxu0
        %v1442 = vadd.f32 0.0, %v1441
        %v1443 = vpop.f32.mrb[0].mxu0
        %v1444 = vpop.f32.mrb[0].mxu0
        %v1445 = vadd.f32 0.0, %v1444
        %v1446 = vpop.f32.mrb[0].mxu0
        %1447 = vmatprep.mubr.bf16.mxu0 0
        %1448 = vmatmul.mubr.bf16.gmra.mrb[0].mxu0 %v1353
        %v1449 = vpop.f32.mrb[0].mxu0
        %v1450 = vadd.f32 0.0, %v1449
        %v1451 = vpop.f32.mrb[0].mxu0
        %v1452 = vpop.f32.mrb[0].mxu0
        %v1453 = vadd.f32 0.0, %v1452
        %v1454 = vpop.f32.mrb[0].mxu0
        %1455 = vmatprep.mubr.bf16.mxu0 0
        %1456 = vmatmul.mubr.bf16.gmra.mrb[0].mxu0 %v1356
        %v1457 = vpop.f32.mrb[0].mxu0
        %v1458 = vadd.f32 0.0, %v1457
        %v1459 = vpop.f32.mrb[0].mxu0
        %v1460 = vpop.f32.mrb[0].mxu0
        %v1461 = vadd.f32 0.0, %v1460
        %v1462 = vpop.f32.mrb[0].mxu0
        %1463 = vmatprep.mubr.bf16.mxu0 0
        %1464 = vmatmul.mubr.bf16.gmra.mrb[0].mxu0 %v1359
        %v1465 = vpop.f32.mrb[0].mxu0
        %v1466 = vadd.f32 0.0, %v1465
        %v1467 = vpop.f32.mrb[0].mxu0
        %v1468 = vpop.f32.mrb[0].mxu0
        %v1469 = vadd.f32 0.0, %v1468
        %v1470 = vpop.f32.mrb[0].mxu0
        %1471 = vmatprep.mubr.bf16.mxu0 0
        %1472 = vmatmul.mubr.bf16.gmra.mrb[0].mxu0 %v1362
        %v1473 = vpop.f32.mrb[0].mxu0
        %v1474 = vadd.f32 0.0, %v1473
        %v1475 = vpop.f32.mrb[0].mxu0
        %v1476 = vpop.f32.mrb[0].mxu0
        %v1477 = vadd.f32 0.0, %v1476
        %v1478 = vpop.f32.mrb[0].mxu0
        %1479 = vmatprep.mubr.bf16.mxu0 0
        %1480 = vmatmul.mubr.bf16.gmra.mrb[0].mxu0 %v1365
        %v1481 = vpop.f32.mrb[0].mxu0
        %v1482 = vadd.f32 0.0, %v1481
        %v1483 = vpop.f32.mrb[0].mxu0
        %v1484 = vpop.f32.mrb[0].mxu0
        %v1485 = vadd.f32 0.0, %v1484
        %v1486 = vpop.f32.mrb[0].mxu0
        %1487 = vdwg.mxu0
        %v1488 = vmul.f32 %v1426, 0.17677669
        %v1489 = vmul.f32 %v1429, 0.17677669
        %v1490 = vmul.f32 %v1434, 0.17677669
        %v1491 = vmul.f32 %v1437, 0.17677669
        %v1492 = vmul.f32 %v1442, 0.17677669
        %v1493 = vmul.f32 %v1445, 0.17677669
        %v1494 = vmul.f32 %v1450, 0.17677669
        %v1495 = vmul.f32 %v1453, 0.17677669
        %v1496 = vmul.f32 %v1458, 0.17677669
        %v1497 = vmul.f32 %v1461, 0.17677669
        %v1498 = vmul.f32 %v1466, 0.17677669
        %v1499 = vmul.f32 %v1469, 0.17677669
        %v1500 = vmul.f32 %v1474, 0.17677669
        %v1501 = vmul.f32 %v1477, 0.17677669
        %v1502 = vmul.f32 %v1482, 0.17677669
        %v1503 = vmul.f32 %v1485, 0.17677669
        %v1504 = vadd.f32 %v1488, %v916
        %v1505 = vadd.f32 %v1489, %v916
        %v1506 = vadd.f32 %v1490, %v916
        %v1507 = vadd.f32 %v1491, %v916
        %v1508 = vadd.f32 %v1492, %v916
        %v1509 = vadd.f32 %v1493, %v916
        %v1510 = vadd.f32 %v1494, %v916
        %v1511 = vadd.f32 %v1495, %v916
        %v1512 = vadd.f32 %v1496, %v916
        %v1513 = vadd.f32 %v1497, %v916
        %v1514 = vadd.f32 %v1498, %v916
        %v1515 = vadd.f32 %v1499, %v916
        %v1516 = vadd.f32 %v1500, %v916
        %v1517 = vadd.f32 %v1501, %v916
        %v1518 = vadd.f32 %v1502, %v916
        %v1519 = vadd.f32 %v1503, %v916
        %1520 = vmax.xlane.f32.xlu0 %v1504
        %v1521 = vpop.xlane.xlu0 %1520
        %1522 = vmax.xlane.f32.xlu0 %v1505
        %v1523 = vpop.xlane.xlu0 %1522
        %1524 = vmax.xlane.f32.xlu0 %v1506
        %v1525 = vpop.xlane.xlu0 %1524
        %1526 = vmax.xlane.f32.xlu0 %v1507
        %v1527 = vpop.xlane.xlu0 %1526
        %1528 = vmax.xlane.f32.xlu0 %v1508
        %v1529 = vpop.xlane.xlu0 %1528
        %1530 = vmax.xlane.f32.xlu0 %v1509
        %v1531 = vpop.xlane.xlu0 %1530
        %1532 = vmax.xlane.f32.xlu0 %v1510
        %v1533 = vpop.xlane.xlu0 %1532
        %1534 = vmax.xlane.f32.xlu0 %v1511
        %v1535 = vpop.xlane.xlu0 %1534
        %1536 = vmax.xlane.f32.xlu0 %v1512
        %v1537 = vpop.xlane.xlu0 %1536
        %1538 = vmax.xlane.f32.xlu0 %v1513
        %v1539 = vpop.xlane.xlu0 %1538
        %1540 = vmax.xlane.f32.xlu0 %v1514
        %v1541 = vpop.xlane.xlu0 %1540
        %1542 = vmax.xlane.f32.xlu0 %v1515
        %v1543 = vpop.xlane.xlu0 %1542
        %1544 = vmax.xlane.f32.xlu0 %v1516
        %v1545 = vpop.xlane.xlu0 %1544
        %1546 = vmax.xlane.f32.xlu0 %v1517
        %v1547 = vpop.xlane.xlu0 %1546
        %1548 = vmax.xlane.f32.xlu0 %v1518
        %v1549 = vpop.xlane.xlu0 %1548
        %1550 = vmax.xlane.f32.xlu0 %v1519
        %v1551 = vpop.xlane.xlu0 %1550
        %v1552 = vsub.f32 %v1504, %v1521
        %v1553 = vsub.f32 %v1505, %v1523
        %v1554 = vsub.f32 %v1506, %v1525
        %v1555 = vsub.f32 %v1507, %v1527
        %v1556 = vsub.f32 %v1508, %v1529
        %v1557 = vsub.f32 %v1509, %v1531
        %v1558 = vsub.f32 %v1510, %v1533
        %v1559 = vsub.f32 %v1511, %v1535
        %v1560 = vsub.f32 %v1512, %v1537
        %v1561 = vsub.f32 %v1513, %v1539
        %v1562 = vsub.f32 %v1514, %v1541
        %v1563 = vsub.f32 %v1515, %v1543
        %v1564 = vsub.f32 %v1516, %v1545
        %v1565 = vsub.f32 %v1517, %v1547
        %v1566 = vsub.f32 %v1518, %v1549
        %v1567 = vsub.f32 %v1519, %v1551
        %v1568 = vmul.f32 %v1552, 1.442695
        %v1569 = vpow.pop %v1568
        %v1570 = vmul.f32 %v1553, 1.442695
        %v1571 = vpow.pop %v1570
        %v1572 = vmul.f32 %v1554, 1.442695
        %v1573 = vpow.pop %v1572
        %v1574 = vmul.f32 %v1555, 1.442695
        %v1575 = vpow.pop %v1574
        %v1576 = vmul.f32 %v1556, 1.442695
        %v1577 = vpow.pop %v1576
        %v1578 = vmul.f32 %v1557, 1.442695
        %v1579 = vpow.pop %v1578
        %v1580 = vmul.f32 %v1558, 1.442695
        %v1581 = vpow.pop %v1580
        %v1582 = vmul.f32 %v1559, 1.442695
        %v1583 = vpow.pop %v1582
        %v1584 = vmul.f32 %v1560, 1.442695
        %v1585 = vpow.pop %v1584
        %v1586 = vmul.f32 %v1561, 1.442695
        %v1587 = vpow.pop %v1586
        %v1588 = vmul.f32 %v1562, 1.442695
        %v1589 = vpow.pop %v1588
        %v1590 = vmul.f32 %v1563, 1.442695
        %v1591 = vpow.pop %v1590
        %v1592 = vmul.f32 %v1564, 1.442695
        %v1593 = vpow.pop %v1592
        %v1594 = vmul.f32 %v1565, 1.442695
        %v1595 = vpow.pop %v1594
        %v1596 = vmul.f32 %v1566, 1.442695
        %v1597 = vpow.pop %v1596
        %v1598 = vmul.f32 %v1567, 1.442695
        %v1599 = vpow.pop %v1598
        %1600 = vadd.xlane.f32.xlu0 %v1569
        %v1601 = vpop.xlane.xlu0 %1600
        %1602 = vadd.xlane.f32.xlu0 %v1571
        %v1603 = vpop.xlane.xlu0 %1602
        %1604 = vadd.xlane.f32.xlu0 %v1573
        %v1605 = vpop.xlane.xlu0 %1604
        %1606 = vadd.xlane.f32.xlu0 %v1575
        %v1607 = vpop.xlane.xlu0 %1606
        %1608 = vadd.xlane.f32.xlu0 %v1577
        %v1609 = vpop.xlane.xlu0 %1608
        %1610 = vadd.xlane.f32.xlu0 %v1579
        %v1611 = vpop.xlane.xlu0 %1610
        %1612 = vadd.xlane.f32.xlu0 %v1581
        %v1613 = vpop.xlane.xlu0 %1612
        %1614 = vadd.xlane.f32.xlu0 %v1583
        %v1615 = vpop.xlane.xlu0 %1614
        %1616 = vadd.xlane.f32.xlu0 %v1585
        %v1617 = vpop.xlane.xlu0 %1616
        %1618 = vadd.xlane.f32.xlu0 %v1587
        %v1619 = vpop.xlane.xlu0 %1618
        %1620 = vadd.xlane.f32.xlu0 %v1589
        %v1621 = vpop.xlane.xlu0 %1620
        %1622 = vadd.xlane.f32.xlu0 %v1591
        %v1623 = vpop.xlane.xlu0 %1622
        %1624 = vadd.xlane.f32.xlu0 %v1593
        %v1625 = vpop.xlane.xlu0 %1624
        %1626 = vadd.xlane.f32.xlu0 %v1595
        %v1627 = vpop.xlane.xlu0 %1626
        %1628 = vadd.xlane.f32.xlu0 %v1597
        %v1629 = vpop.xlane.xlu0 %1628
        %1630 = vadd.xlane.f32.xlu0 %v1599
        %v1631 = vpop.xlane.xlu0 %1630
        %v1632 = vpack.c.bf16 %v1571, %v1569
        %v1633 = vpack.c.bf16 %v1575, %v1573
        %v1634 = vpack.c.bf16 %v1579, %v1577
        %v1635 = vpack.c.bf16 %v1583, %v1581
        %v1636 = vpack.c.bf16 %v1587, %v1585
        %v1637 = vpack.c.bf16 %v1591, %v1589
        %v1638 = vpack.c.bf16 %v1595, %v1593
        %v1639 = vpack.c.bf16 %v1599, %v1597
        %1640 = vrot.lane.b32.xlu0 %v1085, 96
        %v1641 = vpop.permute.xlu0 %1640
        %1642 = vrot.lane.b32.xlu0 %v1086, 96
        %v1643 = vpop.permute.xlu0 %1642
        %1644 = vrot.lane.b32.xlu0 %v1087, 96
        %v1645 = vpop.permute.xlu0 %1644
        %1646 = vrot.lane.b32.xlu0 %v1088, 96
        %v1647 = vpop.permute.xlu0 %1646
        %1648 = vrot.lane.b32.xlu0 %v1089, 96
        %v1649 = vpop.permute.xlu0 %1648
        %1650 = vrot.lane.b32.xlu0 %v1090, 96
        %v1651 = vpop.permute.xlu0 %1650
        %1652 = vrot.lane.b32.xlu0 %v1091, 96
        %v1653 = vpop.permute.xlu0 %1652
        %1654 = vrot.lane.b32.xlu0 %v1092, 96
        %v1655 = vpop.permute.xlu0 %1654
        %1664 = vmatprep.subr.bf16.mxu0 0
        %1665 = vmatpush1.bf16.msra.mxu0 %v1641
        %1666 = vmatprep.subr.bf16.mxu0 0
        %1667 = vmatpush1.bf16.msra.mxu0 %v1643
        %1668 = vmatprep.subr.bf16.mxu0 0
        %1669 = vmatpush1.bf16.msra.mxu0 %v1645
        %1670 = vmatprep.subr.bf16.mxu0 0
        %1671 = vmatpush1.bf16.msra.mxu0 %v1647
        %1672 = vmatprep.subr.bf16.mxu0 0
        %1673 = vmatpush1.bf16.msra.mxu0 %v1649
        %1674 = vmatprep.subr.bf16.mxu0 0
        %1675 = vmatpush1.bf16.msra.mxu0 %v1651
        %1676 = vmatprep.subr.bf16.mxu0 0
        %1677 = vmatpush1.bf16.msra.mxu0 %v1653
        %1678 = vmatprep.subr.bf16.mxu0 0
        %1679 = vmatpush1.bf16.msra.mxu0 %v1655
        %1680 = vmatprep.subr.bf16.mxu0 0
        %1681 = vmatpush1.bf16.msra.mxu0 0
        %1682 = vmatprep.subr.bf16.mxu0 0
        %1683 = vmatpush1.bf16.msra.mxu0 0
        %1684 = vmatprep.subr.bf16.mxu0 0
        %1685 = vmatpush1.bf16.msra.mxu0 0
        %1686 = vmatprep.subr.bf16.mxu0 0
        %1687 = vmatpush1.bf16.msra.mxu0 0
        %1688 = vmatprep.subr.bf16.mxu0 0
        %1689 = vmatpush1.bf16.msra.mxu0 0
        %1690 = vmatprep.subr.bf16.mxu0 0
        %1691 = vmatpush1.bf16.msra.mxu0 0
        %1692 = vmatprep.subr.bf16.mxu0 0
        %1693 = vmatpush1.bf16.msra.mxu0 0
        %1694 = vmatprep.subr.bf16.mxu0 0
        %1695 = vmatpush1.bf16.msra.mxu0 0
        %1696 = vmatprep.mubr.bf16.mxu0 0
        %1697 = vmatmul.mubr.bf16.gmra.mrb[0].mxu0 %v1632
        %v1698 = vpop.f32.mrb[0].mxu0
        %v1699 = vadd.f32 0.0, %v1698
        %v1700 = vpop.f32.mrb[0].mxu0
        %v1701 = vpop.f32.mrb[0].mxu0
        %v1702 = vadd.f32 0.0, %v1701
        %v1703 = vpop.f32.mrb[0].mxu0
        %1704 = vmatprep.mubr.bf16.mxu0 0
        %1705 = vmatmul.mubr.bf16.gmra.mrb[0].mxu0 %v1633
        %v1706 = vpop.f32.mrb[0].mxu0
        %v1707 = vadd.f32 0.0, %v1706
        %v1708 = vpop.f32.mrb[0].mxu0
        %v1709 = vpop.f32.mrb[0].mxu0
        %v1710 = vadd.f32 0.0, %v1709
        %v1711 = vpop.f32.mrb[0].mxu0
        %1712 = vmatprep.mubr.bf16.mxu0 0
        %1713 = vmatmul.mubr.bf16.gmra.mrb[0].mxu0 %v1634
        %v1714 = vpop.f32.mrb[0].mxu0
        %v1715 = vadd.f32 0.0, %v1714
        %v1716 = vpop.f32.mrb[0].mxu0
        %v1717 = vpop.f32.mrb[0].mxu0
        %v1718 = vadd.f32 0.0, %v1717
        %v1719 = vpop.f32.mrb[0].mxu0
        %1720 = vmatprep.mubr.bf16.mxu0 0
        %1721 = vmatmul.mubr.bf16.gmra.mrb[0].mxu0 %v1635
        %v1722 = vpop.f32.mrb[0].mxu0
        %v1723 = vadd.f32 0.0, %v1722
        %v1724 = vpop.f32.mrb[0].mxu0
        %v1725 = vpop.f32.mrb[0].mxu0
        %v1726 = vadd.f32 0.0, %v1725
        %v1727 = vpop.f32.mrb[0].mxu0
        %1728 = vmatprep.mubr.bf16.mxu0 0
        %1729 = vmatmul.mubr.bf16.gmra.mrb[0].mxu0 %v1636
        %v1730 = vpop.f32.mrb[0].mxu0
        %v1731 = vadd.f32 0.0, %v1730
        %v1732 = vpop.f32.mrb[0].mxu0
        %v1733 = vpop.f32.mrb[0].mxu0
        %v1734 = vadd.f32 0.0, %v1733
        %v1735 = vpop.f32.mrb[0].mxu0
        %1736 = vmatprep.mubr.bf16.mxu0 0
        %1737 = vmatmul.mubr.bf16.gmra.mrb[0].mxu0 %v1637
        %v1738 = vpop.f32.mrb[0].mxu0
        %v1739 = vadd.f32 0.0, %v1738
        %v1740 = vpop.f32.mrb[0].mxu0
        %v1741 = vpop.f32.mrb[0].mxu0
        %v1742 = vadd.f32 0.0, %v1741
        %v1743 = vpop.f32.mrb[0].mxu0
        %1744 = vmatprep.mubr.bf16.mxu0 0
        %1745 = vmatmul.mubr.bf16.gmra.mrb[0].mxu0 %v1638
        %v1746 = vpop.f32.mrb[0].mxu0
        %v1747 = vadd.f32 0.0, %v1746
        %v1748 = vpop.f32.mrb[0].mxu0
        %v1749 = vpop.f32.mrb[0].mxu0
        %v1750 = vadd.f32 0.0, %v1749
        %v1751 = vpop.f32.mrb[0].mxu0
        %1752 = vmatprep.mubr.bf16.mxu0 0
        %1753 = vmatmul.mubr.bf16.gmra.mrb[0].mxu0 %v1639
        %v1754 = vpop.f32.mrb[0].mxu0
        %v1755 = vadd.f32 0.0, %v1754
        %v1756 = vpop.f32.mrb[0].mxu0
        %v1757 = vpop.f32.mrb[0].mxu0
        %v1758 = vadd.f32 0.0, %v1757
        %v1759 = vpop.f32.mrb[0].mxu0
        %1760 = vdwg.mxu0
        %v1761 = vrcp.pop %v1601
        %v1762 = vrcp.pop %v1603
        %v1763 = vrcp.pop %v1605
        %v1764 = vrcp.pop %v1607
        %v1765 = vrcp.pop %v1609
        %v1766 = vrcp.pop %v1611
        %v1767 = vrcp.pop %v1613
        %v1768 = vrcp.pop %v1615
        %v1769 = vrcp.pop %v1617
        %v1770 = vrcp.pop %v1619
        %v1771 = vrcp.pop %v1621
        %v1772 = vrcp.pop %v1623
        %v1773 = vrcp.pop %v1625
        %v1774 = vrcp.pop %v1627
        %v1775 = vrcp.pop %v1629
        %v1776 = vrcp.pop %v1631
        %v1777 = vmul.f32 %v1699, %v1761
        %v1778 = vmul.f32 %v1702, %v1762
        %v1779 = vmul.f32 %v1707, %v1763
        %v1780 = vmul.f32 %v1710, %v1764
        %v1781 = vmul.f32 %v1715, %v1765
        %v1782 = vmul.f32 %v1718, %v1766
        %v1783 = vmul.f32 %v1723, %v1767
        %v1784 = vmul.f32 %v1726, %v1768
        %v1785 = vmul.f32 %v1731, %v1769
        %v1786 = vmul.f32 %v1734, %v1770
        %v1787 = vmul.f32 %v1739, %v1771
        %v1788 = vmul.f32 %v1742, %v1772
        %v1789 = vmul.f32 %v1747, %v1773
        %v1790 = vmul.f32 %v1750, %v1774
        %v1791 = vmul.f32 %v1755, %v1775
        %v1792 = vmul.f32 %v1758, %v1776
        %v1793 = vpack.c.bf16 %v1778, %v1777
        %v1794 = vpack.c.bf16 %v1780, %v1779
        %v1795 = vpack.c.bf16 %v1782, %v1781
        %v1796 = vpack.c.bf16 %v1784, %v1783
        %v1797 = vpack.c.bf16 %v1786, %v1785
        %v1798 = vpack.c.bf16 %v1788, %v1787
        %v1799 = vpack.c.bf16 %v1790, %v1789
        %v1800 = vpack.c.bf16 %v1792, %v1791
        %v1809 = vunpack.c.l.b16 %v1793
        %v1810 = vunpack.c.h.b16 %v1793
        %v1811 = vunpack.c.l.b16 %v1794
        %v1812 = vunpack.c.h.b16 %v1794
        %v1813 = vunpack.c.l.b16 %v1795
        %v1814 = vunpack.c.h.b16 %v1795
        %v1815 = vunpack.c.l.b16 %v1796
        %v1816 = vunpack.c.h.b16 %v1796
        %v1817 = vunpack.c.l.b16 %v1797
        %v1818 = vunpack.c.h.b16 %v1797
        %v1819 = vunpack.c.l.b16 %v1798
        %v1820 = vunpack.c.h.b16 %v1798
        %v1821 = vunpack.c.l.b16 %v1799
        %v1822 = vunpack.c.h.b16 %v1799
        %v1823 = vunpack.c.l.b16 %v1800
        %v1824 = vunpack.c.h.b16 %v1800
        %v1825 = vpack.c.b16 %v1809, %v1809
        %v1826 = vpack.c.b16 %v1810, %v1810
        %v1827 = vpack.c.b16 %v1811, %v1811
        %v1828 = vpack.c.b16 %v1812, %v1812
        %v1829 = vpack.c.b16 %v1813, %v1813
        %v1830 = vpack.c.b16 %v1814, %v1814
        %v1831 = vpack.c.b16 %v1815, %v1815
        %v1832 = vpack.c.b16 %v1816, %v1816
        %v1833 = vpack.c.b16 %v1817, %v1817
        %v1834 = vpack.c.b16 %v1818, %v1818
        %v1835 = vpack.c.b16 %v1819, %v1819
        %v1836 = vpack.c.b16 %v1820, %v1820
        %v1837 = vpack.c.b16 %v1821, %v1821
        %v1838 = vpack.c.b16 %v1822, %v1822
        %v1839 = vpack.c.b16 %v1823, %v1823
        %v1840 = vpack.c.b16 %v1824, %v1824
        %1841 = vrot.lane.b32.xlu0 %v1825, 32
        %v1842 = vpop.permute.xlu0 %1841
        %1843 = vrot.lane.b32.xlu0 %v1826, 32
        %v1844 = vpop.permute.xlu0 %1843
        %1845 = vrot.lane.b32.xlu0 %v1827, 32
        %v1846 = vpop.permute.xlu0 %1845
        %1847 = vrot.lane.b32.xlu0 %v1828, 32
        %v1848 = vpop.permute.xlu0 %1847
        %1849 = vrot.lane.b32.xlu0 %v1829, 32
        %v1850 = vpop.permute.xlu0 %1849
        %1851 = vrot.lane.b32.xlu0 %v1830, 32
        %v1852 = vpop.permute.xlu0 %1851
        %1853 = vrot.lane.b32.xlu0 %v1831, 32
        %v1854 = vpop.permute.xlu0 %1853
        %1855 = vrot.lane.b32.xlu0 %v1832, 32
        %v1856 = vpop.permute.xlu0 %1855
        %1857 = vrot.lane.b32.xlu0 %v1833, 32
        %v1858 = vpop.permute.xlu0 %1857
        %1859 = vrot.lane.b32.xlu0 %v1834, 32
        %v1860 = vpop.permute.xlu0 %1859
        %1861 = vrot.lane.b32.xlu0 %v1835, 32
        %v1862 = vpop.permute.xlu0 %1861
        %1863 = vrot.lane.b32.xlu0 %v1836, 32
        %v1864 = vpop.permute.xlu0 %1863
        %1865 = vrot.lane.b32.xlu0 %v1837, 32
        %v1866 = vpop.permute.xlu0 %1865
        %1867 = vrot.lane.b32.xlu0 %v1838, 32
        %v1868 = vpop.permute.xlu0 %1867
        %1869 = vrot.lane.b32.xlu0 %v1839, 32
        %v1870 = vpop.permute.xlu0 %1869
        %1871 = vrot.lane.b32.xlu0 %v1840, 32
        %v1872 = vpop.permute.xlu0 %1871
        %vm1889 = vcmask 519424
        %1890 = vst.msk [vmem:[%s615] sm:$0xf] %vm1889, %v1842
        %1891 = vst.msk [vmem:[%s615 + $0x4] sm:$0xf] %vm1889, %v1844
        %1892 = vst.msk [vmem:[%s615 + $0x8] sm:$0xf] %vm1889, %v1846
        %1893 = vst.msk [vmem:[%s615 + $0xc] sm:$0xf] %vm1889, %v1848
        %1894 = vst.msk [vmem:[%s615 + $0x10] sm:$0xf] %vm1889, %v1850
        %1895 = vst.msk [vmem:[%s615 + $0x14] sm:$0xf] %vm1889, %v1852
        %1896 = vst.msk [vmem:[%s615 + $0x18] sm:$0xf] %vm1889, %v1854
        %1897 = vst.msk [vmem:[%s615 + $0x1c] sm:$0xf] %vm1889, %v1856
        %1898 = vst.msk [vmem:[%s615 + $0x20] sm:$0xf] %vm1889, %v1858
        %1899 = vst.msk [vmem:[%s615 + $0x24] sm:$0xf] %vm1889, %v1860
        %1900 = vst.msk [vmem:[%s615 + $0x28] sm:$0xf] %vm1889, %v1862
        %1901 = vst.msk [vmem:[%s615 + $0x2c] sm:$0xf] %vm1889, %v1864
        %1902 = vst.msk [vmem:[%s615 + $0x30] sm:$0xf] %vm1889, %v1866
        %1903 = vst.msk [vmem:[%s615 + $0x34] sm:$0xf] %vm1889, %v1868
        %1904 = vst.msk [vmem:[%s615 + $0x38] sm:$0xf] %vm1889, %v1870
        %1905 = vst.msk [vmem:[%s615 + $0x3c] sm:$0xf] %vm1889, %v1872
        %1906 = vrot.lane.b32.xlu0 %v703, 64
        %v1907 = vpop.permute.xlu0 %1906
        %1908 = vrot.lane.b32.xlu0 %v704, 64
        %v1909 = vpop.permute.xlu0 %1908
        %1910 = vrot.lane.b32.xlu0 %v705, 64
        %v1911 = vpop.permute.xlu0 %1910
        %1912 = vrot.lane.b32.xlu0 %v706, 64
        %v1913 = vpop.permute.xlu0 %1912
        %1914 = vrot.lane.b32.xlu0 %v707, 64
        %v1915 = vpop.permute.xlu0 %1914
        %1916 = vrot.lane.b32.xlu0 %v708, 64
        %v1917 = vpop.permute.xlu0 %1916
        %1918 = vrot.lane.b32.xlu0 %v709, 64
        %v1919 = vpop.permute.xlu0 %1918
        %1920 = vrot.lane.b32.xlu0 %v710, 64
        %v1921 = vpop.permute.xlu0 %1920
        %1922 = vrot.lane.b32.xlu0 %v743, 64
        %v1923 = vpop.permute.xlu0 %1922
        %1924 = vrot.lane.b32.xlu0 %v744, 64
        %v1925 = vpop.permute.xlu0 %1924
        %1926 = vrot.lane.b32.xlu0 %v745, 64
        %v1927 = vpop.permute.xlu0 %1926
        %1928 = vrot.lane.b32.xlu0 %v746, 64
        %v1929 = vpop.permute.xlu0 %1928
        %1930 = vrot.lane.b32.xlu0 %v747, 64
        %v1931 = vpop.permute.xlu0 %1930
        %1932 = vrot.lane.b32.xlu0 %v748, 64
        %v1933 = vpop.permute.xlu0 %1932
        %1934 = vrot.lane.b32.xlu0 %v749, 64
        %v1935 = vpop.permute.xlu0 %1934
        %1936 = vrot.lane.b32.xlu0 %v750, 64
        %v1937 = vpop.permute.xlu0 %1936
        %v1939 = vsel %vm751, %v1907, 0
        %v1942 = vsel %vm751, %v1909, 0
        %v1945 = vsel %vm751, %v1911, 0
        %v1948 = vsel %vm751, %v1913, 0
        %v1951 = vsel %vm751, %v1915, 0
        %v1954 = vsel %vm751, %v1917, 0
        %v1957 = vsel %vm751, %v1919, 0
        %v1960 = vsel %vm751, %v1921, 0
        %v1963 = vsel %vm751, %v1923, 0
        %v1966 = vsel %vm751, %v1925, 0
        %v1969 = vsel %vm751, %v1927, 0
        %v1972 = vsel %vm751, %v1929, 0
        %v1975 = vsel %vm751, %v1931, 0
        %v1978 = vsel %vm751, %v1933, 0
        %v1981 = vsel %vm751, %v1935, 0
        %v1984 = vsel %vm751, %v1937, 0
        %1986 = vmatprep.subr.bf16.mxu0 0
        %1987 = vmatpush1.bf16.xpose.msra.mxu0 %v1963
        %1988 = vmatprep.subr.bf16.mxu0 0
        %1989 = vmatpush1.bf16.xpose.msra.mxu0 %v1966
        %1990 = vmatprep.subr.bf16.mxu0 0
        %1991 = vmatpush1.bf16.xpose.msra.mxu0 %v1969
        %1992 = vmatprep.subr.bf16.mxu0 0
        %1993 = vmatpush1.bf16.xpose.msra.mxu0 %v1972
        %1994 = vmatprep.subr.bf16.mxu0 0
        %1995 = vmatpush1.bf16.xpose.msra.mxu0 %v1975
        %1996 = vmatprep.subr.bf16.mxu0 0
        %1997 = vmatpush1.bf16.xpose.msra.mxu0 %v1978
        %1998 = vmatprep.subr.bf16.mxu0 0
        %1999 = vmatpush1.bf16.xpose.msra.mxu0 %v1981
        %2000 = vmatprep.subr.bf16.mxu0 0
        %2001 = vmatpush1.bf16.xpose.msra.mxu0 %v1984
        %2002 = vmatprep.subr.bf16.mxu0 0
        %2003 = vmatpush1.bf16.xpose.msra.mxu0 0
        %2004 = vmatprep.subr.bf16.mxu0 0
        %2005 = vmatpush1.bf16.xpose.msra.mxu0 0
        %2006 = vmatprep.subr.bf16.mxu0 0
        %2007 = vmatpush1.bf16.xpose.msra.mxu0 0
        %2008 = vmatprep.subr.bf16.mxu0 0
        %2009 = vmatpush1.bf16.xpose.msra.mxu0 0
        %2010 = vmatprep.subr.bf16.mxu0 0
        %2011 = vmatpush1.bf16.xpose.msra.mxu0 0
        %2012 = vmatprep.subr.bf16.mxu0 0
        %2013 = vmatpush1.bf16.xpose.msra.mxu0 0
        %2014 = vmatprep.subr.bf16.mxu0 0
        %2015 = vmatpush1.bf16.xpose.msra.mxu0 0
        %2016 = vmatprep.subr.bf16.mxu0 0
        %2017 = vmatpush1.bf16.xpose.msra.mxu0 0
        %2018 = vmatprep.mubr.bf16.mxu0 0
        %2019 = vmatmul.mubr.bf16.gmra.mrb[0].mxu0 %v1939
        %v2020 = vpop.f32.mrb[0].mxu0
        %v2021 = vadd.f32 0.0, %v2020
        %v2022 = vpop.f32.mrb[0].mxu0
        %v2023 = vpop.f32.mrb[0].mxu0
        %v2024 = vadd.f32 0.0, %v2023
        %v2025 = vpop.f32.mrb[0].mxu0
        %2026 = vmatprep.mubr.bf16.mxu0 0
        %2027 = vmatmul.mubr.bf16.gmra.mrb[0].mxu0 %v1942
        %v2028 = vpop.f32.mrb[0].mxu0
        %v2029 = vadd.f32 0.0, %v2028
        %v2030 = vpop.f32.mrb[0].mxu0
        %v2031 = vpop.f32.mrb[0].mxu0
        %v2032 = vadd.f32 0.0, %v2031
        %v2033 = vpop.f32.mrb[0].mxu0
        %2034 = vmatprep.mubr.bf16.mxu0 0
        %2035 = vmatmul.mubr.bf16.gmra.mrb[0].mxu0 %v1945
        %v2036 = vpop.f32.mrb[0].mxu0
        %v2037 = vadd.f32 0.0, %v2036
        %v2038 = vpop.f32.mrb[0].mxu0
        %v2039 = vpop.f32.mrb[0].mxu0
        %v2040 = vadd.f32 0.0, %v2039
        %v2041 = vpop.f32.mrb[0].mxu0
        %2042 = vmatprep.mubr.bf16.mxu0 0
        %2043 = vmatmul.mubr.bf16.gmra.mrb[0].mxu0 %v1948
        %v2044 = vpop.f32.mrb[0].mxu0
        %v2045 = vadd.f32 0.0, %v2044
        %v2046 = vpop.f32.mrb[0].mxu0
        %v2047 = vpop.f32.mrb[0].mxu0
        %v2048 = vadd.f32 0.0, %v2047
        %v2049 = vpop.f32.mrb[0].mxu0
        %2050 = vmatprep.mubr.bf16.mxu0 0
        %2051 = vmatmul.mubr.bf16.gmra.mrb[0].mxu0 %v1951
        %v2052 = vpop.f32.mrb[0].mxu0
        %v2053 = vadd.f32 0.0, %v2052
        %v2054 = vpop.f32.mrb[0].mxu0
        %v2055 = vpop.f32.mrb[0].mxu0
        %v2056 = vadd.f32 0.0, %v2055
        %v2057 = vpop.f32.mrb[0].mxu0
        %2058 = vmatprep.mubr.bf16.mxu0 0
        %2059 = vmatmul.mubr.bf16.gmra.mrb[0].mxu0 %v1954
        %v2060 = vpop.f32.mrb[0].mxu0
        %v2061 = vadd.f32 0.0, %v2060
        %v2062 = vpop.f32.mrb[0].mxu0
        %v2063 = vpop.f32.mrb[0].mxu0
        %v2064 = vadd.f32 0.0, %v2063
        %v2065 = vpop.f32.mrb[0].mxu0
        %2066 = vmatprep.mubr.bf16.mxu0 0
        %2067 = vmatmul.mubr.bf16.gmra.mrb[0].mxu0 %v1957
        %v2068 = vpop.f32.mrb[0].mxu0
        %v2069 = vadd.f32 0.0, %v2068
        %v2070 = vpop.f32.mrb[0].mxu0
        %v2071 = vpop.f32.mrb[0].mxu0
        %v2072 = vadd.f32 0.0, %v2071
        %v2073 = vpop.f32.mrb[0].mxu0
        %2074 = vmatprep.mubr.bf16.mxu0 0
        %2075 = vmatmul.mubr.bf16.gmra.mrb[0].mxu0 %v1960
        %v2076 = vpop.f32.mrb[0].mxu0
        %v2077 = vadd.f32 0.0, %v2076
        %v2078 = vpop.f32.mrb[0].mxu0
        %v2079 = vpop.f32.mrb[0].mxu0
        %v2080 = vadd.f32 0.0, %v2079
        %v2081 = vpop.f32.mrb[0].mxu0
        %2082 = vdwg.mxu0
        %v2083 = vmul.f32 %v2021, 0.17677669
        %v2084 = vmul.f32 %v2024, 0.17677669
        %v2085 = vmul.f32 %v2029, 0.17677669
        %v2086 = vmul.f32 %v2032, 0.17677669
        %v2087 = vmul.f32 %v2037, 0.17677669
        %v2088 = vmul.f32 %v2040, 0.17677669
        %v2089 = vmul.f32 %v2045, 0.17677669
        %v2090 = vmul.f32 %v2048, 0.17677669
        %v2091 = vmul.f32 %v2053, 0.17677669
        %v2092 = vmul.f32 %v2056, 0.17677669
        %v2093 = vmul.f32 %v2061, 0.17677669
        %v2094 = vmul.f32 %v2064, 0.17677669
        %v2095 = vmul.f32 %v2069, 0.17677669
        %v2096 = vmul.f32 %v2072, 0.17677669
        %v2097 = vmul.f32 %v2077, 0.17677669
        %v2098 = vmul.f32 %v2080, 0.17677669
        %v2099 = vadd.f32 %v2083, %v916
        %v2100 = vadd.f32 %v2084, %v916
        %v2101 = vadd.f32 %v2085, %v916
        %v2102 = vadd.f32 %v2086, %v916
        %v2103 = vadd.f32 %v2087, %v916
        %v2104 = vadd.f32 %v2088, %v916
        %v2105 = vadd.f32 %v2089, %v916
        %v2106 = vadd.f32 %v2090, %v916
        %v2107 = vadd.f32 %v2091, %v916
        %v2108 = vadd.f32 %v2092, %v916
        %v2109 = vadd.f32 %v2093, %v916
        %v2110 = vadd.f32 %v2094, %v916
        %v2111 = vadd.f32 %v2095, %v916
        %v2112 = vadd.f32 %v2096, %v916
        %v2113 = vadd.f32 %v2097, %v916
        %v2114 = vadd.f32 %v2098, %v916
        %2115 = vmax.xlane.f32.xlu0 %v2099
        %v2116 = vpop.xlane.xlu0 %2115
        %2117 = vmax.xlane.f32.xlu0 %v2100
        %v2118 = vpop.xlane.xlu0 %2117
        %2119 = vmax.xlane.f32.xlu0 %v2101
        %v2120 = vpop.xlane.xlu0 %2119
        %2121 = vmax.xlane.f32.xlu0 %v2102
        %v2122 = vpop.xlane.xlu0 %2121
        %2123 = vmax.xlane.f32.xlu0 %v2103
        %v2124 = vpop.xlane.xlu0 %2123
        %2125 = vmax.xlane.f32.xlu0 %v2104
        %v2126 = vpop.xlane.xlu0 %2125
        %2127 = vmax.xlane.f32.xlu0 %v2105
        %v2128 = vpop.xlane.xlu0 %2127
        %2129 = vmax.xlane.f32.xlu0 %v2106
        %v2130 = vpop.xlane.xlu0 %2129
        %2131 = vmax.xlane.f32.xlu0 %v2107
        %v2132 = vpop.xlane.xlu0 %2131
        %2133 = vmax.xlane.f32.xlu0 %v2108
        %v2134 = vpop.xlane.xlu0 %2133
        %2135 = vmax.xlane.f32.xlu0 %v2109
        %v2136 = vpop.xlane.xlu0 %2135
        %2137 = vmax.xlane.f32.xlu0 %v2110
        %v2138 = vpop.xlane.xlu0 %2137
        %2139 = vmax.xlane.f32.xlu0 %v2111
        %v2140 = vpop.xlane.xlu0 %2139
        %2141 = vmax.xlane.f32.xlu0 %v2112
        %v2142 = vpop.xlane.xlu0 %2141
        %2143 = vmax.xlane.f32.xlu0 %v2113
        %v2144 = vpop.xlane.xlu0 %2143
        %2145 = vmax.xlane.f32.xlu0 %v2114
        %v2146 = vpop.xlane.xlu0 %2145
        %v2147 = vsub.f32 %v2099, %v2116
        %v2148 = vsub.f32 %v2100, %v2118
        %v2149 = vsub.f32 %v2101, %v2120
        %v2150 = vsub.f32 %v2102, %v2122
        %v2151 = vsub.f32 %v2103, %v2124
        %v2152 = vsub.f32 %v2104, %v2126
        %v2153 = vsub.f32 %v2105, %v2128
        %v2154 = vsub.f32 %v2106, %v2130
        %v2155 = vsub.f32 %v2107, %v2132
        %v2156 = vsub.f32 %v2108, %v2134
        %v2157 = vsub.f32 %v2109, %v2136
        %v2158 = vsub.f32 %v2110, %v2138
        %v2159 = vsub.f32 %v2111, %v2140
        %v2160 = vsub.f32 %v2112, %v2142
        %v2161 = vsub.f32 %v2113, %v2144
        %v2162 = vsub.f32 %v2114, %v2146
        %v2163 = vmul.f32 %v2147, 1.442695
        %v2164 = vpow.pop %v2163
        %v2165 = vmul.f32 %v2148, 1.442695
        %v2166 = vpow.pop %v2165
        %v2167 = vmul.f32 %v2149, 1.442695
        %v2168 = vpow.pop %v2167
        %v2169 = vmul.f32 %v2150, 1.442695
        %v2170 = vpow.pop %v2169
        %v2171 = vmul.f32 %v2151, 1.442695
        %v2172 = vpow.pop %v2171
        %v2173 = vmul.f32 %v2152, 1.442695
        %v2174 = vpow.pop %v2173
        %v2175 = vmul.f32 %v2153, 1.442695
        %v2176 = vpow.pop %v2175
        %v2177 = vmul.f32 %v2154, 1.442695
        %v2178 = vpow.pop %v2177
        %v2179 = vmul.f32 %v2155, 1.442695
        %v2180 = vpow.pop %v2179
        %v2181 = vmul.f32 %v2156, 1.442695
        %v2182 = vpow.pop %v2181
        %v2183 = vmul.f32 %v2157, 1.442695
        %v2184 = vpow.pop %v2183
        %v2185 = vmul.f32 %v2158, 1.442695
        %v2186 = vpow.pop %v2185
        %v2187 = vmul.f32 %v2159, 1.442695
        %v2188 = vpow.pop %v2187
        %v2189 = vmul.f32 %v2160, 1.442695
        %v2190 = vpow.pop %v2189
        %v2191 = vmul.f32 %v2161, 1.442695
        %v2192 = vpow.pop %v2191
        %v2193 = vmul.f32 %v2162, 1.442695
        %v2194 = vpow.pop %v2193
        %2195 = vadd.xlane.f32.xlu0 %v2164
        %v2196 = vpop.xlane.xlu0 %2195
        %2197 = vadd.xlane.f32.xlu0 %v2166
        %v2198 = vpop.xlane.xlu0 %2197
        %2199 = vadd.xlane.f32.xlu0 %v2168
        %v2200 = vpop.xlane.xlu0 %2199
        %2201 = vadd.xlane.f32.xlu0 %v2170
        %v2202 = vpop.xlane.xlu0 %2201
        %2203 = vadd.xlane.f32.xlu0 %v2172
        %v2204 = vpop.xlane.xlu0 %2203
        %2205 = vadd.xlane.f32.xlu0 %v2174
        %v2206 = vpop.xlane.xlu0 %2205
        %2207 = vadd.xlane.f32.xlu0 %v2176
        %v2208 = vpop.xlane.xlu0 %2207
        %2209 = vadd.xlane.f32.xlu0 %v2178
        %v2210 = vpop.xlane.xlu0 %2209
        %2211 = vadd.xlane.f32.xlu0 %v2180
        %v2212 = vpop.xlane.xlu0 %2211
        %2213 = vadd.xlane.f32.xlu0 %v2182
        %v2214 = vpop.xlane.xlu0 %2213
        %2215 = vadd.xlane.f32.xlu0 %v2184
        %v2216 = vpop.xlane.xlu0 %2215
        %2217 = vadd.xlane.f32.xlu0 %v2186
        %v2218 = vpop.xlane.xlu0 %2217
        %2219 = vadd.xlane.f32.xlu0 %v2188
        %v2220 = vpop.xlane.xlu0 %2219
        %2221 = vadd.xlane.f32.xlu0 %v2190
        %v2222 = vpop.xlane.xlu0 %2221
        %2223 = vadd.xlane.f32.xlu0 %v2192
        %v2224 = vpop.xlane.xlu0 %2223
        %2225 = vadd.xlane.f32.xlu0 %v2194
        %v2226 = vpop.xlane.xlu0 %2225
        %v2227 = vpack.c.bf16 %v2166, %v2164
        %v2228 = vpack.c.bf16 %v2170, %v2168
        %v2229 = vpack.c.bf16 %v2174, %v2172
        %v2230 = vpack.c.bf16 %v2178, %v2176
        %v2231 = vpack.c.bf16 %v2182, %v2180
        %v2232 = vpack.c.bf16 %v2186, %v2184
        %v2233 = vpack.c.bf16 %v2190, %v2188
        %v2234 = vpack.c.bf16 %v2194, %v2192
        %2235 = vrot.lane.b32.xlu0 %v1085, 64
        %v2236 = vpop.permute.xlu0 %2235
        %2237 = vrot.lane.b32.xlu0 %v1086, 64
        %v2238 = vpop.permute.xlu0 %2237
        %2239 = vrot.lane.b32.xlu0 %v1087, 64
        %v2240 = vpop.permute.xlu0 %2239
        %2241 = vrot.lane.b32.xlu0 %v1088, 64
        %v2242 = vpop.permute.xlu0 %2241
        %2243 = vrot.lane.b32.xlu0 %v1089, 64
        %v2244 = vpop.permute.xlu0 %2243
        %2245 = vrot.lane.b32.xlu0 %v1090, 64
        %v2246 = vpop.permute.xlu0 %2245
        %2247 = vrot.lane.b32.xlu0 %v1091, 64
        %v2248 = vpop.permute.xlu0 %2247
        %2249 = vrot.lane.b32.xlu0 %v1092, 64
        %v2250 = vpop.permute.xlu0 %2249
        %2259 = vmatprep.subr.bf16.mxu0 0
        %2260 = vmatpush1.bf16.msra.mxu0 %v2236
        %2261 = vmatprep.subr.bf16.mxu0 0
        %2262 = vmatpush1.bf16.msra.mxu0 %v2238
        %2263 = vmatprep.subr.bf16.mxu0 0
        %2264 = vmatpush1.bf16.msra.mxu0 %v2240
        %2265 = vmatprep.subr.bf16.mxu0 0
        %2266 = vmatpush1.bf16.msra.mxu0 %v2242
        %2267 = vmatprep.subr.bf16.mxu0 0
        %2268 = vmatpush1.bf16.msra.mxu0 %v2244
        %2269 = vmatprep.subr.bf16.mxu0 0
        %2270 = vmatpush1.bf16.msra.mxu0 %v2246
        %2271 = vmatprep.subr.bf16.mxu0 0
        %2272 = vmatpush1.bf16.msra.mxu0 %v2248
        %2273 = vmatprep.subr.bf16.mxu0 0
        %2274 = vmatpush1.bf16.msra.mxu0 %v2250
        %2275 = vmatprep.subr.bf16.mxu0 0
        %2276 = vmatpush1.bf16.msra.mxu0 0
        %2277 = vmatprep.subr.bf16.mxu0 0
        %2278 = vmatpush1.bf16.msra.mxu0 0
        %2279 = vmatprep.subr.bf16.mxu0 0
        %2280 = vmatpush1.bf16.msra.mxu0 0
        %2281 = vmatprep.subr.bf16.mxu0 0
        %2282 = vmatpush1.bf16.msra.mxu0 0
        %2283 = vmatprep.subr.bf16.mxu0 0
        %2284 = vmatpush1.bf16.msra.mxu0 0
        %2285 = vmatprep.subr.bf16.mxu0 0
        %2286 = vmatpush1.bf16.msra.mxu0 0
        %2287 = vmatprep.subr.bf16.mxu0 0
        %2288 = vmatpush1.bf16.msra.mxu0 0
        %2289 = vmatprep.subr.bf16.mxu0 0
        %2290 = vmatpush1.bf16.msra.mxu0 0
        %2291 = vmatprep.mubr.bf16.mxu0 0
        %2292 = vmatmul.mubr.bf16.gmra.mrb[0].mxu0 %v2227
        %v2293 = vpop.f32.mrb[0].mxu0
        %v2294 = vadd.f32 0.0, %v2293
        %v2295 = vpop.f32.mrb[0].mxu0
        %v2296 = vpop.f32.mrb[0].mxu0
        %v2297 = vadd.f32 0.0, %v2296
        %v2298 = vpop.f32.mrb[0].mxu0
        %2299 = vmatprep.mubr.bf16.mxu0 0
        %2300 = vmatmul.mubr.bf16.gmra.mrb[0].mxu0 %v2228
        %v2301 = vpop.f32.mrb[0].mxu0
        %v2302 = vadd.f32 0.0, %v2301
        %v2303 = vpop.f32.mrb[0].mxu0
        %v2304 = vpop.f32.mrb[0].mxu0
        %v2305 = vadd.f32 0.0, %v2304
        %v2306 = vpop.f32.mrb[0].mxu0
        %2307 = vmatprep.mubr.bf16.mxu0 0
        %2308 = vmatmul.mubr.bf16.gmra.mrb[0].mxu0 %v2229
        %v2309 = vpop.f32.mrb[0].mxu0
        %v2310 = vadd.f32 0.0, %v2309
        %v2311 = vpop.f32.mrb[0].mxu0
        %v2312 = vpop.f32.mrb[0].mxu0
        %v2313 = vadd.f32 0.0, %v2312
        %v2314 = vpop.f32.mrb[0].mxu0
        %2315 = vmatprep.mubr.bf16.mxu0 0
        %2316 = vmatmul.mubr.bf16.gmra.mrb[0].mxu0 %v2230
        %v2317 = vpop.f32.mrb[0].mxu0
        %v2318 = vadd.f32 0.0, %v2317
        %v2319 = vpop.f32.mrb[0].mxu0
        %v2320 = vpop.f32.mrb[0].mxu0
        %v2321 = vadd.f32 0.0, %v2320
        %v2322 = vpop.f32.mrb[0].mxu0
        %2323 = vmatprep.mubr.bf16.mxu0 0
        %2324 = vmatmul.mubr.bf16.gmra.mrb[0].mxu0 %v2231
        %v2325 = vpop.f32.mrb[0].mxu0
        %v2326 = vadd.f32 0.0, %v2325
        %v2327 = vpop.f32.mrb[0].mxu0
        %v2328 = vpop.f32.mrb[0].mxu0
        %v2329 = vadd.f32 0.0, %v2328
        %v2330 = vpop.f32.mrb[0].mxu0
        %2331 = vmatprep.mubr.bf16.mxu0 0
        %2332 = vmatmul.mubr.bf16.gmra.mrb[0].mxu0 %v2232
        %v2333 = vpop.f32.mrb[0].mxu0
        %v2334 = vadd.f32 0.0, %v2333
        %v2335 = vpop.f32.mrb[0].mxu0
        %v2336 = vpop.f32.mrb[0].mxu0
        %v2337 = vadd.f32 0.0, %v2336
        %v2338 = vpop.f32.mrb[0].mxu0
        %2339 = vmatprep.mubr.bf16.mxu0 0
        %2340 = vmatmul.mubr.bf16.gmra.mrb[0].mxu0 %v2233
        %v2341 = vpop.f32.mrb[0].mxu0
        %v2342 = vadd.f32 0.0, %v2341
        %v2343 = vpop.f32.mrb[0].mxu0
        %v2344 = vpop.f32.mrb[0].mxu0
        %v2345 = vadd.f32 0.0, %v2344
        %v2346 = vpop.f32.mrb[0].mxu0
        %2347 = vmatprep.mubr.bf16.mxu0 0
        %2348 = vmatmul.mubr.bf16.gmra.mrb[0].mxu0 %v2234
        %v2349 = vpop.f32.mrb[0].mxu0
        %v2350 = vadd.f32 0.0, %v2349
        %v2351 = vpop.f32.mrb[0].mxu0
        %v2352 = vpop.f32.mrb[0].mxu0
        %v2353 = vadd.f32 0.0, %v2352
        %v2354 = vpop.f32.mrb[0].mxu0
        %2355 = vdwg.mxu0
        %v2356 = vrcp.pop %v2196
        %v2357 = vrcp.pop %v2198
        %v2358 = vrcp.pop %v2200
        %v2359 = vrcp.pop %v2202
        %v2360 = vrcp.pop %v2204
        %v2361 = vrcp.pop %v2206
        %v2362 = vrcp.pop %v2208
        %v2363 = vrcp.pop %v2210
        %v2364 = vrcp.pop %v2212
        %v2365 = vrcp.pop %v2214
        %v2366 = vrcp.pop %v2216
        %v2367 = vrcp.pop %v2218
        %v2368 = vrcp.pop %v2220
        %v2369 = vrcp.pop %v2222
        %v2370 = vrcp.pop %v2224
        %v2371 = vrcp.pop %v2226
        %v2372 = vmul.f32 %v2294, %v2356
        %v2373 = vmul.f32 %v2297, %v2357
        %v2374 = vmul.f32 %v2302, %v2358
        %v2375 = vmul.f32 %v2305, %v2359
        %v2376 = vmul.f32 %v2310, %v2360
        %v2377 = vmul.f32 %v2313, %v2361
        %v2378 = vmul.f32 %v2318, %v2362
        %v2379 = vmul.f32 %v2321, %v2363
        %v2380 = vmul.f32 %v2326, %v2364
        %v2381 = vmul.f32 %v2329, %v2365
        %v2382 = vmul.f32 %v2334, %v2366
        %v2383 = vmul.f32 %v2337, %v2367
        %v2384 = vmul.f32 %v2342, %v2368
        %v2385 = vmul.f32 %v2345, %v2369
        %v2386 = vmul.f32 %v2350, %v2370
        %v2387 = vmul.f32 %v2353, %v2371
        %v2388 = vpack.c.bf16 %v2373, %v2372
        %v2389 = vpack.c.bf16 %v2375, %v2374
        %v2390 = vpack.c.bf16 %v2377, %v2376
        %v2391 = vpack.c.bf16 %v2379, %v2378
        %v2392 = vpack.c.bf16 %v2381, %v2380
        %v2393 = vpack.c.bf16 %v2383, %v2382
        %v2394 = vpack.c.bf16 %v2385, %v2384
        %v2395 = vpack.c.bf16 %v2387, %v2386
        %v2404 = vunpack.c.l.b16 %v2388
        %v2405 = vunpack.c.h.b16 %v2388
        %v2406 = vunpack.c.l.b16 %v2389
        %v2407 = vunpack.c.h.b16 %v2389
        %v2408 = vunpack.c.l.b16 %v2390
        %v2409 = vunpack.c.h.b16 %v2390
        %v2410 = vunpack.c.l.b16 %v2391
        %v2411 = vunpack.c.h.b16 %v2391
        %v2412 = vunpack.c.l.b16 %v2392
        %v2413 = vunpack.c.h.b16 %v2392
        %v2414 = vunpack.c.l.b16 %v2393
        %v2415 = vunpack.c.h.b16 %v2393
        %v2416 = vunpack.c.l.b16 %v2394
        %v2417 = vunpack.c.h.b16 %v2394
        %v2418 = vunpack.c.l.b16 %v2395
        %v2419 = vunpack.c.h.b16 %v2395
        %v2420 = vpack.c.b16 %v2404, %v2404
        %v2421 = vpack.c.b16 %v2405, %v2405
        %v2422 = vpack.c.b16 %v2406, %v2406
        %v2423 = vpack.c.b16 %v2407, %v2407
        %v2424 = vpack.c.b16 %v2408, %v2408
        %v2425 = vpack.c.b16 %v2409, %v2409
        %v2426 = vpack.c.b16 %v2410, %v2410
        %v2427 = vpack.c.b16 %v2411, %v2411
        %v2428 = vpack.c.b16 %v2412, %v2412
        %v2429 = vpack.c.b16 %v2413, %v2413
        %v2430 = vpack.c.b16 %v2414, %v2414
        %v2431 = vpack.c.b16 %v2415, %v2415
        %v2432 = vpack.c.b16 %v2416, %v2416
        %v2433 = vpack.c.b16 %v2417, %v2417
        %v2434 = vpack.c.b16 %v2418, %v2418
        %v2435 = vpack.c.b16 %v2419, %v2419
        %2436 = vrot.lane.b32.xlu0 %v2420, 64
        %v2437 = vpop.permute.xlu0 %2436
        %2438 = vrot.lane.b32.xlu0 %v2421, 64
        %v2439 = vpop.permute.xlu0 %2438
        %2440 = vrot.lane.b32.xlu0 %v2422, 64
        %v2441 = vpop.permute.xlu0 %2440
        %2442 = vrot.lane.b32.xlu0 %v2423, 64
        %v2443 = vpop.permute.xlu0 %2442
        %2444 = vrot.lane.b32.xlu0 %v2424, 64
        %v2445 = vpop.permute.xlu0 %2444
        %2446 = vrot.lane.b32.xlu0 %v2425, 64
        %v2447 = vpop.permute.xlu0 %2446
        %2448 = vrot.lane.b32.xlu0 %v2426, 64
        %v2449 = vpop.permute.xlu0 %2448
        %2450 = vrot.lane.b32.xlu0 %v2427, 64
        %v2451 = vpop.permute.xlu0 %2450
        %2452 = vrot.lane.b32.xlu0 %v2428, 64
        %v2453 = vpop.permute.xlu0 %2452
        %2454 = vrot.lane.b32.xlu0 %v2429, 64
        %v2455 = vpop.permute.xlu0 %2454
        %2456 = vrot.lane.b32.xlu0 %v2430, 64
        %v2457 = vpop.permute.xlu0 %2456
        %2458 = vrot.lane.b32.xlu0 %v2431, 64
        %v2459 = vpop.permute.xlu0 %2458
        %2460 = vrot.lane.b32.xlu0 %v2432, 64
        %v2461 = vpop.permute.xlu0 %2460
        %2462 = vrot.lane.b32.xlu0 %v2433, 64
        %v2463 = vpop.permute.xlu0 %2462
        %2464 = vrot.lane.b32.xlu0 %v2434, 64
        %v2465 = vpop.permute.xlu0 %2464
        %2466 = vrot.lane.b32.xlu0 %v2435, 64
        %v2467 = vpop.permute.xlu0 %2466
        %vm2484 = vcmask 781824
        %2485 = vst.msk [vmem:[%s615] sm:$0xf] %vm2484, %v2437
        %2486 = vst.msk [vmem:[%s615 + $0x4] sm:$0xf] %vm2484, %v2439
        %2487 = vst.msk [vmem:[%s615 + $0x8] sm:$0xf] %vm2484, %v2441
        %2488 = vst.msk [vmem:[%s615 + $0xc] sm:$0xf] %vm2484, %v2443
        %2489 = vst.msk [vmem:[%s615 + $0x10] sm:$0xf] %vm2484, %v2445
        %2490 = vst.msk [vmem:[%s615 + $0x14] sm:$0xf] %vm2484, %v2447
        %2491 = vst.msk [vmem:[%s615 + $0x18] sm:$0xf] %vm2484, %v2449
        %2492 = vst.msk [vmem:[%s615 + $0x1c] sm:$0xf] %vm2484, %v2451
        %2493 = vst.msk [vmem:[%s615 + $0x20] sm:$0xf] %vm2484, %v2453
        %2494 = vst.msk [vmem:[%s615 + $0x24] sm:$0xf] %vm2484, %v2455
        %2495 = vst.msk [vmem:[%s615 + $0x28] sm:$0xf] %vm2484, %v2457
        %2496 = vst.msk [vmem:[%s615 + $0x2c] sm:$0xf] %vm2484, %v2459
        %2497 = vst.msk [vmem:[%s615 + $0x30] sm:$0xf] %vm2484, %v2461
        %2498 = vst.msk [vmem:[%s615 + $0x34] sm:$0xf] %vm2484, %v2463
        %2499 = vst.msk [vmem:[%s615 + $0x38] sm:$0xf] %vm2484, %v2465
        %2500 = vst.msk [vmem:[%s615 + $0x3c] sm:$0xf] %vm2484, %v2467
        %2501 = vrot.lane.b32.xlu0 %v703, 32
        %v2502 = vpop.permute.xlu0 %2501
        %2503 = vrot.lane.b32.xlu0 %v704, 32
        %v2504 = vpop.permute.xlu0 %2503
        %2505 = vrot.lane.b32.xlu0 %v705, 32
        %v2506 = vpop.permute.xlu0 %2505
        %2507 = vrot.lane.b32.xlu0 %v706, 32
        %v2508 = vpop.permute.xlu0 %2507
        %2509 = vrot.lane.b32.xlu0 %v707, 32
        %v2510 = vpop.permute.xlu0 %2509
        %2511 = vrot.lane.b32.xlu0 %v708, 32
        %v2512 = vpop.permute.xlu0 %2511
        %2513 = vrot.lane.b32.xlu0 %v709, 32
        %v2514 = vpop.permute.xlu0 %2513
        %2515 = vrot.lane.b32.xlu0 %v710, 32
        %v2516 = vpop.permute.xlu0 %2515
        %2517 = vrot.lane.b32.xlu0 %v743, 32
        %v2518 = vpop.permute.xlu0 %2517
        %2519 = vrot.lane.b32.xlu0 %v744, 32
        %v2520 = vpop.permute.xlu0 %2519
        %2521 = vrot.lane.b32.xlu0 %v745, 32
        %v2522 = vpop.permute.xlu0 %2521
        %2523 = vrot.lane.b32.xlu0 %v746, 32
        %v2524 = vpop.permute.xlu0 %2523
        %2525 = vrot.lane.b32.xlu0 %v747, 32
        %v2526 = vpop.permute.xlu0 %2525
        %2527 = vrot.lane.b32.xlu0 %v748, 32
        %v2528 = vpop.permute.xlu0 %2527
        %2529 = vrot.lane.b32.xlu0 %v749, 32
        %v2530 = vpop.permute.xlu0 %2529
        %2531 = vrot.lane.b32.xlu0 %v750, 32
        %v2532 = vpop.permute.xlu0 %2531
        %v2534 = vsel %vm751, %v2502, 0
        %v2537 = vsel %vm751, %v2504, 0
        %v2540 = vsel %vm751, %v2506, 0
        %v2543 = vsel %vm751, %v2508, 0
        %v2546 = vsel %vm751, %v2510, 0
        %v2549 = vsel %vm751, %v2512, 0
        %v2552 = vsel %vm751, %v2514, 0
        %v2555 = vsel %vm751, %v2516, 0
        %v2558 = vsel %vm751, %v2518, 0
        %v2561 = vsel %vm751, %v2520, 0
        %v2564 = vsel %vm751, %v2522, 0
        %v2567 = vsel %vm751, %v2524, 0
        %v2570 = vsel %vm751, %v2526, 0
        %v2573 = vsel %vm751, %v2528, 0
        %v2576 = vsel %vm751, %v2530, 0
        %v2579 = vsel %vm751, %v2532, 0
        %2581 = vmatprep.subr.bf16.mxu0 0
        %2582 = vmatpush1.bf16.xpose.msra.mxu0 %v2558
        %2583 = vmatprep.subr.bf16.mxu0 0
        %2584 = vmatpush1.bf16.xpose.msra.mxu0 %v2561
        %2585 = vmatprep.subr.bf16.mxu0 0
        %2586 = vmatpush1.bf16.xpose.msra.mxu0 %v2564
        %2587 = vmatprep.subr.bf16.mxu0 0
        %2588 = vmatpush1.bf16.xpose.msra.mxu0 %v2567
        %2589 = vmatprep.subr.bf16.mxu0 0
        %2590 = vmatpush1.bf16.xpose.msra.mxu0 %v2570
        %2591 = vmatprep.subr.bf16.mxu0 0
        %2592 = vmatpush1.bf16.xpose.msra.mxu0 %v2573
        %2593 = vmatprep.subr.bf16.mxu0 0
        %2594 = vmatpush1.bf16.xpose.msra.mxu0 %v2576
        %2595 = vmatprep.subr.bf16.mxu0 0
        %2596 = vmatpush1.bf16.xpose.msra.mxu0 %v2579
        %2597 = vmatprep.subr.bf16.mxu0 0
        %2598 = vmatpush1.bf16.xpose.msra.mxu0 0
        %2599 = vmatprep.subr.bf16.mxu0 0
        %2600 = vmatpush1.bf16.xpose.msra.mxu0 0
        %2601 = vmatprep.subr.bf16.mxu0 0
        %2602 = vmatpush1.bf16.xpose.msra.mxu0 0
        %2603 = vmatprep.subr.bf16.mxu0 0
        %2604 = vmatpush1.bf16.xpose.msra.mxu0 0
        %2605 = vmatprep.subr.bf16.mxu0 0
        %2606 = vmatpush1.bf16.xpose.msra.mxu0 0
        %2607 = vmatprep.subr.bf16.mxu0 0
        %2608 = vmatpush1.bf16.xpose.msra.mxu0 0
        %2609 = vmatprep.subr.bf16.mxu0 0
        %2610 = vmatpush1.bf16.xpose.msra.mxu0 0
        %2611 = vmatprep.subr.bf16.mxu0 0
        %2612 = vmatpush1.bf16.xpose.msra.mxu0 0
        %2613 = vmatprep.mubr.bf16.mxu0 0
        %2614 = vmatmul.mubr.bf16.gmra.mrb[0].mxu0 %v2534
        %v2615 = vpop.f32.mrb[0].mxu0
        %v2616 = vadd.f32 0.0, %v2615
        %v2617 = vpop.f32.mrb[0].mxu0
        %v2618 = vpop.f32.mrb[0].mxu0
        %v2619 = vadd.f32 0.0, %v2618
        %v2620 = vpop.f32.mrb[0].mxu0
        %2621 = vmatprep.mubr.bf16.mxu0 0
        %2622 = vmatmul.mubr.bf16.gmra.mrb[0].mxu0 %v2537
        %v2623 = vpop.f32.mrb[0].mxu0
        %v2624 = vadd.f32 0.0, %v2623
        %v2625 = vpop.f32.mrb[0].mxu0
        %v2626 = vpop.f32.mrb[0].mxu0
        %v2627 = vadd.f32 0.0, %v2626
        %v2628 = vpop.f32.mrb[0].mxu0
        %2629 = vmatprep.mubr.bf16.mxu0 0
        %2630 = vmatmul.mubr.bf16.gmra.mrb[0].mxu0 %v2540
        %v2631 = vpop.f32.mrb[0].mxu0
        %v2632 = vadd.f32 0.0, %v2631
        %v2633 = vpop.f32.mrb[0].mxu0
        %v2634 = vpop.f32.mrb[0].mxu0
        %v2635 = vadd.f32 0.0, %v2634
        %v2636 = vpop.f32.mrb[0].mxu0
        %2637 = vmatprep.mubr.bf16.mxu0 0
        %2638 = vmatmul.mubr.bf16.gmra.mrb[0].mxu0 %v2543
        %v2639 = vpop.f32.mrb[0].mxu0
        %v2640 = vadd.f32 0.0, %v2639
        %v2641 = vpop.f32.mrb[0].mxu0
        %v2642 = vpop.f32.mrb[0].mxu0
        %v2643 = vadd.f32 0.0, %v2642
        %v2644 = vpop.f32.mrb[0].mxu0
        %2645 = vmatprep.mubr.bf16.mxu0 0
        %2646 = vmatmul.mubr.bf16.gmra.mrb[0].mxu0 %v2546
        %v2647 = vpop.f32.mrb[0].mxu0
        %v2648 = vadd.f32 0.0, %v2647
        %v2649 = vpop.f32.mrb[0].mxu0
        %v2650 = vpop.f32.mrb[0].mxu0
        %v2651 = vadd.f32 0.0, %v2650
        %v2652 = vpop.f32.mrb[0].mxu0
        %2653 = vmatprep.mubr.bf16.mxu0 0
        %2654 = vmatmul.mubr.bf16.gmra.mrb[0].mxu0 %v2549
        %v2655 = vpop.f32.mrb[0].mxu0
        %v2656 = vadd.f32 0.0, %v2655
        %v2657 = vpop.f32.mrb[0].mxu0
        %v2658 = vpop.f32.mrb[0].mxu0
        %v2659 = vadd.f32 0.0, %v2658
        %v2660 = vpop.f32.mrb[0].mxu0
        %2661 = vmatprep.mubr.bf16.mxu0 0
        %2662 = vmatmul.mubr.bf16.gmra.mrb[0].mxu0 %v2552
        %v2663 = vpop.f32.mrb[0].mxu0
        %v2664 = vadd.f32 0.0, %v2663
        %v2665 = vpop.f32.mrb[0].mxu0
        %v2666 = vpop.f32.mrb[0].mxu0
        %v2667 = vadd.f32 0.0, %v2666
        %v2668 = vpop.f32.mrb[0].mxu0
        %2669 = vmatprep.mubr.bf16.mxu0 0
        %2670 = vmatmul.mubr.bf16.gmra.mrb[0].mxu0 %v2555
        %v2671 = vpop.f32.mrb[0].mxu0
        %v2672 = vadd.f32 0.0, %v2671
        %v2673 = vpop.f32.mrb[0].mxu0
        %v2674 = vpop.f32.mrb[0].mxu0
        %v2675 = vadd.f32 0.0, %v2674
        %v2676 = vpop.f32.mrb[0].mxu0
        %2677 = vdwg.mxu0
        %v2678 = vmul.f32 %v2616, 0.17677669
        %v2679 = vmul.f32 %v2619, 0.17677669
        %v2680 = vmul.f32 %v2624, 0.17677669
        %v2681 = vmul.f32 %v2627, 0.17677669
        %v2682 = vmul.f32 %v2632, 0.17677669
        %v2683 = vmul.f32 %v2635, 0.17677669
        %v2684 = vmul.f32 %v2640, 0.17677669
        %v2685 = vmul.f32 %v2643, 0.17677669
        %v2686 = vmul.f32 %v2648, 0.17677669
        %v2687 = vmul.f32 %v2651, 0.17677669
        %v2688 = vmul.f32 %v2656, 0.17677669
        %v2689 = vmul.f32 %v2659, 0.17677669
        %v2690 = vmul.f32 %v2664, 0.17677669
        %v2691 = vmul.f32 %v2667, 0.17677669
        %v2692 = vmul.f32 %v2672, 0.17677669
        %v2693 = vmul.f32 %v2675, 0.17677669
        %v2694 = vadd.f32 %v2678, %v916
        %v2695 = vadd.f32 %v2679, %v916
        %v2696 = vadd.f32 %v2680, %v916
        %v2697 = vadd.f32 %v2681, %v916
        %v2698 = vadd.f32 %v2682, %v916
        %v2699 = vadd.f32 %v2683, %v916
        %v2700 = vadd.f32 %v2684, %v916
        %v2701 = vadd.f32 %v2685, %v916
        %v2702 = vadd.f32 %v2686, %v916
        %v2703 = vadd.f32 %v2687, %v916
        %v2704 = vadd.f32 %v2688, %v916
        %v2705 = vadd.f32 %v2689, %v916
        %v2706 = vadd.f32 %v2690, %v916
        %v2707 = vadd.f32 %v2691, %v916
        %v2708 = vadd.f32 %v2692, %v916
        %v2709 = vadd.f32 %v2693, %v916
        %2710 = vmax.xlane.f32.xlu0 %v2694
        %v2711 = vpop.xlane.xlu0 %2710
        %2712 = vmax.xlane.f32.xlu0 %v2695
        %v2713 = vpop.xlane.xlu0 %2712
        %2714 = vmax.xlane.f32.xlu0 %v2696
        %v2715 = vpop.xlane.xlu0 %2714
        %2716 = vmax.xlane.f32.xlu0 %v2697
        %v2717 = vpop.xlane.xlu0 %2716
        %2718 = vmax.xlane.f32.xlu0 %v2698
        %v2719 = vpop.xlane.xlu0 %2718
        %2720 = vmax.xlane.f32.xlu0 %v2699
        %v2721 = vpop.xlane.xlu0 %2720
        %2722 = vmax.xlane.f32.xlu0 %v2700
        %v2723 = vpop.xlane.xlu0 %2722
        %2724 = vmax.xlane.f32.xlu0 %v2701
        %v2725 = vpop.xlane.xlu0 %2724
        %2726 = vmax.xlane.f32.xlu0 %v2702
        %v2727 = vpop.xlane.xlu0 %2726
        %2728 = vmax.xlane.f32.xlu0 %v2703
        %v2729 = vpop.xlane.xlu0 %2728
        %2730 = vmax.xlane.f32.xlu0 %v2704
        %v2731 = vpop.xlane.xlu0 %2730
        %2732 = vmax.xlane.f32.xlu0 %v2705
        %v2733 = vpop.xlane.xlu0 %2732
        %2734 = vmax.xlane.f32.xlu0 %v2706
        %v2735 = vpop.xlane.xlu0 %2734
        %2736 = vmax.xlane.f32.xlu0 %v2707
        %v2737 = vpop.xlane.xlu0 %2736
        %2738 = vmax.xlane.f32.xlu0 %v2708
        %v2739 = vpop.xlane.xlu0 %2738
        %2740 = vmax.xlane.f32.xlu0 %v2709
        %v2741 = vpop.xlane.xlu0 %2740
        %v2742 = vsub.f32 %v2694, %v2711
        %v2743 = vsub.f32 %v2695, %v2713
        %v2744 = vsub.f32 %v2696, %v2715
        %v2745 = vsub.f32 %v2697, %v2717
        %v2746 = vsub.f32 %v2698, %v2719
        %v2747 = vsub.f32 %v2699, %v2721
        %v2748 = vsub.f32 %v2700, %v2723
        %v2749 = vsub.f32 %v2701, %v2725
        %v2750 = vsub.f32 %v2702, %v2727
        %v2751 = vsub.f32 %v2703, %v2729
        %v2752 = vsub.f32 %v2704, %v2731
        %v2753 = vsub.f32 %v2705, %v2733
        %v2754 = vsub.f32 %v2706, %v2735
        %v2755 = vsub.f32 %v2707, %v2737
        %v2756 = vsub.f32 %v2708, %v2739
        %v2757 = vsub.f32 %v2709, %v2741
        %v2758 = vmul.f32 %v2742, 1.442695
        %v2759 = vpow.pop %v2758
        %v2760 = vmul.f32 %v2743, 1.442695
        %v2761 = vpow.pop %v2760
        %v2762 = vmul.f32 %v2744, 1.442695
        %v2763 = vpow.pop %v2762
        %v2764 = vmul.f32 %v2745, 1.442695
        %v2765 = vpow.pop %v2764
        %v2766 = vmul.f32 %v2746, 1.442695
        %v2767 = vpow.pop %v2766
        %v2768 = vmul.f32 %v2747, 1.442695
        %v2769 = vpow.pop %v2768
        %v2770 = vmul.f32 %v2748, 1.442695
        %v2771 = vpow.pop %v2770
        %v2772 = vmul.f32 %v2749, 1.442695
        %v2773 = vpow.pop %v2772
        %v2774 = vmul.f32 %v2750, 1.442695
        %v2775 = vpow.pop %v2774
        %v2776 = vmul.f32 %v2751, 1.442695
        %v2777 = vpow.pop %v2776
        %v2778 = vmul.f32 %v2752, 1.442695
        %v2779 = vpow.pop %v2778
        %v2780 = vmul.f32 %v2753, 1.442695
        %v2781 = vpow.pop %v2780
        %v2782 = vmul.f32 %v2754, 1.442695
        %v2783 = vpow.pop %v2782
        %v2784 = vmul.f32 %v2755, 1.442695
        %v2785 = vpow.pop %v2784
        %v2786 = vmul.f32 %v2756, 1.442695
        %v2787 = vpow.pop %v2786
        %v2788 = vmul.f32 %v2757, 1.442695
        %v2789 = vpow.pop %v2788
        %2790 = vadd.xlane.f32.xlu0 %v2759
        %v2791 = vpop.xlane.xlu0 %2790
        %2792 = vadd.xlane.f32.xlu0 %v2761
        %v2793 = vpop.xlane.xlu0 %2792
        %2794 = vadd.xlane.f32.xlu0 %v2763
        %v2795 = vpop.xlane.xlu0 %2794
        %2796 = vadd.xlane.f32.xlu0 %v2765
        %v2797 = vpop.xlane.xlu0 %2796
        %2798 = vadd.xlane.f32.xlu0 %v2767
        %v2799 = vpop.xlane.xlu0 %2798
        %2800 = vadd.xlane.f32.xlu0 %v2769
        %v2801 = vpop.xlane.xlu0 %2800
        %2802 = vadd.xlane.f32.xlu0 %v2771
        %v2803 = vpop.xlane.xlu0 %2802
        %2804 = vadd.xlane.f32.xlu0 %v2773
        %v2805 = vpop.xlane.xlu0 %2804
        %2806 = vadd.xlane.f32.xlu0 %v2775
        %v2807 = vpop.xlane.xlu0 %2806
        %2808 = vadd.xlane.f32.xlu0 %v2777
        %v2809 = vpop.xlane.xlu0 %2808
        %2810 = vadd.xlane.f32.xlu0 %v2779
        %v2811 = vpop.xlane.xlu0 %2810
        %2812 = vadd.xlane.f32.xlu0 %v2781
        %v2813 = vpop.xlane.xlu0 %2812
        %2814 = vadd.xlane.f32.xlu0 %v2783
        %v2815 = vpop.xlane.xlu0 %2814
        %2816 = vadd.xlane.f32.xlu0 %v2785
        %v2817 = vpop.xlane.xlu0 %2816
        %2818 = vadd.xlane.f32.xlu0 %v2787
        %v2819 = vpop.xlane.xlu0 %2818
        %2820 = vadd.xlane.f32.xlu0 %v2789
        %v2821 = vpop.xlane.xlu0 %2820
        %v2822 = vpack.c.bf16 %v2761, %v2759
        %v2823 = vpack.c.bf16 %v2765, %v2763
        %v2824 = vpack.c.bf16 %v2769, %v2767
        %v2825 = vpack.c.bf16 %v2773, %v2771
        %v2826 = vpack.c.bf16 %v2777, %v2775
        %v2827 = vpack.c.bf16 %v2781, %v2779
        %v2828 = vpack.c.bf16 %v2785, %v2783
        %v2829 = vpack.c.bf16 %v2789, %v2787
        %2830 = vrot.lane.b32.xlu0 %v1085, 32
        %v2831 = vpop.permute.xlu0 %2830
        %2832 = vrot.lane.b32.xlu0 %v1086, 32
        %v2833 = vpop.permute.xlu0 %2832
        %2834 = vrot.lane.b32.xlu0 %v1087, 32
        %v2835 = vpop.permute.xlu0 %2834
        %2836 = vrot.lane.b32.xlu0 %v1088, 32
        %v2837 = vpop.permute.xlu0 %2836
        %2838 = vrot.lane.b32.xlu0 %v1089, 32
        %v2839 = vpop.permute.xlu0 %2838
        %2840 = vrot.lane.b32.xlu0 %v1090, 32
        %v2841 = vpop.permute.xlu0 %2840
        %2842 = vrot.lane.b32.xlu0 %v1091, 32
        %v2843 = vpop.permute.xlu0 %2842
        %2844 = vrot.lane.b32.xlu0 %v1092, 32
        %v2845 = vpop.permute.xlu0 %2844
        %2854 = vmatprep.subr.bf16.mxu0 0
        %2855 = vmatpush1.bf16.msra.mxu0 %v2831
        %2856 = vmatprep.subr.bf16.mxu0 0
        %2857 = vmatpush1.bf16.msra.mxu0 %v2833
        %2858 = vmatprep.subr.bf16.mxu0 0
        %2859 = vmatpush1.bf16.msra.mxu0 %v2835
        %2860 = vmatprep.subr.bf16.mxu0 0
        %2861 = vmatpush1.bf16.msra.mxu0 %v2837
        %2862 = vmatprep.subr.bf16.mxu0 0
        %2863 = vmatpush1.bf16.msra.mxu0 %v2839
        %2864 = vmatprep.subr.bf16.mxu0 0
        %2865 = vmatpush1.bf16.msra.mxu0 %v2841
        %2866 = vmatprep.subr.bf16.mxu0 0
        %2867 = vmatpush1.bf16.msra.mxu0 %v2843
        %2868 = vmatprep.subr.bf16.mxu0 0
        %2869 = vmatpush1.bf16.msra.mxu0 %v2845
        %2870 = vmatprep.subr.bf16.mxu0 0
        %2871 = vmatpush1.bf16.msra.mxu0 0
        %2872 = vmatprep.subr.bf16.mxu0 0
        %2873 = vmatpush1.bf16.msra.mxu0 0
        %2874 = vmatprep.subr.bf16.mxu0 0
        %2875 = vmatpush1.bf16.msra.mxu0 0
        %2876 = vmatprep.subr.bf16.mxu0 0
        %2877 = vmatpush1.bf16.msra.mxu0 0
        %2878 = vmatprep.subr.bf16.mxu0 0
        %2879 = vmatpush1.bf16.msra.mxu0 0
        %2880 = vmatprep.subr.bf16.mxu0 0
        %2881 = vmatpush1.bf16.msra.mxu0 0
        %2882 = vmatprep.subr.bf16.mxu0 0
        %2883 = vmatpush1.bf16.msra.mxu0 0
        %2884 = vmatprep.subr.bf16.mxu0 0
        %2885 = vmatpush1.bf16.msra.mxu0 0
        %2886 = vmatprep.mubr.bf16.mxu0 0
        %2887 = vmatmul.mubr.bf16.gmra.mrb[0].mxu0 %v2822
        %v2888 = vpop.f32.mrb[0].mxu0
        %v2889 = vadd.f32 0.0, %v2888
        %v2890 = vpop.f32.mrb[0].mxu0
        %v2891 = vpop.f32.mrb[0].mxu0
        %v2892 = vadd.f32 0.0, %v2891
        %v2893 = vpop.f32.mrb[0].mxu0
        %2894 = vmatprep.mubr.bf16.mxu0 0
        %2895 = vmatmul.mubr.bf16.gmra.mrb[0].mxu0 %v2823
        %v2896 = vpop.f32.mrb[0].mxu0
        %v2897 = vadd.f32 0.0, %v2896
        %v2898 = vpop.f32.mrb[0].mxu0
        %v2899 = vpop.f32.mrb[0].mxu0
        %v2900 = vadd.f32 0.0, %v2899
        %v2901 = vpop.f32.mrb[0].mxu0
        %2902 = vmatprep.mubr.bf16.mxu0 0
        %2903 = vmatmul.mubr.bf16.gmra.mrb[0].mxu0 %v2824
        %v2904 = vpop.f32.mrb[0].mxu0
        %v2905 = vadd.f32 0.0, %v2904
        %v2906 = vpop.f32.mrb[0].mxu0
        %v2907 = vpop.f32.mrb[0].mxu0
        %v2908 = vadd.f32 0.0, %v2907
        %v2909 = vpop.f32.mrb[0].mxu0
        %2910 = vmatprep.mubr.bf16.mxu0 0
        %2911 = vmatmul.mubr.bf16.gmra.mrb[0].mxu0 %v2825
        %v2912 = vpop.f32.mrb[0].mxu0
        %v2913 = vadd.f32 0.0, %v2912
        %v2914 = vpop.f32.mrb[0].mxu0
        %v2915 = vpop.f32.mrb[0].mxu0
        %v2916 = vadd.f32 0.0, %v2915
        %v2917 = vpop.f32.mrb[0].mxu0
        %2918 = vmatprep.mubr.bf16.mxu0 0
        %2919 = vmatmul.mubr.bf16.gmra.mrb[0].mxu0 %v2826
        %v2920 = vpop.f32.mrb[0].mxu0
        %v2921 = vadd.f32 0.0, %v2920
        %v2922 = vpop.f32.mrb[0].mxu0
        %v2923 = vpop.f32.mrb[0].mxu0
        %v2924 = vadd.f32 0.0, %v2923
        %v2925 = vpop.f32.mrb[0].mxu0
        %2926 = vmatprep.mubr.bf16.mxu0 0
        %2927 = vmatmul.mubr.bf16.gmra.mrb[0].mxu0 %v2827
        %v2928 = vpop.f32.mrb[0].mxu0
        %v2929 = vadd.f32 0.0, %v2928
        %v2930 = vpop.f32.mrb[0].mxu0
        %v2931 = vpop.f32.mrb[0].mxu0
        %v2932 = vadd.f32 0.0, %v2931
        %v2933 = vpop.f32.mrb[0].mxu0
        %2934 = vmatprep.mubr.bf16.mxu0 0
        %2935 = vmatmul.mubr.bf16.gmra.mrb[0].mxu0 %v2828
        %v2936 = vpop.f32.mrb[0].mxu0
        %v2937 = vadd.f32 0.0, %v2936
        %v2938 = vpop.f32.mrb[0].mxu0
        %v2939 = vpop.f32.mrb[0].mxu0
        %v2940 = vadd.f32 0.0, %v2939
        %v2941 = vpop.f32.mrb[0].mxu0
        %2942 = vmatprep.mubr.bf16.mxu0 0
        %2943 = vmatmul.mubr.bf16.gmra.mrb[0].mxu0 %v2829
        %v2944 = vpop.f32.mrb[0].mxu0
        %v2945 = vadd.f32 0.0, %v2944
        %v2946 = vpop.f32.mrb[0].mxu0
        %v2947 = vpop.f32.mrb[0].mxu0
        %v2948 = vadd.f32 0.0, %v2947
        %v2949 = vpop.f32.mrb[0].mxu0
        %2950 = vdwg.mxu0
        %v2951 = vrcp.pop %v2791
        %v2952 = vrcp.pop %v2793
        %v2953 = vrcp.pop %v2795
        %v2954 = vrcp.pop %v2797
        %v2955 = vrcp.pop %v2799
        %v2956 = vrcp.pop %v2801
        %v2957 = vrcp.pop %v2803
        %v2958 = vrcp.pop %v2805
        %v2959 = vrcp.pop %v2807
        %v2960 = vrcp.pop %v2809
        %v2961 = vrcp.pop %v2811
        %v2962 = vrcp.pop %v2813
        %v2963 = vrcp.pop %v2815
        %v2964 = vrcp.pop %v2817
        %v2965 = vrcp.pop %v2819
        %v2966 = vrcp.pop %v2821
        %v2967 = vmul.f32 %v2889, %v2951
        %v2968 = vmul.f32 %v2892, %v2952
        %v2969 = vmul.f32 %v2897, %v2953
        %v2970 = vmul.f32 %v2900, %v2954
        %v2971 = vmul.f32 %v2905, %v2955
        %v2972 = vmul.f32 %v2908, %v2956
        %v2973 = vmul.f32 %v2913, %v2957
        %v2974 = vmul.f32 %v2916, %v2958
        %v2975 = vmul.f32 %v2921, %v2959
        %v2976 = vmul.f32 %v2924, %v2960
        %v2977 = vmul.f32 %v2929, %v2961
        %v2978 = vmul.f32 %v2932, %v2962
        %v2979 = vmul.f32 %v2937, %v2963
        %v2980 = vmul.f32 %v2940, %v2964
        %v2981 = vmul.f32 %v2945, %v2965
        %v2982 = vmul.f32 %v2948, %v2966
        %v2983 = vpack.c.bf16 %v2968, %v2967
        %v2984 = vpack.c.bf16 %v2970, %v2969
        %v2985 = vpack.c.bf16 %v2972, %v2971
        %v2986 = vpack.c.bf16 %v2974, %v2973
        %v2987 = vpack.c.bf16 %v2976, %v2975
        %v2988 = vpack.c.bf16 %v2978, %v2977
        %v2989 = vpack.c.bf16 %v2980, %v2979
        %v2990 = vpack.c.bf16 %v2982, %v2981
        %v2999 = vunpack.c.l.b16 %v2983
        %v3000 = vunpack.c.h.b16 %v2983
        %v3001 = vunpack.c.l.b16 %v2984
        %v3002 = vunpack.c.h.b16 %v2984
        %v3003 = vunpack.c.l.b16 %v2985
        %v3004 = vunpack.c.h.b16 %v2985
        %v3005 = vunpack.c.l.b16 %v2986
        %v3006 = vunpack.c.h.b16 %v2986
        %v3007 = vunpack.c.l.b16 %v2987
        %v3008 = vunpack.c.h.b16 %v2987
        %v3009 = vunpack.c.l.b16 %v2988
        %v3010 = vunpack.c.h.b16 %v2988
        %v3011 = vunpack.c.l.b16 %v2989
        %v3012 = vunpack.c.h.b16 %v2989
        %v3013 = vunpack.c.l.b16 %v2990
        %v3014 = vunpack.c.h.b16 %v2990
        %v3015 = vpack.c.b16 %v2999, %v2999
        %v3016 = vpack.c.b16 %v3000, %v3000
        %v3017 = vpack.c.b16 %v3001, %v3001
        %v3018 = vpack.c.b16 %v3002, %v3002
        %v3019 = vpack.c.b16 %v3003, %v3003
        %v3020 = vpack.c.b16 %v3004, %v3004
        %v3021 = vpack.c.b16 %v3005, %v3005
        %v3022 = vpack.c.b16 %v3006, %v3006
        %v3023 = vpack.c.b16 %v3007, %v3007
        %v3024 = vpack.c.b16 %v3008, %v3008
        %v3025 = vpack.c.b16 %v3009, %v3009
        %v3026 = vpack.c.b16 %v3010, %v3010
        %v3027 = vpack.c.b16 %v3011, %v3011
        %v3028 = vpack.c.b16 %v3012, %v3012
        %v3029 = vpack.c.b16 %v3013, %v3013
        %v3030 = vpack.c.b16 %v3014, %v3014
        %3031 = vrot.lane.b32.xlu0 %v3015, 96
        %v3032 = vpop.permute.xlu0 %3031
        %3033 = vrot.lane.b32.xlu0 %v3016, 96
        %v3034 = vpop.permute.xlu0 %3033
        %3035 = vrot.lane.b32.xlu0 %v3017, 96
        %v3036 = vpop.permute.xlu0 %3035
        %3037 = vrot.lane.b32.xlu0 %v3018, 96
        %v3038 = vpop.permute.xlu0 %3037
        %3039 = vrot.lane.b32.xlu0 %v3019, 96
        %v3040 = vpop.permute.xlu0 %3039
        %3041 = vrot.lane.b32.xlu0 %v3020, 96
        %v3042 = vpop.permute.xlu0 %3041
        %3043 = vrot.lane.b32.xlu0 %v3021, 96
        %v3044 = vpop.permute.xlu0 %3043
        %3045 = vrot.lane.b32.xlu0 %v3022, 96
        %v3046 = vpop.permute.xlu0 %3045
        %3047 = vrot.lane.b32.xlu0 %v3023, 96
        %v3048 = vpop.permute.xlu0 %3047
        %3049 = vrot.lane.b32.xlu0 %v3024, 96
        %v3050 = vpop.permute.xlu0 %3049
        %3051 = vrot.lane.b32.xlu0 %v3025, 96
        %v3052 = vpop.permute.xlu0 %3051
        %3053 = vrot.lane.b32.xlu0 %v3026, 96
        %v3054 = vpop.permute.xlu0 %3053
        %3055 = vrot.lane.b32.xlu0 %v3027, 96
        %v3056 = vpop.permute.xlu0 %3055
        %3057 = vrot.lane.b32.xlu0 %v3028, 96
        %v3058 = vpop.permute.xlu0 %3057
        %3059 = vrot.lane.b32.xlu0 %v3029, 96
        %v3060 = vpop.permute.xlu0 %3059
        %3061 = vrot.lane.b32.xlu0 %v3030, 96
        %v3062 = vpop.permute.xlu0 %3061
        %vm3079 = vcmask 1044224
        %3080 = vst.msk [vmem:[%s615] sm:$0xf] %vm3079, %v3032
        %3081 = vst.msk [vmem:[%s615 + $0x4] sm:$0xf] %vm3079, %v3034
        %3082 = vst.msk [vmem:[%s615 + $0x8] sm:$0xf] %vm3079, %v3036
        %3083 = vst.msk [vmem:[%s615 + $0xc] sm:$0xf] %vm3079, %v3038
        %3084 = vst.msk [vmem:[%s615 + $0x10] sm:$0xf] %vm3079, %v3040
        %3085 = vst.msk [vmem:[%s615 + $0x14] sm:$0xf] %vm3079, %v3042
        %3086 = vst.msk [vmem:[%s615 + $0x18] sm:$0xf] %vm3079, %v3044
        %3087 = vst.msk [vmem:[%s615 + $0x1c] sm:$0xf] %vm3079, %v3046
        %3088 = vst.msk [vmem:[%s615 + $0x20] sm:$0xf] %vm3079, %v3048
        %3089 = vst.msk [vmem:[%s615 + $0x24] sm:$0xf] %vm3079, %v3050
        %3090 = vst.msk [vmem:[%s615 + $0x28] sm:$0xf] %vm3079, %v3052
        %3091 = vst.msk [vmem:[%s615 + $0x2c] sm:$0xf] %vm3079, %v3054
        %3092 = vst.msk [vmem:[%s615 + $0x30] sm:$0xf] %vm3079, %v3056
        %3093 = vst.msk [vmem:[%s615 + $0x34] sm:$0xf] %vm3079, %v3058
        %3094 = vst.msk [vmem:[%s615 + $0x38] sm:$0xf] %vm3079, %v3060
        %3095 = vst.msk [vmem:[%s615 + $0x3c] sm:$0xf] %vm3079, %v3062
        %s3096 = sadd.s32 %s20, %s22
        %s3097 = smul.u32 16, %s3096
        %p3098 = scmp.lt.s32.totalorder %s3097, 31
        %s3099 = scalar_select %p3098, %s3097, 31
        %p3100 = scmp.lt.s32.totalorder %s21, 0
        %s3101 = scalar_select %p3100, %s21, 0
        %s3102 = sadd.s32 %s3101, %s3099
        %s3103 = smul.addr %s3102, 4
        %s3104 = scalar_lea.vmem %s4, %s3103
        // Predicated region
        $region160: #{transformer_block.6} parent=146 // pred_check
          %p3105 = pneg %p172
        $region161: #{transformer_block.6} parent=146 // pred_check_branch
          %3107 = sbr.rel (%p3105) target = $region163
        $region162: #{transformer_block.6} parent=146 // pred_region
          %s3108 = sadd.s32 %s20, %s22
          %s3109 = smul.u32 16, %s3108
        $region163: #{transformer_block.6} parent=146 // pred_fallthru
          _
      $region147: #{transformer_block.6} parent=5 // pred_fallthru
        _
      %p3110 = scmp.le.s32.totalorder 2, %s10
      // Predicated region
      $region164: #{transformer_block.6} parent=5 // pred_check
        %p3111 = pneg %p3110
      $region165: #{transformer_block.6} parent=5 // pred_check_branch
        %3113 = sbr.rel (%p3111) target = $region167
      $region166: #{transformer_block.6} parent=5 // pred_region
        %s3114 = ssub.s32 %s10, 2
        // Predicated region
        $region168: #{transformer_block.6} parent=166 // pred_check
          %p3115 = pneg %p178
        $region169: #{transformer_block.6} parent=166 // pred_check_branch
          %3117 = sbr.rel (%p3115) target = $region171
        $region170: #{transformer_block.6} parent=166 // pred_region
          %s3118 = sadd.s32 %s23, %s25
          %s3119 = smul.u32 16, %s3118
          %p3120 = scmp.lt.s32.totalorder %s3119, 31
          %s3121 = scalar_select %p3120, %s3119, 31
          %p3122 = scmp.lt.s32.totalorder %s24, 0
          %s3123 = scalar_select %p3122, %s24, 0
          %s3124 = sadd.s32 %s3123, %s3121
          %s3125 = smul.addr %s3124, 4
          %s3126 = scalar_lea.vmem %s4, %s3125
        $region171: #{transformer_block.6} parent=166 // pred_fallthru
          _
      $region167: #{transformer_block.6} parent=5 // pred_fallthru
        _
    $region6: #{transformer_block.6} parent=1 // loop_footer
      %s14 = sadd.s32 1, %s10
    $region7: #{transformer_block.6} parent=1 // loop_footer_branch
      %9 = sbr.rel target = $region3
    $region8: #{transformer_block.6} parent=1 // loop_exit
      _

// kernel: transformer_block.9
$region0: #{transformer_block.9}
  #allocation0 [shape = 'u32[]', space=smem, size = 0x4, offset = 0x4, fixed_abs, tag = 'smem constant byte address 0x4 - core index']
  #allocation1 [shape = 'u32[144,128]{1,0:T(1,128)}', space=vmem, size = 0x12000, scoped, tag = 'internal scratch']
  %s0 = inlined_call_operand.vmem [shape: bf16[256,256], index: 0, kind: input, shape index: {}]
  %s1 = inlined_call_operand.vmem [shape: bf16[256,128], index: 1, kind: input, shape index: {}]
  %s2 = inlined_call_operand.vmem [shape: bf16[1,128], index: 2, kind: input, shape index: {}]
  %s3 = inlined_call_operand.vmem [shape: bf16[256,128], index: 3, kind: input, shape index: {}]
  %s4 = inlined_call_operand.vmem [shape: bf16[1,128], index: 4, kind: input, shape index: {}]
  %s5 = inlined_call_operand.vmem [shape: bf16[1,128], index: 5, kind: input, shape index: {}]
  %s6 = inlined_call_operand.hbm [shape: bf16[256,128], index: 6, kind: output, shape index: {}]
  %s7 = sld [smem:[#allocation0]]
  $region34: #{transformer_block.9} parent=0
    _
  %s9 = ssub.s32 1, %s7
  %s10 = scalar_select 0, %s9, %s7
  $region1: #{transformer_block.9} parent=0
    #allocation2 [shape = 'u8[65536]{0}', space=vmem, size = 0x10000, scoped, tag = 'output window, operand 0, single buffered']
    #allocation3 [shape = 's32[1]{0}', space=sflag, size = 0x4, scoped, tag = 'scoped memory for transformer_block.9']
    %11 = vsyncpa [#allocation3], 0
    // Predicated region
    $region2: #{transformer_block.9} parent=1 // pred_check
      _
    $region3: #{transformer_block.9} parent=1 // pred_check_branch
      %13 = sbr.rel (0) target = $region5
    $region4: #{transformer_block.9} parent=1 // pred_region
      _
    $region5: #{transformer_block.9} parent=1 // pred_fallthru
      _
    // Predicated region
    $region6: #{transformer_block.9} parent=1 // pred_check
      _
    $region7: #{transformer_block.9} parent=1 // pred_check_branch
      %15 = sbr.rel (0) target = $region9
    $region8: #{transformer_block.9} parent=1 // pred_region
      _
    $region9: #{transformer_block.9} parent=1 // pred_fallthru
      _
    // Predicated region
    $region10: #{transformer_block.9} parent=1 // pred_check
      _
    $region11: #{transformer_block.9} parent=1 // pred_check_branch
      %17 = sbr.rel (0) target = $region13
    $region12: #{transformer_block.9} parent=1 // pred_region
      _
    $region13: #{transformer_block.9} parent=1 // pred_fallthru
      _
    // Predicated region
    $region14: #{transformer_block.9} parent=1 // pred_check
      _
    $region15: #{transformer_block.9} parent=1 // pred_check_branch
      %19 = sbr.rel (0) target = $region17
    $region16: #{transformer_block.9} parent=1 // pred_region
      _
    $region17: #{transformer_block.9} parent=1 // pred_fallthru
      _
    // Predicated region
    $region18: #{transformer_block.9} parent=1 // pred_check
      _
    $region19: #{transformer_block.9} parent=1 // pred_check_branch
      %21 = sbr.rel (0) target = $region21
    $region20: #{transformer_block.9} parent=1 // pred_region
      _
    $region21: #{transformer_block.9} parent=1 // pred_fallthru
      _
    // Predicated region
    $region22: #{transformer_block.9} parent=1 // pred_check
      _
    $region23: #{transformer_block.9} parent=1 // pred_check_branch
      %23 = sbr.rel (0) target = $region25
    $region24: #{transformer_block.9} parent=1 // pred_region
      _
    $region25: #{transformer_block.9} parent=1 // pred_fallthru
      _
    %v25 = vld [vmem:[%s0] sm:$0xff]
    %v26 = vld [vmem:[%s0 + $0x8] sm:$0xff]
    %v27 = vld [vmem:[%s0 + $0x10] sm:$0xff]
    %v28 = vld [vmem:[%s0 + $0x18] sm:$0xff]
    %v29 = vld [vmem:[%s0 + $0x20] sm:$0xff]
    %v30 = vld [vmem:[%s0 + $0x28] sm:$0xff]
    %v31 = vld [vmem:[%s0 + $0x30] sm:$0xff]
    %v32 = vld [vmem:[%s0 + $0x38] sm:$0xff]
    %v33 = vld [vmem:[%s0 + $0x40] sm:$0xff]
    %v34 = vld [vmem:[%s0 + $0x48] sm:$0xff]
    %v35 = vld [vmem:[%s0 + $0x50] sm:$0xff]
    %v36 = vld [vmem:[%s0 + $0x58] sm:$0xff]
    %v37 = vld [vmem:[%s0 + $0x60] sm:$0xff]
    %v38 = vld [vmem:[%s0 + $0x68] sm:$0xff]
    %v39 = vld [vmem:[%s0 + $0x70] sm:$0xff]
    %v40 = vld [vmem:[%s0 + $0x78] sm:$0xff]
    %v41 = vld [vmem:[%s0 + $0x80] sm:$0xff]
    %v42 = vld [vmem:[%s0 + $0x88] sm:$0xff]
    %v43 = vld [vmem:[%s0 + $0x90] sm:$0xff]
    %v44 = vld [vmem:[%s0 + $0x98] sm:$0xff]
    %v45 = vld [vmem:[%s0 + $0xa0] sm:$0xff]
    %v46 = vld [vmem:[%s0 + $0xa8] sm:$0xff]
    %v47 = vld [vmem:[%s0 + $0xb0] sm:$0xff]
    %v48 = vld [vmem:[%s0 + $0xb8] sm:$0xff]
    %v49 = vld [vmem:[%s0 + $0xc0] sm:$0xff]
    %v50 = vld [vmem:[%s0 + $0xc8] sm:$0xff]
    %v51 = vld [vmem:[%s0 + $0xd0] sm:$0xff]
    %v52 = vld [vmem:[%s0 + $0xd8] sm:$0xff]
    %v53 = vld [vmem:[%s0 + $0xe0] sm:$0xff]
    %v54 = vld [vmem:[%s0 + $0xe8] sm:$0xff]
    %v55 = vld [vmem:[%s0 + $0xf0] sm:$0xff]
    %v56 = vld [vmem:[%s0 + $0xf8] sm:$0xff]
    %v57 = vld [vmem:[%s1] sm:$0xf]
    %v58 = vld [vmem:[%s1 + $0x4] sm:$0xf]
    %v59 = vld [vmem:[%s1 + $0x8] sm:$0xf]
    %v60 = vld [vmem:[%s1 + $0xc] sm:$0xf]
    %v61 = vld [vmem:[%s1 + $0x10] sm:$0xf]
    %v62 = vld [vmem:[%s1 + $0x14] sm:$0xf]
    %v63 = vld [vmem:[%s1 + $0x18] sm:$0xf]
    %v64 = vld [vmem:[%s1 + $0x1c] sm:$0xf]
    %v65 = vld [vmem:[%s1 + $0x20] sm:$0xf]
    %v66 = vld [vmem:[%s1 + $0x24] sm:$0xf]
    %v67 = vld [vmem:[%s1 + $0x28] sm:$0xf]
    %v68 = vld [vmem:[%s1 + $0x2c] sm:$0xf]
    %v69 = vld [vmem:[%s1 + $0x30] sm:$0xf]
    %v70 = vld [vmem:[%s1 + $0x34] sm:$0xf]
    %v71 = vld [vmem:[%s1 + $0x38] sm:$0xf]
    %v72 = vld [vmem:[%s1 + $0x3c] sm:$0xf]
    %v73 = vld [vmem:[%s1 + $0x40] sm:$0xf]
    %v74 = vld [vmem:[%s1 + $0x44] sm:$0xf]
    %v75 = vld [vmem:[%s1 + $0x48] sm:$0xf]
    %v76 = vld [vmem:[%s1 + $0x4c] sm:$0xf]
    %v77 = vld [vmem:[%s1 + $0x50] sm:$0xf]
    %v78 = vld [vmem:[%s1 + $0x54] sm:$0xf]
    %v79 = vld [vmem:[%s1 + $0x58] sm:$0xf]
    %v80 = vld [vmem:[%s1 + $0x5c] sm:$0xf]
    %v81 = vld [vmem:[%s1 + $0x60] sm:$0xf]
    %v82 = vld [vmem:[%s1 + $0x64] sm:$0xf]
    %v83 = vld [vmem:[%s1 + $0x68] sm:$0xf]
    %v84 = vld [vmem:[%s1 + $0x6c] sm:$0xf]
    %v85 = vld [vmem:[%s1 + $0x70] sm:$0xf]
    %v86 = vld [vmem:[%s1 + $0x74] sm:$0xf]
    %v87 = vld [vmem:[%s1 + $0x78] sm:$0xf]
    %v88 = vld [vmem:[%s1 + $0x7c] sm:$0xf]
    %v89 = vld [vmem:[%s2] sm:$0x1]
    %v90 = vunpack.c.l.bf16 %v89
    %v91 = vlaneseq
    %v92 = vshrl.u32 %v91, 7
    %v93 = vsub.s32 0, %v92
    %v94 = vrot.slane %v90, %v93
    %v127 = vunpack.c.l.b16 %v25
    %v128 = vunpack.c.h.b16 %v25
    %v129 = vunpack.c.l.b16 %v26
    %v130 = vunpack.c.h.b16 %v26
    %v131 = vunpack.c.l.b16 %v27
    %v132 = vunpack.c.h.b16 %v27
    %v133 = vunpack.c.l.b16 %v28
    %v134 = vunpack.c.h.b16 %v28
    %v135 = vunpack.c.l.b16 %v29
    %v136 = vunpack.c.h.b16 %v29
    %v137 = vunpack.c.l.b16 %v30
    %v138 = vunpack.c.h.b16 %v30
    %v139 = vunpack.c.l.b16 %v31
    %v140 = vunpack.c.h.b16 %v31
    %v141 = vunpack.c.l.b16 %v32
    %v142 = vunpack.c.h.b16 %v32
    %v143 = vunpack.c.l.b16 %v33
    %v144 = vunpack.c.h.b16 %v33
    %v145 = vunpack.c.l.b16 %v34
    %v146 = vunpack.c.h.b16 %v34
    %v147 = vunpack.c.l.b16 %v35
    %v148 = vunpack.c.h.b16 %v35
    %v149 = vunpack.c.l.b16 %v36
    %v150 = vunpack.c.h.b16 %v36
    %v151 = vunpack.c.l.b16 %v37
    %v152 = vunpack.c.h.b16 %v37
    %v153 = vunpack.c.l.b16 %v38
    %v154 = vunpack.c.h.b16 %v38
    %v155 = vunpack.c.l.b16 %v39
    %v156 = vunpack.c.h.b16 %v39
    %v157 = vunpack.c.l.b16 %v40
    %v158 = vunpack.c.h.b16 %v40
    %v159 = vunpack.c.l.b16 %v41
    %v160 = vunpack.c.h.b16 %v41
    %v161 = vunpack.c.l.b16 %v42
    %v162 = vunpack.c.h.b16 %v42
    %v163 = vunpack.c.l.b16 %v43
    %v164 = vunpack.c.h.b16 %v43
    %v165 = vunpack.c.l.b16 %v44
    %v166 = vunpack.c.h.b16 %v44
    %v167 = vunpack.c.l.b16 %v45
    %v168 = vunpack.c.h.b16 %v45
    %v169 = vunpack.c.l.b16 %v46
    %v170 = vunpack.c.h.b16 %v46
    %v171 = vunpack.c.l.b16 %v47
    %v172 = vunpack.c.h.b16 %v47
    %v173 = vunpack.c.l.b16 %v48
    %v174 = vunpack.c.h.b16 %v48
    %v175 = vunpack.c.l.b16 %v49
    %v176 = vunpack.c.h.b16 %v49
    %v177 = vunpack.c.l.b16 %v50
    %v178 = vunpack.c.h.b16 %v50
    %v179 = vunpack.c.l.b16 %v51
    %v180 = vunpack.c.h.b16 %v51
    %v181 = vunpack.c.l.b16 %v52
    %v182 = vunpack.c.h.b16 %v52
    %v183 = vunpack.c.l.b16 %v53
    %v184 = vunpack.c.h.b16 %v53
    %v185 = vunpack.c.l.b16 %v54
    %v186 = vunpack.c.h.b16 %v54
    %v187 = vunpack.c.l.b16 %v55
    %v188 = vunpack.c.h.b16 %v55
    %v189 = vunpack.c.l.b16 %v56
    %v190 = vunpack.c.h.b16 %v56
    %v191 = vpack.c.b16 %v129, %v127
    %v192 = vpack.c.b16 %v130, %v128
    %v193 = vpack.c.b16 %v133, %v131
    %v194 = vpack.c.b16 %v134, %v132
    %v195 = vpack.c.b16 %v137, %v135
    %v196 = vpack.c.b16 %v138, %v136
    %v197 = vpack.c.b16 %v141, %v139
    %v198 = vpack.c.b16 %v142, %v140
    %v199 = vpack.c.b16 %v145, %v143
    %v200 = vpack.c.b16 %v146, %v144
    %v201 = vpack.c.b16 %v149, %v147
    %v202 = vpack.c.b16 %v150, %v148
    %v203 = vpack.c.b16 %v153, %v151
    %v204 = vpack.c.b16 %v154, %v152
    %v205 = vpack.c.b16 %v157, %v155
    %v206 = vpack.c.b16 %v158, %v156
    %v207 = vpack.c.b16 %v161, %v159
    %v208 = vpack.c.b16 %v162, %v160
    %v209 = vpack.c.b16 %v165, %v163
    %v210 = vpack.c.b16 %v166, %v164
    %v211 = vpack.c.b16 %v169, %v167
    %v212 = vpack.c.b16 %v170, %v168
    %v213 = vpack.c.b16 %v173, %v171
    %v214 = vpack.c.b16 %v174, %v172
    %v215 = vpack.c.b16 %v177, %v175
    %v216 = vpack.c.b16 %v178, %v176
    %v217 = vpack.c.b16 %v181, %v179
    %v218 = vpack.c.b16 %v182, %v180
    %v219 = vpack.c.b16 %v185, %v183
    %v220 = vpack.c.b16 %v186, %v184
    %v221 = vpack.c.b16 %v189, %v187
    %v222 = vpack.c.b16 %v190, %v188
    %v287 = vunpack.c.l.b16 %v57
    %v288 = vunpack.c.l.b16 %v58
    %v289 = vunpack.c.l.b16 %v59
    %v290 = vunpack.c.l.b16 %v60
    %v291 = vunpack.c.l.b16 %v61
    %v292 = vunpack.c.l.b16 %v62
    %v293 = vunpack.c.l.b16 %v63
    %v294 = vunpack.c.l.b16 %v64
    %v295 = vunpack.c.l.b16 %v65
    %v296 = vunpack.c.l.b16 %v66
    %v297 = vunpack.c.l.b16 %v67
    %v298 = vunpack.c.l.b16 %v68
    %v299 = vunpack.c.l.b16 %v69
    %v300 = vunpack.c.l.b16 %v70
    %v301 = vunpack.c.l.b16 %v71
    %v302 = vunpack.c.l.b16 %v72
    %v303 = vunpack.c.l.b16 %v73
    %v304 = vunpack.c.l.b16 %v74
    %v305 = vunpack.c.l.b16 %v75
    %v306 = vunpack.c.l.b16 %v76
    %v307 = vunpack.c.l.b16 %v77
    %v308 = vunpack.c.l.b16 %v78
    %v309 = vunpack.c.l.b16 %v79
    %v310 = vunpack.c.l.b16 %v80
    %v311 = vunpack.c.l.b16 %v81
    %v312 = vunpack.c.l.b16 %v82
    %v313 = vunpack.c.l.b16 %v83
    %v314 = vunpack.c.l.b16 %v84
    %v315 = vunpack.c.l.b16 %v85
    %v316 = vunpack.c.l.b16 %v86
    %v317 = vunpack.c.l.b16 %v87
    %v318 = vunpack.c.l.b16 %v88
    %v319 = vpack.c.b16 %v288, %v287
    %v320 = vpack.c.b16 %v290, %v289
    %v321 = vpack.c.b16 %v292, %v291
    %v322 = vpack.c.b16 %v294, %v293
    %v323 = vpack.c.b16 %v296, %v295
    %v324 = vpack.c.b16 %v298, %v297
    %v325 = vpack.c.b16 %v300, %v299
    %v326 = vpack.c.b16 %v302, %v301
    %v327 = vpack.c.b16 %v304, %v303
    %v328 = vpack.c.b16 %v306, %v305
    %v329 = vpack.c.b16 %v308, %v307
    %v330 = vpack.c.b16 %v310, %v309
    %v331 = vpack.c.b16 %v312, %v311
    %v332 = vpack.c.b16 %v314, %v313
    %v333 = vpack.c.b16 %v316, %v315
    %v334 = vpack.c.b16 %v318, %v317
    %351 = vmatprep.subr.bf16.mxu0 0
    %352 = vmatpush1.bf16.msra.mxu0 %v319
    %353 = vmatprep.subr.bf16.mxu0 0
    %354 = vmatpush1.bf16.msra.mxu0 %v320
    %355 = vmatprep.subr.bf16.mxu0 0
    %356 = vmatpush1.bf16.msra.mxu0 %v321
    %357 = vmatprep.subr.bf16.mxu0 0
    %358 = vmatpush1.bf16.msra.mxu0 %v322
    %359 = vmatprep.subr.bf16.mxu0 0
    %360 = vmatpush1.bf16.msra.mxu0 %v323
    %361 = vmatprep.subr.bf16.mxu0 0
    %362 = vmatpush1.bf16.msra.mxu0 %v324
    %363 = vmatprep.subr.bf16.mxu0 0
    %364 = vmatpush1.bf16.msra.mxu0 %v325
    %365 = vmatprep.subr.bf16.mxu0 0
    %366 = vmatpush1.bf16.msra.mxu0 %v326
    %367 = vmatprep.subr.bf16.mxu0 0
    %368 = vmatpush1.bf16.msra.mxu0 %v327
    %369 = vmatprep.subr.bf16.mxu0 0
    %370 = vmatpush1.bf16.msra.mxu0 %v328
    %371 = vmatprep.subr.bf16.mxu0 0
    %372 = vmatpush1.bf16.msra.mxu0 %v329
    %373 = vmatprep.subr.bf16.mxu0 0
    %374 = vmatpush1.bf16.msra.mxu0 %v330
    %375 = vmatprep.subr.bf16.mxu0 0
    %376 = vmatpush1.bf16.msra.mxu0 %v331
    %377 = vmatprep.subr.bf16.mxu0 0
    %378 = vmatpush1.bf16.msra.mxu0 %v332
    %379 = vmatprep.subr.bf16.mxu0 0
    %380 = vmatpush1.bf16.msra.mxu0 %v333
    %381 = vmatprep.subr.bf16.mxu0 0
    %382 = vmatpush1.bf16.msra.mxu0 %v334
    %383 = vmatprep.mubr.bf16.mxu0 %v192
    %384 = vmatmul.mubr.bf16.gmra.mrb[0].mxu0 %v191
    %v385 = vpop.f32.mrb[0].mxu0
    %v386 = vadd.f32 %v94, %v385
    %v387 = vpop.f32.mrb[0].mxu0
    %v388 = vpop.f32.mrb[0].mxu0
    %v389 = vadd.f32 %v94, %v388
    %v390 = vpop.f32.mrb[0].mxu0
    %391 = vmatprep.mubr.bf16.mxu0 %v194
    %392 = vmatmul.mubr.bf16.gmra.mrb[0].mxu0 %v193
    %v393 = vpop.f32.mrb[0].mxu0
    %v394 = vadd.f32 %v94, %v393
    %v395 = vpop.f32.mrb[0].mxu0
    %v396 = vpop.f32.mrb[0].mxu0
    %v397 = vadd.f32 %v94, %v396
    %v398 = vpop.f32.mrb[0].mxu0
    %399 = vmatprep.mubr.bf16.mxu0 %v196
    %400 = vmatmul.mubr.bf16.gmra.mrb[0].mxu0 %v195
    %v401 = vpop.f32.mrb[0].mxu0
    %v402 = vadd.f32 %v94, %v401
    %v403 = vpop.f32.mrb[0].mxu0
    %v404 = vpop.f32.mrb[0].mxu0
    %v405 = vadd.f32 %v94, %v404
    %v406 = vpop.f32.mrb[0].mxu0
    %407 = vmatprep.mubr.bf16.mxu0 %v198
    %408 = vmatmul.mubr.bf16.gmra.mrb[0].mxu0 %v197
    %v409 = vpop.f32.mrb[0].mxu0
    %v410 = vadd.f32 %v94, %v409
    %v411 = vpop.f32.mrb[0].mxu0
    %v412 = vpop.f32.mrb[0].mxu0
    %v413 = vadd.f32 %v94, %v412
    %v414 = vpop.f32.mrb[0].mxu0
    %415 = vmatprep.mubr.bf16.mxu0 %v200
    %416 = vmatmul.mubr.bf16.gmra.mrb[0].mxu0 %v199
    %v417 = vpop.f32.mrb[0].mxu0
    %v418 = vadd.f32 %v94, %v417
    %v419 = vpop.f32.mrb[0].mxu0
    %v420 = vpop.f32.mrb[0].mxu0
    %v421 = vadd.f32 %v94, %v420
    %v422 = vpop.f32.mrb[0].mxu0
    %423 = vmatprep.mubr.bf16.mxu0 %v202
    %424 = vmatmul.mubr.bf16.gmra.mrb[0].mxu0 %v201
    %v425 = vpop.f32.mrb[0].mxu0
    %v426 = vadd.f32 %v94, %v425
    %v427 = vpop.f32.mrb[0].mxu0
    %v428 = vpop.f32.mrb[0].mxu0
    %v429 = vadd.f32 %v94, %v428
    %v430 = vpop.f32.mrb[0].mxu0
    %431 = vmatprep.mubr.bf16.mxu0 %v204
    %432 = vmatmul.mubr.bf16.gmra.mrb[0].mxu0 %v203
    %v433 = vpop.f32.mrb[0].mxu0
    %v434 = vadd.f32 %v94, %v433
    %v435 = vpop.f32.mrb[0].mxu0
    %v436 = vpop.f32.mrb[0].mxu0
    %v437 = vadd.f32 %v94, %v436
    %v438 = vpop.f32.mrb[0].mxu0
    %439 = vmatprep.mubr.bf16.mxu0 %v206
    %440 = vmatmul.mubr.bf16.gmra.mrb[0].mxu0 %v205
    %v441 = vpop.f32.mrb[0].mxu0
    %v442 = vadd.f32 %v94, %v441
    %v443 = vpop.f32.mrb[0].mxu0
    %v444 = vpop.f32.mrb[0].mxu0
    %v445 = vadd.f32 %v94, %v444
    %v446 = vpop.f32.mrb[0].mxu0
    %447 = vmatprep.mubr.bf16.mxu0 %v208
    %448 = vmatmul.mubr.bf16.gmra.mrb[0].mxu0 %v207
    %v449 = vpop.f32.mrb[0].mxu0
    %v450 = vadd.f32 %v94, %v449
    %v451 = vpop.f32.mrb[0].mxu0
    %v452 = vpop.f32.mrb[0].mxu0
    %v453 = vadd.f32 %v94, %v452
    %v454 = vpop.f32.mrb[0].mxu0
    %455 = vmatprep.mubr.bf16.mxu0 %v210
    %456 = vmatmul.mubr.bf16.gmra.mrb[0].mxu0 %v209
    %v457 = vpop.f32.mrb[0].mxu0
    %v458 = vadd.f32 %v94, %v457
    %v459 = vpop.f32.mrb[0].mxu0
    %v460 = vpop.f32.mrb[0].mxu0
    %v461 = vadd.f32 %v94, %v460
    %v462 = vpop.f32.mrb[0].mxu0
    %463 = vmatprep.mubr.bf16.mxu0 %v212
    %464 = vmatmul.mubr.bf16.gmra.mrb[0].mxu0 %v211
    %v465 = vpop.f32.mrb[0].mxu0
    %v466 = vadd.f32 %v94, %v465
    %v467 = vpop.f32.mrb[0].mxu0
    %v468 = vpop.f32.mrb[0].mxu0
    %v469 = vadd.f32 %v94, %v468
    %v470 = vpop.f32.mrb[0].mxu0
    %471 = vmatprep.mubr.bf16.mxu0 %v214
    %472 = vmatmul.mubr.bf16.gmra.mrb[0].mxu0 %v213
    %v473 = vpop.f32.mrb[0].mxu0
    %v474 = vadd.f32 %v94, %v473
    %v475 = vpop.f32.mrb[0].mxu0
    %v476 = vpop.f32.mrb[0].mxu0
    %v477 = vadd.f32 %v94, %v476
    %v478 = vpop.f32.mrb[0].mxu0
    %479 = vmatprep.mubr.bf16.mxu0 %v216
    %480 = vmatmul.mubr.bf16.gmra.mrb[0].mxu0 %v215
    %v481 = vpop.f32.mrb[0].mxu0
    %v482 = vadd.f32 %v94, %v481
    %v483 = vpop.f32.mrb[0].mxu0
    %v484 = vpop.f32.mrb[0].mxu0
    %v485 = vadd.f32 %v94, %v484
    %v486 = vpop.f32.mrb[0].mxu0
    %487 = vmatprep.mubr.bf16.mxu0 %v218
    %488 = vmatmul.mubr.bf16.gmra.mrb[0].mxu0 %v217
    %v489 = vpop.f32.mrb[0].mxu0
    %v490 = vadd.f32 %v94, %v489
    %v491 = vpop.f32.mrb[0].mxu0
    %v492 = vpop.f32.mrb[0].mxu0
    %v493 = vadd.f32 %v94, %v492
    %v494 = vpop.f32.mrb[0].mxu0
    %495 = vmatprep.mubr.bf16.mxu0 %v220
    %496 = vmatmul.mubr.bf16.gmra.mrb[0].mxu0 %v219
    %v497 = vpop.f32.mrb[0].mxu0
    %v498 = vadd.f32 %v94, %v497
    %v499 = vpop.f32.mrb[0].mxu0
    %v500 = vpop.f32.mrb[0].mxu0
    %v501 = vadd.f32 %v94, %v500
    %v502 = vpop.f32.mrb[0].mxu0
    %503 = vmatprep.mubr.bf16.mxu0 %v222
    %504 = vmatmul.mubr.bf16.gmra.mrb[0].mxu0 %v221
    %v505 = vpop.f32.mrb[0].mxu0
    %v506 = vadd.f32 %v94, %v505
    %v507 = vpop.f32.mrb[0].mxu0
    %v508 = vpop.f32.mrb[0].mxu0
    %v509 = vadd.f32 %v94, %v508
    %v510 = vpop.f32.mrb[0].mxu0
    %511 = vdwg.mxu0
    %v512 = vld [vmem:[%s3] sm:$0xf]
    %v513 = vld [vmem:[%s3 + $0x4] sm:$0xf]
    %v514 = vld [vmem:[%s3 + $0x8] sm:$0xf]
    %v515 = vld [vmem:[%s3 + $0xc] sm:$0xf]
    %v516 = vld [vmem:[%s3 + $0x10] sm:$0xf]
    %v517 = vld [vmem:[%s3 + $0x14] sm:$0xf]
    %v518 = vld [vmem:[%s3 + $0x18] sm:$0xf]
    %v519 = vld [vmem:[%s3 + $0x1c] sm:$0xf]
    %v520 = vld [vmem:[%s3 + $0x20] sm:$0xf]
    %v521 = vld [vmem:[%s3 + $0x24] sm:$0xf]
    %v522 = vld [vmem:[%s3 + $0x28] sm:$0xf]
    %v523 = vld [vmem:[%s3 + $0x2c] sm:$0xf]
    %v524 = vld [vmem:[%s3 + $0x30] sm:$0xf]
    %v525 = vld [vmem:[%s3 + $0x34] sm:$0xf]
    %v526 = vld [vmem:[%s3 + $0x38] sm:$0xf]
    %v527 = vld [vmem:[%s3 + $0x3c] sm:$0xf]
    %v528 = vld [vmem:[%s3 + $0x40] sm:$0xf]
    %v529 = vld [vmem:[%s3 + $0x44] sm:$0xf]
    %v530 = vld [vmem:[%s3 + $0x48] sm:$0xf]
    %v531 = vld [vmem:[%s3 + $0x4c] sm:$0xf]
    %v532 = vld [vmem:[%s3 + $0x50] sm:$0xf]
    %v533 = vld [vmem:[%s3 + $0x54] sm:$0xf]
    %v534 = vld [vmem:[%s3 + $0x58] sm:$0xf]
    %v535 = vld [vmem:[%s3 + $0x5c] sm:$0xf]
    %v536 = vld [vmem:[%s3 + $0x60] sm:$0xf]
    %v537 = vld [vmem:[%s3 + $0x64] sm:$0xf]
    %v538 = vld [vmem:[%s3 + $0x68] sm:$0xf]
    %v539 = vld [vmem:[%s3 + $0x6c] sm:$0xf]
    %v540 = vld [vmem:[%s3 + $0x70] sm:$0xf]
    %v541 = vld [vmem:[%s3 + $0x74] sm:$0xf]
    %v542 = vld [vmem:[%s3 + $0x78] sm:$0xf]
    %v543 = vld [vmem:[%s3 + $0x7c] sm:$0xf]
    %v544 = vunpack.c.l.bf16 %v512
    %v545 = vunpack.c.l.bf16 %v513
    %v546 = vunpack.c.l.bf16 %v514
    %v547 = vunpack.c.l.bf16 %v515
    %v548 = vunpack.c.l.bf16 %v516
    %v549 = vunpack.c.l.bf16 %v517
    %v550 = vunpack.c.l.bf16 %v518
    %v551 = vunpack.c.l.bf16 %v519
    %v552 = vunpack.c.l.bf16 %v520
    %v553 = vunpack.c.l.bf16 %v521
    %v554 = vunpack.c.l.bf16 %v522
    %v555 = vunpack.c.l.bf16 %v523
    %v556 = vunpack.c.l.bf16 %v524
    %v557 = vunpack.c.l.bf16 %v525
    %v558 = vunpack.c.l.bf16 %v526
    %v559 = vunpack.c.l.bf16 %v527
    %v560 = vunpack.c.l.bf16 %v528
    %v561 = vunpack.c.l.bf16 %v529
    %v562 = vunpack.c.l.bf16 %v530
    %v563 = vunpack.c.l.bf16 %v531
    %v564 = vunpack.c.l.bf16 %v532
    %v565 = vunpack.c.l.bf16 %v533
    %v566 = vunpack.c.l.bf16 %v534
    %v567 = vunpack.c.l.bf16 %v535
    %v568 = vunpack.c.l.bf16 %v536
    %v569 = vunpack.c.l.bf16 %v537
    %v570 = vunpack.c.l.bf16 %v538
    %v571 = vunpack.c.l.bf16 %v539
    %v572 = vunpack.c.l.bf16 %v540
    %v573 = vunpack.c.l.bf16 %v541
    %v574 = vunpack.c.l.bf16 %v542
    %v575 = vunpack.c.l.bf16 %v543
    %v576 = vadd.f32 %v386, %v544
    %v577 = vadd.f32 %v389, %v545
    %v578 = vadd.f32 %v394, %v546
    %v579 = vadd.f32 %v397, %v547
    %v580 = vadd.f32 %v402, %v548
    %v581 = vadd.f32 %v405, %v549
    %v582 = vadd.f32 %v410, %v550
    %v583 = vadd.f32 %v413, %v551
    %v584 = vadd.f32 %v418, %v552
    %v585 = vadd.f32 %v421, %v553
    %v586 = vadd.f32 %v426, %v554
    %v587 = vadd.f32 %v429, %v555
    %v588 = vadd.f32 %v434, %v556
    %v589 = vadd.f32 %v437, %v557
    %v590 = vadd.f32 %v442, %v558
    %v591 = vadd.f32 %v445, %v559
    %v592 = vadd.f32 %v450, %v560
    %v593 = vadd.f32 %v453, %v561
    %v594 = vadd.f32 %v458, %v562
    %v595 = vadd.f32 %v461, %v563
    %v596 = vadd.f32 %v466, %v564
    %v597 = vadd.f32 %v469, %v565
    %v598 = vadd.f32 %v474, %v566
    %v599 = vadd.f32 %v477, %v567
    %v600 = vadd.f32 %v482, %v568
    %v601 = vadd.f32 %v485, %v569
    %v602 = vadd.f32 %v490, %v570
    %v603 = vadd.f32 %v493, %v571
    %v604 = vadd.f32 %v498, %v572
    %v605 = vadd.f32 %v501, %v573
    %v606 = vadd.f32 %v506, %v574
    %v607 = vadd.f32 %v509, %v575
    %608 = vadd.xlane.f32.xlu0 %v576
    %v609 = vpop.xlane.xlu0 %608
    %610 = vadd.xlane.f32.xlu0 %v577
    %v611 = vpop.xlane.xlu0 %610
    %612 = vadd.xlane.f32.xlu0 %v578
    %v613 = vpop.xlane.xlu0 %612
    %614 = vadd.xlane.f32.xlu0 %v579
    %v615 = vpop.xlane.xlu0 %614
    %616 = vadd.xlane.f32.xlu0 %v580
    %v617 = vpop.xlane.xlu0 %616
    %618 = vadd.xlane.f32.xlu0 %v581
    %v619 = vpop.xlane.xlu0 %618
    %620 = vadd.xlane.f32.xlu0 %v582
    %v621 = vpop.xlane.xlu0 %620
    %622 = vadd.xlane.f32.xlu0 %v583
    %v623 = vpop.xlane.xlu0 %622
    %624 = vadd.xlane.f32.xlu0 %v584
    %v625 = vpop.xlane.xlu0 %624
    %626 = vadd.xlane.f32.xlu0 %v585
    %v627 = vpop.xlane.xlu0 %626
    %628 = vadd.xlane.f32.xlu0 %v586
    %v629 = vpop.xlane.xlu0 %628
    %630 = vadd.xlane.f32.xlu0 %v587
    %v631 = vpop.xlane.xlu0 %630
    %632 = vadd.xlane.f32.xlu0 %v588
    %v633 = vpop.xlane.xlu0 %632
    %634 = vadd.xlane.f32.xlu0 %v589
    %v635 = vpop.xlane.xlu0 %634
    %636 = vadd.xlane.f32.xlu0 %v590
    %v637 = vpop.xlane.xlu0 %636
    %638 = vadd.xlane.f32.xlu0 %v591
    %v639 = vpop.xlane.xlu0 %638
    %640 = vadd.xlane.f32.xlu0 %v592
    %v641 = vpop.xlane.xlu0 %640
    %642 = vadd.xlane.f32.xlu0 %v593
    %v643 = vpop.xlane.xlu0 %642
    %644 = vadd.xlane.f32.xlu0 %v594
    %v645 = vpop.xlane.xlu0 %644
    %646 = vadd.xlane.f32.xlu0 %v595
    %v647 = vpop.xlane.xlu0 %646
    %648 = vadd.xlane.f32.xlu0 %v596
    %v649 = vpop.xlane.xlu0 %648
    %650 = vadd.xlane.f32.xlu0 %v597
    %v651 = vpop.xlane.xlu0 %650
    %652 = vadd.xlane.f32.xlu0 %v598
    %v653 = vpop.xlane.xlu0 %652
    %654 = vadd.xlane.f32.xlu0 %v599
    %v655 = vpop.xlane.xlu0 %654
    %656 = vadd.xlane.f32.xlu0 %v600
    %v657 = vpop.xlane.xlu0 %656
    %658 = vadd.xlane.f32.xlu0 %v601
    %v659 = vpop.xlane.xlu0 %658
    %660 = vadd.xlane.f32.xlu0 %v602
    %v661 = vpop.xlane.xlu0 %660
    %662 = vadd.xlane.f32.xlu0 %v603
    %v663 = vpop.xlane.xlu0 %662
    %664 = vadd.xlane.f32.xlu0 %v604
    %v665 = vpop.xlane.xlu0 %664
    %666 = vadd.xlane.f32.xlu0 %v605
    %v667 = vpop.xlane.xlu0 %666
    %668 = vadd.xlane.f32.xlu0 %v606
    %v669 = vpop.xlane.xlu0 %668
    %670 = vadd.xlane.f32.xlu0 %v607
    %v671 = vpop.xlane.xlu0 %670
    %v672 = vrcp.pop 128.0
    %v673 = vmul.f32 %v609, %v672
    %v674 = vmul.f32 %v611, %v672
    %v675 = vmul.f32 %v613, %v672
    %v676 = vmul.f32 %v615, %v672
    %v677 = vmul.f32 %v617, %v672
    %v678 = vmul.f32 %v619, %v672
    %v679 = vmul.f32 %v621, %v672
    %v680 = vmul.f32 %v623, %v672
    %v681 = vmul.f32 %v625, %v672
    %v682 = vmul.f32 %v627, %v672
    %v683 = vmul.f32 %v629, %v672
    %v684 = vmul.f32 %v631, %v672
    %v685 = vmul.f32 %v633, %v672
    %v686 = vmul.f32 %v635, %v672
    %v687 = vmul.f32 %v637, %v672
    %v688 = vmul.f32 %v639, %v672
    %v689 = vmul.f32 %v641, %v672
    %v690 = vmul.f32 %v643, %v672
    %v691 = vmul.f32 %v645, %v672
    %v692 = vmul.f32 %v647, %v672
    %v693 = vmul.f32 %v649, %v672
    %v694 = vmul.f32 %v651, %v672
    %v695 = vmul.f32 %v653, %v672
    %v696 = vmul.f32 %v655, %v672
    %v697 = vmul.f32 %v657, %v672
    %v698 = vmul.f32 %v659, %v672
    %v699 = vmul.f32 %v661, %v672
    %v700 = vmul.f32 %v663, %v672
    %v701 = vmul.f32 %v665, %v672
    %v702 = vmul.f32 %v667, %v672
    %v703 = vmul.f32 %v669, %v672
    %v704 = vmul.f32 %v671, %v672
    %v705 = vsub.f32 %v576, %v673
    %v706 = vsub.f32 %v577, %v674
    %v707 = vsub.f32 %v578, %v675
    %v708 = vsub.f32 %v579, %v676
    %v709 = vsub.f32 %v580, %v677
    %v710 = vsub.f32 %v581, %v678
    %v711 = vsub.f32 %v582, %v679
    %v712 = vsub.f32 %v583, %v680
    %v713 = vsub.f32 %v584, %v681
    %v714 = vsub.f32 %v585, %v682
    %v715 = vsub.f32 %v586, %v683
    %v716 = vsub.f32 %v587, %v684
    %v717 = vsub.f32 %v588, %v685
    %v718 = vsub.f32 %v589, %v686
    %v719 = vsub.f32 %v590, %v687
    %v720 = vsub.f32 %v591, %v688
    %v721 = vsub.f32 %v592, %v689
    %v722 = vsub.f32 %v593, %v690
    %v723 = vsub.f32 %v594, %v691
    %v724 = vsub.f32 %v595, %v692
    %v725 = vsub.f32 %v596, %v693
    %v726 = vsub.f32 %v597, %v694
    %v727 = vsub.f32 %v598, %v695
    %v728 = vsub.f32 %v599, %v696
    %v729 = vsub.f32 %v600, %v697
    %v730 = vsub.f32 %v601, %v698
    %v731 = vsub.f32 %v602, %v699
    %v732 = vsub.f32 %v603, %v700
    %v733 = vsub.f32 %v604, %v701
    %v734 = vsub.f32 %v605, %v702
    %v735 = vsub.f32 %v606, %v703
    %v736 = vsub.f32 %v607, %v704
    %v737 = vmul.f32 %v705, %v705
    %v738 = vmul.f32 %v706, %v706
    %v739 = vmul.f32 %v707, %v707
    %v740 = vmul.f32 %v708, %v708
    %v741 = vmul.f32 %v709, %v709
    %v742 = vmul.f32 %v710, %v710
    %v743 = vmul.f32 %v711, %v711
    %v744 = vmul.f32 %v712, %v712
    %v745 = vmul.f32 %v713, %v713
    %v746 = vmul.f32 %v714, %v714
    %v747 = vmul.f32 %v715, %v715
    %v748 = vmul.f32 %v716, %v716
    %v749 = vmul.f32 %v717, %v717
    %v750 = vmul.f32 %v718, %v718
    %v751 = vmul.f32 %v719, %v719
    %v752 = vmul.f32 %v720, %v720
    %v753 = vmul.f32 %v721, %v721
    %v754 = vmul.f32 %v722, %v722
    %v755 = vmul.f32 %v723, %v723
    %v756 = vmul.f32 %v724, %v724
    %v757 = vmul.f32 %v725, %v725
    %v758 = vmul.f32 %v726, %v726
    %v759 = vmul.f32 %v727, %v727
    %v760 = vmul.f32 %v728, %v728
    %v761 = vmul.f32 %v729, %v729
    %v762 = vmul.f32 %v730, %v730
    %v763 = vmul.f32 %v731, %v731
    %v764 = vmul.f32 %v732, %v732
    %v765 = vmul.f32 %v733, %v733
    %v766 = vmul.f32 %v734, %v734
    %v767 = vmul.f32 %v735, %v735
    %v768 = vmul.f32 %v736, %v736
    %769 = vadd.xlane.f32.xlu0 %v737
    %v770 = vpop.xlane.xlu0 %769
    %771 = vadd.xlane.f32.xlu0 %v738
    %v772 = vpop.xlane.xlu0 %771
    %773 = vadd.xlane.f32.xlu0 %v739
    %v774 = vpop.xlane.xlu0 %773
    %775 = vadd.xlane.f32.xlu0 %v740
    %v776 = vpop.xlane.xlu0 %775
    %777 = vadd.xlane.f32.xlu0 %v741
    %v778 = vpop.xlane.xlu0 %777
    %779 = vadd.xlane.f32.xlu0 %v742
    %v780 = vpop.xlane.xlu0 %779
    %781 = vadd.xlane.f32.xlu0 %v743
    %v782 = vpop.xlane.xlu0 %781
    %783 = vadd.xlane.f32.xlu0 %v744
    %v784 = vpop.xlane.xlu0 %783
    %785 = vadd.xlane.f32.xlu0 %v745
    %v786 = vpop.xlane.xlu0 %785
    %787 = vadd.xlane.f32.xlu0 %v746
    %v788 = vpop.xlane.xlu0 %787
    %789 = vadd.xlane.f32.xlu0 %v747
    %v790 = vpop.xlane.xlu0 %789
    %791 = vadd.xlane.f32.xlu0 %v748
    %v792 = vpop.xlane.xlu0 %791
    %793 = vadd.xlane.f32.xlu0 %v749
    %v794 = vpop.xlane.xlu0 %793
    %795 = vadd.xlane.f32.xlu0 %v750
    %v796 = vpop.xlane.xlu0 %795
    %797 = vadd.xlane.f32.xlu0 %v751
    %v798 = vpop.xlane.xlu0 %797
    %799 = vadd.xlane.f32.xlu0 %v752
    %v800 = vpop.xlane.xlu0 %799
    %801 = vadd.xlane.f32.xlu0 %v753
    %v802 = vpop.xlane.xlu0 %801
    %803 = vadd.xlane.f32.xlu0 %v754
    %v804 = vpop.xlane.xlu0 %803
    %805 = vadd.xlane.f32.xlu0 %v755
    %v806 = vpop.xlane.xlu0 %805
    %807 = vadd.xlane.f32.xlu0 %v756
    %v808 = vpop.xlane.xlu0 %807
    %809 = vadd.xlane.f32.xlu0 %v757
    %v810 = vpop.xlane.xlu0 %809
    %811 = vadd.xlane.f32.xlu0 %v758
    %v812 = vpop.xlane.xlu0 %811
    %813 = vadd.xlane.f32.xlu0 %v759
    %v814 = vpop.xlane.xlu0 %813
    %815 = vadd.xlane.f32.xlu0 %v760
    %v816 = vpop.xlane.xlu0 %815
    %817 = vadd.xlane.f32.xlu0 %v761
    %v818 = vpop.xlane.xlu0 %817
    %819 = vadd.xlane.f32.xlu0 %v762
    %v820 = vpop.xlane.xlu0 %819
    %821 = vadd.xlane.f32.xlu0 %v763
    %v822 = vpop.xlane.xlu0 %821
    %823 = vadd.xlane.f32.xlu0 %v764
    %v824 = vpop.xlane.xlu0 %823
    %825 = vadd.xlane.f32.xlu0 %v765
    %v826 = vpop.xlane.xlu0 %825
    %827 = vadd.xlane.f32.xlu0 %v766
    %v828 = vpop.xlane.xlu0 %827
    %829 = vadd.xlane.f32.xlu0 %v767
    %v830 = vpop.xlane.xlu0 %829
    %831 = vadd.xlane.f32.xlu0 %v768
    %v832 = vpop.xlane.xlu0 %831
    %v833 = vmul.f32 %v770, %v672
    %v834 = vmul.f32 %v772, %v672
    %v835 = vmul.f32 %v774, %v672
    %v836 = vmul.f32 %v776, %v672
    %v837 = vmul.f32 %v778, %v672
    %v838 = vmul.f32 %v780, %v672
    %v839 = vmul.f32 %v782, %v672
    %v840 = vmul.f32 %v784, %v672
    %v841 = vmul.f32 %v786, %v672
    %v842 = vmul.f32 %v788, %v672
    %v843 = vmul.f32 %v790, %v672
    %v844 = vmul.f32 %v792, %v672
    %v845 = vmul.f32 %v794, %v672
    %v846 = vmul.f32 %v796, %v672
    %v847 = vmul.f32 %v798, %v672
    %v848 = vmul.f32 %v800, %v672
    %v849 = vmul.f32 %v802, %v672
    %v850 = vmul.f32 %v804, %v672
    %v851 = vmul.f32 %v806, %v672
    %v852 = vmul.f32 %v808, %v672
    %v853 = vmul.f32 %v810, %v672
    %v854 = vmul.f32 %v812, %v672
    %v855 = vmul.f32 %v814, %v672
    %v856 = vmul.f32 %v816, %v672
    %v857 = vmul.f32 %v818, %v672
    %v858 = vmul.f32 %v820, %v672
    %v859 = vmul.f32 %v822, %v672
    %v860 = vmul.f32 %v824, %v672
    %v861 = vmul.f32 %v826, %v672
    %v862 = vmul.f32 %v828, %v672
    %v863 = vmul.f32 %v830, %v672
    %v864 = vmul.f32 %v832, %v672
    %v865 = vadd.f32 %v833, 1e-05
    %v866 = vadd.f32 %v834, 1e-05
    %v867 = vadd.f32 %v835, 1e-05
    %v868 = vadd.f32 %v836, 1e-05
    %v869 = vadd.f32 %v837, 1e-05
    %v870 = vadd.f32 %v838, 1e-05
    %v871 = vadd.f32 %v839, 1e-05
    %v872 = vadd.f32 %v840, 1e-05
    %v873 = vadd.f32 %v841, 1e-05
    %v874 = vadd.f32 %v842, 1e-05
    %v875 = vadd.f32 %v843, 1e-05
    %v876 = vadd.f32 %v844, 1e-05
    %v877 = vadd.f32 %v845, 1e-05
    %v878 = vadd.f32 %v846, 1e-05
    %v879 = vadd.f32 %v847, 1e-05
    %v880 = vadd.f32 %v848, 1e-05
    %v881 = vadd.f32 %v849, 1e-05
    %v882 = vadd.f32 %v850, 1e-05
    %v883 = vadd.f32 %v851, 1e-05
    %v884 = vadd.f32 %v852, 1e-05
    %v885 = vadd.f32 %v853, 1e-05
    %v886 = vadd.f32 %v854, 1e-05
    %v887 = vadd.f32 %v855, 1e-05
    %v888 = vadd.f32 %v856, 1e-05
    %v889 = vadd.f32 %v857, 1e-05
    %v890 = vadd.f32 %v858, 1e-05
    %v891 = vadd.f32 %v859, 1e-05
    %v892 = vadd.f32 %v860, 1e-05
    %v893 = vadd.f32 %v861, 1e-05
    %v894 = vadd.f32 %v862, 1e-05
    %v895 = vadd.f32 %v863, 1e-05
    %v896 = vadd.f32 %v864, 1e-05
    %v897 = vrsqrt.pop %v865
    %v898 = vrsqrt.pop %v866
    %v899 = vrsqrt.pop %v867
    %v900 = vrsqrt.pop %v868
    %v901 = vrsqrt.pop %v869
    %v902 = vrsqrt.pop %v870
    %v903 = vrsqrt.pop %v871
    %v904 = vrsqrt.pop %v872
    %v905 = vrsqrt.pop %v873
    %v906 = vrsqrt.pop %v874
    %v907 = vrsqrt.pop %v875
    %v908 = vrsqrt.pop %v876
    %v909 = vrsqrt.pop %v877
    %v910 = vrsqrt.pop %v878
    %v911 = vrsqrt.pop %v879
    %v912 = vrsqrt.pop %v880
    %v913 = vrsqrt.pop %v881
    %v914 = vrsqrt.pop %v882
    %v915 = vrsqrt.pop %v883
    %v916 = vrsqrt.pop %v884
    %v917 = vrsqrt.pop %v885
    %v918 = vrsqrt.pop %v886
    %v919 = vrsqrt.pop %v887
    %v920 = vrsqrt.pop %v888
    %v921 = vrsqrt.pop %v889
    %v922 = vrsqrt.pop %v890
    %v923 = vrsqrt.pop %v891
    %v924 = vrsqrt.pop %v892
    %v925 = vrsqrt.pop %v893
    %v926 = vrsqrt.pop %v894
    %v927 = vrsqrt.pop %v895
    %v928 = vrsqrt.pop %v896
    %v929 = vmul.f32 %v705, %v897
    %v930 = vmul.f32 %v706, %v898
    %v931 = vmul.f32 %v707, %v899
    %v932 = vmul.f32 %v708, %v900
    %v933 = vmul.f32 %v709, %v901
    %v934 = vmul.f32 %v710, %v902
    %v935 = vmul.f32 %v711, %v903
    %v936 = vmul.f32 %v712, %v904
    %v937 = vmul.f32 %v713, %v905
    %v938 = vmul.f32 %v714, %v906
    %v939 = vmul.f32 %v715, %v907
    %v940 = vmul.f32 %v716, %v908
    %v941 = vmul.f32 %v717, %v909
    %v942 = vmul.f32 %v718, %v910
    %v943 = vmul.f32 %v719, %v911
    %v944 = vmul.f32 %v720, %v912
    %v945 = vmul.f32 %v721, %v913
    %v946 = vmul.f32 %v722, %v914
    %v947 = vmul.f32 %v723, %v915
    %v948 = vmul.f32 %v724, %v916
    %v949 = vmul.f32 %v725, %v917
    %v950 = vmul.f32 %v726, %v918
    %v951 = vmul.f32 %v727, %v919
    %v952 = vmul.f32 %v728, %v920
    %v953 = vmul.f32 %v729, %v921
    %v954 = vmul.f32 %v730, %v922
    %v955 = vmul.f32 %v731, %v923
    %v956 = vmul.f32 %v732, %v924
    %v957 = vmul.f32 %v733, %v925
    %v958 = vmul.f32 %v734, %v926
    %v959 = vmul.f32 %v735, %v927
    %v960 = vmul.f32 %v736, %v928
    %v961 = vld [vmem:[%s4] sm:$0x1]
    %v962 = vunpack.c.l.bf16 %v961
    %v963 = vlaneseq
    %v964 = vshrl.u32 %v963, 7
    %v965 = vsub.s32 0, %v964
    %v966 = vrot.slane %v962, %v965
    %v967 = vmul.f32 %v929, %v966
    %v968 = vmul.f32 %v930, %v966
    %v969 = vmul.f32 %v931, %v966
    %v970 = vmul.f32 %v932, %v966
    %v971 = vmul.f32 %v933, %v966
    %v972 = vmul.f32 %v934, %v966
    %v973 = vmul.f32 %v935, %v966
    %v974 = vmul.f32 %v936, %v966
    %v975 = vmul.f32 %v937, %v966
    %v976 = vmul.f32 %v938, %v966
    %v977 = vmul.f32 %v939, %v966
    %v978 = vmul.f32 %v940, %v966
    %v979 = vmul.f32 %v941, %v966
    %v980 = vmul.f32 %v942, %v966
    %v981 = vmul.f32 %v943, %v966
    %v982 = vmul.f32 %v944, %v966
    %v983 = vmul.f32 %v945, %v966
    %v984 = vmul.f32 %v946, %v966
    %v985 = vmul.f32 %v947, %v966
    %v986 = vmul.f32 %v948, %v966
    %v987 = vmul.f32 %v949, %v966
    %v988 = vmul.f32 %v950, %v966
    %v989 = vmul.f32 %v951, %v966
    %v990 = vmul.f32 %v952, %v966
    %v991 = vmul.f32 %v953, %v966
    %v992 = vmul.f32 %v954, %v966
    %v993 = vmul.f32 %v955, %v966
    %v994 = vmul.f32 %v956, %v966
    %v995 = vmul.f32 %v957, %v966
    %v996 = vmul.f32 %v958, %v966
    %v997 = vmul.f32 %v959, %v966
    %v998 = vmul.f32 %v960, %v966
    %v999 = vld [vmem:[%s5] sm:$0x1]
    %v1000 = vunpack.c.l.bf16 %v999
    %v1001 = vlaneseq
    %v1002 = vshrl.u32 %v1001, 7
    %v1003 = vsub.s32 0, %v1002
    %v1004 = vrot.slane %v1000, %v1003
    %v1005 = vadd.f32 %v967, %v1004
    %v1006 = vadd.f32 %v968, %v1004
    %v1007 = vadd.f32 %v969, %v1004
    %v1008 = vadd.f32 %v970, %v1004
    %v1009 = vadd.f32 %v971, %v1004
    %v1010 = vadd.f32 %v972, %v1004
    %v1011 = vadd.f32 %v973, %v1004
    %v1012 = vadd.f32 %v974, %v1004
    %v1013 = vadd.f32 %v975, %v1004
    %v1014 = vadd.f32 %v976, %v1004
    %v1015 = vadd.f32 %v977, %v1004
    %v1016 = vadd.f32 %v978, %v1004
    %v1017 = vadd.f32 %v979, %v1004
    %v1018 = vadd.f32 %v980, %v1004
    %v1019 = vadd.f32 %v981, %v1004
    %v1020 = vadd.f32 %v982, %v1004
    %v1021 = vadd.f32 %v983, %v1004
    %v1022 = vadd.f32 %v984, %v1004
    %v1023 = vadd.f32 %v985, %v1004
    %v1024 = vadd.f32 %v986, %v1004
    %v1025 = vadd.f32 %v987, %v1004
    %v1026 = vadd.f32 %v988, %v1004
    %v1027 = vadd.f32 %v989, %v1004
    %v1028 = vadd.f32 %v990, %v1004
    %v1029 = vadd.f32 %v991, %v1004
    %v1030 = vadd.f32 %v992, %v1004
    %v1031 = vadd.f32 %v993, %v1004
    %v1032 = vadd.f32 %v994, %v1004
    %v1033 = vadd.f32 %v995, %v1004
    %v1034 = vadd.f32 %v996, %v1004
    %v1035 = vadd.f32 %v997, %v1004
    %v1036 = vadd.f32 %v998, %v1004
    %v1037 = vpack.c.bf16 %v1006, %v1005
    %v1038 = vpack.c.bf16 %v1008, %v1007
    %v1039 = vpack.c.bf16 %v1010, %v1009
    %v1040 = vpack.c.bf16 %v1012, %v1011
    %v1041 = vpack.c.bf16 %v1014, %v1013
    %v1042 = vpack.c.bf16 %v1016, %v1015
    %v1043 = vpack.c.bf16 %v1018, %v1017
    %v1044 = vpack.c.bf16 %v1020, %v1019
    %v1045 = vpack.c.bf16 %v1022, %v1021
    %v1046 = vpack.c.bf16 %v1024, %v1023
    %v1047 = vpack.c.bf16 %v1026, %v1025
    %v1048 = vpack.c.bf16 %v1028, %v1027
    %v1049 = vpack.c.bf16 %v1030, %v1029
    %v1050 = vpack.c.bf16 %v1032, %v1031
    %v1051 = vpack.c.bf16 %v1034, %v1033
    %v1052 = vpack.c.bf16 %v1036, %v1035
    %v1069 = vunpack.c.l.b16 %v1037
    %v1070 = vunpack.c.h.b16 %v1037
    %v1071 = vunpack.c.l.b16 %v1038
    %v1072 = vunpack.c.h.b16 %v1038
    %v1073 = vunpack.c.l.b16 %v1039
    %v1074 = vunpack.c.h.b16 %v1039
    %v1075 = vunpack.c.l.b16 %v1040
    %v1076 = vunpack.c.h.b16 %v1040
    %v1077 = vunpack.c.l.b16 %v1041
    %v1078 = vunpack.c.h.b16 %v1041
    %v1079 = vunpack.c.l.b16 %v1042
    %v1080 = vunpack.c.h.b16 %v1042
    %v1081 = vunpack.c.l.b16 %v1043
    %v1082 = vunpack.c.h.b16 %v1043
    %v1083 = vunpack.c.l.b16 %v1044
    %v1084 = vunpack.c.h.b16 %v1044
    %v1085 = vunpack.c.l.b16 %v1045
    %v1086 = vunpack.c.h.b16 %v1045
    %v1087 = vunpack.c.l.b16 %v1046
    %v1088 = vunpack.c.h.b16 %v1046
    %v1089 = vunpack.c.l.b16 %v1047
    %v1090 = vunpack.c.h.b16 %v1047
    %v1091 = vunpack.c.l.b16 %v1048
    %v1092 = vunpack.c.h.b16 %v1048
    %v1093 = vunpack.c.l.b16 %v1049
    %v1094 = vunpack.c.h.b16 %v1049
    %v1095 = vunpack.c.l.b16 %v1050
    %v1096 = vunpack.c.h.b16 %v1050
    %v1097 = vunpack.c.l.b16 %v1051
    %v1098 = vunpack.c.h.b16 %v1051
    %v1099 = vunpack.c.l.b16 %v1052
    %v1100 = vunpack.c.h.b16 %v1052
    %v1101 = vpack.c.b16 %v1069, %v1069
    %v1102 = vpack.c.b16 %v1070, %v1070
    %v1103 = vpack.c.b16 %v1071, %v1071
    %v1104 = vpack.c.b16 %v1072, %v1072
    %v1105 = vpack.c.b16 %v1073, %v1073
    %v1106 = vpack.c.b16 %v1074, %v1074
    %v1107 = vpack.c.b16 %v1075, %v1075
    %v1108 = vpack.c.b16 %v1076, %v1076
    %v1109 = vpack.c.b16 %v1077, %v1077
    %v1110 = vpack.c.b16 %v1078, %v1078
    %v1111 = vpack.c.b16 %v1079, %v1079
    %v1112 = vpack.c.b16 %v1080, %v1080
    %v1113 = vpack.c.b16 %v1081, %v1081
    %v1114 = vpack.c.b16 %v1082, %v1082
    %v1115 = vpack.c.b16 %v1083, %v1083
    %v1116 = vpack.c.b16 %v1084, %v1084
    %v1117 = vpack.c.b16 %v1085, %v1085
    %v1118 = vpack.c.b16 %v1086, %v1086
    %v1119 = vpack.c.b16 %v1087, %v1087
    %v1120 = vpack.c.b16 %v1088, %v1088
    %v1121 = vpack.c.b16 %v1089, %v1089
    %v1122 = vpack.c.b16 %v1090, %v1090
    %v1123 = vpack.c.b16 %v1091, %v1091
    %v1124 = vpack.c.b16 %v1092, %v1092
    %v1125 = vpack.c.b16 %v1093, %v1093
    %v1126 = vpack.c.b16 %v1094, %v1094
    %v1127 = vpack.c.b16 %v1095, %v1095
    %v1128 = vpack.c.b16 %v1096, %v1096
    %v1129 = vpack.c.b16 %v1097, %v1097
    %v1130 = vpack.c.b16 %v1098, %v1098
    %v1131 = vpack.c.b16 %v1099, %v1099
    %v1132 = vpack.c.b16 %v1100, %v1100
    %1165 = vst [vmem:[#allocation2] sm:$0xf] %v1101
    %1166 = vst [vmem:[#allocation2 + $0x4] sm:$0xf] %v1102
    %1167 = vst [vmem:[#allocation2 + $0x8] sm:$0xf] %v1103
    %1168 = vst [vmem:[#allocation2 + $0xc] sm:$0xf] %v1104
    %1169 = vst [vmem:[#allocation2 + $0x10] sm:$0xf] %v1105
    %1170 = vst [vmem:[#allocation2 + $0x14] sm:$0xf] %v1106
    %1171 = vst [vmem:[#allocation2 + $0x18] sm:$0xf] %v1107
    %1172 = vst [vmem:[#allocation2 + $0x1c] sm:$0xf] %v1108
    %1173 = vst [vmem:[#allocation2 + $0x20] sm:$0xf] %v1109
    %1174 = vst [vmem:[#allocation2 + $0x24] sm:$0xf] %v1110
    %1175 = vst [vmem:[#allocation2 + $0x28] sm:$0xf] %v1111
    %1176 = vst [vmem:[#allocation2 + $0x2c] sm:$0xf] %v1112
    %1177 = vst [vmem:[#allocation2 + $0x30] sm:$0xf] %v1113
    %1178 = vst [vmem:[#allocation2 + $0x34] sm:$0xf] %v1114
    %1179 = vst [vmem:[#allocation2 + $0x38] sm:$0xf] %v1115
    %1180 = vst [vmem:[#allocation2 + $0x3c] sm:$0xf] %v1116
    %1181 = vst [vmem:[#allocation2 + $0x40] sm:$0xf] %v1117
    %1182 = vst [vmem:[#allocation2 + $0x44] sm:$0xf] %v1118
    %1183 = vst [vmem:[#allocation2 + $0x48] sm:$0xf] %v1119
    %1184 = vst [vmem:[#allocation2 + $0x4c] sm:$0xf] %v1120
    %1185 = vst [vmem:[#allocation2 + $0x50] sm:$0xf] %v1121
    %1186 = vst [vmem:[#allocation2 + $0x54] sm:$0xf] %v1122
    %1187 = vst [vmem:[#allocation2 + $0x58] sm:$0xf] %v1123
    %1188 = vst [vmem:[#allocation2 + $0x5c] sm:$0xf] %v1124
    %1189 = vst [vmem:[#allocation2 + $0x60] sm:$0xf] %v1125
    %1190 = vst [vmem:[#allocation2 + $0x64] sm:$0xf] %v1126
    %1191 = vst [vmem:[#allocation2 + $0x68] sm:$0xf] %v1127
    %1192 = vst [vmem:[#allocation2 + $0x6c] sm:$0xf] %v1128
    %1193 = vst [vmem:[#allocation2 + $0x70] sm:$0xf] %v1129
    %1194 = vst [vmem:[#allocation2 + $0x74] sm:$0xf] %v1130
    %1195 = vst [vmem:[#allocation2 + $0x78] sm:$0xf] %v1131
    %1196 = vst [vmem:[#allocation2 + $0x7c] sm:$0xf] %v1132
    // Predicated region
    $region26: #{transformer_block.9} parent=1 // pred_check
      _
    $region27: #{transformer_block.9} parent=1 // pred_check_branch
      %1198 = sbr.rel (0) target = $region29
    $region28: #{transformer_block.9} parent=1 // pred_region
      %s1200 = ssub.s32 2048, 2048
      %1201 = vsyncadd [#allocation3], %s1200
      %s1202 = sshll.u32 [#allocation2], 4
      %s1203 = int_to_ptr.vmem [resolvable:$true] %s1202
      %1208 = dma.vmem_to_hbm [thread:$0]  %s1203, 2048, %s6, [#allocation3], 64, 64, 4
    $region29: #{transformer_block.9} parent=1 // pred_fallthru
      _
    // Predicated region
    $region30: #{transformer_block.9} parent=1 // pred_check
      _
    $region31: #{transformer_block.9} parent=1 // pred_check_branch
      %1210 = sbr.rel (0) target = $region33
    $region32: #{transformer_block.9} parent=1 // pred_region
      %1211 = dma.done [#allocation3], 2048
    $region33: #{transformer_block.9} parent=1 // pred_fallthru
      _
    %1212 = vsyncpa [#allocation3], 1

</llo_original>
